<compile_context>
chip_gen: v7x
topology: tpu7x:2x2x1
jax: 0.10.0
libtpu: 0.0.40
codegen_flags: <defaults>
</compile_context>

<pallas_src>
import functools

import jax
import jax.numpy as jnp
from jax.experimental import pallas as pl
from jax.experimental.pallas import tpu as pltpu

_VMEM_LIMIT = 48 * 1024 * 1024  # > v5e/v6e defaults, < v7x's 64 MiB physical.


# ---------------------------------------------------------------------------
# Shared helpers (run on VMEM-resident data inside the kernels).
# ---------------------------------------------------------------------------
def _qkv(x2, wqkv3_ref, bqkv3_ref):
    """x2: (S, C) bf16.  Three lane-aligned projections; f32 results."""
    q = jnp.dot(x2, wqkv3_ref[0], preferred_element_type=jnp.float32) + bqkv3_ref[0]
    k = jnp.dot(x2, wqkv3_ref[1], preferred_element_type=jnp.float32) + bqkv3_ref[1]
    v = jnp.dot(x2, wqkv3_ref[2], preferred_element_type=jnp.float32) + bqkv3_ref[2]
    return q, k, v


def _head_attention(qh, kh, vh, exact_softmax):
    """qh/kh/vh: (G, N, D) f32.  Returns softmax(q k^T) v in f32 (G, N, D).
    Matmul operands are cast to bf16 (MXU-native); softmax math stays f32."""
    s = jnp.einsum('gnd,gmd->gnm', qh.astype(jnp.bfloat16), kh.astype(jnp.bfloat16),
                   preferred_element_type=jnp.float32)
    s = s - jnp.max(s, axis=-1, keepdims=True)
    p = jnp.exp(s)
    denom = jnp.sum(p, axis=-1, keepdims=True)
    if exact_softmax:
        p = p / denom                                    # exact (feeds top-k ranking)
    else:
        p = p * pl.reciprocal(denom, approx=True)        # EUP reciprocal
    return jnp.einsum('gnm,gmd->gnd', p.astype(jnp.bfloat16), vh.astype(jnp.bfloat16),
                      preferred_element_type=jnp.float32)


# ---------------------------------------------------------------------------
# Stage 1: per-window self-attention reduced to one scalar score per window.
# The token/channel mean commutes with fc_o, so the output projection is
# folded into wo_mean (exact-equal result, no (S, C) projection needed).
# ---------------------------------------------------------------------------
def _window_score_kernel(num_heads, head_dim, group, n_tok,
                         x_ref, wqkv3_ref, bqkv3_ref, womean_ref,
                         score_ref):
    C = num_heads * head_dim
    x2 = x_ref[...].reshape(group * n_tok, C)            # (S, C) bf16
    q, k, v = _qkv(x2, wqkv3_ref, bqkv3_ref)             # (S, C) f32 each
    q = q.reshape(group, n_tok, C)
    k = k.reshape(group, n_tok, C)
    v = v.reshape(group, n_tok, C)

    womean = womean_ref[0]                                # (C,) f32
    acc = jnp.zeros((group, n_tok), jnp.float32)
    for h in range(num_heads):                            # static unroll
        lo = h * head_dim
        att = _head_attention(q[..., lo:lo + head_dim],
                              k[..., lo:lo + head_dim],
                              v[..., lo:lo + head_dim],
                              exact_softmax=True)         # (G, N, D) f32
        w_h = womean[lo:lo + head_dim].reshape(1, 1, head_dim)
        acc = acc + jnp.sum(att * w_h, axis=-1)           # folded fc_o + channel mean

    score = jnp.mean(acc, axis=-1)                        # mean over tokens -> (G,)
    score_ref[...] = score.reshape(1, 1, group)           # lane-dense store


def window_scores(xw_flat, wqkv3, bqkv3, wo_mean, num_heads, group):
    """xw_flat: (BT, N, C) bf16.  Returns (BT,) f32 per-window scores
    (excluding the constant bo.mean(), added by the caller)."""
    BT, N, C = xw_flat.shape
    head_dim = C // num_heads
    num_groups = BT // group
    kernel = functools.partial(_window_score_kernel, num_heads, head_dim, group, N)
    out = pl.pallas_call(
        kernel,
        out_shape=jax.ShapeDtypeStruct((num_groups, 1, group), jnp.float32),
        grid=(num_groups,),
        in_specs=[pl.BlockSpec((group, N, C), lambda i: (i, 0, 0)),
                  pl.BlockSpec((3, C, C), lambda i: (0, 0, 0)),
                  pl.BlockSpec((3, 1, C), lambda i: (0, 0, 0)),
                  pl.BlockSpec((1, C), lambda i: (0, 0))],
        out_specs=pl.BlockSpec((1, 1, group), lambda i: (i, 0, 0)),
        compiler_params=pltpu.CompilerParams(
            dimension_semantics=("parallel",),
            vmem_limit_bytes=_VMEM_LIMIT),
    )(xw_flat, wqkv3, bqkv3, wo_mean)
    return out.reshape(BT)


# ---------------------------------------------------------------------------
# Stage 2: attention over the concatenated tokens of the top_k selected
# windows.  grid = (batch,); the window gather is done with manual DMAs from
# HBM into a double-buffered bf16 scratch so batch b+1's gathers overlap
# batch b's attention compute.
# ---------------------------------------------------------------------------
def _topk_attention_kernel(num_heads, head_dim, top_k, n_tok,
                           gidx_ref, x_hbm, wqkv3_ref, bqkv3_ref, wo_ref, bo_ref,
                           o_ref, gbuf, sems):
    C = num_heads * head_dim
    seq = top_k * n_tok
    b = pl.program_id(0)
    nb = pl.num_programs(0)

    def issue(batch_idx, slot):
        for kk in range(top_k):                           # static unroll (small top_k)
            w = gidx_ref[batch_idx * top_k + kk]
            pltpu.make_async_copy(x_hbm.at[w], gbuf.at[slot, kk],
                                  sems.at[slot, kk]).start()

    # Prime the first slot (grid axis is sequential: "arbitrary").
    @pl.when(b == 0)
    def _():
        issue(0, 0)

    slot = b % 2

    # Start the next batch's gather before computing on the current one so the
    # DMAs hide behind this step's attention work.
    @pl.when(b + 1 < nb)
    def _():
        issue(b + 1, 1 - slot)

    for kk in range(top_k):
        pltpu.make_async_copy(x_hbm.at[0], gbuf.at[slot, kk],
                              sems.at[slot, kk]).wait()

    x2 = gbuf[slot].reshape(seq, C)                       # (seq, C) bf16
    q, k, v = _qkv(x2, wqkv3_ref, bqkv3_ref)              # (seq, C) f32 each
    q = q.reshape(1, seq, C)
    k = k.reshape(1, seq, C)
    v = v.reshape(1, seq, C)

    acc = None
    for h in range(num_heads):                            # static unroll
        lo = h * head_dim
        att = _head_attention(q[..., lo:lo + head_dim],
                              k[..., lo:lo + head_dim],
                              v[..., lo:lo + head_dim],
                              exact_softmax=False)        # (1, seq, D) f32
        contrib = jnp.dot(att.reshape(seq, head_dim).astype(jnp.bfloat16),
                          wo_ref[lo:lo + head_dim, :],
                          preferred_element_type=jnp.float32)   # (seq, C)
        acc = contrib if acc is None else acc + contrib

    out = acc + bo_ref[...]
    o_ref[...] = out.reshape(1, seq, C).astype(o_ref.dtype)


def topk_window_attention(xw_flat, gidx, wqkv3, bqkv3, wo, bo,
                          num_heads, batch, top_k):
    """xw_flat: (BT, N, C) bf16; gidx: (batch*top_k,) int32 flat window indices.
    Returns (batch, top_k*N, C) f32."""
    BT, N, C = xw_flat.shape
    head_dim = C // num_heads
    kernel = functools.partial(_topk_attention_kernel, num_heads, head_dim, top_k, N)
    grid_spec = pltpu.PrefetchScalarGridSpec(
        num_scalar_prefetch=1,
        grid=(batch,),
        in_specs=[
            pl.BlockSpec(memory_space=pl.ANY),            # xw_flat stays in HBM
            pl.BlockSpec((3, C, C), lambda b, g: (0, 0, 0)),
            pl.BlockSpec((3, 1, C), lambda b, g: (0, 0, 0)),
            pl.BlockSpec((C, C), lambda b, g: (0, 0)),
            pl.BlockSpec((1, C), lambda b, g: (0, 0)),
        ],
        out_specs=pl.BlockSpec((1, top_k * N, C), lambda b, g: (b, 0, 0)),
        scratch_shapes=[pltpu.VMEM((2, top_k, N, C), jnp.bfloat16),
                        pltpu.SemaphoreType.DMA((2, top_k))],
    )
    return pl.pallas_call(
        kernel,
        out_shape=jax.ShapeDtypeStruct((batch, top_k * N, C), jnp.float32),
        grid_spec=grid_spec,
        # "arbitrary": the cross-step double-buffered gather needs sequential steps.
        compiler_params=pltpu.CompilerParams(
            dimension_semantics=("arbitrary",),
            vmem_limit_bytes=_VMEM_LIMIT),
    )(gidx, xw_flat, wqkv3, bqkv3, wo, bo)


# ---------------------------------------------------------------------------
# Host-side helpers.
# ---------------------------------------------------------------------------
def init_linear_attention_params(key, dim):
    """Deterministic synthetic init for one LinearAttention block.
    Weights are stored as (in, out) so the kernel does x @ W + b."""
    ks = jax.random.split(key, 8)

    def lin(kw, kb):
        w = 0.05 * jax.random.normal(kw, (dim, dim), jnp.float32)
        b = 0.05 * jax.random.normal(kb, (1, dim), jnp.float32)
        return w, b

    wq, bq = lin(ks[0], ks[1])
    wk, bk = lin(ks[2], ks[3])
    wv, bv = lin(ks[4], ks[5])
    wo, bo = lin(ks[6], ks[7])
    return (wq, wk, wv, wo, bq, bk, bv, bo)


def _pack_params(params, num_heads):
    """Stack Q/K/V weights (lane-aligned, bf16), fold 1/sqrt(head_dim) into the
    Q branch, and precompute the stage-1 folded output projection."""
    wq, wk, wv, wo, bq, bk, bv, bo = params
    dim = wq.shape[0]
    head_dim = dim // num_heads
    inv_scale = 1.0 / (float(head_dim) ** 0.5)            # matches / head_dim ** 0.5
    wqkv3 = jnp.stack([wq * inv_scale, wk, wv]).astype(jnp.bfloat16)   # (3, C, C)
    bqkv3 = jnp.stack([bq * inv_scale, bk, bv])                        # (3, 1, C) f32
    wo_bf = wo.astype(jnp.bfloat16)                                    # (C, C)
    wo_mean = jnp.mean(wo, axis=1).reshape(1, dim)                     # (1, C) f32
    bo_mean = jnp.mean(bo)                                             # scalar
    return wqkv3, bqkv3, wo_bf, bo, wo_mean, bo_mean


def window_partition(x, ws):
    """(B, C, H, W) -> (B, num_windows, ws*ws, C) token windows."""
    B, C, H, W = x.shape
    nH, nW = H // ws, W // ws
    x = x.reshape(B, C, nH, ws, nW, ws)
    x = jnp.transpose(x, (0, 2, 4, 3, 5, 1))              # (B, nH, nW, ws, ws, C)
    return x.reshape(B, nH * nW, ws * ws, C)


def _pick_group(bt, n_tok, target_rows=1024):
    """Largest divisor of bt with ~target_rows tokens per step, while keeping
    at least 2 grid steps so v7x's two TensorCores both get work."""
    cap = max(1, target_rows // max(1, n_tok))
    if bt >= 2:
        cap = min(cap, bt // 2)
    g = max(1, min(bt, cap))
    while bt % g:
        g -= 1
    return g


def topk_attention_forward(x, params_window, params_final,
                           num_heads, window_size, top_k):
    B, C, H, W = x.shape
    xw = window_partition(x, window_size)                 # (B, nWin, N, C)
    nWin, N = xw.shape[1], xw.shape[2]
    # bf16 in HBM: halves both stages' input DMA; MXU is bf16-native.
    xw_flat = xw.reshape(B * nWin, N, C).astype(jnp.bfloat16)

    wqkv1, bqkv1, _wo1, _bo1, womean1, bomean1 = _pack_params(params_window, num_heads)
    wqkv2, bqkv2, wo2, bo2, _, _ = _pack_params(params_final, num_heads)

    # Stage 1: batched per-window self-attention -> scalar score per window.
    group = _pick_group(B * nWin, N)
    scores = window_scores(xw_flat, wqkv1, bqkv1, womean1, num_heads, group)
    scores = scores.reshape(B, nWin) + bomean1

    # TODO(synk): the reference feeds the float window-attention output straight
    # into torch.gather as indices with incompatible shapes (not executable);
    # reinterpreted as selecting the top_k highest-scoring windows per image.
    _, idx = jax.lax.top_k(scores, top_k)                 # (B, top_k)
    gidx = (jnp.arange(B, dtype=jnp.int32)[:, None] * nWin
            + idx.astype(jnp.int32)).reshape(-1)          # (B*top_k,)

    # Stage 2: attention over the tokens of the selected top_k windows; the
    # window gather is fused into the kernel as overlapped manual DMAs.
    out = topk_window_attention(xw_flat, gidx, wqkv2, bqkv2, wo2, bo2,
                                num_heads, B, top_k)
    return out                                            # (B, top_k*ws*ws, C) f32


if __name__ == "__main__":
    # TODO(synk): at demo dims C=32 (head_dim=8) the lane axis is only 25%
    # occupied; at production C >= 128 the same kernels become lane-dense.
    B, C, H, W = 2, 32, 16, 16
    num_heads, window_size, top_k = 4, 4, 2

    key = jax.random.PRNGKey(0)
    kx, kp1, kp2 = jax.random.split(key, 3)

    x = jax.random.normal(kx, (B, C, H, W), jnp.float32)
    params_window = init_linear_attention_params(kp1, C)
    params_final = init_linear_attention_params(kp2, C)

    out = topk_attention_forward(x, params_window, params_final,
                                 num_heads, window_size, top_k)
    jax.block_until_ready(out)
    assert out.shape == (B, top_k * window_size * window_size, C)
    print("KERNEL_OK")
</pallas_src>

<mosaic_0001>
module attributes {stable_mosaic.version = 11 : i64} {
  func.func @_window_score_kernel(%arg0: i32, %arg1: memref<16x16x32xbf16, #tpu.memory_space<vmem>>, %arg2: memref<3x32x32xbf16, #tpu.memory_space<vmem>>, %arg3: memref<3x1x32xf32, #tpu.memory_space<vmem>>, %arg4: memref<1x32xf32, #tpu.memory_space<vmem>>, %arg5: memref<1x1x16xf32, #tpu.memory_space<vmem>>) attributes {dimension_semantics = [#tpu.dimension_semantics<parallel>], iteration_bounds = array<i64: 2>, scalar_prefetch = 0 : i64, scratch_operands = 0 : i64, tpu.core_type = #tpu.core_type<tc>, window_params = [{transform_indices = @transform_0, window_bounds = array<i64: 16, 16, 32>}, {pipeline_mode = #tpu.pipeline_mode<synchronous>, transform_indices = @transform_1, window_bounds = array<i64: 3, 32, 32>}, {pipeline_mode = #tpu.pipeline_mode<synchronous>, transform_indices = @transform_2, window_bounds = array<i64: 3, 1, 32>}, {pipeline_mode = #tpu.pipeline_mode<synchronous>, transform_indices = @transform_3, window_bounds = array<i64: 1, 32>}, {transform_indices = @transform_4, window_bounds = array<i64: 1, 1, 16>}]} {
    %c0 = arith.constant 0 : index
    %c0_0 = arith.constant 0 : index
    %c0_1 = arith.constant 0 : index
    %0 = vector.load %arg1[%c0, %c0_0, %c0_1] : memref<16x16x32xbf16, #tpu.memory_space<vmem>>, vector<16x16x32xbf16>
    %1 = vector.shape_cast %0 : vector<16x16x32xbf16> to vector<256x32xbf16>
    %c0_2 = arith.constant 0 : index
    %c0_3 = arith.constant 0 : index
    %c0_4 = arith.constant 0 : index
    %2 = vector.load %arg2[%c0_2, %c0_3, %c0_4] : memref<3x32x32xbf16, #tpu.memory_space<vmem>>, vector<1x32x32xbf16>
    %3 = vector.shape_cast %2 : vector<1x32x32xbf16> to vector<32x32xbf16>
    %cst = arith.constant dense<0.000000e+00> : vector<256x32xf32>
    %4 = tpu.matmul %1, %3, %cst {dimension_numbers = #tpu.dot_dimension_numbers<[1], [0], [0], [1], [0, 0, 1, 1], [], []>} : vector<256x32xbf16>, vector<32x32xbf16>, vector<256x32xf32> -> vector<256x32xf32>
    %c0_5 = arith.constant 0 : index
    %c0_6 = arith.constant 0 : index
    %c0_7 = arith.constant 0 : index
    %5 = vector.load %arg3[%c0_5, %c0_6, %c0_7] : memref<3x1x32xf32, #tpu.memory_space<vmem>>, vector<1x1x32xf32>
    %6 = vector.shape_cast %5 : vector<1x1x32xf32> to vector<1x32xf32>
    %7 = vector.broadcast %6 : vector<1x32xf32> to vector<256x32xf32>
    %8 = arith.addf %4, %7 : vector<256x32xf32>
    %c1 = arith.constant 1 : index
    %c0_8 = arith.constant 0 : index
    %c0_9 = arith.constant 0 : index
    %9 = vector.load %arg2[%c1, %c0_8, %c0_9] : memref<3x32x32xbf16, #tpu.memory_space<vmem>>, vector<1x32x32xbf16>
    %10 = vector.shape_cast %9 : vector<1x32x32xbf16> to vector<32x32xbf16>
    %cst_10 = arith.constant dense<0.000000e+00> : vector<256x32xf32>
    %11 = tpu.matmul %1, %10, %cst_10 {dimension_numbers = #tpu.dot_dimension_numbers<[1], [0], [0], [1], [0, 0, 1, 1], [], []>} : vector<256x32xbf16>, vector<32x32xbf16>, vector<256x32xf32> -> vector<256x32xf32>
    %c1_11 = arith.constant 1 : index
    %c0_12 = arith.constant 0 : index
    %c0_13 = arith.constant 0 : index
    %12 = vector.load %arg3[%c1_11, %c0_12, %c0_13] : memref<3x1x32xf32, #tpu.memory_space<vmem>>, vector<1x1x32xf32>
    %13 = vector.shape_cast %12 : vector<1x1x32xf32> to vector<1x32xf32>
    %14 = vector.broadcast %13 : vector<1x32xf32> to vector<256x32xf32>
    %15 = arith.addf %11, %14 : vector<256x32xf32>
    %c2 = arith.constant 2 : index
    %c0_14 = arith.constant 0 : index
    %c0_15 = arith.constant 0 : index
    %16 = vector.load %arg2[%c2, %c0_14, %c0_15] : memref<3x32x32xbf16, #tpu.memory_space<vmem>>, vector<1x32x32xbf16>
    %17 = vector.shape_cast %16 : vector<1x32x32xbf16> to vector<32x32xbf16>
    %cst_16 = arith.constant dense<0.000000e+00> : vector<256x32xf32>
    %18 = tpu.matmul %1, %17, %cst_16 {dimension_numbers = #tpu.dot_dimension_numbers<[1], [0], [0], [1], [0, 0, 1, 1], [], []>} : vector<256x32xbf16>, vector<32x32xbf16>, vector<256x32xf32> -> vector<256x32xf32>
    %c2_17 = arith.constant 2 : index
    %c0_18 = arith.constant 0 : index
    %c0_19 = arith.constant 0 : index
    %19 = vector.load %arg3[%c2_17, %c0_18, %c0_19] : memref<3x1x32xf32, #tpu.memory_space<vmem>>, vector<1x1x32xf32>
    %20 = vector.shape_cast %19 : vector<1x1x32xf32> to vector<1x32xf32>
    %21 = vector.broadcast %20 : vector<1x32xf32> to vector<256x32xf32>
    %22 = arith.addf %18, %21 : vector<256x32xf32>
    %23 = vector.shape_cast %8 : vector<256x32xf32> to vector<16x16x32xf32>
    %24 = vector.shape_cast %15 : vector<256x32xf32> to vector<16x16x32xf32>
    %25 = vector.shape_cast %22 : vector<256x32xf32> to vector<16x16x32xf32>
    %c0_20 = arith.constant 0 : index
    %c0_21 = arith.constant 0 : index
    %26 = vector.load %arg4[%c0_20, %c0_21] : memref<1x32xf32, #tpu.memory_space<vmem>>, vector<1x32xf32>
    %27 = vector.shape_cast %26 : vector<1x32xf32> to vector<32xf32>
    %cst_22 = arith.constant 0.000000e+00 : f32
    %28 = vector.broadcast %cst_22 : f32 to vector<16x16xf32>
    %29 = vector.extract_strided_slice %23 {offsets = [0, 0, 0], sizes = [16, 16, 8], strides = [1, 1, 1]} : vector<16x16x32xf32> to vector<16x16x8xf32>
    %30 = vector.extract_strided_slice %24 {offsets = [0, 0, 0], sizes = [16, 16, 8], strides = [1, 1, 1]} : vector<16x16x32xf32> to vector<16x16x8xf32>
    %31 = vector.extract_strided_slice %25 {offsets = [0, 0, 0], sizes = [16, 16, 8], strides = [1, 1, 1]} : vector<16x16x32xf32> to vector<16x16x8xf32>
    %32 = arith.truncf %29 : vector<16x16x8xf32> to vector<16x16x8xbf16>
    %33 = arith.truncf %30 : vector<16x16x8xf32> to vector<16x16x8xbf16>
    "tpu.trace_start"() <{level = 10 : i32, message = "gnd,gmd->gnm"}> : () -> ()
    %cst_23 = arith.constant dense<0.000000e+00> : vector<16x16x16xf32>
    %34 = tpu.matmul %32, %33, %cst_23 {dimension_numbers = #tpu.dot_dimension_numbers<[2], [2], [1], [1], [0, 0, 0, 1, 1, 1], [0], [0]>} : vector<16x16x8xbf16>, vector<16x16x8xbf16>, vector<16x16x16xf32> -> vector<16x16x16xf32>
    "tpu.trace_stop"() : () -> ()
    %cst_24 = arith.constant dense<0xFF800000> : vector<16x16xf32>
    %35 = vector.multi_reduction <maximumf>, %34, %cst_24 [2] : vector<16x16x16xf32> to vector<16x16xf32>
    %36 = vector.shape_cast %35 : vector<16x16xf32> to vector<16x16x1xf32>
    %37 = vector.broadcast %36 : vector<16x16x1xf32> to vector<16x16x16xf32>
    %38 = arith.subf %34, %37 : vector<16x16x16xf32>
    %39 = math.exp %38 : vector<16x16x16xf32>
    %cst_25 = arith.constant dense<0.000000e+00> : vector<16x16xf32>
    %40 = vector.multi_reduction <add>, %39, %cst_25 [2] : vector<16x16x16xf32> to vector<16x16xf32>
    %41 = vector.shape_cast %40 : vector<16x16xf32> to vector<16x16x1xf32>
    %42 = vector.broadcast %41 : vector<16x16x1xf32> to vector<16x16x16xf32>
    %43 = arith.divf %39, %42 : vector<16x16x16xf32>
    %44 = arith.truncf %43 : vector<16x16x16xf32> to vector<16x16x16xbf16>
    %45 = arith.truncf %31 : vector<16x16x8xf32> to vector<16x16x8xbf16>
    "tpu.trace_start"() <{level = 10 : i32, message = "gnm,gmd->gnd"}> : () -> ()
    %cst_26 = arith.constant dense<0.000000e+00> : vector<16x16x8xf32>
    %46 = tpu.matmul %44, %45, %cst_26 {dimension_numbers = #tpu.dot_dimension_numbers<[2], [1], [1], [2], [0, 0, 0, 1, 1, 2], [0], [0]>} : vector<16x16x16xbf16>, vector<16x16x8xbf16>, vector<16x16x8xf32> -> vector<16x16x8xf32>
    "tpu.trace_stop"() : () -> ()
    %47 = vector.extract_strided_slice %27 {offsets = [0], sizes = [8], strides = [1]} : vector<32xf32> to vector<8xf32>
    %48 = vector.shape_cast %47 : vector<8xf32> to vector<1x1x8xf32>
    %49 = vector.broadcast %48 : vector<1x1x8xf32> to vector<16x16x8xf32>
    %50 = arith.mulf %46, %49 : vector<16x16x8xf32>
    %cst_27 = arith.constant dense<0.000000e+00> : vector<16x16xf32>
    %51 = vector.multi_reduction <add>, %50, %cst_27 [2] : vector<16x16x8xf32> to vector<16x16xf32>
    %52 = arith.addf %28, %51 : vector<16x16xf32>
    %53 = vector.extract_strided_slice %23 {offsets = [0, 0, 8], sizes = [16, 16, 8], strides = [1, 1, 1]} : vector<16x16x32xf32> to vector<16x16x8xf32>
    %54 = vector.extract_strided_slice %24 {offsets = [0, 0, 8], sizes = [16, 16, 8], strides = [1, 1, 1]} : vector<16x16x32xf32> to vector<16x16x8xf32>
    %55 = vector.extract_strided_slice %25 {offsets = [0, 0, 8], sizes = [16, 16, 8], strides = [1, 1, 1]} : vector<16x16x32xf32> to vector<16x16x8xf32>
    %56 = arith.truncf %53 : vector<16x16x8xf32> to vector<16x16x8xbf16>
    %57 = arith.truncf %54 : vector<16x16x8xf32> to vector<16x16x8xbf16>
    "tpu.trace_start"() <{level = 10 : i32, message = "gnd,gmd->gnm"}> : () -> ()
    %cst_28 = arith.constant dense<0.000000e+00> : vector<16x16x16xf32>
    %58 = tpu.matmul %56, %57, %cst_28 {dimension_numbers = #tpu.dot_dimension_numbers<[2], [2], [1], [1], [0, 0, 0, 1, 1, 1], [0], [0]>} : vector<16x16x8xbf16>, vector<16x16x8xbf16>, vector<16x16x16xf32> -> vector<16x16x16xf32>
    "tpu.trace_stop"() : () -> ()
    %cst_29 = arith.constant dense<0xFF800000> : vector<16x16xf32>
    %59 = vector.multi_reduction <maximumf>, %58, %cst_29 [2] : vector<16x16x16xf32> to vector<16x16xf32>
    %60 = vector.shape_cast %59 : vector<16x16xf32> to vector<16x16x1xf32>
    %61 = vector.broadcast %60 : vector<16x16x1xf32> to vector<16x16x16xf32>
    %62 = arith.subf %58, %61 : vector<16x16x16xf32>
    %63 = math.exp %62 : vector<16x16x16xf32>
    %cst_30 = arith.constant dense<0.000000e+00> : vector<16x16xf32>
    %64 = vector.multi_reduction <add>, %63, %cst_30 [2] : vector<16x16x16xf32> to vector<16x16xf32>
    %65 = vector.shape_cast %64 : vector<16x16xf32> to vector<16x16x1xf32>
    %66 = vector.broadcast %65 : vector<16x16x1xf32> to vector<16x16x16xf32>
    %67 = arith.divf %63, %66 : vector<16x16x16xf32>
    %68 = arith.truncf %67 : vector<16x16x16xf32> to vector<16x16x16xbf16>
    %69 = arith.truncf %55 : vector<16x16x8xf32> to vector<16x16x8xbf16>
    "tpu.trace_start"() <{level = 10 : i32, message = "gnm,gmd->gnd"}> : () -> ()
    %cst_31 = arith.constant dense<0.000000e+00> : vector<16x16x8xf32>
    %70 = tpu.matmul %68, %69, %cst_31 {dimension_numbers = #tpu.dot_dimension_numbers<[2], [1], [1], [2], [0, 0, 0, 1, 1, 2], [0], [0]>} : vector<16x16x16xbf16>, vector<16x16x8xbf16>, vector<16x16x8xf32> -> vector<16x16x8xf32>
    "tpu.trace_stop"() : () -> ()
    %71 = vector.extract_strided_slice %27 {offsets = [8], sizes = [8], strides = [1]} : vector<32xf32> to vector<8xf32>
    %72 = vector.shape_cast %71 : vector<8xf32> to vector<1x1x8xf32>
    %73 = vector.broadcast %72 : vector<1x1x8xf32> to vector<16x16x8xf32>
    %74 = arith.mulf %70, %73 : vector<16x16x8xf32>
    %cst_32 = arith.constant dense<0.000000e+00> : vector<16x16xf32>
    %75 = vector.multi_reduction <add>, %74, %cst_32 [2] : vector<16x16x8xf32> to vector<16x16xf32>
    %76 = arith.addf %52, %75 : vector<16x16xf32>
    %77 = vector.extract_strided_slice %23 {offsets = [0, 0, 16], sizes = [16, 16, 8], strides = [1, 1, 1]} : vector<16x16x32xf32> to vector<16x16x8xf32>
    %78 = vector.extract_strided_slice %24 {offsets = [0, 0, 16], sizes = [16, 16, 8], strides = [1, 1, 1]} : vector<16x16x32xf32> to vector<16x16x8xf32>
    %79 = vector.extract_strided_slice %25 {offsets = [0, 0, 16], sizes = [16, 16, 8], strides = [1, 1, 1]} : vector<16x16x32xf32> to vector<16x16x8xf32>
    %80 = arith.truncf %77 : vector<16x16x8xf32> to vector<16x16x8xbf16>
    %81 = arith.truncf %78 : vector<16x16x8xf32> to vector<16x16x8xbf16>
    "tpu.trace_start"() <{level = 10 : i32, message = "gnd,gmd->gnm"}> : () -> ()
    %cst_33 = arith.constant dense<0.000000e+00> : vector<16x16x16xf32>
    %82 = tpu.matmul %80, %81, %cst_33 {dimension_numbers = #tpu.dot_dimension_numbers<[2], [2], [1], [1], [0, 0, 0, 1, 1, 1], [0], [0]>} : vector<16x16x8xbf16>, vector<16x16x8xbf16>, vector<16x16x16xf32> -> vector<16x16x16xf32>
    "tpu.trace_stop"() : () -> ()
    %cst_34 = arith.constant dense<0xFF800000> : vector<16x16xf32>
    %83 = vector.multi_reduction <maximumf>, %82, %cst_34 [2] : vector<16x16x16xf32> to vector<16x16xf32>
    %84 = vector.shape_cast %83 : vector<16x16xf32> to vector<16x16x1xf32>
    %85 = vector.broadcast %84 : vector<16x16x1xf32> to vector<16x16x16xf32>
    %86 = arith.subf %82, %85 : vector<16x16x16xf32>
    %87 = math.exp %86 : vector<16x16x16xf32>
    %cst_35 = arith.constant dense<0.000000e+00> : vector<16x16xf32>
    %88 = vector.multi_reduction <add>, %87, %cst_35 [2] : vector<16x16x16xf32> to vector<16x16xf32>
    %89 = vector.shape_cast %88 : vector<16x16xf32> to vector<16x16x1xf32>
    %90 = vector.broadcast %89 : vector<16x16x1xf32> to vector<16x16x16xf32>
    %91 = arith.divf %87, %90 : vector<16x16x16xf32>
    %92 = arith.truncf %91 : vector<16x16x16xf32> to vector<16x16x16xbf16>
    %93 = arith.truncf %79 : vector<16x16x8xf32> to vector<16x16x8xbf16>
    "tpu.trace_start"() <{level = 10 : i32, message = "gnm,gmd->gnd"}> : () -> ()
    %cst_36 = arith.constant dense<0.000000e+00> : vector<16x16x8xf32>
    %94 = tpu.matmul %92, %93, %cst_36 {dimension_numbers = #tpu.dot_dimension_numbers<[2], [1], [1], [2], [0, 0, 0, 1, 1, 2], [0], [0]>} : vector<16x16x16xbf16>, vector<16x16x8xbf16>, vector<16x16x8xf32> -> vector<16x16x8xf32>
    "tpu.trace_stop"() : () -> ()
    %95 = vector.extract_strided_slice %27 {offsets = [16], sizes = [8], strides = [1]} : vector<32xf32> to vector<8xf32>
    %96 = vector.shape_cast %95 : vector<8xf32> to vector<1x1x8xf32>
    %97 = vector.broadcast %96 : vector<1x1x8xf32> to vector<16x16x8xf32>
    %98 = arith.mulf %94, %97 : vector<16x16x8xf32>
    %cst_37 = arith.constant dense<0.000000e+00> : vector<16x16xf32>
    %99 = vector.multi_reduction <add>, %98, %cst_37 [2] : vector<16x16x8xf32> to vector<16x16xf32>
    %100 = arith.addf %76, %99 : vector<16x16xf32>
    %101 = vector.extract_strided_slice %23 {offsets = [0, 0, 24], sizes = [16, 16, 8], strides = [1, 1, 1]} : vector<16x16x32xf32> to vector<16x16x8xf32>
    %102 = vector.extract_strided_slice %24 {offsets = [0, 0, 24], sizes = [16, 16, 8], strides = [1, 1, 1]} : vector<16x16x32xf32> to vector<16x16x8xf32>
    %103 = vector.extract_strided_slice %25 {offsets = [0, 0, 24], sizes = [16, 16, 8], strides = [1, 1, 1]} : vector<16x16x32xf32> to vector<16x16x8xf32>
    %104 = arith.truncf %101 : vector<16x16x8xf32> to vector<16x16x8xbf16>
    %105 = arith.truncf %102 : vector<16x16x8xf32> to vector<16x16x8xbf16>
    "tpu.trace_start"() <{level = 10 : i32, message = "gnd,gmd->gnm"}> : () -> ()
    %cst_38 = arith.constant dense<0.000000e+00> : vector<16x16x16xf32>
    %106 = tpu.matmul %104, %105, %cst_38 {dimension_numbers = #tpu.dot_dimension_numbers<[2], [2], [1], [1], [0, 0, 0, 1, 1, 1], [0], [0]>} : vector<16x16x8xbf16>, vector<16x16x8xbf16>, vector<16x16x16xf32> -> vector<16x16x16xf32>
    "tpu.trace_stop"() : () -> ()
    %cst_39 = arith.constant dense<0xFF800000> : vector<16x16xf32>
    %107 = vector.multi_reduction <maximumf>, %106, %cst_39 [2] : vector<16x16x16xf32> to vector<16x16xf32>
    %108 = vector.shape_cast %107 : vector<16x16xf32> to vector<16x16x1xf32>
    %109 = vector.broadcast %108 : vector<16x16x1xf32> to vector<16x16x16xf32>
    %110 = arith.subf %106, %109 : vector<16x16x16xf32>
    %111 = math.exp %110 : vector<16x16x16xf32>
    %cst_40 = arith.constant dense<0.000000e+00> : vector<16x16xf32>
    %112 = vector.multi_reduction <add>, %111, %cst_40 [2] : vector<16x16x16xf32> to vector<16x16xf32>
    %113 = vector.shape_cast %112 : vector<16x16xf32> to vector<16x16x1xf32>
    %114 = vector.broadcast %113 : vector<16x16x1xf32> to vector<16x16x16xf32>
    %115 = arith.divf %111, %114 : vector<16x16x16xf32>
    %116 = arith.truncf %115 : vector<16x16x16xf32> to vector<16x16x16xbf16>
    %117 = arith.truncf %103 : vector<16x16x8xf32> to vector<16x16x8xbf16>
    "tpu.trace_start"() <{level = 10 : i32, message = "gnm,gmd->gnd"}> : () -> ()
    %cst_41 = arith.constant dense<0.000000e+00> : vector<16x16x8xf32>
    %118 = tpu.matmul %116, %117, %cst_41 {dimension_numbers = #tpu.dot_dimension_numbers<[2], [1], [1], [2], [0, 0, 0, 1, 1, 2], [0], [0]>} : vector<16x16x16xbf16>, vector<16x16x8xbf16>, vector<16x16x8xf32> -> vector<16x16x8xf32>
    "tpu.trace_stop"() : () -> ()
    %119 = vector.extract_strided_slice %27 {offsets = [24], sizes = [8], strides = [1]} : vector<32xf32> to vector<8xf32>
    %120 = vector.shape_cast %119 : vector<8xf32> to vector<1x1x8xf32>
    %121 = vector.broadcast %120 : vector<1x1x8xf32> to vector<16x16x8xf32>
    %122 = arith.mulf %118, %121 : vector<16x16x8xf32>
    %cst_42 = arith.constant dense<0.000000e+00> : vector<16x16xf32>
    %123 = vector.multi_reduction <add>, %122, %cst_42 [2] : vector<16x16x8xf32> to vector<16x16xf32>
    %124 = arith.addf %100, %123 : vector<16x16xf32>
    %cst_43 = arith.constant dense<0.000000e+00> : vector<16xf32>
    %125 = vector.multi_reduction <add>, %124, %cst_43 [1] : vector<16x16xf32> to vector<16xf32>
    %cst_44 = arith.constant 1.600000e+01 : f32
    %126 = vector.broadcast %cst_44 : f32 to vector<16xf32>
    %127 = arith.divf %125, %126 : vector<16xf32>
    %128 = vector.shape_cast %127 : vector<16xf32> to vector<1x1x16xf32>
    %c0_45 = arith.constant 0 : index
    %c0_46 = arith.constant 0 : index
    %c0_47 = arith.constant 0 : index
    %129 = vector.load %arg5[%c0_45, %c0_46, %c0_47] : memref<1x1x16xf32, #tpu.memory_space<vmem>>, vector<1x1x16xf32>
    tpu.vector_store %arg5[%c0_45, %c0_46, %c0_47], %128 {strides = array<i32>} : memref<1x1x16xf32, #tpu.memory_space<vmem>>, vector<1x1x16xf32>,
    return
  }
  func.func @transform_0(%arg0: i32) -> (i32, i32, i32) {
    %c0_i32 = arith.constant 0 : i32
    %c0_i32_0 = arith.constant 0 : i32
    %c0_i32_1 = arith.constant 0 : i32
    return %arg0, %c0_i32, %c0_i32_0 : i32, i32, i32
  }
  func.func @transform_1(%arg0: i32) -> (i32, i32, i32) {
    %c0_i32 = arith.constant 0 : i32
    %c0_i32_0 = arith.constant 0 : i32
    %c0_i32_1 = arith.constant 0 : i32
    %c0_i32_2 = arith.constant 0 : i32
    return %c0_i32, %c0_i32_0, %c0_i32_1 : i32, i32, i32
  }
  func.func @transform_2(%arg0: i32) -> (i32, i32, i32) {
    %c0_i32 = arith.constant 0 : i32
    %c0_i32_0 = arith.constant 0 : i32
    %c0_i32_1 = arith.constant 0 : i32
    %c0_i32_2 = arith.constant 0 : i32
    return %c0_i32, %c0_i32_0, %c0_i32_1 : i32, i32, i32
  }
  func.func @transform_3(%arg0: i32) -> (i32, i32) {
    %c0_i32 = arith.constant 0 : i32
    %c0_i32_0 = arith.constant 0 : i32
    %c0_i32_1 = arith.constant 0 : i32
    return %c0_i32, %c0_i32_0 : i32, i32
  }
  func.func @transform_4(%arg0: i32) -> (i32, i32, i32) {
    %c0_i32 = arith.constant 0 : i32
    %c0_i32_0 = arith.constant 0 : i32
    %c0_i32_1 = arith.constant 0 : i32
    return %arg0, %c0_i32, %c0_i32_0 : i32, i32, i32
  }
}

</mosaic_0001>

<llo_original>
// kernel: tpu_custom_call.1
$region0: #{tpu_custom_call.1}
  #allocation0 [shape = 'u32[]', space=smem, size = 0x4, offset = 0x4, fixed_abs, tag = 'smem constant byte address 0x4 - core index']
  #allocation1 [shape = 'u32[144,128]{1,0:T(1,128)}', space=vmem, size = 0x12000, scoped, tag = 'internal scratch']
  %s0 = inlined_call_operand.hbm [shape: bf16[32,16,32], index: 0, kind: input, shape index: {}]
  %s1 = inlined_call_operand.hbm [shape: bf16[3,32,32], index: 1, kind: input, shape index: {}]
  %s2 = inlined_call_operand.vmem [shape: f32[3,1,32], index: 2, kind: input, shape index: {}]
  %s3 = inlined_call_operand.vmem [shape: f32[1,32], index: 3, kind: input, shape index: {}]
  %s4 = inlined_call_operand.hbm [shape: f32[2,1,16], index: 4, kind: output, shape index: {}]
  %s5 = sld [smem:[#allocation0]]
  $region57: #{tpu_custom_call.1} parent=0
    _
  %s7 = ssub.s32 1, %s5
  %s8 = scalar_select 0, %s7, %s5
  $region1: #{tpu_custom_call.1} parent=0
    #allocation2 [shape = 'u8[131072]{0}', space=vmem, size = 0x20000, scoped, tag = 'input window, operand 0']
    #allocation3 [shape = 's32[2]{0}', space=sflag, size = 0x8, scoped, tag = 'scoped memory for tpu_custom_call.1']
    #allocation4 [shape = 's32[2]{0}', space=sflag, size = 0x8, scoped, tag = 'scoped memory for tpu_custom_call.1']
    #allocation5 [shape = 'u8[24576]{0}', space=vmem, size = 0x6000, scoped, tag = 'input window, operand 1, single buffered']
    #allocation6 [shape = 's32[1]{0}', space=sflag, size = 0x4, scoped, tag = 'scoped memory for tpu_custom_call.1']
    #allocation7 [shape = 'u8[1024]{0}', space=vmem, size = 0x400, scoped, tag = 'output window, operand 0']
    %9 = vsyncpa [#allocation3], 0
    %s10 = scalar_lea.sflag [#allocation3], 1
    %11 = vsyncpa %s10, 0
    %12 = vsyncpa [#allocation6], 0
    %13 = vsyncpa [#allocation4], 0
    %s14 = scalar_lea.sflag [#allocation4], 1
    %15 = vsyncpa %s14, 0
    loop: start=0, step=1, limit=4
    $region2: #{tpu_custom_call.1} parent=1 // loop_pre_header
      _
    $region3: #{tpu_custom_call.1} parent=1 // loop_header
      %s17 = sphi 0, %s21
      %p18 = scmp.ge.s32.totalorder %s17, 4
      %s27 = sphi 0, %s29
      %s30 = sphi 0, %s27
      %s31 = sphi 0, %s30
      %s47 = sphi 0, %s31
      %s51 = sphi 0, %s51
      %s53 = sphi 0, %s51
      %s54 = sphi 0, %s53
      %s68 = sphi 0, %s54
      %s72 = sphi 0, %s72
      %s74 = sphi 0, %s72
      %s75 = sphi 0, %s74
      %s89 = sphi 0, %s75
      %s93 = sphi 0, %s93
      %s95 = sphi 0, %s93
      %s96 = sphi 0, %s95
      %s110 = sphi 0, %s96
      %s116 = sphi 0, %s118
      %s119 = sphi 0, %s116
      %s120 = sphi 0, %s119
      %s136 = sphi 0, %s120
    $region4: #{tpu_custom_call.1} parent=1 // loop_header_branch
      %20 = sbr.rel (%p18) target = $region8
    $region5: #{tpu_custom_call.1} parent=1 // loop_body
      %s22 = ssub.s32 %s17, 1
      %s23 = ssub.s32 %s17, 2
      %s24 = sadd.s32 %s17, 1
      %s25 = ssub.s32 %s17, %s24
      %p26 = scmp.eq.s32.totalorder %s25, 0
      %s28 = sadd.s32 %s27, 1
      %s29 = scalar_select %p26, %s27, %s28
      %p32 = pneg %p26
      %p33 = scmp.eq.s32.totalorder %s17, 1
      %p34 = por %p32, %p33
      %p35 = scmp.ne.s32.totalorder %s27, %s30
      %p36 = scmp.eq.s32.totalorder %s17, 0
      %p37 = por %p35, %p36
      %p38 = scmp.ne.s32.totalorder %s27, %s30
      %p39 = scmp.eq.s32.totalorder %s22, 1
      %p40 = por %p38, %p39
      %p41 = scmp.ne.s32.totalorder %s30, %s31
      %p42 = scmp.eq.s32.totalorder %s22, 0
      %p43 = por %p41, %p42
      %p44 = scmp.ne.s32.totalorder %s30, %s31
      %p45 = scmp.eq.s32.totalorder %s23, 1
      %p46 = por %p44, %p45
      %p48 = scmp.ne.s32.totalorder %s31, %s47
      %p49 = scmp.eq.s32.totalorder %s23, 0
      %p50 = por %p48, %p49
      %s52 = sadd.s32 %s51, 1
      %p55 = scmp.eq.s32.totalorder %s17, 1
      %p56 = scmp.ne.s32.totalorder %s51, %s53
      %p57 = scmp.eq.s32.totalorder %s17, 0
      %p58 = por %p56, %p57
      %p59 = scmp.ne.s32.totalorder %s51, %s53
      %p60 = scmp.eq.s32.totalorder %s22, 1
      %p61 = por %p59, %p60
      %p62 = scmp.ne.s32.totalorder %s53, %s54
      %p63 = scmp.eq.s32.totalorder %s22, 0
      %p64 = por %p62, %p63
      %p65 = scmp.ne.s32.totalorder %s53, %s54
      %p66 = scmp.eq.s32.totalorder %s23, 1
      %p67 = por %p65, %p66
      %p69 = scmp.ne.s32.totalorder %s54, %s68
      %p70 = scmp.eq.s32.totalorder %s23, 0
      %p71 = por %p69, %p70
      %s73 = sadd.s32 %s72, 1
      %p76 = scmp.eq.s32.totalorder %s17, 1
      %p77 = scmp.ne.s32.totalorder %s72, %s74
      %p78 = scmp.eq.s32.totalorder %s17, 0
      %p79 = por %p77, %p78
      %p80 = scmp.ne.s32.totalorder %s72, %s74
      %p81 = scmp.eq.s32.totalorder %s22, 1
      %p82 = por %p80, %p81
      %p83 = scmp.ne.s32.totalorder %s74, %s75
      %p84 = scmp.eq.s32.totalorder %s22, 0
      %p85 = por %p83, %p84
      %p86 = scmp.ne.s32.totalorder %s74, %s75
      %p87 = scmp.eq.s32.totalorder %s23, 1
      %p88 = por %p86, %p87
      %p90 = scmp.ne.s32.totalorder %s75, %s89
      %p91 = scmp.eq.s32.totalorder %s23, 0
      %p92 = por %p90, %p91
      %s94 = sadd.s32 %s93, 1
      %p97 = scmp.eq.s32.totalorder %s17, 1
      %p98 = scmp.ne.s32.totalorder %s93, %s95
      %p99 = scmp.eq.s32.totalorder %s17, 0
      %p100 = por %p98, %p99
      %p101 = scmp.ne.s32.totalorder %s93, %s95
      %p102 = scmp.eq.s32.totalorder %s22, 1
      %p103 = por %p101, %p102
      %p104 = scmp.ne.s32.totalorder %s95, %s96
      %p105 = scmp.eq.s32.totalorder %s22, 0
      %p106 = por %p104, %p105
      %p107 = scmp.ne.s32.totalorder %s95, %s96
      %p108 = scmp.eq.s32.totalorder %s23, 1
      %p109 = por %p107, %p108
      %p111 = scmp.ne.s32.totalorder %s96, %s110
      %p112 = scmp.eq.s32.totalorder %s23, 0
      %p113 = por %p111, %p112
      %s114 = ssub.s32 %s17, %s24
      %p115 = scmp.eq.s32.totalorder %s114, 0
      %s117 = sadd.s32 %s116, 1
      %s118 = scalar_select %p115, %s116, %s117
      %p121 = pneg %p115
      %p122 = scmp.eq.s32.totalorder %s17, 1
      %p123 = por %p121, %p122
      %p124 = scmp.ne.s32.totalorder %s116, %s119
      %p125 = scmp.eq.s32.totalorder %s17, 0
      %p126 = por %p124, %p125
      %p127 = scmp.ne.s32.totalorder %s116, %s119
      %p128 = scmp.eq.s32.totalorder %s22, 1
      %p129 = por %p127, %p128
      %p130 = scmp.ne.s32.totalorder %s119, %s120
      %p131 = scmp.eq.s32.totalorder %s22, 0
      %p132 = por %p130, %p131
      %p133 = scmp.ne.s32.totalorder %s119, %s120
      %p134 = scmp.eq.s32.totalorder %s23, 1
      %p135 = por %p133, %p134
      %p137 = scmp.ne.s32.totalorder %s120, %s136
      %p138 = scmp.eq.s32.totalorder %s23, 0
      %p139 = por %p137, %p138
      %p140 = scmp.le.s32.totalorder 1, %s17
      %p141 = scmp.lt.s32.totalorder %s17, 3
      %p142 = pnand %p140, %p141
      %p143 = pneg %p142
      // Predicated region
      $region9: #{tpu_custom_call.1} parent=5 // pred_check
        _
      $region10: #{tpu_custom_call.1} parent=5 // pred_check_branch
        %145 = sbr.rel (%p142) target = $region12
      $region11: #{tpu_custom_call.1} parent=5 // pred_region
        %s146 = ssub.s32 %s17, 1
        // Predicated region
        $region13: #{tpu_custom_call.1} parent=11 // pred_check
          %p147 = pneg %p64
        $region14: #{tpu_custom_call.1} parent=11 // pred_check_branch
          %149 = sbr.rel (%p147) target = $region16
        $region15: #{tpu_custom_call.1} parent=11 // pred_region
          %s151 = ssub.s32 768, 768
          %152 = vsyncadd [#allocation6], %s151
          %s153 = sshll.u32 [#allocation5], 4
          %s154 = int_to_ptr.vmem [resolvable:$true] %s153
          %159 = dma.hbm_to_vmem [thread:$0]  %s1, 768, %s154, [#allocation6], 64, 64, 4
        $region16: #{tpu_custom_call.1} parent=11 // pred_fallthru
          _
        // Predicated region
        $region17: #{tpu_custom_call.1} parent=11 // pred_check
          %p160 = pneg %p85
        $region18: #{tpu_custom_call.1} parent=11 // pred_check_branch
          %162 = sbr.rel (%p160) target = $region20
        $region19: #{tpu_custom_call.1} parent=11 // pred_region
          _
        $region20: #{tpu_custom_call.1} parent=11 // pred_fallthru
          _
        // Predicated region
        $region21: #{tpu_custom_call.1} parent=11 // pred_check
          %p163 = pneg %p106
        $region22: #{tpu_custom_call.1} parent=11 // pred_check_branch
          %165 = sbr.rel (%p163) target = $region24
        $region23: #{tpu_custom_call.1} parent=11 // pred_region
          _
        $region24: #{tpu_custom_call.1} parent=11 // pred_fallthru
          _
      $region12: #{tpu_custom_call.1} parent=5 // pred_fallthru
        _
      %p166 = scmp.lt.s32.totalorder %s17, 2
      // Predicated region
      $region25: #{tpu_custom_call.1} parent=5 // pred_check
        %p167 = pneg %p166
      $region26: #{tpu_custom_call.1} parent=5 // pred_check_branch
        %169 = sbr.rel (%p167) target = $region28
      $region27: #{tpu_custom_call.1} parent=5 // pred_region
        // Predicated region
        $region29: #{tpu_custom_call.1} parent=27 // pred_check
          %p170 = pneg %p37
        $region30: #{tpu_custom_call.1} parent=27 // pred_check_branch
          %172 = sbr.rel (%p170) target = $region32
        $region31: #{tpu_custom_call.1} parent=27 // pred_region
          %s173 = sand.u32 %s27, 1
          %s174 = scalar_lea.sflag [#allocation3], %s173
          %s175 = sand.u32 %s27, 1
          %s176 = smul.addr %s175, 128
          %s177 = scalar_lea.vmem [#allocation2], %s176
          %s178 = smul.u32 16, %s17
          %s180 = ssub.s32 2048, 2048
          %181 = vsyncadd %s174, %s180
          %s182 = smul.addr %s178, 2
          %s183 = smul.addr %s182, 64
          %s184 = scalar_lea.hbm %s0, %s183
          %s185 = sshll.u32 %s177, 4
          %s186 = int_to_ptr.vmem [resolvable:$true] %s185
          %191 = dma.hbm_to_vmem [thread:$0]  %s184, 2048, %s186, %s174, 64, 64, 4
        $region32: #{tpu_custom_call.1} parent=27 // pred_fallthru
          _
      $region28: #{tpu_custom_call.1} parent=5 // pred_fallthru
        _
      %p192 = scmp.le.s32.totalorder 1, %s17
      %p193 = scmp.lt.s32.totalorder %s17, 3
      %p194 = pnand %p192, %p193
      %p195 = pneg %p194
      // Predicated region
      $region33: #{tpu_custom_call.1} parent=5 // pred_check
        _
      $region34: #{tpu_custom_call.1} parent=5 // pred_check_branch
        %197 = sbr.rel (%p194) target = $region36
      $region35: #{tpu_custom_call.1} parent=5 // pred_region
        %s198 = ssub.s32 %s17, 1
        %s199 = sand.u32 %s30, 1
        %s200 = scalar_lea.sflag [#allocation3], %s199
        %s201 = sand.u32 %s30, 1
        %s202 = smul.addr %s201, 128
        %s203 = scalar_lea.vmem [#allocation2], %s202
        // Predicated region
        $region37: #{tpu_custom_call.1} parent=35 // pred_check
          %p204 = pneg %p43
        $region38: #{tpu_custom_call.1} parent=35 // pred_check_branch
          %206 = sbr.rel (%p204) target = $region40
        $region39: #{tpu_custom_call.1} parent=35 // pred_region
          %207 = dma.done %s200, 2048
        $region40: #{tpu_custom_call.1} parent=35 // pred_fallthru
          _
        // Predicated region
        $region41: #{tpu_custom_call.1} parent=35 // pred_check
          %p208 = pneg %p64
        $region42: #{tpu_custom_call.1} parent=35 // pred_check_branch
          %210 = sbr.rel (%p208) target = $region44
        $region43: #{tpu_custom_call.1} parent=35 // pred_region
          %211 = dma.done [#allocation6], 768
        $region44: #{tpu_custom_call.1} parent=35 // pred_fallthru
          _
        %s212 = sand.u32 %s30, 1
        %s213 = scalar_lea.sflag [#allocation3], %s212
        %s214 = sand.u32 %s30, 1
        %s215 = smul.addr %s214, 128
        %s216 = scalar_lea.vmem [#allocation2], %s215
        %p217 = pneg %p43
        %p218 = pneg %p40
        %p219 = pneg %p64
        %p220 = pneg %p61
        %p221 = pneg %p85
        %p222 = pneg %p82
        %p223 = pneg %p106
        %p224 = pneg %p103
        %p225 = pneg %p132
        %p226 = pneg %p129
        %s227 = sand.u32 %s119, 1
        %s228 = scalar_lea.sflag [#allocation4], %s227
        %s229 = sand.u32 %s119, 1
        %s230 = scalar_lea.vmem [#allocation7], %s229
        %s231 = smul.u32 16, %s22
        %v233 = vld [vmem:[%s203] sm:$0xf]
        %v234 = vld [vmem:[%s203 + $0x4] sm:$0xf]
        %v235 = vld [vmem:[%s203 + $0x8] sm:$0xf]
        %v236 = vld [vmem:[%s203 + $0xc] sm:$0xf]
        %v237 = vld [vmem:[%s203 + $0x10] sm:$0xf]
        %v238 = vld [vmem:[%s203 + $0x14] sm:$0xf]
        %v239 = vld [vmem:[%s203 + $0x18] sm:$0xf]
        %v240 = vld [vmem:[%s203 + $0x1c] sm:$0xf]
        %v241 = vld [vmem:[%s203 + $0x20] sm:$0xf]
        %v242 = vld [vmem:[%s203 + $0x24] sm:$0xf]
        %v243 = vld [vmem:[%s203 + $0x28] sm:$0xf]
        %v244 = vld [vmem:[%s203 + $0x2c] sm:$0xf]
        %v245 = vld [vmem:[%s203 + $0x30] sm:$0xf]
        %v246 = vld [vmem:[%s203 + $0x34] sm:$0xf]
        %v247 = vld [vmem:[%s203 + $0x38] sm:$0xf]
        %v248 = vld [vmem:[%s203 + $0x3c] sm:$0xf]
        %v249 = vld [vmem:[%s203 + $0x40] sm:$0xf]
        %v250 = vld [vmem:[%s203 + $0x44] sm:$0xf]
        %v251 = vld [vmem:[%s203 + $0x48] sm:$0xf]
        %v252 = vld [vmem:[%s203 + $0x4c] sm:$0xf]
        %v253 = vld [vmem:[%s203 + $0x50] sm:$0xf]
        %v254 = vld [vmem:[%s203 + $0x54] sm:$0xf]
        %v255 = vld [vmem:[%s203 + $0x58] sm:$0xf]
        %v256 = vld [vmem:[%s203 + $0x5c] sm:$0xf]
        %v257 = vld [vmem:[%s203 + $0x60] sm:$0xf]
        %v258 = vld [vmem:[%s203 + $0x64] sm:$0xf]
        %v259 = vld [vmem:[%s203 + $0x68] sm:$0xf]
        %v260 = vld [vmem:[%s203 + $0x6c] sm:$0xf]
        %v261 = vld [vmem:[%s203 + $0x70] sm:$0xf]
        %v262 = vld [vmem:[%s203 + $0x74] sm:$0xf]
        %v263 = vld [vmem:[%s203 + $0x78] sm:$0xf]
        %v264 = vld [vmem:[%s203 + $0x7c] sm:$0xf]
        %v265 = vld [vmem:[#allocation5] sm:$0xf]
        %v266 = vld [vmem:[#allocation5 + $0x4] sm:$0xf]
        %v267 = vld [vmem:[#allocation5 + $0x8] sm:$0xf]
        %v268 = vld [vmem:[#allocation5 + $0xc] sm:$0xf]
        %v269 = vld [vmem:[%s2] sm:$0x1]
        %v271 = vlaneseq
        %v272 = vshrl.u32 %v271, 7
        %v273 = vsub.s32 0, %v272
        %v274 = vrot.slane %v269, %v273
        %v308 = vunpack.c.l.b16 %v233
        %v309 = vunpack.c.l.b16 %v234
        %v310 = vunpack.c.l.b16 %v235
        %v311 = vunpack.c.l.b16 %v236
        %v312 = vunpack.c.l.b16 %v237
        %v313 = vunpack.c.l.b16 %v238
        %v314 = vunpack.c.l.b16 %v239
        %v315 = vunpack.c.l.b16 %v240
        %v316 = vunpack.c.l.b16 %v241
        %v317 = vunpack.c.l.b16 %v242
        %v318 = vunpack.c.l.b16 %v243
        %v319 = vunpack.c.l.b16 %v244
        %v320 = vunpack.c.l.b16 %v245
        %v321 = vunpack.c.l.b16 %v246
        %v322 = vunpack.c.l.b16 %v247
        %v323 = vunpack.c.l.b16 %v248
        %v324 = vunpack.c.l.b16 %v249
        %v325 = vunpack.c.l.b16 %v250
        %v326 = vunpack.c.l.b16 %v251
        %v327 = vunpack.c.l.b16 %v252
        %v328 = vunpack.c.l.b16 %v253
        %v329 = vunpack.c.l.b16 %v254
        %v330 = vunpack.c.l.b16 %v255
        %v331 = vunpack.c.l.b16 %v256
        %v332 = vunpack.c.l.b16 %v257
        %v333 = vunpack.c.l.b16 %v258
        %v334 = vunpack.c.l.b16 %v259
        %v335 = vunpack.c.l.b16 %v260
        %v336 = vunpack.c.l.b16 %v261
        %v337 = vunpack.c.l.b16 %v262
        %v338 = vunpack.c.l.b16 %v263
        %v339 = vunpack.c.l.b16 %v264
        %v340 = vpack.c.b16 %v309, %v308
        %v341 = vpack.c.b16 %v311, %v310
        %v342 = vpack.c.b16 %v313, %v312
        %v343 = vpack.c.b16 %v315, %v314
        %v344 = vpack.c.b16 %v317, %v316
        %v345 = vpack.c.b16 %v319, %v318
        %v346 = vpack.c.b16 %v321, %v320
        %v347 = vpack.c.b16 %v323, %v322
        %v348 = vpack.c.b16 %v325, %v324
        %v349 = vpack.c.b16 %v327, %v326
        %v350 = vpack.c.b16 %v329, %v328
        %v351 = vpack.c.b16 %v331, %v330
        %v352 = vpack.c.b16 %v333, %v332
        %v353 = vpack.c.b16 %v335, %v334
        %v354 = vpack.c.b16 %v337, %v336
        %v355 = vpack.c.b16 %v339, %v338
        %v360 = vunpack.c.l.b16 %v265
        %v361 = vunpack.c.l.b16 %v266
        %v362 = vunpack.c.l.b16 %v267
        %v363 = vunpack.c.l.b16 %v268
        %v364 = vpack.c.b16 %v361, %v360
        %v365 = vpack.c.b16 %v363, %v362
        %vm368 = vcmask 261120
        %v370 = vsel %vm368, %v340, 0
        %v373 = vsel %vm368, %v341, 0
        %v376 = vsel %vm368, %v342, 0
        %v379 = vsel %vm368, %v343, 0
        %v382 = vsel %vm368, %v344, 0
        %v385 = vsel %vm368, %v345, 0
        %v388 = vsel %vm368, %v346, 0
        %v391 = vsel %vm368, %v347, 0
        %v394 = vsel %vm368, %v348, 0
        %v397 = vsel %vm368, %v349, 0
        %v400 = vsel %vm368, %v350, 0
        %v403 = vsel %vm368, %v351, 0
        %v406 = vsel %vm368, %v352, 0
        %v409 = vsel %vm368, %v353, 0
        %v412 = vsel %vm368, %v354, 0
        %v415 = vsel %vm368, %v355, 0
        %417 = vmatprep.subr.bf16.mxu0 0
        %418 = vmatpush1.bf16.msra.mxu0 %v364
        %419 = vmatprep.subr.bf16.mxu0 0
        %420 = vmatpush1.bf16.msra.mxu0 %v365
        %421 = vmatprep.subr.bf16.mxu0 0
        %422 = vmatpush1.bf16.msra.mxu0 0
        %423 = vmatprep.subr.bf16.mxu0 0
        %424 = vmatpush1.bf16.msra.mxu0 0
        %425 = vmatprep.subr.bf16.mxu0 0
        %426 = vmatpush1.bf16.msra.mxu0 0
        %427 = vmatprep.subr.bf16.mxu0 0
        %428 = vmatpush1.bf16.msra.mxu0 0
        %429 = vmatprep.subr.bf16.mxu0 0
        %430 = vmatpush1.bf16.msra.mxu0 0
        %431 = vmatprep.subr.bf16.mxu0 0
        %432 = vmatpush1.bf16.msra.mxu0 0
        %433 = vmatprep.subr.bf16.mxu0 0
        %434 = vmatpush1.bf16.msra.mxu0 0
        %435 = vmatprep.subr.bf16.mxu0 0
        %436 = vmatpush1.bf16.msra.mxu0 0
        %437 = vmatprep.subr.bf16.mxu0 0
        %438 = vmatpush1.bf16.msra.mxu0 0
        %439 = vmatprep.subr.bf16.mxu0 0
        %440 = vmatpush1.bf16.msra.mxu0 0
        %441 = vmatprep.subr.bf16.mxu0 0
        %442 = vmatpush1.bf16.msra.mxu0 0
        %443 = vmatprep.subr.bf16.mxu0 0
        %444 = vmatpush1.bf16.msra.mxu0 0
        %445 = vmatprep.subr.bf16.mxu0 0
        %446 = vmatpush1.bf16.msra.mxu0 0
        %447 = vmatprep.subr.bf16.mxu0 0
        %448 = vmatpush1.bf16.msra.mxu0 0
        %449 = vmatprep.mubr.bf16.mxu0 0
        %450 = vmatmul.mubr.bf16.gmra.mrb[0].mxu0 %v370
        %v451 = vpop.f32.mrb[0].mxu0
        %v452 = vadd.f32 %v274, %v451
        %v453 = vpop.f32.mrb[0].mxu0
        %v454 = vpop.f32.mrb[0].mxu0
        %v455 = vadd.f32 %v274, %v454
        %v456 = vpop.f32.mrb[0].mxu0
        %457 = vmatprep.mubr.bf16.mxu0 0
        %458 = vmatmul.mubr.bf16.gmra.mrb[0].mxu0 %v373
        %v459 = vpop.f32.mrb[0].mxu0
        %v460 = vadd.f32 %v274, %v459
        %v461 = vpop.f32.mrb[0].mxu0
        %v462 = vpop.f32.mrb[0].mxu0
        %v463 = vadd.f32 %v274, %v462
        %v464 = vpop.f32.mrb[0].mxu0
        %465 = vmatprep.mubr.bf16.mxu0 0
        %466 = vmatmul.mubr.bf16.gmra.mrb[0].mxu0 %v376
        %v467 = vpop.f32.mrb[0].mxu0
        %v468 = vadd.f32 %v274, %v467
        %v469 = vpop.f32.mrb[0].mxu0
        %v470 = vpop.f32.mrb[0].mxu0
        %v471 = vadd.f32 %v274, %v470
        %v472 = vpop.f32.mrb[0].mxu0
        %473 = vmatprep.mubr.bf16.mxu0 0
        %474 = vmatmul.mubr.bf16.gmra.mrb[0].mxu0 %v379
        %v475 = vpop.f32.mrb[0].mxu0
        %v476 = vadd.f32 %v274, %v475
        %v477 = vpop.f32.mrb[0].mxu0
        %v478 = vpop.f32.mrb[0].mxu0
        %v479 = vadd.f32 %v274, %v478
        %v480 = vpop.f32.mrb[0].mxu0
        %481 = vmatprep.mubr.bf16.mxu0 0
        %482 = vmatmul.mubr.bf16.gmra.mrb[0].mxu0 %v382
        %v483 = vpop.f32.mrb[0].mxu0
        %v484 = vadd.f32 %v274, %v483
        %v485 = vpop.f32.mrb[0].mxu0
        %v486 = vpop.f32.mrb[0].mxu0
        %v487 = vadd.f32 %v274, %v486
        %v488 = vpop.f32.mrb[0].mxu0
        %489 = vmatprep.mubr.bf16.mxu0 0
        %490 = vmatmul.mubr.bf16.gmra.mrb[0].mxu0 %v385
        %v491 = vpop.f32.mrb[0].mxu0
        %v492 = vadd.f32 %v274, %v491
        %v493 = vpop.f32.mrb[0].mxu0
        %v494 = vpop.f32.mrb[0].mxu0
        %v495 = vadd.f32 %v274, %v494
        %v496 = vpop.f32.mrb[0].mxu0
        %497 = vmatprep.mubr.bf16.mxu0 0
        %498 = vmatmul.mubr.bf16.gmra.mrb[0].mxu0 %v388
        %v499 = vpop.f32.mrb[0].mxu0
        %v500 = vadd.f32 %v274, %v499
        %v501 = vpop.f32.mrb[0].mxu0
        %v502 = vpop.f32.mrb[0].mxu0
        %v503 = vadd.f32 %v274, %v502
        %v504 = vpop.f32.mrb[0].mxu0
        %505 = vmatprep.mubr.bf16.mxu0 0
        %506 = vmatmul.mubr.bf16.gmra.mrb[0].mxu0 %v391
        %v507 = vpop.f32.mrb[0].mxu0
        %v508 = vadd.f32 %v274, %v507
        %v509 = vpop.f32.mrb[0].mxu0
        %v510 = vpop.f32.mrb[0].mxu0
        %v511 = vadd.f32 %v274, %v510
        %v512 = vpop.f32.mrb[0].mxu0
        %513 = vmatprep.mubr.bf16.mxu0 0
        %514 = vmatmul.mubr.bf16.gmra.mrb[0].mxu0 %v394
        %v515 = vpop.f32.mrb[0].mxu0
        %v516 = vadd.f32 %v274, %v515
        %v517 = vpop.f32.mrb[0].mxu0
        %v518 = vpop.f32.mrb[0].mxu0
        %v519 = vadd.f32 %v274, %v518
        %v520 = vpop.f32.mrb[0].mxu0
        %521 = vmatprep.mubr.bf16.mxu0 0
        %522 = vmatmul.mubr.bf16.gmra.mrb[0].mxu0 %v397
        %v523 = vpop.f32.mrb[0].mxu0
        %v524 = vadd.f32 %v274, %v523
        %v525 = vpop.f32.mrb[0].mxu0
        %v526 = vpop.f32.mrb[0].mxu0
        %v527 = vadd.f32 %v274, %v526
        %v528 = vpop.f32.mrb[0].mxu0
        %529 = vmatprep.mubr.bf16.mxu0 0
        %530 = vmatmul.mubr.bf16.gmra.mrb[0].mxu0 %v400
        %v531 = vpop.f32.mrb[0].mxu0
        %v532 = vadd.f32 %v274, %v531
        %v533 = vpop.f32.mrb[0].mxu0
        %v534 = vpop.f32.mrb[0].mxu0
        %v535 = vadd.f32 %v274, %v534
        %v536 = vpop.f32.mrb[0].mxu0
        %537 = vmatprep.mubr.bf16.mxu0 0
        %538 = vmatmul.mubr.bf16.gmra.mrb[0].mxu0 %v403
        %v539 = vpop.f32.mrb[0].mxu0
        %v540 = vadd.f32 %v274, %v539
        %v541 = vpop.f32.mrb[0].mxu0
        %v542 = vpop.f32.mrb[0].mxu0
        %v543 = vadd.f32 %v274, %v542
        %v544 = vpop.f32.mrb[0].mxu0
        %545 = vmatprep.mubr.bf16.mxu0 0
        %546 = vmatmul.mubr.bf16.gmra.mrb[0].mxu0 %v406
        %v547 = vpop.f32.mrb[0].mxu0
        %v548 = vadd.f32 %v274, %v547
        %v549 = vpop.f32.mrb[0].mxu0
        %v550 = vpop.f32.mrb[0].mxu0
        %v551 = vadd.f32 %v274, %v550
        %v552 = vpop.f32.mrb[0].mxu0
        %553 = vmatprep.mubr.bf16.mxu0 0
        %554 = vmatmul.mubr.bf16.gmra.mrb[0].mxu0 %v409
        %v555 = vpop.f32.mrb[0].mxu0
        %v556 = vadd.f32 %v274, %v555
        %v557 = vpop.f32.mrb[0].mxu0
        %v558 = vpop.f32.mrb[0].mxu0
        %v559 = vadd.f32 %v274, %v558
        %v560 = vpop.f32.mrb[0].mxu0
        %561 = vmatprep.mubr.bf16.mxu0 0
        %562 = vmatmul.mubr.bf16.gmra.mrb[0].mxu0 %v412
        %v563 = vpop.f32.mrb[0].mxu0
        %v564 = vadd.f32 %v274, %v563
        %v565 = vpop.f32.mrb[0].mxu0
        %v566 = vpop.f32.mrb[0].mxu0
        %v567 = vadd.f32 %v274, %v566
        %v568 = vpop.f32.mrb[0].mxu0
        %569 = vmatprep.mubr.bf16.mxu0 0
        %570 = vmatmul.mubr.bf16.gmra.mrb[0].mxu0 %v415
        %v571 = vpop.f32.mrb[0].mxu0
        %v572 = vadd.f32 %v274, %v571
        %v573 = vpop.f32.mrb[0].mxu0
        %v574 = vpop.f32.mrb[0].mxu0
        %v575 = vadd.f32 %v274, %v574
        %v576 = vpop.f32.mrb[0].mxu0
        %577 = vdwg.mxu0
        %s578 = scalar_lea.vmem [#allocation5], 16
        %v579 = vld [vmem:[%s578] sm:$0xf]
        %v580 = vld [vmem:[%s578 + $0x4] sm:$0xf]
        %v581 = vld [vmem:[%s578 + $0x8] sm:$0xf]
        %v582 = vld [vmem:[%s578 + $0xc] sm:$0xf]
        %s583 = scalar_lea.vmem %s2, 1
        %v584 = vld [vmem:[%s583] sm:$0x1]
        %v586 = vlaneseq
        %v587 = vshrl.u32 %v586, 7
        %v588 = vsub.s32 0, %v587
        %v589 = vrot.slane %v584, %v588
        %v595 = vunpack.c.l.b16 %v579
        %v596 = vunpack.c.l.b16 %v580
        %v597 = vunpack.c.l.b16 %v581
        %v598 = vunpack.c.l.b16 %v582
        %v599 = vpack.c.b16 %v596, %v595
        %v600 = vpack.c.b16 %v598, %v597
        %603 = vmatprep.subr.bf16.mxu0 0
        %604 = vmatpush1.bf16.msra.mxu0 %v599
        %605 = vmatprep.subr.bf16.mxu0 0
        %606 = vmatpush1.bf16.msra.mxu0 %v600
        %607 = vmatprep.subr.bf16.mxu0 0
        %608 = vmatpush1.bf16.msra.mxu0 0
        %609 = vmatprep.subr.bf16.mxu0 0
        %610 = vmatpush1.bf16.msra.mxu0 0
        %611 = vmatprep.subr.bf16.mxu0 0
        %612 = vmatpush1.bf16.msra.mxu0 0
        %613 = vmatprep.subr.bf16.mxu0 0
        %614 = vmatpush1.bf16.msra.mxu0 0
        %615 = vmatprep.subr.bf16.mxu0 0
        %616 = vmatpush1.bf16.msra.mxu0 0
        %617 = vmatprep.subr.bf16.mxu0 0
        %618 = vmatpush1.bf16.msra.mxu0 0
        %619 = vmatprep.subr.bf16.mxu0 0
        %620 = vmatpush1.bf16.msra.mxu0 0
        %621 = vmatprep.subr.bf16.mxu0 0
        %622 = vmatpush1.bf16.msra.mxu0 0
        %623 = vmatprep.subr.bf16.mxu0 0
        %624 = vmatpush1.bf16.msra.mxu0 0
        %625 = vmatprep.subr.bf16.mxu0 0
        %626 = vmatpush1.bf16.msra.mxu0 0
        %627 = vmatprep.subr.bf16.mxu0 0
        %628 = vmatpush1.bf16.msra.mxu0 0
        %629 = vmatprep.subr.bf16.mxu0 0
        %630 = vmatpush1.bf16.msra.mxu0 0
        %631 = vmatprep.subr.bf16.mxu0 0
        %632 = vmatpush1.bf16.msra.mxu0 0
        %633 = vmatprep.subr.bf16.mxu0 0
        %634 = vmatpush1.bf16.msra.mxu0 0
        %635 = vmatprep.mubr.bf16.mxu0 0
        %636 = vmatmul.mubr.bf16.gmra.mrb[0].mxu0 %v370
        %v637 = vpop.f32.mrb[0].mxu0
        %v638 = vadd.f32 %v589, %v637
        %v639 = vpop.f32.mrb[0].mxu0
        %v640 = vpop.f32.mrb[0].mxu0
        %v641 = vadd.f32 %v589, %v640
        %v642 = vpop.f32.mrb[0].mxu0
        %643 = vmatprep.mubr.bf16.mxu0 0
        %644 = vmatmul.mubr.bf16.gmra.mrb[0].mxu0 %v373
        %v645 = vpop.f32.mrb[0].mxu0
        %v646 = vadd.f32 %v589, %v645
        %v647 = vpop.f32.mrb[0].mxu0
        %v648 = vpop.f32.mrb[0].mxu0
        %v649 = vadd.f32 %v589, %v648
        %v650 = vpop.f32.mrb[0].mxu0
        %651 = vmatprep.mubr.bf16.mxu0 0
        %652 = vmatmul.mubr.bf16.gmra.mrb[0].mxu0 %v376
        %v653 = vpop.f32.mrb[0].mxu0
        %v654 = vadd.f32 %v589, %v653
        %v655 = vpop.f32.mrb[0].mxu0
        %v656 = vpop.f32.mrb[0].mxu0
        %v657 = vadd.f32 %v589, %v656
        %v658 = vpop.f32.mrb[0].mxu0
        %659 = vmatprep.mubr.bf16.mxu0 0
        %660 = vmatmul.mubr.bf16.gmra.mrb[0].mxu0 %v379
        %v661 = vpop.f32.mrb[0].mxu0
        %v662 = vadd.f32 %v589, %v661
        %v663 = vpop.f32.mrb[0].mxu0
        %v664 = vpop.f32.mrb[0].mxu0
        %v665 = vadd.f32 %v589, %v664
        %v666 = vpop.f32.mrb[0].mxu0
        %667 = vmatprep.mubr.bf16.mxu0 0
        %668 = vmatmul.mubr.bf16.gmra.mrb[0].mxu0 %v382
        %v669 = vpop.f32.mrb[0].mxu0
        %v670 = vadd.f32 %v589, %v669
        %v671 = vpop.f32.mrb[0].mxu0
        %v672 = vpop.f32.mrb[0].mxu0
        %v673 = vadd.f32 %v589, %v672
        %v674 = vpop.f32.mrb[0].mxu0
        %675 = vmatprep.mubr.bf16.mxu0 0
        %676 = vmatmul.mubr.bf16.gmra.mrb[0].mxu0 %v385
        %v677 = vpop.f32.mrb[0].mxu0
        %v678 = vadd.f32 %v589, %v677
        %v679 = vpop.f32.mrb[0].mxu0
        %v680 = vpop.f32.mrb[0].mxu0
        %v681 = vadd.f32 %v589, %v680
        %v682 = vpop.f32.mrb[0].mxu0
        %683 = vmatprep.mubr.bf16.mxu0 0
        %684 = vmatmul.mubr.bf16.gmra.mrb[0].mxu0 %v388
        %v685 = vpop.f32.mrb[0].mxu0
        %v686 = vadd.f32 %v589, %v685
        %v687 = vpop.f32.mrb[0].mxu0
        %v688 = vpop.f32.mrb[0].mxu0
        %v689 = vadd.f32 %v589, %v688
        %v690 = vpop.f32.mrb[0].mxu0
        %691 = vmatprep.mubr.bf16.mxu0 0
        %692 = vmatmul.mubr.bf16.gmra.mrb[0].mxu0 %v391
        %v693 = vpop.f32.mrb[0].mxu0
        %v694 = vadd.f32 %v589, %v693
        %v695 = vpop.f32.mrb[0].mxu0
        %v696 = vpop.f32.mrb[0].mxu0
        %v697 = vadd.f32 %v589, %v696
        %v698 = vpop.f32.mrb[0].mxu0
        %699 = vmatprep.mubr.bf16.mxu0 0
        %700 = vmatmul.mubr.bf16.gmra.mrb[0].mxu0 %v394
        %v701 = vpop.f32.mrb[0].mxu0
        %v702 = vadd.f32 %v589, %v701
        %v703 = vpop.f32.mrb[0].mxu0
        %v704 = vpop.f32.mrb[0].mxu0
        %v705 = vadd.f32 %v589, %v704
        %v706 = vpop.f32.mrb[0].mxu0
        %707 = vmatprep.mubr.bf16.mxu0 0
        %708 = vmatmul.mubr.bf16.gmra.mrb[0].mxu0 %v397
        %v709 = vpop.f32.mrb[0].mxu0
        %v710 = vadd.f32 %v589, %v709
        %v711 = vpop.f32.mrb[0].mxu0
        %v712 = vpop.f32.mrb[0].mxu0
        %v713 = vadd.f32 %v589, %v712
        %v714 = vpop.f32.mrb[0].mxu0
        %715 = vmatprep.mubr.bf16.mxu0 0
        %716 = vmatmul.mubr.bf16.gmra.mrb[0].mxu0 %v400
        %v717 = vpop.f32.mrb[0].mxu0
        %v718 = vadd.f32 %v589, %v717
        %v719 = vpop.f32.mrb[0].mxu0
        %v720 = vpop.f32.mrb[0].mxu0
        %v721 = vadd.f32 %v589, %v720
        %v722 = vpop.f32.mrb[0].mxu0
        %723 = vmatprep.mubr.bf16.mxu0 0
        %724 = vmatmul.mubr.bf16.gmra.mrb[0].mxu0 %v403
        %v725 = vpop.f32.mrb[0].mxu0
        %v726 = vadd.f32 %v589, %v725
        %v727 = vpop.f32.mrb[0].mxu0
        %v728 = vpop.f32.mrb[0].mxu0
        %v729 = vadd.f32 %v589, %v728
        %v730 = vpop.f32.mrb[0].mxu0
        %731 = vmatprep.mubr.bf16.mxu0 0
        %732 = vmatmul.mubr.bf16.gmra.mrb[0].mxu0 %v406
        %v733 = vpop.f32.mrb[0].mxu0
        %v734 = vadd.f32 %v589, %v733
        %v735 = vpop.f32.mrb[0].mxu0
        %v736 = vpop.f32.mrb[0].mxu0
        %v737 = vadd.f32 %v589, %v736
        %v738 = vpop.f32.mrb[0].mxu0
        %739 = vmatprep.mubr.bf16.mxu0 0
        %740 = vmatmul.mubr.bf16.gmra.mrb[0].mxu0 %v409
        %v741 = vpop.f32.mrb[0].mxu0
        %v742 = vadd.f32 %v589, %v741
        %v743 = vpop.f32.mrb[0].mxu0
        %v744 = vpop.f32.mrb[0].mxu0
        %v745 = vadd.f32 %v589, %v744
        %v746 = vpop.f32.mrb[0].mxu0
        %747 = vmatprep.mubr.bf16.mxu0 0
        %748 = vmatmul.mubr.bf16.gmra.mrb[0].mxu0 %v412
        %v749 = vpop.f32.mrb[0].mxu0
        %v750 = vadd.f32 %v589, %v749
        %v751 = vpop.f32.mrb[0].mxu0
        %v752 = vpop.f32.mrb[0].mxu0
        %v753 = vadd.f32 %v589, %v752
        %v754 = vpop.f32.mrb[0].mxu0
        %755 = vmatprep.mubr.bf16.mxu0 0
        %756 = vmatmul.mubr.bf16.gmra.mrb[0].mxu0 %v415
        %v757 = vpop.f32.mrb[0].mxu0
        %v758 = vadd.f32 %v589, %v757
        %v759 = vpop.f32.mrb[0].mxu0
        %v760 = vpop.f32.mrb[0].mxu0
        %v761 = vadd.f32 %v589, %v760
        %v762 = vpop.f32.mrb[0].mxu0
        %763 = vdwg.mxu0
        %s764 = scalar_lea.vmem [#allocation5], 32
        %v765 = vld [vmem:[%s764] sm:$0xf]
        %v766 = vld [vmem:[%s764 + $0x4] sm:$0xf]
        %v767 = vld [vmem:[%s764 + $0x8] sm:$0xf]
        %v768 = vld [vmem:[%s764 + $0xc] sm:$0xf]
        %s769 = scalar_lea.vmem %s2, 2
        %v770 = vld [vmem:[%s769] sm:$0x1]
        %v772 = vlaneseq
        %v773 = vshrl.u32 %v772, 7
        %v774 = vsub.s32 0, %v773
        %v775 = vrot.slane %v770, %v774
        %v781 = vunpack.c.l.b16 %v765
        %v782 = vunpack.c.l.b16 %v766
        %v783 = vunpack.c.l.b16 %v767
        %v784 = vunpack.c.l.b16 %v768
        %v785 = vpack.c.b16 %v782, %v781
        %v786 = vpack.c.b16 %v784, %v783
        %789 = vmatprep.subr.bf16.mxu0 0
        %790 = vmatpush1.bf16.msra.mxu0 %v785
        %791 = vmatprep.subr.bf16.mxu0 0
        %792 = vmatpush1.bf16.msra.mxu0 %v786
        %793 = vmatprep.subr.bf16.mxu0 0
        %794 = vmatpush1.bf16.msra.mxu0 0
        %795 = vmatprep.subr.bf16.mxu0 0
        %796 = vmatpush1.bf16.msra.mxu0 0
        %797 = vmatprep.subr.bf16.mxu0 0
        %798 = vmatpush1.bf16.msra.mxu0 0
        %799 = vmatprep.subr.bf16.mxu0 0
        %800 = vmatpush1.bf16.msra.mxu0 0
        %801 = vmatprep.subr.bf16.mxu0 0
        %802 = vmatpush1.bf16.msra.mxu0 0
        %803 = vmatprep.subr.bf16.mxu0 0
        %804 = vmatpush1.bf16.msra.mxu0 0
        %805 = vmatprep.subr.bf16.mxu0 0
        %806 = vmatpush1.bf16.msra.mxu0 0
        %807 = vmatprep.subr.bf16.mxu0 0
        %808 = vmatpush1.bf16.msra.mxu0 0
        %809 = vmatprep.subr.bf16.mxu0 0
        %810 = vmatpush1.bf16.msra.mxu0 0
        %811 = vmatprep.subr.bf16.mxu0 0
        %812 = vmatpush1.bf16.msra.mxu0 0
        %813 = vmatprep.subr.bf16.mxu0 0
        %814 = vmatpush1.bf16.msra.mxu0 0
        %815 = vmatprep.subr.bf16.mxu0 0
        %816 = vmatpush1.bf16.msra.mxu0 0
        %817 = vmatprep.subr.bf16.mxu0 0
        %818 = vmatpush1.bf16.msra.mxu0 0
        %819 = vmatprep.subr.bf16.mxu0 0
        %820 = vmatpush1.bf16.msra.mxu0 0
        %821 = vmatprep.mubr.bf16.mxu0 0
        %822 = vmatmul.mubr.bf16.gmra.mrb[0].mxu0 %v370
        %v823 = vpop.f32.mrb[0].mxu0
        %v824 = vadd.f32 %v775, %v823
        %v825 = vpop.f32.mrb[0].mxu0
        %v826 = vpop.f32.mrb[0].mxu0
        %v827 = vadd.f32 %v775, %v826
        %v828 = vpop.f32.mrb[0].mxu0
        %829 = vmatprep.mubr.bf16.mxu0 0
        %830 = vmatmul.mubr.bf16.gmra.mrb[0].mxu0 %v373
        %v831 = vpop.f32.mrb[0].mxu0
        %v832 = vadd.f32 %v775, %v831
        %v833 = vpop.f32.mrb[0].mxu0
        %v834 = vpop.f32.mrb[0].mxu0
        %v835 = vadd.f32 %v775, %v834
        %v836 = vpop.f32.mrb[0].mxu0
        %837 = vmatprep.mubr.bf16.mxu0 0
        %838 = vmatmul.mubr.bf16.gmra.mrb[0].mxu0 %v376
        %v839 = vpop.f32.mrb[0].mxu0
        %v840 = vadd.f32 %v775, %v839
        %v841 = vpop.f32.mrb[0].mxu0
        %v842 = vpop.f32.mrb[0].mxu0
        %v843 = vadd.f32 %v775, %v842
        %v844 = vpop.f32.mrb[0].mxu0
        %845 = vmatprep.mubr.bf16.mxu0 0
        %846 = vmatmul.mubr.bf16.gmra.mrb[0].mxu0 %v379
        %v847 = vpop.f32.mrb[0].mxu0
        %v848 = vadd.f32 %v775, %v847
        %v849 = vpop.f32.mrb[0].mxu0
        %v850 = vpop.f32.mrb[0].mxu0
        %v851 = vadd.f32 %v775, %v850
        %v852 = vpop.f32.mrb[0].mxu0
        %853 = vmatprep.mubr.bf16.mxu0 0
        %854 = vmatmul.mubr.bf16.gmra.mrb[0].mxu0 %v382
        %v855 = vpop.f32.mrb[0].mxu0
        %v856 = vadd.f32 %v775, %v855
        %v857 = vpop.f32.mrb[0].mxu0
        %v858 = vpop.f32.mrb[0].mxu0
        %v859 = vadd.f32 %v775, %v858
        %v860 = vpop.f32.mrb[0].mxu0
        %861 = vmatprep.mubr.bf16.mxu0 0
        %862 = vmatmul.mubr.bf16.gmra.mrb[0].mxu0 %v385
        %v863 = vpop.f32.mrb[0].mxu0
        %v864 = vadd.f32 %v775, %v863
        %v865 = vpop.f32.mrb[0].mxu0
        %v866 = vpop.f32.mrb[0].mxu0
        %v867 = vadd.f32 %v775, %v866
        %v868 = vpop.f32.mrb[0].mxu0
        %869 = vmatprep.mubr.bf16.mxu0 0
        %870 = vmatmul.mubr.bf16.gmra.mrb[0].mxu0 %v388
        %v871 = vpop.f32.mrb[0].mxu0
        %v872 = vadd.f32 %v775, %v871
        %v873 = vpop.f32.mrb[0].mxu0
        %v874 = vpop.f32.mrb[0].mxu0
        %v875 = vadd.f32 %v775, %v874
        %v876 = vpop.f32.mrb[0].mxu0
        %877 = vmatprep.mubr.bf16.mxu0 0
        %878 = vmatmul.mubr.bf16.gmra.mrb[0].mxu0 %v391
        %v879 = vpop.f32.mrb[0].mxu0
        %v880 = vadd.f32 %v775, %v879
        %v881 = vpop.f32.mrb[0].mxu0
        %v882 = vpop.f32.mrb[0].mxu0
        %v883 = vadd.f32 %v775, %v882
        %v884 = vpop.f32.mrb[0].mxu0
        %885 = vmatprep.mubr.bf16.mxu0 0
        %886 = vmatmul.mubr.bf16.gmra.mrb[0].mxu0 %v394
        %v887 = vpop.f32.mrb[0].mxu0
        %v888 = vadd.f32 %v775, %v887
        %v889 = vpop.f32.mrb[0].mxu0
        %v890 = vpop.f32.mrb[0].mxu0
        %v891 = vadd.f32 %v775, %v890
        %v892 = vpop.f32.mrb[0].mxu0
        %893 = vmatprep.mubr.bf16.mxu0 0
        %894 = vmatmul.mubr.bf16.gmra.mrb[0].mxu0 %v397
        %v895 = vpop.f32.mrb[0].mxu0
        %v896 = vadd.f32 %v775, %v895
        %v897 = vpop.f32.mrb[0].mxu0
        %v898 = vpop.f32.mrb[0].mxu0
        %v899 = vadd.f32 %v775, %v898
        %v900 = vpop.f32.mrb[0].mxu0
        %901 = vmatprep.mubr.bf16.mxu0 0
        %902 = vmatmul.mubr.bf16.gmra.mrb[0].mxu0 %v400
        %v903 = vpop.f32.mrb[0].mxu0
        %v904 = vadd.f32 %v775, %v903
        %v905 = vpop.f32.mrb[0].mxu0
        %v906 = vpop.f32.mrb[0].mxu0
        %v907 = vadd.f32 %v775, %v906
        %v908 = vpop.f32.mrb[0].mxu0
        %909 = vmatprep.mubr.bf16.mxu0 0
        %910 = vmatmul.mubr.bf16.gmra.mrb[0].mxu0 %v403
        %v911 = vpop.f32.mrb[0].mxu0
        %v912 = vadd.f32 %v775, %v911
        %v913 = vpop.f32.mrb[0].mxu0
        %v914 = vpop.f32.mrb[0].mxu0
        %v915 = vadd.f32 %v775, %v914
        %v916 = vpop.f32.mrb[0].mxu0
        %917 = vmatprep.mubr.bf16.mxu0 0
        %918 = vmatmul.mubr.bf16.gmra.mrb[0].mxu0 %v406
        %v919 = vpop.f32.mrb[0].mxu0
        %v920 = vadd.f32 %v775, %v919
        %v921 = vpop.f32.mrb[0].mxu0
        %v922 = vpop.f32.mrb[0].mxu0
        %v923 = vadd.f32 %v775, %v922
        %v924 = vpop.f32.mrb[0].mxu0
        %925 = vmatprep.mubr.bf16.mxu0 0
        %926 = vmatmul.mubr.bf16.gmra.mrb[0].mxu0 %v409
        %v927 = vpop.f32.mrb[0].mxu0
        %v928 = vadd.f32 %v775, %v927
        %v929 = vpop.f32.mrb[0].mxu0
        %v930 = vpop.f32.mrb[0].mxu0
        %v931 = vadd.f32 %v775, %v930
        %v932 = vpop.f32.mrb[0].mxu0
        %933 = vmatprep.mubr.bf16.mxu0 0
        %934 = vmatmul.mubr.bf16.gmra.mrb[0].mxu0 %v412
        %v935 = vpop.f32.mrb[0].mxu0
        %v936 = vadd.f32 %v775, %v935
        %v937 = vpop.f32.mrb[0].mxu0
        %v938 = vpop.f32.mrb[0].mxu0
        %v939 = vadd.f32 %v775, %v938
        %v940 = vpop.f32.mrb[0].mxu0
        %941 = vmatprep.mubr.bf16.mxu0 0
        %942 = vmatmul.mubr.bf16.gmra.mrb[0].mxu0 %v415
        %v943 = vpop.f32.mrb[0].mxu0
        %v944 = vadd.f32 %v775, %v943
        %v945 = vpop.f32.mrb[0].mxu0
        %v946 = vpop.f32.mrb[0].mxu0
        %v947 = vadd.f32 %v775, %v946
        %v948 = vpop.f32.mrb[0].mxu0
        %949 = vdwg.mxu0
        %v950 = vld [vmem:[%s3] sm:$0x1]
        %v951 = vpack.c.bf16 %v455, %v452
        %v952 = vpack.c.bf16 %v463, %v460
        %v953 = vpack.c.bf16 %v471, %v468
        %v954 = vpack.c.bf16 %v479, %v476
        %v955 = vpack.c.bf16 %v487, %v484
        %v956 = vpack.c.bf16 %v495, %v492
        %v957 = vpack.c.bf16 %v503, %v500
        %v958 = vpack.c.bf16 %v511, %v508
        %v959 = vpack.c.bf16 %v519, %v516
        %v960 = vpack.c.bf16 %v527, %v524
        %v961 = vpack.c.bf16 %v535, %v532
        %v962 = vpack.c.bf16 %v543, %v540
        %v963 = vpack.c.bf16 %v551, %v548
        %v964 = vpack.c.bf16 %v559, %v556
        %v965 = vpack.c.bf16 %v567, %v564
        %v966 = vpack.c.bf16 %v575, %v572
        %v967 = vpack.c.bf16 %v641, %v638
        %v968 = vpack.c.bf16 %v649, %v646
        %v969 = vpack.c.bf16 %v657, %v654
        %v970 = vpack.c.bf16 %v665, %v662
        %v971 = vpack.c.bf16 %v673, %v670
        %v972 = vpack.c.bf16 %v681, %v678
        %v973 = vpack.c.bf16 %v689, %v686
        %v974 = vpack.c.bf16 %v697, %v694
        %v975 = vpack.c.bf16 %v705, %v702
        %v976 = vpack.c.bf16 %v713, %v710
        %v977 = vpack.c.bf16 %v721, %v718
        %v978 = vpack.c.bf16 %v729, %v726
        %v979 = vpack.c.bf16 %v737, %v734
        %v980 = vpack.c.bf16 %v745, %v742
        %v981 = vpack.c.bf16 %v753, %v750
        %v982 = vpack.c.bf16 %v761, %v758
        %vm983 = vcmask 64512
        %v985 = vsel %vm983, %v951, 0
        %v988 = vsel %vm983, %v967, 0
        %990 = vmatprep.subr.bf16.mxu0 0
        %991 = vmatpush1.bf16.xpose.msra.mxu0 %v988
        %992 = vmatprep.subr.bf16.mxu0 0
        %993 = vmatpush1.bf16.xpose.msra.mxu0 0
        %994 = vmatprep.subr.bf16.mxu0 0
        %995 = vmatpush1.bf16.xpose.msra.mxu0 0
        %996 = vmatprep.subr.bf16.mxu0 0
        %997 = vmatpush1.bf16.xpose.msra.mxu0 0
        %998 = vmatprep.subr.bf16.mxu0 0
        %999 = vmatpush1.bf16.xpose.msra.mxu0 0
        %1000 = vmatprep.subr.bf16.mxu0 0
        %1001 = vmatpush1.bf16.xpose.msra.mxu0 0
        %1002 = vmatprep.subr.bf16.mxu0 0
        %1003 = vmatpush1.bf16.xpose.msra.mxu0 0
        %1004 = vmatprep.subr.bf16.mxu0 0
        %1005 = vmatpush1.bf16.xpose.msra.mxu0 0
        %1006 = vmatprep.subr.bf16.mxu0 0
        %1007 = vmatpush1.bf16.xpose.msra.mxu0 0
        %1008 = vmatprep.subr.bf16.mxu0 0
        %1009 = vmatpush1.bf16.xpose.msra.mxu0 0
        %1010 = vmatprep.subr.bf16.mxu0 0
        %1011 = vmatpush1.bf16.xpose.msra.mxu0 0
        %1012 = vmatprep.subr.bf16.mxu0 0
        %1013 = vmatpush1.bf16.xpose.msra.mxu0 0
        %1014 = vmatprep.subr.bf16.mxu0 0
        %1015 = vmatpush1.bf16.xpose.msra.mxu0 0
        %1016 = vmatprep.subr.bf16.mxu0 0
        %1017 = vmatpush1.bf16.xpose.msra.mxu0 0
        %1018 = vmatprep.subr.bf16.mxu0 0
        %1019 = vmatpush1.bf16.xpose.msra.mxu0 0
        %1020 = vmatprep.subr.bf16.mxu0 0
        %1021 = vmatpush1.bf16.xpose.msra.mxu0 0
        %1022 = vmatprep.mubr.bf16.mxu0 0
        %1023 = vmatmul.mubr.bf16.gmra.mrb[0].mxu0 %v985
        %v1024 = vpop.f32.mrb[0].mxu0
        %v1025 = vadd.f32 0.0, %v1024
        %v1026 = vpop.f32.mrb[0].mxu0
        %v1027 = vpop.f32.mrb[0].mxu0
        %v1028 = vadd.f32 0.0, %v1027
        %v1029 = vpop.f32.mrb[0].mxu0
        %1030 = vdwg.mxu0
        %v1032 = vsel %vm983, %v952, 0
        %v1035 = vsel %vm983, %v968, 0
        %1037 = vmatprep.subr.bf16.mxu0 0
        %1038 = vmatpush1.bf16.xpose.msra.mxu0 %v1035
        %1039 = vmatprep.subr.bf16.mxu0 0
        %1040 = vmatpush1.bf16.xpose.msra.mxu0 0
        %1041 = vmatprep.subr.bf16.mxu0 0
        %1042 = vmatpush1.bf16.xpose.msra.mxu0 0
        %1043 = vmatprep.subr.bf16.mxu0 0
        %1044 = vmatpush1.bf16.xpose.msra.mxu0 0
        %1045 = vmatprep.subr.bf16.mxu0 0
        %1046 = vmatpush1.bf16.xpose.msra.mxu0 0
        %1047 = vmatprep.subr.bf16.mxu0 0
        %1048 = vmatpush1.bf16.xpose.msra.mxu0 0
        %1049 = vmatprep.subr.bf16.mxu0 0
        %1050 = vmatpush1.bf16.xpose.msra.mxu0 0
        %1051 = vmatprep.subr.bf16.mxu0 0
        %1052 = vmatpush1.bf16.xpose.msra.mxu0 0
        %1053 = vmatprep.subr.bf16.mxu0 0
        %1054 = vmatpush1.bf16.xpose.msra.mxu0 0
        %1055 = vmatprep.subr.bf16.mxu0 0
        %1056 = vmatpush1.bf16.xpose.msra.mxu0 0
        %1057 = vmatprep.subr.bf16.mxu0 0
        %1058 = vmatpush1.bf16.xpose.msra.mxu0 0
        %1059 = vmatprep.subr.bf16.mxu0 0
        %1060 = vmatpush1.bf16.xpose.msra.mxu0 0
        %1061 = vmatprep.subr.bf16.mxu0 0
        %1062 = vmatpush1.bf16.xpose.msra.mxu0 0
        %1063 = vmatprep.subr.bf16.mxu0 0
        %1064 = vmatpush1.bf16.xpose.msra.mxu0 0
        %1065 = vmatprep.subr.bf16.mxu0 0
        %1066 = vmatpush1.bf16.xpose.msra.mxu0 0
        %1067 = vmatprep.subr.bf16.mxu0 0
        %1068 = vmatpush1.bf16.xpose.msra.mxu0 0
        %1069 = vmatprep.mubr.bf16.mxu0 0
        %1070 = vmatmul.mubr.bf16.gmra.mrb[0].mxu0 %v1032
        %v1071 = vpop.f32.mrb[0].mxu0
        %v1072 = vadd.f32 0.0, %v1071
        %v1073 = vpop.f32.mrb[0].mxu0
        %v1074 = vpop.f32.mrb[0].mxu0
        %v1075 = vadd.f32 0.0, %v1074
        %v1076 = vpop.f32.mrb[0].mxu0
        %1077 = vdwg.mxu0
        %v1079 = vsel %vm983, %v953, 0
        %v1082 = vsel %vm983, %v969, 0
        %1084 = vmatprep.subr.bf16.mxu0 0
        %1085 = vmatpush1.bf16.xpose.msra.mxu0 %v1082
        %1086 = vmatprep.subr.bf16.mxu0 0
        %1087 = vmatpush1.bf16.xpose.msra.mxu0 0
        %1088 = vmatprep.subr.bf16.mxu0 0
        %1089 = vmatpush1.bf16.xpose.msra.mxu0 0
        %1090 = vmatprep.subr.bf16.mxu0 0
        %1091 = vmatpush1.bf16.xpose.msra.mxu0 0
        %1092 = vmatprep.subr.bf16.mxu0 0
        %1093 = vmatpush1.bf16.xpose.msra.mxu0 0
        %1094 = vmatprep.subr.bf16.mxu0 0
        %1095 = vmatpush1.bf16.xpose.msra.mxu0 0
        %1096 = vmatprep.subr.bf16.mxu0 0
        %1097 = vmatpush1.bf16.xpose.msra.mxu0 0
        %1098 = vmatprep.subr.bf16.mxu0 0
        %1099 = vmatpush1.bf16.xpose.msra.mxu0 0
        %1100 = vmatprep.subr.bf16.mxu0 0
        %1101 = vmatpush1.bf16.xpose.msra.mxu0 0
        %1102 = vmatprep.subr.bf16.mxu0 0
        %1103 = vmatpush1.bf16.xpose.msra.mxu0 0
        %1104 = vmatprep.subr.bf16.mxu0 0
        %1105 = vmatpush1.bf16.xpose.msra.mxu0 0
        %1106 = vmatprep.subr.bf16.mxu0 0
        %1107 = vmatpush1.bf16.xpose.msra.mxu0 0
        %1108 = vmatprep.subr.bf16.mxu0 0
        %1109 = vmatpush1.bf16.xpose.msra.mxu0 0
        %1110 = vmatprep.subr.bf16.mxu0 0
        %1111 = vmatpush1.bf16.xpose.msra.mxu0 0
        %1112 = vmatprep.subr.bf16.mxu0 0
        %1113 = vmatpush1.bf16.xpose.msra.mxu0 0
        %1114 = vmatprep.subr.bf16.mxu0 0
        %1115 = vmatpush1.bf16.xpose.msra.mxu0 0
        %1116 = vmatprep.mubr.bf16.mxu0 0
        %1117 = vmatmul.mubr.bf16.gmra.mrb[0].mxu0 %v1079
        %v1118 = vpop.f32.mrb[0].mxu0
        %v1119 = vadd.f32 0.0, %v1118
        %v1120 = vpop.f32.mrb[0].mxu0
        %v1121 = vpop.f32.mrb[0].mxu0
        %v1122 = vadd.f32 0.0, %v1121
        %v1123 = vpop.f32.mrb[0].mxu0
        %1124 = vdwg.mxu0
        %v1126 = vsel %vm983, %v954, 0
        %v1129 = vsel %vm983, %v970, 0
        %1131 = vmatprep.subr.bf16.mxu0 0
        %1132 = vmatpush1.bf16.xpose.msra.mxu0 %v1129
        %1133 = vmatprep.subr.bf16.mxu0 0
        %1134 = vmatpush1.bf16.xpose.msra.mxu0 0
        %1135 = vmatprep.subr.bf16.mxu0 0
        %1136 = vmatpush1.bf16.xpose.msra.mxu0 0
        %1137 = vmatprep.subr.bf16.mxu0 0
        %1138 = vmatpush1.bf16.xpose.msra.mxu0 0
        %1139 = vmatprep.subr.bf16.mxu0 0
        %1140 = vmatpush1.bf16.xpose.msra.mxu0 0
        %1141 = vmatprep.subr.bf16.mxu0 0
        %1142 = vmatpush1.bf16.xpose.msra.mxu0 0
        %1143 = vmatprep.subr.bf16.mxu0 0
        %1144 = vmatpush1.bf16.xpose.msra.mxu0 0
        %1145 = vmatprep.subr.bf16.mxu0 0
        %1146 = vmatpush1.bf16.xpose.msra.mxu0 0
        %1147 = vmatprep.subr.bf16.mxu0 0
        %1148 = vmatpush1.bf16.xpose.msra.mxu0 0
        %1149 = vmatprep.subr.bf16.mxu0 0
        %1150 = vmatpush1.bf16.xpose.msra.mxu0 0
        %1151 = vmatprep.subr.bf16.mxu0 0
        %1152 = vmatpush1.bf16.xpose.msra.mxu0 0
        %1153 = vmatprep.subr.bf16.mxu0 0
        %1154 = vmatpush1.bf16.xpose.msra.mxu0 0
        %1155 = vmatprep.subr.bf16.mxu0 0
        %1156 = vmatpush1.bf16.xpose.msra.mxu0 0
        %1157 = vmatprep.subr.bf16.mxu0 0
        %1158 = vmatpush1.bf16.xpose.msra.mxu0 0
        %1159 = vmatprep.subr.bf16.mxu0 0
        %1160 = vmatpush1.bf16.xpose.msra.mxu0 0
        %1161 = vmatprep.subr.bf16.mxu0 0
        %1162 = vmatpush1.bf16.xpose.msra.mxu0 0
        %1163 = vmatprep.mubr.bf16.mxu0 0
        %1164 = vmatmul.mubr.bf16.gmra.mrb[0].mxu0 %v1126
        %v1165 = vpop.f32.mrb[0].mxu0
        %v1166 = vadd.f32 0.0, %v1165
        %v1167 = vpop.f32.mrb[0].mxu0
        %v1168 = vpop.f32.mrb[0].mxu0
        %v1169 = vadd.f32 0.0, %v1168
        %v1170 = vpop.f32.mrb[0].mxu0
        %1171 = vdwg.mxu0
        %v1173 = vsel %vm983, %v955, 0
        %v1176 = vsel %vm983, %v971, 0
        %1178 = vmatprep.subr.bf16.mxu0 0
        %1179 = vmatpush1.bf16.xpose.msra.mxu0 %v1176
        %1180 = vmatprep.subr.bf16.mxu0 0
        %1181 = vmatpush1.bf16.xpose.msra.mxu0 0
        %1182 = vmatprep.subr.bf16.mxu0 0
        %1183 = vmatpush1.bf16.xpose.msra.mxu0 0
        %1184 = vmatprep.subr.bf16.mxu0 0
        %1185 = vmatpush1.bf16.xpose.msra.mxu0 0
        %1186 = vmatprep.subr.bf16.mxu0 0
        %1187 = vmatpush1.bf16.xpose.msra.mxu0 0
        %1188 = vmatprep.subr.bf16.mxu0 0
        %1189 = vmatpush1.bf16.xpose.msra.mxu0 0
        %1190 = vmatprep.subr.bf16.mxu0 0
        %1191 = vmatpush1.bf16.xpose.msra.mxu0 0
        %1192 = vmatprep.subr.bf16.mxu0 0
        %1193 = vmatpush1.bf16.xpose.msra.mxu0 0
        %1194 = vmatprep.subr.bf16.mxu0 0
        %1195 = vmatpush1.bf16.xpose.msra.mxu0 0
        %1196 = vmatprep.subr.bf16.mxu0 0
        %1197 = vmatpush1.bf16.xpose.msra.mxu0 0
        %1198 = vmatprep.subr.bf16.mxu0 0
        %1199 = vmatpush1.bf16.xpose.msra.mxu0 0
        %1200 = vmatprep.subr.bf16.mxu0 0
        %1201 = vmatpush1.bf16.xpose.msra.mxu0 0
        %1202 = vmatprep.subr.bf16.mxu0 0
        %1203 = vmatpush1.bf16.xpose.msra.mxu0 0
        %1204 = vmatprep.subr.bf16.mxu0 0
        %1205 = vmatpush1.bf16.xpose.msra.mxu0 0
        %1206 = vmatprep.subr.bf16.mxu0 0
        %1207 = vmatpush1.bf16.xpose.msra.mxu0 0
        %1208 = vmatprep.subr.bf16.mxu0 0
        %1209 = vmatpush1.bf16.xpose.msra.mxu0 0
        %1210 = vmatprep.mubr.bf16.mxu0 0
        %1211 = vmatmul.mubr.bf16.gmra.mrb[0].mxu0 %v1173
        %v1212 = vpop.f32.mrb[0].mxu0
        %v1213 = vadd.f32 0.0, %v1212
        %v1214 = vpop.f32.mrb[0].mxu0
        %v1215 = vpop.f32.mrb[0].mxu0
        %v1216 = vadd.f32 0.0, %v1215
        %v1217 = vpop.f32.mrb[0].mxu0
        %1218 = vdwg.mxu0
        %v1220 = vsel %vm983, %v956, 0
        %v1223 = vsel %vm983, %v972, 0
        %1225 = vmatprep.subr.bf16.mxu0 0
        %1226 = vmatpush1.bf16.xpose.msra.mxu0 %v1223
        %1227 = vmatprep.subr.bf16.mxu0 0
        %1228 = vmatpush1.bf16.xpose.msra.mxu0 0
        %1229 = vmatprep.subr.bf16.mxu0 0
        %1230 = vmatpush1.bf16.xpose.msra.mxu0 0
        %1231 = vmatprep.subr.bf16.mxu0 0
        %1232 = vmatpush1.bf16.xpose.msra.mxu0 0
        %1233 = vmatprep.subr.bf16.mxu0 0
        %1234 = vmatpush1.bf16.xpose.msra.mxu0 0
        %1235 = vmatprep.subr.bf16.mxu0 0
        %1236 = vmatpush1.bf16.xpose.msra.mxu0 0
        %1237 = vmatprep.subr.bf16.mxu0 0
        %1238 = vmatpush1.bf16.xpose.msra.mxu0 0
        %1239 = vmatprep.subr.bf16.mxu0 0
        %1240 = vmatpush1.bf16.xpose.msra.mxu0 0
        %1241 = vmatprep.subr.bf16.mxu0 0
        %1242 = vmatpush1.bf16.xpose.msra.mxu0 0
        %1243 = vmatprep.subr.bf16.mxu0 0
        %1244 = vmatpush1.bf16.xpose.msra.mxu0 0
        %1245 = vmatprep.subr.bf16.mxu0 0
        %1246 = vmatpush1.bf16.xpose.msra.mxu0 0
        %1247 = vmatprep.subr.bf16.mxu0 0
        %1248 = vmatpush1.bf16.xpose.msra.mxu0 0
        %1249 = vmatprep.subr.bf16.mxu0 0
        %1250 = vmatpush1.bf16.xpose.msra.mxu0 0
        %1251 = vmatprep.subr.bf16.mxu0 0
        %1252 = vmatpush1.bf16.xpose.msra.mxu0 0
        %1253 = vmatprep.subr.bf16.mxu0 0
        %1254 = vmatpush1.bf16.xpose.msra.mxu0 0
        %1255 = vmatprep.subr.bf16.mxu0 0
        %1256 = vmatpush1.bf16.xpose.msra.mxu0 0
        %1257 = vmatprep.mubr.bf16.mxu0 0
        %1258 = vmatmul.mubr.bf16.gmra.mrb[0].mxu0 %v1220
        %v1259 = vpop.f32.mrb[0].mxu0
        %v1260 = vadd.f32 0.0, %v1259
        %v1261 = vpop.f32.mrb[0].mxu0
        %v1262 = vpop.f32.mrb[0].mxu0
        %v1263 = vadd.f32 0.0, %v1262
        %v1264 = vpop.f32.mrb[0].mxu0
        %1265 = vdwg.mxu0
        %v1267 = vsel %vm983, %v957, 0
        %v1270 = vsel %vm983, %v973, 0
        %1272 = vmatprep.subr.bf16.mxu0 0
        %1273 = vmatpush1.bf16.xpose.msra.mxu0 %v1270
        %1274 = vmatprep.subr.bf16.mxu0 0
        %1275 = vmatpush1.bf16.xpose.msra.mxu0 0
        %1276 = vmatprep.subr.bf16.mxu0 0
        %1277 = vmatpush1.bf16.xpose.msra.mxu0 0
        %1278 = vmatprep.subr.bf16.mxu0 0
        %1279 = vmatpush1.bf16.xpose.msra.mxu0 0
        %1280 = vmatprep.subr.bf16.mxu0 0
        %1281 = vmatpush1.bf16.xpose.msra.mxu0 0
        %1282 = vmatprep.subr.bf16.mxu0 0
        %1283 = vmatpush1.bf16.xpose.msra.mxu0 0
        %1284 = vmatprep.subr.bf16.mxu0 0
        %1285 = vmatpush1.bf16.xpose.msra.mxu0 0
        %1286 = vmatprep.subr.bf16.mxu0 0
        %1287 = vmatpush1.bf16.xpose.msra.mxu0 0
        %1288 = vmatprep.subr.bf16.mxu0 0
        %1289 = vmatpush1.bf16.xpose.msra.mxu0 0
        %1290 = vmatprep.subr.bf16.mxu0 0
        %1291 = vmatpush1.bf16.xpose.msra.mxu0 0
        %1292 = vmatprep.subr.bf16.mxu0 0
        %1293 = vmatpush1.bf16.xpose.msra.mxu0 0
        %1294 = vmatprep.subr.bf16.mxu0 0
        %1295 = vmatpush1.bf16.xpose.msra.mxu0 0
        %1296 = vmatprep.subr.bf16.mxu0 0
        %1297 = vmatpush1.bf16.xpose.msra.mxu0 0
        %1298 = vmatprep.subr.bf16.mxu0 0
        %1299 = vmatpush1.bf16.xpose.msra.mxu0 0
        %1300 = vmatprep.subr.bf16.mxu0 0
        %1301 = vmatpush1.bf16.xpose.msra.mxu0 0
        %1302 = vmatprep.subr.bf16.mxu0 0
        %1303 = vmatpush1.bf16.xpose.msra.mxu0 0
        %1304 = vmatprep.mubr.bf16.mxu0 0
        %1305 = vmatmul.mubr.bf16.gmra.mrb[0].mxu0 %v1267
        %v1306 = vpop.f32.mrb[0].mxu0
        %v1307 = vadd.f32 0.0, %v1306
        %v1308 = vpop.f32.mrb[0].mxu0
        %v1309 = vpop.f32.mrb[0].mxu0
        %v1310 = vadd.f32 0.0, %v1309
        %v1311 = vpop.f32.mrb[0].mxu0
        %1312 = vdwg.mxu0
        %v1314 = vsel %vm983, %v958, 0
        %v1317 = vsel %vm983, %v974, 0
        %1319 = vmatprep.subr.bf16.mxu0 0
        %1320 = vmatpush1.bf16.xpose.msra.mxu0 %v1317
        %1321 = vmatprep.subr.bf16.mxu0 0
        %1322 = vmatpush1.bf16.xpose.msra.mxu0 0
        %1323 = vmatprep.subr.bf16.mxu0 0
        %1324 = vmatpush1.bf16.xpose.msra.mxu0 0
        %1325 = vmatprep.subr.bf16.mxu0 0
        %1326 = vmatpush1.bf16.xpose.msra.mxu0 0
        %1327 = vmatprep.subr.bf16.mxu0 0
        %1328 = vmatpush1.bf16.xpose.msra.mxu0 0
        %1329 = vmatprep.subr.bf16.mxu0 0
        %1330 = vmatpush1.bf16.xpose.msra.mxu0 0
        %1331 = vmatprep.subr.bf16.mxu0 0
        %1332 = vmatpush1.bf16.xpose.msra.mxu0 0
        %1333 = vmatprep.subr.bf16.mxu0 0
        %1334 = vmatpush1.bf16.xpose.msra.mxu0 0
        %1335 = vmatprep.subr.bf16.mxu0 0
        %1336 = vmatpush1.bf16.xpose.msra.mxu0 0
        %1337 = vmatprep.subr.bf16.mxu0 0
        %1338 = vmatpush1.bf16.xpose.msra.mxu0 0
        %1339 = vmatprep.subr.bf16.mxu0 0
        %1340 = vmatpush1.bf16.xpose.msra.mxu0 0
        %1341 = vmatprep.subr.bf16.mxu0 0
        %1342 = vmatpush1.bf16.xpose.msra.mxu0 0
        %1343 = vmatprep.subr.bf16.mxu0 0
        %1344 = vmatpush1.bf16.xpose.msra.mxu0 0
        %1345 = vmatprep.subr.bf16.mxu0 0
        %1346 = vmatpush1.bf16.xpose.msra.mxu0 0
        %1347 = vmatprep.subr.bf16.mxu0 0
        %1348 = vmatpush1.bf16.xpose.msra.mxu0 0
        %1349 = vmatprep.subr.bf16.mxu0 0
        %1350 = vmatpush1.bf16.xpose.msra.mxu0 0
        %1351 = vmatprep.mubr.bf16.mxu0 0
        %1352 = vmatmul.mubr.bf16.gmra.mrb[0].mxu0 %v1314
        %v1353 = vpop.f32.mrb[0].mxu0
        %v1354 = vadd.f32 0.0, %v1353
        %v1355 = vpop.f32.mrb[0].mxu0
        %v1356 = vpop.f32.mrb[0].mxu0
        %v1357 = vadd.f32 0.0, %v1356
        %v1358 = vpop.f32.mrb[0].mxu0
        %1359 = vdwg.mxu0
        %v1361 = vsel %vm983, %v959, 0
        %v1364 = vsel %vm983, %v975, 0
        %1366 = vmatprep.subr.bf16.mxu0 0
        %1367 = vmatpush1.bf16.xpose.msra.mxu0 %v1364
        %1368 = vmatprep.subr.bf16.mxu0 0
        %1369 = vmatpush1.bf16.xpose.msra.mxu0 0
        %1370 = vmatprep.subr.bf16.mxu0 0
        %1371 = vmatpush1.bf16.xpose.msra.mxu0 0
        %1372 = vmatprep.subr.bf16.mxu0 0
        %1373 = vmatpush1.bf16.xpose.msra.mxu0 0
        %1374 = vmatprep.subr.bf16.mxu0 0
        %1375 = vmatpush1.bf16.xpose.msra.mxu0 0
        %1376 = vmatprep.subr.bf16.mxu0 0
        %1377 = vmatpush1.bf16.xpose.msra.mxu0 0
        %1378 = vmatprep.subr.bf16.mxu0 0
        %1379 = vmatpush1.bf16.xpose.msra.mxu0 0
        %1380 = vmatprep.subr.bf16.mxu0 0
        %1381 = vmatpush1.bf16.xpose.msra.mxu0 0
        %1382 = vmatprep.subr.bf16.mxu0 0
        %1383 = vmatpush1.bf16.xpose.msra.mxu0 0
        %1384 = vmatprep.subr.bf16.mxu0 0
        %1385 = vmatpush1.bf16.xpose.msra.mxu0 0
        %1386 = vmatprep.subr.bf16.mxu0 0
        %1387 = vmatpush1.bf16.xpose.msra.mxu0 0
        %1388 = vmatprep.subr.bf16.mxu0 0
        %1389 = vmatpush1.bf16.xpose.msra.mxu0 0
        %1390 = vmatprep.subr.bf16.mxu0 0
        %1391 = vmatpush1.bf16.xpose.msra.mxu0 0
        %1392 = vmatprep.subr.bf16.mxu0 0
        %1393 = vmatpush1.bf16.xpose.msra.mxu0 0
        %1394 = vmatprep.subr.bf16.mxu0 0
        %1395 = vmatpush1.bf16.xpose.msra.mxu0 0
        %1396 = vmatprep.subr.bf16.mxu0 0
        %1397 = vmatpush1.bf16.xpose.msra.mxu0 0
        %1398 = vmatprep.mubr.bf16.mxu0 0
        %1399 = vmatmul.mubr.bf16.gmra.mrb[0].mxu0 %v1361
        %v1400 = vpop.f32.mrb[0].mxu0
        %v1401 = vadd.f32 0.0, %v1400
        %v1402 = vpop.f32.mrb[0].mxu0
        %v1403 = vpop.f32.mrb[0].mxu0
        %v1404 = vadd.f32 0.0, %v1403
        %v1405 = vpop.f32.mrb[0].mxu0
        %1406 = vdwg.mxu0
        %v1408 = vsel %vm983, %v960, 0
        %v1411 = vsel %vm983, %v976, 0
        %1413 = vmatprep.subr.bf16.mxu0 0
        %1414 = vmatpush1.bf16.xpose.msra.mxu0 %v1411
        %1415 = vmatprep.subr.bf16.mxu0 0
        %1416 = vmatpush1.bf16.xpose.msra.mxu0 0
        %1417 = vmatprep.subr.bf16.mxu0 0
        %1418 = vmatpush1.bf16.xpose.msra.mxu0 0
        %1419 = vmatprep.subr.bf16.mxu0 0
        %1420 = vmatpush1.bf16.xpose.msra.mxu0 0
        %1421 = vmatprep.subr.bf16.mxu0 0
        %1422 = vmatpush1.bf16.xpose.msra.mxu0 0
        %1423 = vmatprep.subr.bf16.mxu0 0
        %1424 = vmatpush1.bf16.xpose.msra.mxu0 0
        %1425 = vmatprep.subr.bf16.mxu0 0
        %1426 = vmatpush1.bf16.xpose.msra.mxu0 0
        %1427 = vmatprep.subr.bf16.mxu0 0
        %1428 = vmatpush1.bf16.xpose.msra.mxu0 0
        %1429 = vmatprep.subr.bf16.mxu0 0
        %1430 = vmatpush1.bf16.xpose.msra.mxu0 0
        %1431 = vmatprep.subr.bf16.mxu0 0
        %1432 = vmatpush1.bf16.xpose.msra.mxu0 0
        %1433 = vmatprep.subr.bf16.mxu0 0
        %1434 = vmatpush1.bf16.xpose.msra.mxu0 0
        %1435 = vmatprep.subr.bf16.mxu0 0
        %1436 = vmatpush1.bf16.xpose.msra.mxu0 0
        %1437 = vmatprep.subr.bf16.mxu0 0
        %1438 = vmatpush1.bf16.xpose.msra.mxu0 0
        %1439 = vmatprep.subr.bf16.mxu0 0
        %1440 = vmatpush1.bf16.xpose.msra.mxu0 0
        %1441 = vmatprep.subr.bf16.mxu0 0
        %1442 = vmatpush1.bf16.xpose.msra.mxu0 0
        %1443 = vmatprep.subr.bf16.mxu0 0
        %1444 = vmatpush1.bf16.xpose.msra.mxu0 0
        %1445 = vmatprep.mubr.bf16.mxu0 0
        %1446 = vmatmul.mubr.bf16.gmra.mrb[0].mxu0 %v1408
        %v1447 = vpop.f32.mrb[0].mxu0
        %v1448 = vadd.f32 0.0, %v1447
        %v1449 = vpop.f32.mrb[0].mxu0
        %v1450 = vpop.f32.mrb[0].mxu0
        %v1451 = vadd.f32 0.0, %v1450
        %v1452 = vpop.f32.mrb[0].mxu0
        %1453 = vdwg.mxu0
        %v1455 = vsel %vm983, %v961, 0
        %v1458 = vsel %vm983, %v977, 0
        %1460 = vmatprep.subr.bf16.mxu0 0
        %1461 = vmatpush1.bf16.xpose.msra.mxu0 %v1458
        %1462 = vmatprep.subr.bf16.mxu0 0
        %1463 = vmatpush1.bf16.xpose.msra.mxu0 0
        %1464 = vmatprep.subr.bf16.mxu0 0
        %1465 = vmatpush1.bf16.xpose.msra.mxu0 0
        %1466 = vmatprep.subr.bf16.mxu0 0
        %1467 = vmatpush1.bf16.xpose.msra.mxu0 0
        %1468 = vmatprep.subr.bf16.mxu0 0
        %1469 = vmatpush1.bf16.xpose.msra.mxu0 0
        %1470 = vmatprep.subr.bf16.mxu0 0
        %1471 = vmatpush1.bf16.xpose.msra.mxu0 0
        %1472 = vmatprep.subr.bf16.mxu0 0
        %1473 = vmatpush1.bf16.xpose.msra.mxu0 0
        %1474 = vmatprep.subr.bf16.mxu0 0
        %1475 = vmatpush1.bf16.xpose.msra.mxu0 0
        %1476 = vmatprep.subr.bf16.mxu0 0
        %1477 = vmatpush1.bf16.xpose.msra.mxu0 0
        %1478 = vmatprep.subr.bf16.mxu0 0
        %1479 = vmatpush1.bf16.xpose.msra.mxu0 0
        %1480 = vmatprep.subr.bf16.mxu0 0
        %1481 = vmatpush1.bf16.xpose.msra.mxu0 0
        %1482 = vmatprep.subr.bf16.mxu0 0
        %1483 = vmatpush1.bf16.xpose.msra.mxu0 0
        %1484 = vmatprep.subr.bf16.mxu0 0
        %1485 = vmatpush1.bf16.xpose.msra.mxu0 0
        %1486 = vmatprep.subr.bf16.mxu0 0
        %1487 = vmatpush1.bf16.xpose.msra.mxu0 0
        %1488 = vmatprep.subr.bf16.mxu0 0
        %1489 = vmatpush1.bf16.xpose.msra.mxu0 0
        %1490 = vmatprep.subr.bf16.mxu0 0
        %1491 = vmatpush1.bf16.xpose.msra.mxu0 0
        %1492 = vmatprep.mubr.bf16.mxu0 0
        %1493 = vmatmul.mubr.bf16.gmra.mrb[0].mxu0 %v1455
        %v1494 = vpop.f32.mrb[0].mxu0
        %v1495 = vadd.f32 0.0, %v1494
        %v1496 = vpop.f32.mrb[0].mxu0
        %v1497 = vpop.f32.mrb[0].mxu0
        %v1498 = vadd.f32 0.0, %v1497
        %v1499 = vpop.f32.mrb[0].mxu0
        %1500 = vdwg.mxu0
        %v1502 = vsel %vm983, %v962, 0
        %v1505 = vsel %vm983, %v978, 0
        %1507 = vmatprep.subr.bf16.mxu0 0
        %1508 = vmatpush1.bf16.xpose.msra.mxu0 %v1505
        %1509 = vmatprep.subr.bf16.mxu0 0
        %1510 = vmatpush1.bf16.xpose.msra.mxu0 0
        %1511 = vmatprep.subr.bf16.mxu0 0
        %1512 = vmatpush1.bf16.xpose.msra.mxu0 0
        %1513 = vmatprep.subr.bf16.mxu0 0
        %1514 = vmatpush1.bf16.xpose.msra.mxu0 0
        %1515 = vmatprep.subr.bf16.mxu0 0
        %1516 = vmatpush1.bf16.xpose.msra.mxu0 0
        %1517 = vmatprep.subr.bf16.mxu0 0
        %1518 = vmatpush1.bf16.xpose.msra.mxu0 0
        %1519 = vmatprep.subr.bf16.mxu0 0
        %1520 = vmatpush1.bf16.xpose.msra.mxu0 0
        %1521 = vmatprep.subr.bf16.mxu0 0
        %1522 = vmatpush1.bf16.xpose.msra.mxu0 0
        %1523 = vmatprep.subr.bf16.mxu0 0
        %1524 = vmatpush1.bf16.xpose.msra.mxu0 0
        %1525 = vmatprep.subr.bf16.mxu0 0
        %1526 = vmatpush1.bf16.xpose.msra.mxu0 0
        %1527 = vmatprep.subr.bf16.mxu0 0
        %1528 = vmatpush1.bf16.xpose.msra.mxu0 0
        %1529 = vmatprep.subr.bf16.mxu0 0
        %1530 = vmatpush1.bf16.xpose.msra.mxu0 0
        %1531 = vmatprep.subr.bf16.mxu0 0
        %1532 = vmatpush1.bf16.xpose.msra.mxu0 0
        %1533 = vmatprep.subr.bf16.mxu0 0
        %1534 = vmatpush1.bf16.xpose.msra.mxu0 0
        %1535 = vmatprep.subr.bf16.mxu0 0
        %1536 = vmatpush1.bf16.xpose.msra.mxu0 0
        %1537 = vmatprep.subr.bf16.mxu0 0
        %1538 = vmatpush1.bf16.xpose.msra.mxu0 0
        %1539 = vmatprep.mubr.bf16.mxu0 0
        %1540 = vmatmul.mubr.bf16.gmra.mrb[0].mxu0 %v1502
        %v1541 = vpop.f32.mrb[0].mxu0
        %v1542 = vadd.f32 0.0, %v1541
        %v1543 = vpop.f32.mrb[0].mxu0
        %v1544 = vpop.f32.mrb[0].mxu0
        %v1545 = vadd.f32 0.0, %v1544
        %v1546 = vpop.f32.mrb[0].mxu0
        %1547 = vdwg.mxu0
        %v1549 = vsel %vm983, %v963, 0
        %v1552 = vsel %vm983, %v979, 0
        %1554 = vmatprep.subr.bf16.mxu0 0
        %1555 = vmatpush1.bf16.xpose.msra.mxu0 %v1552
        %1556 = vmatprep.subr.bf16.mxu0 0
        %1557 = vmatpush1.bf16.xpose.msra.mxu0 0
        %1558 = vmatprep.subr.bf16.mxu0 0
        %1559 = vmatpush1.bf16.xpose.msra.mxu0 0
        %1560 = vmatprep.subr.bf16.mxu0 0
        %1561 = vmatpush1.bf16.xpose.msra.mxu0 0
        %1562 = vmatprep.subr.bf16.mxu0 0
        %1563 = vmatpush1.bf16.xpose.msra.mxu0 0
        %1564 = vmatprep.subr.bf16.mxu0 0
        %1565 = vmatpush1.bf16.xpose.msra.mxu0 0
        %1566 = vmatprep.subr.bf16.mxu0 0
        %1567 = vmatpush1.bf16.xpose.msra.mxu0 0
        %1568 = vmatprep.subr.bf16.mxu0 0
        %1569 = vmatpush1.bf16.xpose.msra.mxu0 0
        %1570 = vmatprep.subr.bf16.mxu0 0
        %1571 = vmatpush1.bf16.xpose.msra.mxu0 0
        %1572 = vmatprep.subr.bf16.mxu0 0
        %1573 = vmatpush1.bf16.xpose.msra.mxu0 0
        %1574 = vmatprep.subr.bf16.mxu0 0
        %1575 = vmatpush1.bf16.xpose.msra.mxu0 0
        %1576 = vmatprep.subr.bf16.mxu0 0
        %1577 = vmatpush1.bf16.xpose.msra.mxu0 0
        %1578 = vmatprep.subr.bf16.mxu0 0
        %1579 = vmatpush1.bf16.xpose.msra.mxu0 0
        %1580 = vmatprep.subr.bf16.mxu0 0
        %1581 = vmatpush1.bf16.xpose.msra.mxu0 0
        %1582 = vmatprep.subr.bf16.mxu0 0
        %1583 = vmatpush1.bf16.xpose.msra.mxu0 0
        %1584 = vmatprep.subr.bf16.mxu0 0
        %1585 = vmatpush1.bf16.xpose.msra.mxu0 0
        %1586 = vmatprep.mubr.bf16.mxu0 0
        %1587 = vmatmul.mubr.bf16.gmra.mrb[0].mxu0 %v1549
        %v1588 = vpop.f32.mrb[0].mxu0
        %v1589 = vadd.f32 0.0, %v1588
        %v1590 = vpop.f32.mrb[0].mxu0
        %v1591 = vpop.f32.mrb[0].mxu0
        %v1592 = vadd.f32 0.0, %v1591
        %v1593 = vpop.f32.mrb[0].mxu0
        %1594 = vdwg.mxu0
        %v1596 = vsel %vm983, %v964, 0
        %v1599 = vsel %vm983, %v980, 0
        %1601 = vmatprep.subr.bf16.mxu0 0
        %1602 = vmatpush1.bf16.xpose.msra.mxu0 %v1599
        %1603 = vmatprep.subr.bf16.mxu0 0
        %1604 = vmatpush1.bf16.xpose.msra.mxu0 0
        %1605 = vmatprep.subr.bf16.mxu0 0
        %1606 = vmatpush1.bf16.xpose.msra.mxu0 0
        %1607 = vmatprep.subr.bf16.mxu0 0
        %1608 = vmatpush1.bf16.xpose.msra.mxu0 0
        %1609 = vmatprep.subr.bf16.mxu0 0
        %1610 = vmatpush1.bf16.xpose.msra.mxu0 0
        %1611 = vmatprep.subr.bf16.mxu0 0
        %1612 = vmatpush1.bf16.xpose.msra.mxu0 0
        %1613 = vmatprep.subr.bf16.mxu0 0
        %1614 = vmatpush1.bf16.xpose.msra.mxu0 0
        %1615 = vmatprep.subr.bf16.mxu0 0
        %1616 = vmatpush1.bf16.xpose.msra.mxu0 0
        %1617 = vmatprep.subr.bf16.mxu0 0
        %1618 = vmatpush1.bf16.xpose.msra.mxu0 0
        %1619 = vmatprep.subr.bf16.mxu0 0
        %1620 = vmatpush1.bf16.xpose.msra.mxu0 0
        %1621 = vmatprep.subr.bf16.mxu0 0
        %1622 = vmatpush1.bf16.xpose.msra.mxu0 0
        %1623 = vmatprep.subr.bf16.mxu0 0
        %1624 = vmatpush1.bf16.xpose.msra.mxu0 0
        %1625 = vmatprep.subr.bf16.mxu0 0
        %1626 = vmatpush1.bf16.xpose.msra.mxu0 0
        %1627 = vmatprep.subr.bf16.mxu0 0
        %1628 = vmatpush1.bf16.xpose.msra.mxu0 0
        %1629 = vmatprep.subr.bf16.mxu0 0
        %1630 = vmatpush1.bf16.xpose.msra.mxu0 0
        %1631 = vmatprep.subr.bf16.mxu0 0
        %1632 = vmatpush1.bf16.xpose.msra.mxu0 0
        %1633 = vmatprep.mubr.bf16.mxu0 0
        %1634 = vmatmul.mubr.bf16.gmra.mrb[0].mxu0 %v1596
        %v1635 = vpop.f32.mrb[0].mxu0
        %v1636 = vadd.f32 0.0, %v1635
        %v1637 = vpop.f32.mrb[0].mxu0
        %v1638 = vpop.f32.mrb[0].mxu0
        %v1639 = vadd.f32 0.0, %v1638
        %v1640 = vpop.f32.mrb[0].mxu0
        %1641 = vdwg.mxu0
        %v1643 = vsel %vm983, %v965, 0
        %v1646 = vsel %vm983, %v981, 0
        %1648 = vmatprep.subr.bf16.mxu0 0
        %1649 = vmatpush1.bf16.xpose.msra.mxu0 %v1646
        %1650 = vmatprep.subr.bf16.mxu0 0
        %1651 = vmatpush1.bf16.xpose.msra.mxu0 0
        %1652 = vmatprep.subr.bf16.mxu0 0
        %1653 = vmatpush1.bf16.xpose.msra.mxu0 0
        %1654 = vmatprep.subr.bf16.mxu0 0
        %1655 = vmatpush1.bf16.xpose.msra.mxu0 0
        %1656 = vmatprep.subr.bf16.mxu0 0
        %1657 = vmatpush1.bf16.xpose.msra.mxu0 0
        %1658 = vmatprep.subr.bf16.mxu0 0
        %1659 = vmatpush1.bf16.xpose.msra.mxu0 0
        %1660 = vmatprep.subr.bf16.mxu0 0
        %1661 = vmatpush1.bf16.xpose.msra.mxu0 0
        %1662 = vmatprep.subr.bf16.mxu0 0
        %1663 = vmatpush1.bf16.xpose.msra.mxu0 0
        %1664 = vmatprep.subr.bf16.mxu0 0
        %1665 = vmatpush1.bf16.xpose.msra.mxu0 0
        %1666 = vmatprep.subr.bf16.mxu0 0
        %1667 = vmatpush1.bf16.xpose.msra.mxu0 0
        %1668 = vmatprep.subr.bf16.mxu0 0
        %1669 = vmatpush1.bf16.xpose.msra.mxu0 0
        %1670 = vmatprep.subr.bf16.mxu0 0
        %1671 = vmatpush1.bf16.xpose.msra.mxu0 0
        %1672 = vmatprep.subr.bf16.mxu0 0
        %1673 = vmatpush1.bf16.xpose.msra.mxu0 0
        %1674 = vmatprep.subr.bf16.mxu0 0
        %1675 = vmatpush1.bf16.xpose.msra.mxu0 0
        %1676 = vmatprep.subr.bf16.mxu0 0
        %1677 = vmatpush1.bf16.xpose.msra.mxu0 0
        %1678 = vmatprep.subr.bf16.mxu0 0
        %1679 = vmatpush1.bf16.xpose.msra.mxu0 0
        %1680 = vmatprep.mubr.bf16.mxu0 0
        %1681 = vmatmul.mubr.bf16.gmra.mrb[0].mxu0 %v1643
        %v1682 = vpop.f32.mrb[0].mxu0
        %v1683 = vadd.f32 0.0, %v1682
        %v1684 = vpop.f32.mrb[0].mxu0
        %v1685 = vpop.f32.mrb[0].mxu0
        %v1686 = vadd.f32 0.0, %v1685
        %v1687 = vpop.f32.mrb[0].mxu0
        %1688 = vdwg.mxu0
        %v1690 = vsel %vm983, %v966, 0
        %v1693 = vsel %vm983, %v982, 0
        %1695 = vmatprep.subr.bf16.mxu0 0
        %1696 = vmatpush1.bf16.xpose.msra.mxu0 %v1693
        %1697 = vmatprep.subr.bf16.mxu0 0
        %1698 = vmatpush1.bf16.xpose.msra.mxu0 0
        %1699 = vmatprep.subr.bf16.mxu0 0
        %1700 = vmatpush1.bf16.xpose.msra.mxu0 0
        %1701 = vmatprep.subr.bf16.mxu0 0
        %1702 = vmatpush1.bf16.xpose.msra.mxu0 0
        %1703 = vmatprep.subr.bf16.mxu0 0
        %1704 = vmatpush1.bf16.xpose.msra.mxu0 0
        %1705 = vmatprep.subr.bf16.mxu0 0
        %1706 = vmatpush1.bf16.xpose.msra.mxu0 0
        %1707 = vmatprep.subr.bf16.mxu0 0
        %1708 = vmatpush1.bf16.xpose.msra.mxu0 0
        %1709 = vmatprep.subr.bf16.mxu0 0
        %1710 = vmatpush1.bf16.xpose.msra.mxu0 0
        %1711 = vmatprep.subr.bf16.mxu0 0
        %1712 = vmatpush1.bf16.xpose.msra.mxu0 0
        %1713 = vmatprep.subr.bf16.mxu0 0
        %1714 = vmatpush1.bf16.xpose.msra.mxu0 0
        %1715 = vmatprep.subr.bf16.mxu0 0
        %1716 = vmatpush1.bf16.xpose.msra.mxu0 0
        %1717 = vmatprep.subr.bf16.mxu0 0
        %1718 = vmatpush1.bf16.xpose.msra.mxu0 0
        %1719 = vmatprep.subr.bf16.mxu0 0
        %1720 = vmatpush1.bf16.xpose.msra.mxu0 0
        %1721 = vmatprep.subr.bf16.mxu0 0
        %1722 = vmatpush1.bf16.xpose.msra.mxu0 0
        %1723 = vmatprep.subr.bf16.mxu0 0
        %1724 = vmatpush1.bf16.xpose.msra.mxu0 0
        %1725 = vmatprep.subr.bf16.mxu0 0
        %1726 = vmatpush1.bf16.xpose.msra.mxu0 0
        %1727 = vmatprep.mubr.bf16.mxu0 0
        %1728 = vmatmul.mubr.bf16.gmra.mrb[0].mxu0 %v1690
        %v1729 = vpop.f32.mrb[0].mxu0
        %v1730 = vadd.f32 0.0, %v1729
        %v1731 = vpop.f32.mrb[0].mxu0
        %v1732 = vpop.f32.mrb[0].mxu0
        %v1733 = vadd.f32 0.0, %v1732
        %v1734 = vpop.f32.mrb[0].mxu0
        %1735 = vdwg.mxu0
        %vm1736 = vcmask 130048
        %v1737 = vsel %vm1736, %v1025, -inf
        %1738 = vmax.xlane.f32.xlu0 %v1737
        %v1739 = vpop.xlane.xlu0 %1738
        %v1740 = vsel %vm1736, %v1028, -inf
        %1741 = vmax.xlane.f32.xlu0 %v1740
        %v1742 = vpop.xlane.xlu0 %1741
        %v1743 = vsel %vm1736, %v1072, -inf
        %1744 = vmax.xlane.f32.xlu0 %v1743
        %v1745 = vpop.xlane.xlu0 %1744
        %v1746 = vsel %vm1736, %v1075, -inf
        %1747 = vmax.xlane.f32.xlu0 %v1746
        %v1748 = vpop.xlane.xlu0 %1747
        %v1749 = vsel %vm1736, %v1119, -inf
        %1750 = vmax.xlane.f32.xlu0 %v1749
        %v1751 = vpop.xlane.xlu0 %1750
        %v1752 = vsel %vm1736, %v1122, -inf
        %1753 = vmax.xlane.f32.xlu0 %v1752
        %v1754 = vpop.xlane.xlu0 %1753
        %v1755 = vsel %vm1736, %v1166, -inf
        %1756 = vmax.xlane.f32.xlu0 %v1755
        %v1757 = vpop.xlane.xlu0 %1756
        %v1758 = vsel %vm1736, %v1169, -inf
        %1759 = vmax.xlane.f32.xlu0 %v1758
        %v1760 = vpop.xlane.xlu0 %1759
        %v1761 = vsel %vm1736, %v1213, -inf
        %1762 = vmax.xlane.f32.xlu0 %v1761
        %v1763 = vpop.xlane.xlu0 %1762
        %v1764 = vsel %vm1736, %v1216, -inf
        %1765 = vmax.xlane.f32.xlu0 %v1764
        %v1766 = vpop.xlane.xlu0 %1765
        %v1767 = vsel %vm1736, %v1260, -inf
        %1768 = vmax.xlane.f32.xlu0 %v1767
        %v1769 = vpop.xlane.xlu0 %1768
        %v1770 = vsel %vm1736, %v1263, -inf
        %1771 = vmax.xlane.f32.xlu0 %v1770
        %v1772 = vpop.xlane.xlu0 %1771
        %v1773 = vsel %vm1736, %v1307, -inf
        %1774 = vmax.xlane.f32.xlu0 %v1773
        %v1775 = vpop.xlane.xlu0 %1774
        %v1776 = vsel %vm1736, %v1310, -inf
        %1777 = vmax.xlane.f32.xlu0 %v1776
        %v1778 = vpop.xlane.xlu0 %1777
        %v1779 = vsel %vm1736, %v1354, -inf
        %1780 = vmax.xlane.f32.xlu0 %v1779
        %v1781 = vpop.xlane.xlu0 %1780
        %v1782 = vsel %vm1736, %v1357, -inf
        %1783 = vmax.xlane.f32.xlu0 %v1782
        %v1784 = vpop.xlane.xlu0 %1783
        %v1785 = vsel %vm1736, %v1401, -inf
        %1786 = vmax.xlane.f32.xlu0 %v1785
        %v1787 = vpop.xlane.xlu0 %1786
        %v1788 = vsel %vm1736, %v1404, -inf
        %1789 = vmax.xlane.f32.xlu0 %v1788
        %v1790 = vpop.xlane.xlu0 %1789
        %v1791 = vsel %vm1736, %v1448, -inf
        %1792 = vmax.xlane.f32.xlu0 %v1791
        %v1793 = vpop.xlane.xlu0 %1792
        %v1794 = vsel %vm1736, %v1451, -inf
        %1795 = vmax.xlane.f32.xlu0 %v1794
        %v1796 = vpop.xlane.xlu0 %1795
        %v1797 = vsel %vm1736, %v1495, -inf
        %1798 = vmax.xlane.f32.xlu0 %v1797
        %v1799 = vpop.xlane.xlu0 %1798
        %v1800 = vsel %vm1736, %v1498, -inf
        %1801 = vmax.xlane.f32.xlu0 %v1800
        %v1802 = vpop.xlane.xlu0 %1801
        %v1803 = vsel %vm1736, %v1542, -inf
        %1804 = vmax.xlane.f32.xlu0 %v1803
        %v1805 = vpop.xlane.xlu0 %1804
        %v1806 = vsel %vm1736, %v1545, -inf
        %1807 = vmax.xlane.f32.xlu0 %v1806
        %v1808 = vpop.xlane.xlu0 %1807
        %v1809 = vsel %vm1736, %v1589, -inf
        %1810 = vmax.xlane.f32.xlu0 %v1809
        %v1811 = vpop.xlane.xlu0 %1810
        %v1812 = vsel %vm1736, %v1592, -inf
        %1813 = vmax.xlane.f32.xlu0 %v1812
        %v1814 = vpop.xlane.xlu0 %1813
        %v1815 = vsel %vm1736, %v1636, -inf
        %1816 = vmax.xlane.f32.xlu0 %v1815
        %v1817 = vpop.xlane.xlu0 %1816
        %v1818 = vsel %vm1736, %v1639, -inf
        %1819 = vmax.xlane.f32.xlu0 %v1818
        %v1820 = vpop.xlane.xlu0 %1819
        %v1821 = vsel %vm1736, %v1683, -inf
        %1822 = vmax.xlane.f32.xlu0 %v1821
        %v1823 = vpop.xlane.xlu0 %1822
        %v1824 = vsel %vm1736, %v1686, -inf
        %1825 = vmax.xlane.f32.xlu0 %v1824
        %v1826 = vpop.xlane.xlu0 %1825
        %v1827 = vsel %vm1736, %v1730, -inf
        %1828 = vmax.xlane.f32.xlu0 %v1827
        %v1829 = vpop.xlane.xlu0 %1828
        %v1830 = vsel %vm1736, %v1733, -inf
        %1831 = vmax.xlane.f32.xlu0 %v1830
        %v1832 = vpop.xlane.xlu0 %1831
        %v1833 = vsub.f32 %v1025, %v1739
        %v1834 = vsub.f32 %v1028, %v1742
        %v1835 = vsub.f32 %v1072, %v1745
        %v1836 = vsub.f32 %v1075, %v1748
        %v1837 = vsub.f32 %v1119, %v1751
        %v1838 = vsub.f32 %v1122, %v1754
        %v1839 = vsub.f32 %v1166, %v1757
        %v1840 = vsub.f32 %v1169, %v1760
        %v1841 = vsub.f32 %v1213, %v1763
        %v1842 = vsub.f32 %v1216, %v1766
        %v1843 = vsub.f32 %v1260, %v1769
        %v1844 = vsub.f32 %v1263, %v1772
        %v1845 = vsub.f32 %v1307, %v1775
        %v1846 = vsub.f32 %v1310, %v1778
        %v1847 = vsub.f32 %v1354, %v1781
        %v1848 = vsub.f32 %v1357, %v1784
        %v1849 = vsub.f32 %v1401, %v1787
        %v1850 = vsub.f32 %v1404, %v1790
        %v1851 = vsub.f32 %v1448, %v1793
        %v1852 = vsub.f32 %v1451, %v1796
        %v1853 = vsub.f32 %v1495, %v1799
        %v1854 = vsub.f32 %v1498, %v1802
        %v1855 = vsub.f32 %v1542, %v1805
        %v1856 = vsub.f32 %v1545, %v1808
        %v1857 = vsub.f32 %v1589, %v1811
        %v1858 = vsub.f32 %v1592, %v1814
        %v1859 = vsub.f32 %v1636, %v1817
        %v1860 = vsub.f32 %v1639, %v1820
        %v1861 = vsub.f32 %v1683, %v1823
        %v1862 = vsub.f32 %v1686, %v1826
        %v1863 = vsub.f32 %v1730, %v1829
        %v1864 = vsub.f32 %v1733, %v1832
        %v1865 = vmul.f32 %v1833, 1.442695
        %v1866 = vpow.pop %v1865
        %v1867 = vmul.f32 %v1834, 1.442695
        %v1868 = vpow.pop %v1867
        %v1869 = vmul.f32 %v1835, 1.442695
        %v1870 = vpow.pop %v1869
        %v1871 = vmul.f32 %v1836, 1.442695
        %v1872 = vpow.pop %v1871
        %v1873 = vmul.f32 %v1837, 1.442695
        %v1874 = vpow.pop %v1873
        %v1875 = vmul.f32 %v1838, 1.442695
        %v1876 = vpow.pop %v1875
        %v1877 = vmul.f32 %v1839, 1.442695
        %v1878 = vpow.pop %v1877
        %v1879 = vmul.f32 %v1840, 1.442695
        %v1880 = vpow.pop %v1879
        %v1881 = vmul.f32 %v1841, 1.442695
        %v1882 = vpow.pop %v1881
        %v1883 = vmul.f32 %v1842, 1.442695
        %v1884 = vpow.pop %v1883
        %v1885 = vmul.f32 %v1843, 1.442695
        %v1886 = vpow.pop %v1885
        %v1887 = vmul.f32 %v1844, 1.442695
        %v1888 = vpow.pop %v1887
        %v1889 = vmul.f32 %v1845, 1.442695
        %v1890 = vpow.pop %v1889
        %v1891 = vmul.f32 %v1846, 1.442695
        %v1892 = vpow.pop %v1891
        %v1893 = vmul.f32 %v1847, 1.442695
        %v1894 = vpow.pop %v1893
        %v1895 = vmul.f32 %v1848, 1.442695
        %v1896 = vpow.pop %v1895
        %v1897 = vmul.f32 %v1849, 1.442695
        %v1898 = vpow.pop %v1897
        %v1899 = vmul.f32 %v1850, 1.442695
        %v1900 = vpow.pop %v1899
        %v1901 = vmul.f32 %v1851, 1.442695
        %v1902 = vpow.pop %v1901
        %v1903 = vmul.f32 %v1852, 1.442695
        %v1904 = vpow.pop %v1903
        %v1905 = vmul.f32 %v1853, 1.442695
        %v1906 = vpow.pop %v1905
        %v1907 = vmul.f32 %v1854, 1.442695
        %v1908 = vpow.pop %v1907
        %v1909 = vmul.f32 %v1855, 1.442695
        %v1910 = vpow.pop %v1909
        %v1911 = vmul.f32 %v1856, 1.442695
        %v1912 = vpow.pop %v1911
        %v1913 = vmul.f32 %v1857, 1.442695
        %v1914 = vpow.pop %v1913
        %v1915 = vmul.f32 %v1858, 1.442695
        %v1916 = vpow.pop %v1915
        %v1917 = vmul.f32 %v1859, 1.442695
        %v1918 = vpow.pop %v1917
        %v1919 = vmul.f32 %v1860, 1.442695
        %v1920 = vpow.pop %v1919
        %v1921 = vmul.f32 %v1861, 1.442695
        %v1922 = vpow.pop %v1921
        %v1923 = vmul.f32 %v1862, 1.442695
        %v1924 = vpow.pop %v1923
        %v1925 = vmul.f32 %v1863, 1.442695
        %v1926 = vpow.pop %v1925
        %v1927 = vmul.f32 %v1864, 1.442695
        %v1928 = vpow.pop %v1927
        %v1929 = vsel %vm1736, %v1866, 0.0
        %1930 = vadd.xlane.f32.xlu0 %v1929
        %v1931 = vpop.xlane.xlu0 %1930
        %v1932 = vsel %vm1736, %v1868, 0.0
        %1933 = vadd.xlane.f32.xlu0 %v1932
        %v1934 = vpop.xlane.xlu0 %1933
        %v1935 = vsel %vm1736, %v1870, 0.0
        %1936 = vadd.xlane.f32.xlu0 %v1935
        %v1937 = vpop.xlane.xlu0 %1936
        %v1938 = vsel %vm1736, %v1872, 0.0
        %1939 = vadd.xlane.f32.xlu0 %v1938
        %v1940 = vpop.xlane.xlu0 %1939
        %v1941 = vsel %vm1736, %v1874, 0.0
        %1942 = vadd.xlane.f32.xlu0 %v1941
        %v1943 = vpop.xlane.xlu0 %1942
        %v1944 = vsel %vm1736, %v1876, 0.0
        %1945 = vadd.xlane.f32.xlu0 %v1944
        %v1946 = vpop.xlane.xlu0 %1945
        %v1947 = vsel %vm1736, %v1878, 0.0
        %1948 = vadd.xlane.f32.xlu0 %v1947
        %v1949 = vpop.xlane.xlu0 %1948
        %v1950 = vsel %vm1736, %v1880, 0.0
        %1951 = vadd.xlane.f32.xlu0 %v1950
        %v1952 = vpop.xlane.xlu0 %1951
        %v1953 = vsel %vm1736, %v1882, 0.0
        %1954 = vadd.xlane.f32.xlu0 %v1953
        %v1955 = vpop.xlane.xlu0 %1954
        %v1956 = vsel %vm1736, %v1884, 0.0
        %1957 = vadd.xlane.f32.xlu0 %v1956
        %v1958 = vpop.xlane.xlu0 %1957
        %v1959 = vsel %vm1736, %v1886, 0.0
        %1960 = vadd.xlane.f32.xlu0 %v1959
        %v1961 = vpop.xlane.xlu0 %1960
        %v1962 = vsel %vm1736, %v1888, 0.0
        %1963 = vadd.xlane.f32.xlu0 %v1962
        %v1964 = vpop.xlane.xlu0 %1963
        %v1965 = vsel %vm1736, %v1890, 0.0
        %1966 = vadd.xlane.f32.xlu0 %v1965
        %v1967 = vpop.xlane.xlu0 %1966
        %v1968 = vsel %vm1736, %v1892, 0.0
        %1969 = vadd.xlane.f32.xlu0 %v1968
        %v1970 = vpop.xlane.xlu0 %1969
        %v1971 = vsel %vm1736, %v1894, 0.0
        %1972 = vadd.xlane.f32.xlu0 %v1971
        %v1973 = vpop.xlane.xlu0 %1972
        %v1974 = vsel %vm1736, %v1896, 0.0
        %1975 = vadd.xlane.f32.xlu0 %v1974
        %v1976 = vpop.xlane.xlu0 %1975
        %v1977 = vsel %vm1736, %v1898, 0.0
        %1978 = vadd.xlane.f32.xlu0 %v1977
        %v1979 = vpop.xlane.xlu0 %1978
        %v1980 = vsel %vm1736, %v1900, 0.0
        %1981 = vadd.xlane.f32.xlu0 %v1980
        %v1982 = vpop.xlane.xlu0 %1981
        %v1983 = vsel %vm1736, %v1902, 0.0
        %1984 = vadd.xlane.f32.xlu0 %v1983
        %v1985 = vpop.xlane.xlu0 %1984
        %v1986 = vsel %vm1736, %v1904, 0.0
        %1987 = vadd.xlane.f32.xlu0 %v1986
        %v1988 = vpop.xlane.xlu0 %1987
        %v1989 = vsel %vm1736, %v1906, 0.0
        %1990 = vadd.xlane.f32.xlu0 %v1989
        %v1991 = vpop.xlane.xlu0 %1990
        %v1992 = vsel %vm1736, %v1908, 0.0
        %1993 = vadd.xlane.f32.xlu0 %v1992
        %v1994 = vpop.xlane.xlu0 %1993
        %v1995 = vsel %vm1736, %v1910, 0.0
        %1996 = vadd.xlane.f32.xlu0 %v1995
        %v1997 = vpop.xlane.xlu0 %1996
        %v1998 = vsel %vm1736, %v1912, 0.0
        %1999 = vadd.xlane.f32.xlu0 %v1998
        %v2000 = vpop.xlane.xlu0 %1999
        %v2001 = vsel %vm1736, %v1914, 0.0
        %2002 = vadd.xlane.f32.xlu0 %v2001
        %v2003 = vpop.xlane.xlu0 %2002
        %v2004 = vsel %vm1736, %v1916, 0.0
        %2005 = vadd.xlane.f32.xlu0 %v2004
        %v2006 = vpop.xlane.xlu0 %2005
        %v2007 = vsel %vm1736, %v1918, 0.0
        %2008 = vadd.xlane.f32.xlu0 %v2007
        %v2009 = vpop.xlane.xlu0 %2008
        %v2010 = vsel %vm1736, %v1920, 0.0
        %2011 = vadd.xlane.f32.xlu0 %v2010
        %v2012 = vpop.xlane.xlu0 %2011
        %v2013 = vsel %vm1736, %v1922, 0.0
        %2014 = vadd.xlane.f32.xlu0 %v2013
        %v2015 = vpop.xlane.xlu0 %2014
        %v2016 = vsel %vm1736, %v1924, 0.0
        %2017 = vadd.xlane.f32.xlu0 %v2016
        %v2018 = vpop.xlane.xlu0 %2017
        %v2019 = vsel %vm1736, %v1926, 0.0
        %2020 = vadd.xlane.f32.xlu0 %v2019
        %v2021 = vpop.xlane.xlu0 %2020
        %v2022 = vsel %vm1736, %v1928, 0.0
        %2023 = vadd.xlane.f32.xlu0 %v2022
        %v2024 = vpop.xlane.xlu0 %2023
        %v2025 = vrcp.pop %v1931
        %v2026 = vmul.f32 %v1866, %v2025
        %v2027 = vrcp.pop %v1934
        %v2028 = vmul.f32 %v1868, %v2027
        %v2029 = vrcp.pop %v1937
        %v2030 = vmul.f32 %v1870, %v2029
        %v2031 = vrcp.pop %v1940
        %v2032 = vmul.f32 %v1872, %v2031
        %v2033 = vrcp.pop %v1943
        %v2034 = vmul.f32 %v1874, %v2033
        %v2035 = vrcp.pop %v1946
        %v2036 = vmul.f32 %v1876, %v2035
        %v2037 = vrcp.pop %v1949
        %v2038 = vmul.f32 %v1878, %v2037
        %v2039 = vrcp.pop %v1952
        %v2040 = vmul.f32 %v1880, %v2039
        %v2041 = vrcp.pop %v1955
        %v2042 = vmul.f32 %v1882, %v2041
        %v2043 = vrcp.pop %v1958
        %v2044 = vmul.f32 %v1884, %v2043
        %v2045 = vrcp.pop %v1961
        %v2046 = vmul.f32 %v1886, %v2045
        %v2047 = vrcp.pop %v1964
        %v2048 = vmul.f32 %v1888, %v2047
        %v2049 = vrcp.pop %v1967
        %v2050 = vmul.f32 %v1890, %v2049
        %v2051 = vrcp.pop %v1970
        %v2052 = vmul.f32 %v1892, %v2051
        %v2053 = vrcp.pop %v1973
        %v2054 = vmul.f32 %v1894, %v2053
        %v2055 = vrcp.pop %v1976
        %v2056 = vmul.f32 %v1896, %v2055
        %v2057 = vrcp.pop %v1979
        %v2058 = vmul.f32 %v1898, %v2057
        %v2059 = vrcp.pop %v1982
        %v2060 = vmul.f32 %v1900, %v2059
        %v2061 = vrcp.pop %v1985
        %v2062 = vmul.f32 %v1902, %v2061
        %v2063 = vrcp.pop %v1988
        %v2064 = vmul.f32 %v1904, %v2063
        %v2065 = vrcp.pop %v1991
        %v2066 = vmul.f32 %v1906, %v2065
        %v2067 = vrcp.pop %v1994
        %v2068 = vmul.f32 %v1908, %v2067
        %v2069 = vrcp.pop %v1997
        %v2070 = vmul.f32 %v1910, %v2069
        %v2071 = vrcp.pop %v2000
        %v2072 = vmul.f32 %v1912, %v2071
        %v2073 = vrcp.pop %v2003
        %v2074 = vmul.f32 %v1914, %v2073
        %v2075 = vrcp.pop %v2006
        %v2076 = vmul.f32 %v1916, %v2075
        %v2077 = vrcp.pop %v2009
        %v2078 = vmul.f32 %v1918, %v2077
        %v2079 = vrcp.pop %v2012
        %v2080 = vmul.f32 %v1920, %v2079
        %v2081 = vrcp.pop %v2015
        %v2082 = vmul.f32 %v1922, %v2081
        %v2083 = vrcp.pop %v2018
        %v2084 = vmul.f32 %v1924, %v2083
        %v2085 = vrcp.pop %v2021
        %v2086 = vmul.f32 %v1926, %v2085
        %v2087 = vrcp.pop %v2024
        %v2088 = vmul.f32 %v1928, %v2087
        %v2089 = vpack.c.bf16 %v2028, %v2026
        %v2090 = vpack.c.bf16 %v2032, %v2030
        %v2091 = vpack.c.bf16 %v2036, %v2034
        %v2092 = vpack.c.bf16 %v2040, %v2038
        %v2093 = vpack.c.bf16 %v2044, %v2042
        %v2094 = vpack.c.bf16 %v2048, %v2046
        %v2095 = vpack.c.bf16 %v2052, %v2050
        %v2096 = vpack.c.bf16 %v2056, %v2054
        %v2097 = vpack.c.bf16 %v2060, %v2058
        %v2098 = vpack.c.bf16 %v2064, %v2062
        %v2099 = vpack.c.bf16 %v2068, %v2066
        %v2100 = vpack.c.bf16 %v2072, %v2070
        %v2101 = vpack.c.bf16 %v2076, %v2074
        %v2102 = vpack.c.bf16 %v2080, %v2078
        %v2103 = vpack.c.bf16 %v2084, %v2082
        %v2104 = vpack.c.bf16 %v2088, %v2086
        %v2105 = vpack.c.bf16 %v827, %v824
        %v2106 = vpack.c.bf16 %v835, %v832
        %v2107 = vpack.c.bf16 %v843, %v840
        %v2108 = vpack.c.bf16 %v851, %v848
        %v2109 = vpack.c.bf16 %v859, %v856
        %v2110 = vpack.c.bf16 %v867, %v864
        %v2111 = vpack.c.bf16 %v875, %v872
        %v2112 = vpack.c.bf16 %v883, %v880
        %v2113 = vpack.c.bf16 %v891, %v888
        %v2114 = vpack.c.bf16 %v899, %v896
        %v2115 = vpack.c.bf16 %v907, %v904
        %v2116 = vpack.c.bf16 %v915, %v912
        %v2117 = vpack.c.bf16 %v923, %v920
        %v2118 = vpack.c.bf16 %v931, %v928
        %v2119 = vpack.c.bf16 %v939, %v936
        %v2120 = vpack.c.bf16 %v947, %v944
        %v2122 = vsel %vm1736, %v2089, 0
        %2124 = vmatprep.subr.bf16.mxu0 0
        %2125 = vmatpush1.bf16.msra.mxu0 %v2105
        %2126 = vmatprep.subr.bf16.mxu0 0
        %2127 = vmatpush1.bf16.msra.mxu0 0
        %2128 = vmatprep.subr.bf16.mxu0 0
        %2129 = vmatpush1.bf16.msra.mxu0 0
        %2130 = vmatprep.subr.bf16.mxu0 0
        %2131 = vmatpush1.bf16.msra.mxu0 0
        %2132 = vmatprep.subr.bf16.mxu0 0
        %2133 = vmatpush1.bf16.msra.mxu0 0
        %2134 = vmatprep.subr.bf16.mxu0 0
        %2135 = vmatpush1.bf16.msra.mxu0 0
        %2136 = vmatprep.subr.bf16.mxu0 0
        %2137 = vmatpush1.bf16.msra.mxu0 0
        %2138 = vmatprep.subr.bf16.mxu0 0
        %2139 = vmatpush1.bf16.msra.mxu0 0
        %2140 = vmatprep.subr.bf16.mxu0 0
        %2141 = vmatpush1.bf16.msra.mxu0 0
        %2142 = vmatprep.subr.bf16.mxu0 0
        %2143 = vmatpush1.bf16.msra.mxu0 0
        %2144 = vmatprep.subr.bf16.mxu0 0
        %2145 = vmatpush1.bf16.msra.mxu0 0
        %2146 = vmatprep.subr.bf16.mxu0 0
        %2147 = vmatpush1.bf16.msra.mxu0 0
        %2148 = vmatprep.subr.bf16.mxu0 0
        %2149 = vmatpush1.bf16.msra.mxu0 0
        %2150 = vmatprep.subr.bf16.mxu0 0
        %2151 = vmatpush1.bf16.msra.mxu0 0
        %2152 = vmatprep.subr.bf16.mxu0 0
        %2153 = vmatpush1.bf16.msra.mxu0 0
        %2154 = vmatprep.subr.bf16.mxu0 0
        %2155 = vmatpush1.bf16.msra.mxu0 0
        %2156 = vmatprep.mubr.bf16.mxu0 0
        %2157 = vmatmul.mubr.bf16.gmra.mrb[0].mxu0 %v2122
        %v2158 = vpop.f32.mrb[0].mxu0
        %v2159 = vadd.f32 0.0, %v2158
        %v2160 = vpop.f32.mrb[0].mxu0
        %v2161 = vpop.f32.mrb[0].mxu0
        %v2162 = vadd.f32 0.0, %v2161
        %v2163 = vpop.f32.mrb[0].mxu0
        %2164 = vdwg.mxu0
        %v2166 = vsel %vm1736, %v2090, 0
        %2168 = vmatprep.subr.bf16.mxu0 0
        %2169 = vmatpush1.bf16.msra.mxu0 %v2106
        %2170 = vmatprep.subr.bf16.mxu0 0
        %2171 = vmatpush1.bf16.msra.mxu0 0
        %2172 = vmatprep.subr.bf16.mxu0 0
        %2173 = vmatpush1.bf16.msra.mxu0 0
        %2174 = vmatprep.subr.bf16.mxu0 0
        %2175 = vmatpush1.bf16.msra.mxu0 0
        %2176 = vmatprep.subr.bf16.mxu0 0
        %2177 = vmatpush1.bf16.msra.mxu0 0
        %2178 = vmatprep.subr.bf16.mxu0 0
        %2179 = vmatpush1.bf16.msra.mxu0 0
        %2180 = vmatprep.subr.bf16.mxu0 0
        %2181 = vmatpush1.bf16.msra.mxu0 0
        %2182 = vmatprep.subr.bf16.mxu0 0
        %2183 = vmatpush1.bf16.msra.mxu0 0
        %2184 = vmatprep.subr.bf16.mxu0 0
        %2185 = vmatpush1.bf16.msra.mxu0 0
        %2186 = vmatprep.subr.bf16.mxu0 0
        %2187 = vmatpush1.bf16.msra.mxu0 0
        %2188 = vmatprep.subr.bf16.mxu0 0
        %2189 = vmatpush1.bf16.msra.mxu0 0
        %2190 = vmatprep.subr.bf16.mxu0 0
        %2191 = vmatpush1.bf16.msra.mxu0 0
        %2192 = vmatprep.subr.bf16.mxu0 0
        %2193 = vmatpush1.bf16.msra.mxu0 0
        %2194 = vmatprep.subr.bf16.mxu0 0
        %2195 = vmatpush1.bf16.msra.mxu0 0
        %2196 = vmatprep.subr.bf16.mxu0 0
        %2197 = vmatpush1.bf16.msra.mxu0 0
        %2198 = vmatprep.subr.bf16.mxu0 0
        %2199 = vmatpush1.bf16.msra.mxu0 0
        %2200 = vmatprep.mubr.bf16.mxu0 0
        %2201 = vmatmul.mubr.bf16.gmra.mrb[0].mxu0 %v2166
        %v2202 = vpop.f32.mrb[0].mxu0
        %v2203 = vadd.f32 0.0, %v2202
        %v2204 = vpop.f32.mrb[0].mxu0
        %v2205 = vpop.f32.mrb[0].mxu0
        %v2206 = vadd.f32 0.0, %v2205
        %v2207 = vpop.f32.mrb[0].mxu0
        %2208 = vdwg.mxu0
        %v2210 = vsel %vm1736, %v2091, 0
        %2212 = vmatprep.subr.bf16.mxu0 0
        %2213 = vmatpush1.bf16.msra.mxu0 %v2107
        %2214 = vmatprep.subr.bf16.mxu0 0
        %2215 = vmatpush1.bf16.msra.mxu0 0
        %2216 = vmatprep.subr.bf16.mxu0 0
        %2217 = vmatpush1.bf16.msra.mxu0 0
        %2218 = vmatprep.subr.bf16.mxu0 0
        %2219 = vmatpush1.bf16.msra.mxu0 0
        %2220 = vmatprep.subr.bf16.mxu0 0
        %2221 = vmatpush1.bf16.msra.mxu0 0
        %2222 = vmatprep.subr.bf16.mxu0 0
        %2223 = vmatpush1.bf16.msra.mxu0 0
        %2224 = vmatprep.subr.bf16.mxu0 0
        %2225 = vmatpush1.bf16.msra.mxu0 0
        %2226 = vmatprep.subr.bf16.mxu0 0
        %2227 = vmatpush1.bf16.msra.mxu0 0
        %2228 = vmatprep.subr.bf16.mxu0 0
        %2229 = vmatpush1.bf16.msra.mxu0 0
        %2230 = vmatprep.subr.bf16.mxu0 0
        %2231 = vmatpush1.bf16.msra.mxu0 0
        %2232 = vmatprep.subr.bf16.mxu0 0
        %2233 = vmatpush1.bf16.msra.mxu0 0
        %2234 = vmatprep.subr.bf16.mxu0 0
        %2235 = vmatpush1.bf16.msra.mxu0 0
        %2236 = vmatprep.subr.bf16.mxu0 0
        %2237 = vmatpush1.bf16.msra.mxu0 0
        %2238 = vmatprep.subr.bf16.mxu0 0
        %2239 = vmatpush1.bf16.msra.mxu0 0
        %2240 = vmatprep.subr.bf16.mxu0 0
        %2241 = vmatpush1.bf16.msra.mxu0 0
        %2242 = vmatprep.subr.bf16.mxu0 0
        %2243 = vmatpush1.bf16.msra.mxu0 0
        %2244 = vmatprep.mubr.bf16.mxu0 0
        %2245 = vmatmul.mubr.bf16.gmra.mrb[0].mxu0 %v2210
        %v2246 = vpop.f32.mrb[0].mxu0
        %v2247 = vadd.f32 0.0, %v2246
        %v2248 = vpop.f32.mrb[0].mxu0
        %v2249 = vpop.f32.mrb[0].mxu0
        %v2250 = vadd.f32 0.0, %v2249
        %v2251 = vpop.f32.mrb[0].mxu0
        %2252 = vdwg.mxu0
        %v2254 = vsel %vm1736, %v2092, 0
        %2256 = vmatprep.subr.bf16.mxu0 0
        %2257 = vmatpush1.bf16.msra.mxu0 %v2108
        %2258 = vmatprep.subr.bf16.mxu0 0
        %2259 = vmatpush1.bf16.msra.mxu0 0
        %2260 = vmatprep.subr.bf16.mxu0 0
        %2261 = vmatpush1.bf16.msra.mxu0 0
        %2262 = vmatprep.subr.bf16.mxu0 0
        %2263 = vmatpush1.bf16.msra.mxu0 0
        %2264 = vmatprep.subr.bf16.mxu0 0
        %2265 = vmatpush1.bf16.msra.mxu0 0
        %2266 = vmatprep.subr.bf16.mxu0 0
        %2267 = vmatpush1.bf16.msra.mxu0 0
        %2268 = vmatprep.subr.bf16.mxu0 0
        %2269 = vmatpush1.bf16.msra.mxu0 0
        %2270 = vmatprep.subr.bf16.mxu0 0
        %2271 = vmatpush1.bf16.msra.mxu0 0
        %2272 = vmatprep.subr.bf16.mxu0 0
        %2273 = vmatpush1.bf16.msra.mxu0 0
        %2274 = vmatprep.subr.bf16.mxu0 0
        %2275 = vmatpush1.bf16.msra.mxu0 0
        %2276 = vmatprep.subr.bf16.mxu0 0
        %2277 = vmatpush1.bf16.msra.mxu0 0
        %2278 = vmatprep.subr.bf16.mxu0 0
        %2279 = vmatpush1.bf16.msra.mxu0 0
        %2280 = vmatprep.subr.bf16.mxu0 0
        %2281 = vmatpush1.bf16.msra.mxu0 0
        %2282 = vmatprep.subr.bf16.mxu0 0
        %2283 = vmatpush1.bf16.msra.mxu0 0
        %2284 = vmatprep.subr.bf16.mxu0 0
        %2285 = vmatpush1.bf16.msra.mxu0 0
        %2286 = vmatprep.subr.bf16.mxu0 0
        %2287 = vmatpush1.bf16.msra.mxu0 0
        %2288 = vmatprep.mubr.bf16.mxu0 0
        %2289 = vmatmul.mubr.bf16.gmra.mrb[0].mxu0 %v2254
        %v2290 = vpop.f32.mrb[0].mxu0
        %v2291 = vadd.f32 0.0, %v2290
        %v2292 = vpop.f32.mrb[0].mxu0
        %v2293 = vpop.f32.mrb[0].mxu0
        %v2294 = vadd.f32 0.0, %v2293
        %v2295 = vpop.f32.mrb[0].mxu0
        %2296 = vdwg.mxu0
        %v2298 = vsel %vm1736, %v2093, 0
        %2300 = vmatprep.subr.bf16.mxu0 0
        %2301 = vmatpush1.bf16.msra.mxu0 %v2109
        %2302 = vmatprep.subr.bf16.mxu0 0
        %2303 = vmatpush1.bf16.msra.mxu0 0
        %2304 = vmatprep.subr.bf16.mxu0 0
        %2305 = vmatpush1.bf16.msra.mxu0 0
        %2306 = vmatprep.subr.bf16.mxu0 0
        %2307 = vmatpush1.bf16.msra.mxu0 0
        %2308 = vmatprep.subr.bf16.mxu0 0
        %2309 = vmatpush1.bf16.msra.mxu0 0
        %2310 = vmatprep.subr.bf16.mxu0 0
        %2311 = vmatpush1.bf16.msra.mxu0 0
        %2312 = vmatprep.subr.bf16.mxu0 0
        %2313 = vmatpush1.bf16.msra.mxu0 0
        %2314 = vmatprep.subr.bf16.mxu0 0
        %2315 = vmatpush1.bf16.msra.mxu0 0
        %2316 = vmatprep.subr.bf16.mxu0 0
        %2317 = vmatpush1.bf16.msra.mxu0 0
        %2318 = vmatprep.subr.bf16.mxu0 0
        %2319 = vmatpush1.bf16.msra.mxu0 0
        %2320 = vmatprep.subr.bf16.mxu0 0
        %2321 = vmatpush1.bf16.msra.mxu0 0
        %2322 = vmatprep.subr.bf16.mxu0 0
        %2323 = vmatpush1.bf16.msra.mxu0 0
        %2324 = vmatprep.subr.bf16.mxu0 0
        %2325 = vmatpush1.bf16.msra.mxu0 0
        %2326 = vmatprep.subr.bf16.mxu0 0
        %2327 = vmatpush1.bf16.msra.mxu0 0
        %2328 = vmatprep.subr.bf16.mxu0 0
        %2329 = vmatpush1.bf16.msra.mxu0 0
        %2330 = vmatprep.subr.bf16.mxu0 0
        %2331 = vmatpush1.bf16.msra.mxu0 0
        %2332 = vmatprep.mubr.bf16.mxu0 0
        %2333 = vmatmul.mubr.bf16.gmra.mrb[0].mxu0 %v2298
        %v2334 = vpop.f32.mrb[0].mxu0
        %v2335 = vadd.f32 0.0, %v2334
        %v2336 = vpop.f32.mrb[0].mxu0
        %v2337 = vpop.f32.mrb[0].mxu0
        %v2338 = vadd.f32 0.0, %v2337
        %v2339 = vpop.f32.mrb[0].mxu0
        %2340 = vdwg.mxu0
        %v2342 = vsel %vm1736, %v2094, 0
        %2344 = vmatprep.subr.bf16.mxu0 0
        %2345 = vmatpush1.bf16.msra.mxu0 %v2110
        %2346 = vmatprep.subr.bf16.mxu0 0
        %2347 = vmatpush1.bf16.msra.mxu0 0
        %2348 = vmatprep.subr.bf16.mxu0 0
        %2349 = vmatpush1.bf16.msra.mxu0 0
        %2350 = vmatprep.subr.bf16.mxu0 0
        %2351 = vmatpush1.bf16.msra.mxu0 0
        %2352 = vmatprep.subr.bf16.mxu0 0
        %2353 = vmatpush1.bf16.msra.mxu0 0
        %2354 = vmatprep.subr.bf16.mxu0 0
        %2355 = vmatpush1.bf16.msra.mxu0 0
        %2356 = vmatprep.subr.bf16.mxu0 0
        %2357 = vmatpush1.bf16.msra.mxu0 0
        %2358 = vmatprep.subr.bf16.mxu0 0
        %2359 = vmatpush1.bf16.msra.mxu0 0
        %2360 = vmatprep.subr.bf16.mxu0 0
        %2361 = vmatpush1.bf16.msra.mxu0 0
        %2362 = vmatprep.subr.bf16.mxu0 0
        %2363 = vmatpush1.bf16.msra.mxu0 0
        %2364 = vmatprep.subr.bf16.mxu0 0
        %2365 = vmatpush1.bf16.msra.mxu0 0
        %2366 = vmatprep.subr.bf16.mxu0 0
        %2367 = vmatpush1.bf16.msra.mxu0 0
        %2368 = vmatprep.subr.bf16.mxu0 0
        %2369 = vmatpush1.bf16.msra.mxu0 0
        %2370 = vmatprep.subr.bf16.mxu0 0
        %2371 = vmatpush1.bf16.msra.mxu0 0
        %2372 = vmatprep.subr.bf16.mxu0 0
        %2373 = vmatpush1.bf16.msra.mxu0 0
        %2374 = vmatprep.subr.bf16.mxu0 0
        %2375 = vmatpush1.bf16.msra.mxu0 0
        %2376 = vmatprep.mubr.bf16.mxu0 0
        %2377 = vmatmul.mubr.bf16.gmra.mrb[0].mxu0 %v2342
        %v2378 = vpop.f32.mrb[0].mxu0
        %v2379 = vadd.f32 0.0, %v2378
        %v2380 = vpop.f32.mrb[0].mxu0
        %v2381 = vpop.f32.mrb[0].mxu0
        %v2382 = vadd.f32 0.0, %v2381
        %v2383 = vpop.f32.mrb[0].mxu0
        %2384 = vdwg.mxu0
        %v2386 = vsel %vm1736, %v2095, 0
        %2388 = vmatprep.subr.bf16.mxu0 0
        %2389 = vmatpush1.bf16.msra.mxu0 %v2111
        %2390 = vmatprep.subr.bf16.mxu0 0
        %2391 = vmatpush1.bf16.msra.mxu0 0
        %2392 = vmatprep.subr.bf16.mxu0 0
        %2393 = vmatpush1.bf16.msra.mxu0 0
        %2394 = vmatprep.subr.bf16.mxu0 0
        %2395 = vmatpush1.bf16.msra.mxu0 0
        %2396 = vmatprep.subr.bf16.mxu0 0
        %2397 = vmatpush1.bf16.msra.mxu0 0
        %2398 = vmatprep.subr.bf16.mxu0 0
        %2399 = vmatpush1.bf16.msra.mxu0 0
        %2400 = vmatprep.subr.bf16.mxu0 0
        %2401 = vmatpush1.bf16.msra.mxu0 0
        %2402 = vmatprep.subr.bf16.mxu0 0
        %2403 = vmatpush1.bf16.msra.mxu0 0
        %2404 = vmatprep.subr.bf16.mxu0 0
        %2405 = vmatpush1.bf16.msra.mxu0 0
        %2406 = vmatprep.subr.bf16.mxu0 0
        %2407 = vmatpush1.bf16.msra.mxu0 0
        %2408 = vmatprep.subr.bf16.mxu0 0
        %2409 = vmatpush1.bf16.msra.mxu0 0
        %2410 = vmatprep.subr.bf16.mxu0 0
        %2411 = vmatpush1.bf16.msra.mxu0 0
        %2412 = vmatprep.subr.bf16.mxu0 0
        %2413 = vmatpush1.bf16.msra.mxu0 0
        %2414 = vmatprep.subr.bf16.mxu0 0
        %2415 = vmatpush1.bf16.msra.mxu0 0
        %2416 = vmatprep.subr.bf16.mxu0 0
        %2417 = vmatpush1.bf16.msra.mxu0 0
        %2418 = vmatprep.subr.bf16.mxu0 0
        %2419 = vmatpush1.bf16.msra.mxu0 0
        %2420 = vmatprep.mubr.bf16.mxu0 0
        %2421 = vmatmul.mubr.bf16.gmra.mrb[0].mxu0 %v2386
        %v2422 = vpop.f32.mrb[0].mxu0
        %v2423 = vadd.f32 0.0, %v2422
        %v2424 = vpop.f32.mrb[0].mxu0
        %v2425 = vpop.f32.mrb[0].mxu0
        %v2426 = vadd.f32 0.0, %v2425
        %v2427 = vpop.f32.mrb[0].mxu0
        %2428 = vdwg.mxu0
        %v2430 = vsel %vm1736, %v2096, 0
        %2432 = vmatprep.subr.bf16.mxu0 0
        %2433 = vmatpush1.bf16.msra.mxu0 %v2112
        %2434 = vmatprep.subr.bf16.mxu0 0
        %2435 = vmatpush1.bf16.msra.mxu0 0
        %2436 = vmatprep.subr.bf16.mxu0 0
        %2437 = vmatpush1.bf16.msra.mxu0 0
        %2438 = vmatprep.subr.bf16.mxu0 0
        %2439 = vmatpush1.bf16.msra.mxu0 0
        %2440 = vmatprep.subr.bf16.mxu0 0
        %2441 = vmatpush1.bf16.msra.mxu0 0
        %2442 = vmatprep.subr.bf16.mxu0 0
        %2443 = vmatpush1.bf16.msra.mxu0 0
        %2444 = vmatprep.subr.bf16.mxu0 0
        %2445 = vmatpush1.bf16.msra.mxu0 0
        %2446 = vmatprep.subr.bf16.mxu0 0
        %2447 = vmatpush1.bf16.msra.mxu0 0
        %2448 = vmatprep.subr.bf16.mxu0 0
        %2449 = vmatpush1.bf16.msra.mxu0 0
        %2450 = vmatprep.subr.bf16.mxu0 0
        %2451 = vmatpush1.bf16.msra.mxu0 0
        %2452 = vmatprep.subr.bf16.mxu0 0
        %2453 = vmatpush1.bf16.msra.mxu0 0
        %2454 = vmatprep.subr.bf16.mxu0 0
        %2455 = vmatpush1.bf16.msra.mxu0 0
        %2456 = vmatprep.subr.bf16.mxu0 0
        %2457 = vmatpush1.bf16.msra.mxu0 0
        %2458 = vmatprep.subr.bf16.mxu0 0
        %2459 = vmatpush1.bf16.msra.mxu0 0
        %2460 = vmatprep.subr.bf16.mxu0 0
        %2461 = vmatpush1.bf16.msra.mxu0 0
        %2462 = vmatprep.subr.bf16.mxu0 0
        %2463 = vmatpush1.bf16.msra.mxu0 0
        %2464 = vmatprep.mubr.bf16.mxu0 0
        %2465 = vmatmul.mubr.bf16.gmra.mrb[0].mxu0 %v2430
        %v2466 = vpop.f32.mrb[0].mxu0
        %v2467 = vadd.f32 0.0, %v2466
        %v2468 = vpop.f32.mrb[0].mxu0
        %v2469 = vpop.f32.mrb[0].mxu0
        %v2470 = vadd.f32 0.0, %v2469
        %v2471 = vpop.f32.mrb[0].mxu0
        %2472 = vdwg.mxu0
        %v2474 = vsel %vm1736, %v2097, 0
        %2476 = vmatprep.subr.bf16.mxu0 0
        %2477 = vmatpush1.bf16.msra.mxu0 %v2113
        %2478 = vmatprep.subr.bf16.mxu0 0
        %2479 = vmatpush1.bf16.msra.mxu0 0
        %2480 = vmatprep.subr.bf16.mxu0 0
        %2481 = vmatpush1.bf16.msra.mxu0 0
        %2482 = vmatprep.subr.bf16.mxu0 0
        %2483 = vmatpush1.bf16.msra.mxu0 0
        %2484 = vmatprep.subr.bf16.mxu0 0
        %2485 = vmatpush1.bf16.msra.mxu0 0
        %2486 = vmatprep.subr.bf16.mxu0 0
        %2487 = vmatpush1.bf16.msra.mxu0 0
        %2488 = vmatprep.subr.bf16.mxu0 0
        %2489 = vmatpush1.bf16.msra.mxu0 0
        %2490 = vmatprep.subr.bf16.mxu0 0
        %2491 = vmatpush1.bf16.msra.mxu0 0
        %2492 = vmatprep.subr.bf16.mxu0 0
        %2493 = vmatpush1.bf16.msra.mxu0 0
        %2494 = vmatprep.subr.bf16.mxu0 0
        %2495 = vmatpush1.bf16.msra.mxu0 0
        %2496 = vmatprep.subr.bf16.mxu0 0
        %2497 = vmatpush1.bf16.msra.mxu0 0
        %2498 = vmatprep.subr.bf16.mxu0 0
        %2499 = vmatpush1.bf16.msra.mxu0 0
        %2500 = vmatprep.subr.bf16.mxu0 0
        %2501 = vmatpush1.bf16.msra.mxu0 0
        %2502 = vmatprep.subr.bf16.mxu0 0
        %2503 = vmatpush1.bf16.msra.mxu0 0
        %2504 = vmatprep.subr.bf16.mxu0 0
        %2505 = vmatpush1.bf16.msra.mxu0 0
        %2506 = vmatprep.subr.bf16.mxu0 0
        %2507 = vmatpush1.bf16.msra.mxu0 0
        %2508 = vmatprep.mubr.bf16.mxu0 0
        %2509 = vmatmul.mubr.bf16.gmra.mrb[0].mxu0 %v2474
        %v2510 = vpop.f32.mrb[0].mxu0
        %v2511 = vadd.f32 0.0, %v2510
        %v2512 = vpop.f32.mrb[0].mxu0
        %v2513 = vpop.f32.mrb[0].mxu0
        %v2514 = vadd.f32 0.0, %v2513
        %v2515 = vpop.f32.mrb[0].mxu0
        %2516 = vdwg.mxu0
        %v2518 = vsel %vm1736, %v2098, 0
        %2520 = vmatprep.subr.bf16.mxu0 0
        %2521 = vmatpush1.bf16.msra.mxu0 %v2114
        %2522 = vmatprep.subr.bf16.mxu0 0
        %2523 = vmatpush1.bf16.msra.mxu0 0
        %2524 = vmatprep.subr.bf16.mxu0 0
        %2525 = vmatpush1.bf16.msra.mxu0 0
        %2526 = vmatprep.subr.bf16.mxu0 0
        %2527 = vmatpush1.bf16.msra.mxu0 0
        %2528 = vmatprep.subr.bf16.mxu0 0
        %2529 = vmatpush1.bf16.msra.mxu0 0
        %2530 = vmatprep.subr.bf16.mxu0 0
        %2531 = vmatpush1.bf16.msra.mxu0 0
        %2532 = vmatprep.subr.bf16.mxu0 0
        %2533 = vmatpush1.bf16.msra.mxu0 0
        %2534 = vmatprep.subr.bf16.mxu0 0
        %2535 = vmatpush1.bf16.msra.mxu0 0
        %2536 = vmatprep.subr.bf16.mxu0 0
        %2537 = vmatpush1.bf16.msra.mxu0 0
        %2538 = vmatprep.subr.bf16.mxu0 0
        %2539 = vmatpush1.bf16.msra.mxu0 0
        %2540 = vmatprep.subr.bf16.mxu0 0
        %2541 = vmatpush1.bf16.msra.mxu0 0
        %2542 = vmatprep.subr.bf16.mxu0 0
        %2543 = vmatpush1.bf16.msra.mxu0 0
        %2544 = vmatprep.subr.bf16.mxu0 0
        %2545 = vmatpush1.bf16.msra.mxu0 0
        %2546 = vmatprep.subr.bf16.mxu0 0
        %2547 = vmatpush1.bf16.msra.mxu0 0
        %2548 = vmatprep.subr.bf16.mxu0 0
        %2549 = vmatpush1.bf16.msra.mxu0 0
        %2550 = vmatprep.subr.bf16.mxu0 0
        %2551 = vmatpush1.bf16.msra.mxu0 0
        %2552 = vmatprep.mubr.bf16.mxu0 0
        %2553 = vmatmul.mubr.bf16.gmra.mrb[0].mxu0 %v2518
        %v2554 = vpop.f32.mrb[0].mxu0
        %v2555 = vadd.f32 0.0, %v2554
        %v2556 = vpop.f32.mrb[0].mxu0
        %v2557 = vpop.f32.mrb[0].mxu0
        %v2558 = vadd.f32 0.0, %v2557
        %v2559 = vpop.f32.mrb[0].mxu0
        %2560 = vdwg.mxu0
        %v2562 = vsel %vm1736, %v2099, 0
        %2564 = vmatprep.subr.bf16.mxu0 0
        %2565 = vmatpush1.bf16.msra.mxu0 %v2115
        %2566 = vmatprep.subr.bf16.mxu0 0
        %2567 = vmatpush1.bf16.msra.mxu0 0
        %2568 = vmatprep.subr.bf16.mxu0 0
        %2569 = vmatpush1.bf16.msra.mxu0 0
        %2570 = vmatprep.subr.bf16.mxu0 0
        %2571 = vmatpush1.bf16.msra.mxu0 0
        %2572 = vmatprep.subr.bf16.mxu0 0
        %2573 = vmatpush1.bf16.msra.mxu0 0
        %2574 = vmatprep.subr.bf16.mxu0 0
        %2575 = vmatpush1.bf16.msra.mxu0 0
        %2576 = vmatprep.subr.bf16.mxu0 0
        %2577 = vmatpush1.bf16.msra.mxu0 0
        %2578 = vmatprep.subr.bf16.mxu0 0
        %2579 = vmatpush1.bf16.msra.mxu0 0
        %2580 = vmatprep.subr.bf16.mxu0 0
        %2581 = vmatpush1.bf16.msra.mxu0 0
        %2582 = vmatprep.subr.bf16.mxu0 0
        %2583 = vmatpush1.bf16.msra.mxu0 0
        %2584 = vmatprep.subr.bf16.mxu0 0
        %2585 = vmatpush1.bf16.msra.mxu0 0
        %2586 = vmatprep.subr.bf16.mxu0 0
        %2587 = vmatpush1.bf16.msra.mxu0 0
        %2588 = vmatprep.subr.bf16.mxu0 0
        %2589 = vmatpush1.bf16.msra.mxu0 0
        %2590 = vmatprep.subr.bf16.mxu0 0
        %2591 = vmatpush1.bf16.msra.mxu0 0
        %2592 = vmatprep.subr.bf16.mxu0 0
        %2593 = vmatpush1.bf16.msra.mxu0 0
        %2594 = vmatprep.subr.bf16.mxu0 0
        %2595 = vmatpush1.bf16.msra.mxu0 0
        %2596 = vmatprep.mubr.bf16.mxu0 0
        %2597 = vmatmul.mubr.bf16.gmra.mrb[0].mxu0 %v2562
        %v2598 = vpop.f32.mrb[0].mxu0
        %v2599 = vadd.f32 0.0, %v2598
        %v2600 = vpop.f32.mrb[0].mxu0
        %v2601 = vpop.f32.mrb[0].mxu0
        %v2602 = vadd.f32 0.0, %v2601
        %v2603 = vpop.f32.mrb[0].mxu0
        %2604 = vdwg.mxu0
        %v2606 = vsel %vm1736, %v2100, 0
        %2608 = vmatprep.subr.bf16.mxu0 0
        %2609 = vmatpush1.bf16.msra.mxu0 %v2116
        %2610 = vmatprep.subr.bf16.mxu0 0
        %2611 = vmatpush1.bf16.msra.mxu0 0
        %2612 = vmatprep.subr.bf16.mxu0 0
        %2613 = vmatpush1.bf16.msra.mxu0 0
        %2614 = vmatprep.subr.bf16.mxu0 0
        %2615 = vmatpush1.bf16.msra.mxu0 0
        %2616 = vmatprep.subr.bf16.mxu0 0
        %2617 = vmatpush1.bf16.msra.mxu0 0
        %2618 = vmatprep.subr.bf16.mxu0 0
        %2619 = vmatpush1.bf16.msra.mxu0 0
        %2620 = vmatprep.subr.bf16.mxu0 0
        %2621 = vmatpush1.bf16.msra.mxu0 0
        %2622 = vmatprep.subr.bf16.mxu0 0
        %2623 = vmatpush1.bf16.msra.mxu0 0
        %2624 = vmatprep.subr.bf16.mxu0 0
        %2625 = vmatpush1.bf16.msra.mxu0 0
        %2626 = vmatprep.subr.bf16.mxu0 0
        %2627 = vmatpush1.bf16.msra.mxu0 0
        %2628 = vmatprep.subr.bf16.mxu0 0
        %2629 = vmatpush1.bf16.msra.mxu0 0
        %2630 = vmatprep.subr.bf16.mxu0 0
        %2631 = vmatpush1.bf16.msra.mxu0 0
        %2632 = vmatprep.subr.bf16.mxu0 0
        %2633 = vmatpush1.bf16.msra.mxu0 0
        %2634 = vmatprep.subr.bf16.mxu0 0
        %2635 = vmatpush1.bf16.msra.mxu0 0
        %2636 = vmatprep.subr.bf16.mxu0 0
        %2637 = vmatpush1.bf16.msra.mxu0 0
        %2638 = vmatprep.subr.bf16.mxu0 0
        %2639 = vmatpush1.bf16.msra.mxu0 0
        %2640 = vmatprep.mubr.bf16.mxu0 0
        %2641 = vmatmul.mubr.bf16.gmra.mrb[0].mxu0 %v2606
        %v2642 = vpop.f32.mrb[0].mxu0
        %v2643 = vadd.f32 0.0, %v2642
        %v2644 = vpop.f32.mrb[0].mxu0
        %v2645 = vpop.f32.mrb[0].mxu0
        %v2646 = vadd.f32 0.0, %v2645
        %v2647 = vpop.f32.mrb[0].mxu0
        %2648 = vdwg.mxu0
        %v2650 = vsel %vm1736, %v2101, 0
        %2652 = vmatprep.subr.bf16.mxu0 0
        %2653 = vmatpush1.bf16.msra.mxu0 %v2117
        %2654 = vmatprep.subr.bf16.mxu0 0
        %2655 = vmatpush1.bf16.msra.mxu0 0
        %2656 = vmatprep.subr.bf16.mxu0 0
        %2657 = vmatpush1.bf16.msra.mxu0 0
        %2658 = vmatprep.subr.bf16.mxu0 0
        %2659 = vmatpush1.bf16.msra.mxu0 0
        %2660 = vmatprep.subr.bf16.mxu0 0
        %2661 = vmatpush1.bf16.msra.mxu0 0
        %2662 = vmatprep.subr.bf16.mxu0 0
        %2663 = vmatpush1.bf16.msra.mxu0 0
        %2664 = vmatprep.subr.bf16.mxu0 0
        %2665 = vmatpush1.bf16.msra.mxu0 0
        %2666 = vmatprep.subr.bf16.mxu0 0
        %2667 = vmatpush1.bf16.msra.mxu0 0
        %2668 = vmatprep.subr.bf16.mxu0 0
        %2669 = vmatpush1.bf16.msra.mxu0 0
        %2670 = vmatprep.subr.bf16.mxu0 0
        %2671 = vmatpush1.bf16.msra.mxu0 0
        %2672 = vmatprep.subr.bf16.mxu0 0
        %2673 = vmatpush1.bf16.msra.mxu0 0
        %2674 = vmatprep.subr.bf16.mxu0 0
        %2675 = vmatpush1.bf16.msra.mxu0 0
        %2676 = vmatprep.subr.bf16.mxu0 0
        %2677 = vmatpush1.bf16.msra.mxu0 0
        %2678 = vmatprep.subr.bf16.mxu0 0
        %2679 = vmatpush1.bf16.msra.mxu0 0
        %2680 = vmatprep.subr.bf16.mxu0 0
        %2681 = vmatpush1.bf16.msra.mxu0 0
        %2682 = vmatprep.subr.bf16.mxu0 0
        %2683 = vmatpush1.bf16.msra.mxu0 0
        %2684 = vmatprep.mubr.bf16.mxu0 0
        %2685 = vmatmul.mubr.bf16.gmra.mrb[0].mxu0 %v2650
        %v2686 = vpop.f32.mrb[0].mxu0
        %v2687 = vadd.f32 0.0, %v2686
        %v2688 = vpop.f32.mrb[0].mxu0
        %v2689 = vpop.f32.mrb[0].mxu0
        %v2690 = vadd.f32 0.0, %v2689
        %v2691 = vpop.f32.mrb[0].mxu0
        %2692 = vdwg.mxu0
        %v2694 = vsel %vm1736, %v2102, 0
        %2696 = vmatprep.subr.bf16.mxu0 0
        %2697 = vmatpush1.bf16.msra.mxu0 %v2118
        %2698 = vmatprep.subr.bf16.mxu0 0
        %2699 = vmatpush1.bf16.msra.mxu0 0
        %2700 = vmatprep.subr.bf16.mxu0 0
        %2701 = vmatpush1.bf16.msra.mxu0 0
        %2702 = vmatprep.subr.bf16.mxu0 0
        %2703 = vmatpush1.bf16.msra.mxu0 0
        %2704 = vmatprep.subr.bf16.mxu0 0
        %2705 = vmatpush1.bf16.msra.mxu0 0
        %2706 = vmatprep.subr.bf16.mxu0 0
        %2707 = vmatpush1.bf16.msra.mxu0 0
        %2708 = vmatprep.subr.bf16.mxu0 0
        %2709 = vmatpush1.bf16.msra.mxu0 0
        %2710 = vmatprep.subr.bf16.mxu0 0
        %2711 = vmatpush1.bf16.msra.mxu0 0
        %2712 = vmatprep.subr.bf16.mxu0 0
        %2713 = vmatpush1.bf16.msra.mxu0 0
        %2714 = vmatprep.subr.bf16.mxu0 0
        %2715 = vmatpush1.bf16.msra.mxu0 0
        %2716 = vmatprep.subr.bf16.mxu0 0
        %2717 = vmatpush1.bf16.msra.mxu0 0
        %2718 = vmatprep.subr.bf16.mxu0 0
        %2719 = vmatpush1.bf16.msra.mxu0 0
        %2720 = vmatprep.subr.bf16.mxu0 0
        %2721 = vmatpush1.bf16.msra.mxu0 0
        %2722 = vmatprep.subr.bf16.mxu0 0
        %2723 = vmatpush1.bf16.msra.mxu0 0
        %2724 = vmatprep.subr.bf16.mxu0 0
        %2725 = vmatpush1.bf16.msra.mxu0 0
        %2726 = vmatprep.subr.bf16.mxu0 0
        %2727 = vmatpush1.bf16.msra.mxu0 0
        %2728 = vmatprep.mubr.bf16.mxu0 0
        %2729 = vmatmul.mubr.bf16.gmra.mrb[0].mxu0 %v2694
        %v2730 = vpop.f32.mrb[0].mxu0
        %v2731 = vadd.f32 0.0, %v2730
        %v2732 = vpop.f32.mrb[0].mxu0
        %v2733 = vpop.f32.mrb[0].mxu0
        %v2734 = vadd.f32 0.0, %v2733
        %v2735 = vpop.f32.mrb[0].mxu0
        %2736 = vdwg.mxu0
        %v2738 = vsel %vm1736, %v2103, 0
        %2740 = vmatprep.subr.bf16.mxu0 0
        %2741 = vmatpush1.bf16.msra.mxu0 %v2119
        %2742 = vmatprep.subr.bf16.mxu0 0
        %2743 = vmatpush1.bf16.msra.mxu0 0
        %2744 = vmatprep.subr.bf16.mxu0 0
        %2745 = vmatpush1.bf16.msra.mxu0 0
        %2746 = vmatprep.subr.bf16.mxu0 0
        %2747 = vmatpush1.bf16.msra.mxu0 0
        %2748 = vmatprep.subr.bf16.mxu0 0
        %2749 = vmatpush1.bf16.msra.mxu0 0
        %2750 = vmatprep.subr.bf16.mxu0 0
        %2751 = vmatpush1.bf16.msra.mxu0 0
        %2752 = vmatprep.subr.bf16.mxu0 0
        %2753 = vmatpush1.bf16.msra.mxu0 0
        %2754 = vmatprep.subr.bf16.mxu0 0
        %2755 = vmatpush1.bf16.msra.mxu0 0
        %2756 = vmatprep.subr.bf16.mxu0 0
        %2757 = vmatpush1.bf16.msra.mxu0 0
        %2758 = vmatprep.subr.bf16.mxu0 0
        %2759 = vmatpush1.bf16.msra.mxu0 0
        %2760 = vmatprep.subr.bf16.mxu0 0
        %2761 = vmatpush1.bf16.msra.mxu0 0
        %2762 = vmatprep.subr.bf16.mxu0 0
        %2763 = vmatpush1.bf16.msra.mxu0 0
        %2764 = vmatprep.subr.bf16.mxu0 0
        %2765 = vmatpush1.bf16.msra.mxu0 0
        %2766 = vmatprep.subr.bf16.mxu0 0
        %2767 = vmatpush1.bf16.msra.mxu0 0
        %2768 = vmatprep.subr.bf16.mxu0 0
        %2769 = vmatpush1.bf16.msra.mxu0 0
        %2770 = vmatprep.subr.bf16.mxu0 0
        %2771 = vmatpush1.bf16.msra.mxu0 0
        %2772 = vmatprep.mubr.bf16.mxu0 0
        %2773 = vmatmul.mubr.bf16.gmra.mrb[0].mxu0 %v2738
        %v2774 = vpop.f32.mrb[0].mxu0
        %v2775 = vadd.f32 0.0, %v2774
        %v2776 = vpop.f32.mrb[0].mxu0
        %v2777 = vpop.f32.mrb[0].mxu0
        %v2778 = vadd.f32 0.0, %v2777
        %v2779 = vpop.f32.mrb[0].mxu0
        %2780 = vdwg.mxu0
        %v2782 = vsel %vm1736, %v2104, 0
        %2784 = vmatprep.subr.bf16.mxu0 0
        %2785 = vmatpush1.bf16.msra.mxu0 %v2120
        %2786 = vmatprep.subr.bf16.mxu0 0
        %2787 = vmatpush1.bf16.msra.mxu0 0
        %2788 = vmatprep.subr.bf16.mxu0 0
        %2789 = vmatpush1.bf16.msra.mxu0 0
        %2790 = vmatprep.subr.bf16.mxu0 0
        %2791 = vmatpush1.bf16.msra.mxu0 0
        %2792 = vmatprep.subr.bf16.mxu0 0
        %2793 = vmatpush1.bf16.msra.mxu0 0
        %2794 = vmatprep.subr.bf16.mxu0 0
        %2795 = vmatpush1.bf16.msra.mxu0 0
        %2796 = vmatprep.subr.bf16.mxu0 0
        %2797 = vmatpush1.bf16.msra.mxu0 0
        %2798 = vmatprep.subr.bf16.mxu0 0
        %2799 = vmatpush1.bf16.msra.mxu0 0
        %2800 = vmatprep.subr.bf16.mxu0 0
        %2801 = vmatpush1.bf16.msra.mxu0 0
        %2802 = vmatprep.subr.bf16.mxu0 0
        %2803 = vmatpush1.bf16.msra.mxu0 0
        %2804 = vmatprep.subr.bf16.mxu0 0
        %2805 = vmatpush1.bf16.msra.mxu0 0
        %2806 = vmatprep.subr.bf16.mxu0 0
        %2807 = vmatpush1.bf16.msra.mxu0 0
        %2808 = vmatprep.subr.bf16.mxu0 0
        %2809 = vmatpush1.bf16.msra.mxu0 0
        %2810 = vmatprep.subr.bf16.mxu0 0
        %2811 = vmatpush1.bf16.msra.mxu0 0
        %2812 = vmatprep.subr.bf16.mxu0 0
        %2813 = vmatpush1.bf16.msra.mxu0 0
        %2814 = vmatprep.subr.bf16.mxu0 0
        %2815 = vmatpush1.bf16.msra.mxu0 0
        %2816 = vmatprep.mubr.bf16.mxu0 0
        %2817 = vmatmul.mubr.bf16.gmra.mrb[0].mxu0 %v2782
        %v2818 = vpop.f32.mrb[0].mxu0
        %v2819 = vadd.f32 0.0, %v2818
        %v2820 = vpop.f32.mrb[0].mxu0
        %v2821 = vpop.f32.mrb[0].mxu0
        %v2822 = vadd.f32 0.0, %v2821
        %v2823 = vpop.f32.mrb[0].mxu0
        %2824 = vdwg.mxu0
        %v2826 = vlaneseq
        %v2827 = vshrl.u32 %v2826, 7
        %v2828 = vsub.s32 0, %v2827
        %v2829 = vrot.slane %v950, %v2828
        %v2831 = vmul.f32 %v2159, %v2829
        %v2832 = vmul.f32 %v2162, %v2829
        %v2833 = vmul.f32 %v2203, %v2829
        %v2834 = vmul.f32 %v2206, %v2829
        %v2835 = vmul.f32 %v2247, %v2829
        %v2836 = vmul.f32 %v2250, %v2829
        %v2837 = vmul.f32 %v2291, %v2829
        %v2838 = vmul.f32 %v2294, %v2829
        %v2839 = vmul.f32 %v2335, %v2829
        %v2840 = vmul.f32 %v2338, %v2829
        %v2841 = vmul.f32 %v2379, %v2829
        %v2842 = vmul.f32 %v2382, %v2829
        %v2843 = vmul.f32 %v2423, %v2829
        %v2844 = vmul.f32 %v2426, %v2829
        %v2845 = vmul.f32 %v2467, %v2829
        %v2846 = vmul.f32 %v2470, %v2829
        %v2847 = vmul.f32 %v2511, %v2829
        %v2848 = vmul.f32 %v2514, %v2829
        %v2849 = vmul.f32 %v2555, %v2829
        %v2850 = vmul.f32 %v2558, %v2829
        %v2851 = vmul.f32 %v2599, %v2829
        %v2852 = vmul.f32 %v2602, %v2829
        %v2853 = vmul.f32 %v2643, %v2829
        %v2854 = vmul.f32 %v2646, %v2829
        %v2855 = vmul.f32 %v2687, %v2829
        %v2856 = vmul.f32 %v2690, %v2829
        %v2857 = vmul.f32 %v2731, %v2829
        %v2858 = vmul.f32 %v2734, %v2829
        %v2859 = vmul.f32 %v2775, %v2829
        %v2860 = vmul.f32 %v2778, %v2829
        %v2861 = vmul.f32 %v2819, %v2829
        %v2862 = vmul.f32 %v2822, %v2829
        %v2863 = vsel %vm983, %v2831, 0.0
        %2864 = vadd.xlane.f32.xlu0 %v2863
        %v2865 = vpop.xlane.xlu0 %2864
        %v2866 = vsel %vm983, %v2832, 0.0
        %2867 = vadd.xlane.f32.xlu0 %v2866
        %v2868 = vpop.xlane.xlu0 %2867
        %v2869 = vsel %vm983, %v2833, 0.0
        %2870 = vadd.xlane.f32.xlu0 %v2869
        %v2871 = vpop.xlane.xlu0 %2870
        %v2872 = vsel %vm983, %v2834, 0.0
        %2873 = vadd.xlane.f32.xlu0 %v2872
        %v2874 = vpop.xlane.xlu0 %2873
        %v2875 = vsel %vm983, %v2835, 0.0
        %2876 = vadd.xlane.f32.xlu0 %v2875
        %v2877 = vpop.xlane.xlu0 %2876
        %v2878 = vsel %vm983, %v2836, 0.0
        %2879 = vadd.xlane.f32.xlu0 %v2878
        %v2880 = vpop.xlane.xlu0 %2879
        %v2881 = vsel %vm983, %v2837, 0.0
        %2882 = vadd.xlane.f32.xlu0 %v2881
        %v2883 = vpop.xlane.xlu0 %2882
        %v2884 = vsel %vm983, %v2838, 0.0
        %2885 = vadd.xlane.f32.xlu0 %v2884
        %v2886 = vpop.xlane.xlu0 %2885
        %v2887 = vsel %vm983, %v2839, 0.0
        %2888 = vadd.xlane.f32.xlu0 %v2887
        %v2889 = vpop.xlane.xlu0 %2888
        %v2890 = vsel %vm983, %v2840, 0.0
        %2891 = vadd.xlane.f32.xlu0 %v2890
        %v2892 = vpop.xlane.xlu0 %2891
        %v2893 = vsel %vm983, %v2841, 0.0
        %2894 = vadd.xlane.f32.xlu0 %v2893
        %v2895 = vpop.xlane.xlu0 %2894
        %v2896 = vsel %vm983, %v2842, 0.0
        %2897 = vadd.xlane.f32.xlu0 %v2896
        %v2898 = vpop.xlane.xlu0 %2897
        %v2899 = vsel %vm983, %v2843, 0.0
        %2900 = vadd.xlane.f32.xlu0 %v2899
        %v2901 = vpop.xlane.xlu0 %2900
        %v2902 = vsel %vm983, %v2844, 0.0
        %2903 = vadd.xlane.f32.xlu0 %v2902
        %v2904 = vpop.xlane.xlu0 %2903
        %v2905 = vsel %vm983, %v2845, 0.0
        %2906 = vadd.xlane.f32.xlu0 %v2905
        %v2907 = vpop.xlane.xlu0 %2906
        %v2908 = vsel %vm983, %v2846, 0.0
        %2909 = vadd.xlane.f32.xlu0 %v2908
        %v2910 = vpop.xlane.xlu0 %2909
        %v2911 = vsel %vm983, %v2847, 0.0
        %2912 = vadd.xlane.f32.xlu0 %v2911
        %v2913 = vpop.xlane.xlu0 %2912
        %v2914 = vsel %vm983, %v2848, 0.0
        %2915 = vadd.xlane.f32.xlu0 %v2914
        %v2916 = vpop.xlane.xlu0 %2915
        %v2917 = vsel %vm983, %v2849, 0.0
        %2918 = vadd.xlane.f32.xlu0 %v2917
        %v2919 = vpop.xlane.xlu0 %2918
        %v2920 = vsel %vm983, %v2850, 0.0
        %2921 = vadd.xlane.f32.xlu0 %v2920
        %v2922 = vpop.xlane.xlu0 %2921
        %v2923 = vsel %vm983, %v2851, 0.0
        %2924 = vadd.xlane.f32.xlu0 %v2923
        %v2925 = vpop.xlane.xlu0 %2924
        %v2926 = vsel %vm983, %v2852, 0.0
        %2927 = vadd.xlane.f32.xlu0 %v2926
        %v2928 = vpop.xlane.xlu0 %2927
        %v2929 = vsel %vm983, %v2853, 0.0
        %2930 = vadd.xlane.f32.xlu0 %v2929
        %v2931 = vpop.xlane.xlu0 %2930
        %v2932 = vsel %vm983, %v2854, 0.0
        %2933 = vadd.xlane.f32.xlu0 %v2932
        %v2934 = vpop.xlane.xlu0 %2933
        %v2935 = vsel %vm983, %v2855, 0.0
        %2936 = vadd.xlane.f32.xlu0 %v2935
        %v2937 = vpop.xlane.xlu0 %2936
        %v2938 = vsel %vm983, %v2856, 0.0
        %2939 = vadd.xlane.f32.xlu0 %v2938
        %v2940 = vpop.xlane.xlu0 %2939
        %v2941 = vsel %vm983, %v2857, 0.0
        %2942 = vadd.xlane.f32.xlu0 %v2941
        %v2943 = vpop.xlane.xlu0 %2942
        %v2944 = vsel %vm983, %v2858, 0.0
        %2945 = vadd.xlane.f32.xlu0 %v2944
        %v2946 = vpop.xlane.xlu0 %2945
        %v2947 = vsel %vm983, %v2859, 0.0
        %2948 = vadd.xlane.f32.xlu0 %v2947
        %v2949 = vpop.xlane.xlu0 %2948
        %v2950 = vsel %vm983, %v2860, 0.0
        %2951 = vadd.xlane.f32.xlu0 %v2950
        %v2952 = vpop.xlane.xlu0 %2951
        %v2953 = vsel %vm983, %v2861, 0.0
        %2954 = vadd.xlane.f32.xlu0 %v2953
        %v2955 = vpop.xlane.xlu0 %2954
        %v2956 = vsel %vm983, %v2862, 0.0
        %2957 = vadd.xlane.f32.xlu0 %v2956
        %v2958 = vpop.xlane.xlu0 %2957
        %v2959 = vadd.f32 %v2865, 0.0
        %v2960 = vadd.f32 %v2868, 0.0
        %v2961 = vadd.f32 %v2871, 0.0
        %v2962 = vadd.f32 %v2874, 0.0
        %v2963 = vadd.f32 %v2877, 0.0
        %v2964 = vadd.f32 %v2880, 0.0
        %v2965 = vadd.f32 %v2883, 0.0
        %v2966 = vadd.f32 %v2886, 0.0
        %v2967 = vadd.f32 %v2889, 0.0
        %v2968 = vadd.f32 %v2892, 0.0
        %v2969 = vadd.f32 %v2895, 0.0
        %v2970 = vadd.f32 %v2898, 0.0
        %v2971 = vadd.f32 %v2901, 0.0
        %v2972 = vadd.f32 %v2904, 0.0
        %v2973 = vadd.f32 %v2907, 0.0
        %v2974 = vadd.f32 %v2910, 0.0
        %v2975 = vadd.f32 %v2913, 0.0
        %v2976 = vadd.f32 %v2916, 0.0
        %v2977 = vadd.f32 %v2919, 0.0
        %v2978 = vadd.f32 %v2922, 0.0
        %v2979 = vadd.f32 %v2925, 0.0
        %v2980 = vadd.f32 %v2928, 0.0
        %v2981 = vadd.f32 %v2931, 0.0
        %v2982 = vadd.f32 %v2934, 0.0
        %v2983 = vadd.f32 %v2937, 0.0
        %v2984 = vadd.f32 %v2940, 0.0
        %v2985 = vadd.f32 %v2943, 0.0
        %v2986 = vadd.f32 %v2946, 0.0
        %v2987 = vadd.f32 %v2949, 0.0
        %v2988 = vadd.f32 %v2952, 0.0
        %v2989 = vadd.f32 %v2955, 0.0
        %v2990 = vadd.f32 %v2958, 0.0
        %2992 = vrot.lane.b32.xlu0 %v951, 120
        %v2993 = vpop.permute.xlu0 %2992
        %2995 = vrot.lane.b32.xlu0 %v967, 120
        %v2996 = vpop.permute.xlu0 %2995
        %v2998 = vsel %vm983, %v2993, 0
        %v3001 = vsel %vm983, %v2996, 0
        %3003 = vmatprep.subr.bf16.mxu0 0
        %3004 = vmatpush1.bf16.xpose.msra.mxu0 %v3001
        %3005 = vmatprep.subr.bf16.mxu0 0
        %3006 = vmatpush1.bf16.xpose.msra.mxu0 0
        %3007 = vmatprep.subr.bf16.mxu0 0
        %3008 = vmatpush1.bf16.xpose.msra.mxu0 0
        %3009 = vmatprep.subr.bf16.mxu0 0
        %3010 = vmatpush1.bf16.xpose.msra.mxu0 0
        %3011 = vmatprep.subr.bf16.mxu0 0
        %3012 = vmatpush1.bf16.xpose.msra.mxu0 0
        %3013 = vmatprep.subr.bf16.mxu0 0
        %3014 = vmatpush1.bf16.xpose.msra.mxu0 0
        %3015 = vmatprep.subr.bf16.mxu0 0
        %3016 = vmatpush1.bf16.xpose.msra.mxu0 0
        %3017 = vmatprep.subr.bf16.mxu0 0
        %3018 = vmatpush1.bf16.xpose.msra.mxu0 0
        %3019 = vmatprep.subr.bf16.mxu0 0
        %3020 = vmatpush1.bf16.xpose.msra.mxu0 0
        %3021 = vmatprep.subr.bf16.mxu0 0
        %3022 = vmatpush1.bf16.xpose.msra.mxu0 0
        %3023 = vmatprep.subr.bf16.mxu0 0
        %3024 = vmatpush1.bf16.xpose.msra.mxu0 0
        %3025 = vmatprep.subr.bf16.mxu0 0
        %3026 = vmatpush1.bf16.xpose.msra.mxu0 0
        %3027 = vmatprep.subr.bf16.mxu0 0
        %3028 = vmatpush1.bf16.xpose.msra.mxu0 0
        %3029 = vmatprep.subr.bf16.mxu0 0
        %3030 = vmatpush1.bf16.xpose.msra.mxu0 0
        %3031 = vmatprep.subr.bf16.mxu0 0
        %3032 = vmatpush1.bf16.xpose.msra.mxu0 0
        %3033 = vmatprep.subr.bf16.mxu0 0
        %3034 = vmatpush1.bf16.xpose.msra.mxu0 0
        %3035 = vmatprep.mubr.bf16.mxu0 0
        %3036 = vmatmul.mubr.bf16.gmra.mrb[0].mxu0 %v2998
        %v3037 = vpop.f32.mrb[0].mxu0
        %v3038 = vadd.f32 0.0, %v3037
        %v3039 = vpop.f32.mrb[0].mxu0
        %v3040 = vpop.f32.mrb[0].mxu0
        %v3041 = vadd.f32 0.0, %v3040
        %v3042 = vpop.f32.mrb[0].mxu0
        %3043 = vdwg.mxu0
        %3045 = vrot.lane.b32.xlu0 %v952, 120
        %v3046 = vpop.permute.xlu0 %3045
        %3048 = vrot.lane.b32.xlu0 %v968, 120
        %v3049 = vpop.permute.xlu0 %3048
        %v3051 = vsel %vm983, %v3046, 0
        %v3054 = vsel %vm983, %v3049, 0
        %3056 = vmatprep.subr.bf16.mxu0 0
        %3057 = vmatpush1.bf16.xpose.msra.mxu0 %v3054
        %3058 = vmatprep.subr.bf16.mxu0 0
        %3059 = vmatpush1.bf16.xpose.msra.mxu0 0
        %3060 = vmatprep.subr.bf16.mxu0 0
        %3061 = vmatpush1.bf16.xpose.msra.mxu0 0
        %3062 = vmatprep.subr.bf16.mxu0 0
        %3063 = vmatpush1.bf16.xpose.msra.mxu0 0
        %3064 = vmatprep.subr.bf16.mxu0 0
        %3065 = vmatpush1.bf16.xpose.msra.mxu0 0
        %3066 = vmatprep.subr.bf16.mxu0 0
        %3067 = vmatpush1.bf16.xpose.msra.mxu0 0
        %3068 = vmatprep.subr.bf16.mxu0 0
        %3069 = vmatpush1.bf16.xpose.msra.mxu0 0
        %3070 = vmatprep.subr.bf16.mxu0 0
        %3071 = vmatpush1.bf16.xpose.msra.mxu0 0
        %3072 = vmatprep.subr.bf16.mxu0 0
        %3073 = vmatpush1.bf16.xpose.msra.mxu0 0
        %3074 = vmatprep.subr.bf16.mxu0 0
        %3075 = vmatpush1.bf16.xpose.msra.mxu0 0
        %3076 = vmatprep.subr.bf16.mxu0 0
        %3077 = vmatpush1.bf16.xpose.msra.mxu0 0
        %3078 = vmatprep.subr.bf16.mxu0 0
        %3079 = vmatpush1.bf16.xpose.msra.mxu0 0
        %3080 = vmatprep.subr.bf16.mxu0 0
        %3081 = vmatpush1.bf16.xpose.msra.mxu0 0
        %3082 = vmatprep.subr.bf16.mxu0 0
        %3083 = vmatpush1.bf16.xpose.msra.mxu0 0
        %3084 = vmatprep.subr.bf16.mxu0 0
        %3085 = vmatpush1.bf16.xpose.msra.mxu0 0
        %3086 = vmatprep.subr.bf16.mxu0 0
        %3087 = vmatpush1.bf16.xpose.msra.mxu0 0
        %3088 = vmatprep.mubr.bf16.mxu0 0
        %3089 = vmatmul.mubr.bf16.gmra.mrb[0].mxu0 %v3051
        %v3090 = vpop.f32.mrb[0].mxu0
        %v3091 = vadd.f32 0.0, %v3090
        %v3092 = vpop.f32.mrb[0].mxu0
        %v3093 = vpop.f32.mrb[0].mxu0
        %v3094 = vadd.f32 0.0, %v3093
        %v3095 = vpop.f32.mrb[0].mxu0
        %3096 = vdwg.mxu0
        %3098 = vrot.lane.b32.xlu0 %v953, 120
        %v3099 = vpop.permute.xlu0 %3098
        %3101 = vrot.lane.b32.xlu0 %v969, 120
        %v3102 = vpop.permute.xlu0 %3101
        %v3104 = vsel %vm983, %v3099, 0
        %v3107 = vsel %vm983, %v3102, 0
        %3109 = vmatprep.subr.bf16.mxu0 0
        %3110 = vmatpush1.bf16.xpose.msra.mxu0 %v3107
        %3111 = vmatprep.subr.bf16.mxu0 0
        %3112 = vmatpush1.bf16.xpose.msra.mxu0 0
        %3113 = vmatprep.subr.bf16.mxu0 0
        %3114 = vmatpush1.bf16.xpose.msra.mxu0 0
        %3115 = vmatprep.subr.bf16.mxu0 0
        %3116 = vmatpush1.bf16.xpose.msra.mxu0 0
        %3117 = vmatprep.subr.bf16.mxu0 0
        %3118 = vmatpush1.bf16.xpose.msra.mxu0 0
        %3119 = vmatprep.subr.bf16.mxu0 0
        %3120 = vmatpush1.bf16.xpose.msra.mxu0 0
        %3121 = vmatprep.subr.bf16.mxu0 0
        %3122 = vmatpush1.bf16.xpose.msra.mxu0 0
        %3123 = vmatprep.subr.bf16.mxu0 0
        %3124 = vmatpush1.bf16.xpose.msra.mxu0 0
        %3125 = vmatprep.subr.bf16.mxu0 0
        %3126 = vmatpush1.bf16.xpose.msra.mxu0 0
        %3127 = vmatprep.subr.bf16.mxu0 0
        %3128 = vmatpush1.bf16.xpose.msra.mxu0 0
        %3129 = vmatprep.subr.bf16.mxu0 0
        %3130 = vmatpush1.bf16.xpose.msra.mxu0 0
        %3131 = vmatprep.subr.bf16.mxu0 0
        %3132 = vmatpush1.bf16.xpose.msra.mxu0 0
        %3133 = vmatprep.subr.bf16.mxu0 0
        %3134 = vmatpush1.bf16.xpose.msra.mxu0 0
        %3135 = vmatprep.subr.bf16.mxu0 0
        %3136 = vmatpush1.bf16.xpose.msra.mxu0 0
        %3137 = vmatprep.subr.bf16.mxu0 0
        %3138 = vmatpush1.bf16.xpose.msra.mxu0 0
        %3139 = vmatprep.subr.bf16.mxu0 0
        %3140 = vmatpush1.bf16.xpose.msra.mxu0 0
        %3141 = vmatprep.mubr.bf16.mxu0 0
        %3142 = vmatmul.mubr.bf16.gmra.mrb[0].mxu0 %v3104
        %v3143 = vpop.f32.mrb[0].mxu0
        %v3144 = vadd.f32 0.0, %v3143
        %v3145 = vpop.f32.mrb[0].mxu0
        %v3146 = vpop.f32.mrb[0].mxu0
        %v3147 = vadd.f32 0.0, %v3146
        %v3148 = vpop.f32.mrb[0].mxu0
        %3149 = vdwg.mxu0
        %3151 = vrot.lane.b32.xlu0 %v954, 120
        %v3152 = vpop.permute.xlu0 %3151
        %3154 = vrot.lane.b32.xlu0 %v970, 120
        %v3155 = vpop.permute.xlu0 %3154
        %v3157 = vsel %vm983, %v3152, 0
        %v3160 = vsel %vm983, %v3155, 0
        %3162 = vmatprep.subr.bf16.mxu0 0
        %3163 = vmatpush1.bf16.xpose.msra.mxu0 %v3160
        %3164 = vmatprep.subr.bf16.mxu0 0
        %3165 = vmatpush1.bf16.xpose.msra.mxu0 0
        %3166 = vmatprep.subr.bf16.mxu0 0
        %3167 = vmatpush1.bf16.xpose.msra.mxu0 0
        %3168 = vmatprep.subr.bf16.mxu0 0
        %3169 = vmatpush1.bf16.xpose.msra.mxu0 0
        %3170 = vmatprep.subr.bf16.mxu0 0
        %3171 = vmatpush1.bf16.xpose.msra.mxu0 0
        %3172 = vmatprep.subr.bf16.mxu0 0
        %3173 = vmatpush1.bf16.xpose.msra.mxu0 0
        %3174 = vmatprep.subr.bf16.mxu0 0
        %3175 = vmatpush1.bf16.xpose.msra.mxu0 0
        %3176 = vmatprep.subr.bf16.mxu0 0
        %3177 = vmatpush1.bf16.xpose.msra.mxu0 0
        %3178 = vmatprep.subr.bf16.mxu0 0
        %3179 = vmatpush1.bf16.xpose.msra.mxu0 0
        %3180 = vmatprep.subr.bf16.mxu0 0
        %3181 = vmatpush1.bf16.xpose.msra.mxu0 0
        %3182 = vmatprep.subr.bf16.mxu0 0
        %3183 = vmatpush1.bf16.xpose.msra.mxu0 0
        %3184 = vmatprep.subr.bf16.mxu0 0
        %3185 = vmatpush1.bf16.xpose.msra.mxu0 0
        %3186 = vmatprep.subr.bf16.mxu0 0
        %3187 = vmatpush1.bf16.xpose.msra.mxu0 0
        %3188 = vmatprep.subr.bf16.mxu0 0
        %3189 = vmatpush1.bf16.xpose.msra.mxu0 0
        %3190 = vmatprep.subr.bf16.mxu0 0
        %3191 = vmatpush1.bf16.xpose.msra.mxu0 0
        %3192 = vmatprep.subr.bf16.mxu0 0
        %3193 = vmatpush1.bf16.xpose.msra.mxu0 0
        %3194 = vmatprep.mubr.bf16.mxu0 0
        %3195 = vmatmul.mubr.bf16.gmra.mrb[0].mxu0 %v3157
        %v3196 = vpop.f32.mrb[0].mxu0
        %v3197 = vadd.f32 0.0, %v3196
        %v3198 = vpop.f32.mrb[0].mxu0
        %v3199 = vpop.f32.mrb[0].mxu0
        %v3200 = vadd.f32 0.0, %v3199
        %v3201 = vpop.f32.mrb[0].mxu0
        %3202 = vdwg.mxu0
        %3204 = vrot.lane.b32.xlu0 %v955, 120
        %v3205 = vpop.permute.xlu0 %3204
        %3207 = vrot.lane.b32.xlu0 %v971, 120
        %v3208 = vpop.permute.xlu0 %3207
        %v3210 = vsel %vm983, %v3205, 0
        %v3213 = vsel %vm983, %v3208, 0
        %3215 = vmatprep.subr.bf16.mxu0 0
        %3216 = vmatpush1.bf16.xpose.msra.mxu0 %v3213
        %3217 = vmatprep.subr.bf16.mxu0 0
        %3218 = vmatpush1.bf16.xpose.msra.mxu0 0
        %3219 = vmatprep.subr.bf16.mxu0 0
        %3220 = vmatpush1.bf16.xpose.msra.mxu0 0
        %3221 = vmatprep.subr.bf16.mxu0 0
        %3222 = vmatpush1.bf16.xpose.msra.mxu0 0
        %3223 = vmatprep.subr.bf16.mxu0 0
        %3224 = vmatpush1.bf16.xpose.msra.mxu0 0
        %3225 = vmatprep.subr.bf16.mxu0 0
        %3226 = vmatpush1.bf16.xpose.msra.mxu0 0
        %3227 = vmatprep.subr.bf16.mxu0 0
        %3228 = vmatpush1.bf16.xpose.msra.mxu0 0
        %3229 = vmatprep.subr.bf16.mxu0 0
        %3230 = vmatpush1.bf16.xpose.msra.mxu0 0
        %3231 = vmatprep.subr.bf16.mxu0 0
        %3232 = vmatpush1.bf16.xpose.msra.mxu0 0
        %3233 = vmatprep.subr.bf16.mxu0 0
        %3234 = vmatpush1.bf16.xpose.msra.mxu0 0
        %3235 = vmatprep.subr.bf16.mxu0 0
        %3236 = vmatpush1.bf16.xpose.msra.mxu0 0
        %3237 = vmatprep.subr.bf16.mxu0 0
        %3238 = vmatpush1.bf16.xpose.msra.mxu0 0
        %3239 = vmatprep.subr.bf16.mxu0 0
        %3240 = vmatpush1.bf16.xpose.msra.mxu0 0
        %3241 = vmatprep.subr.bf16.mxu0 0
        %3242 = vmatpush1.bf16.xpose.msra.mxu0 0
        %3243 = vmatprep.subr.bf16.mxu0 0
        %3244 = vmatpush1.bf16.xpose.msra.mxu0 0
        %3245 = vmatprep.subr.bf16.mxu0 0
        %3246 = vmatpush1.bf16.xpose.msra.mxu0 0
        %3247 = vmatprep.mubr.bf16.mxu0 0
        %3248 = vmatmul.mubr.bf16.gmra.mrb[0].mxu0 %v3210
        %v3249 = vpop.f32.mrb[0].mxu0
        %v3250 = vadd.f32 0.0, %v3249
        %v3251 = vpop.f32.mrb[0].mxu0
        %v3252 = vpop.f32.mrb[0].mxu0
        %v3253 = vadd.f32 0.0, %v3252
        %v3254 = vpop.f32.mrb[0].mxu0
        %3255 = vdwg.mxu0
        %3257 = vrot.lane.b32.xlu0 %v956, 120
        %v3258 = vpop.permute.xlu0 %3257
        %3260 = vrot.lane.b32.xlu0 %v972, 120
        %v3261 = vpop.permute.xlu0 %3260
        %v3263 = vsel %vm983, %v3258, 0
        %v3266 = vsel %vm983, %v3261, 0
        %3268 = vmatprep.subr.bf16.mxu0 0
        %3269 = vmatpush1.bf16.xpose.msra.mxu0 %v3266
        %3270 = vmatprep.subr.bf16.mxu0 0
        %3271 = vmatpush1.bf16.xpose.msra.mxu0 0
        %3272 = vmatprep.subr.bf16.mxu0 0
        %3273 = vmatpush1.bf16.xpose.msra.mxu0 0
        %3274 = vmatprep.subr.bf16.mxu0 0
        %3275 = vmatpush1.bf16.xpose.msra.mxu0 0
        %3276 = vmatprep.subr.bf16.mxu0 0
        %3277 = vmatpush1.bf16.xpose.msra.mxu0 0
        %3278 = vmatprep.subr.bf16.mxu0 0
        %3279 = vmatpush1.bf16.xpose.msra.mxu0 0
        %3280 = vmatprep.subr.bf16.mxu0 0
        %3281 = vmatpush1.bf16.xpose.msra.mxu0 0
        %3282 = vmatprep.subr.bf16.mxu0 0
        %3283 = vmatpush1.bf16.xpose.msra.mxu0 0
        %3284 = vmatprep.subr.bf16.mxu0 0
        %3285 = vmatpush1.bf16.xpose.msra.mxu0 0
        %3286 = vmatprep.subr.bf16.mxu0 0
        %3287 = vmatpush1.bf16.xpose.msra.mxu0 0
        %3288 = vmatprep.subr.bf16.mxu0 0
        %3289 = vmatpush1.bf16.xpose.msra.mxu0 0
        %3290 = vmatprep.subr.bf16.mxu0 0
        %3291 = vmatpush1.bf16.xpose.msra.mxu0 0
        %3292 = vmatprep.subr.bf16.mxu0 0
        %3293 = vmatpush1.bf16.xpose.msra.mxu0 0
        %3294 = vmatprep.subr.bf16.mxu0 0
        %3295 = vmatpush1.bf16.xpose.msra.mxu0 0
        %3296 = vmatprep.subr.bf16.mxu0 0
        %3297 = vmatpush1.bf16.xpose.msra.mxu0 0
        %3298 = vmatprep.subr.bf16.mxu0 0
        %3299 = vmatpush1.bf16.xpose.msra.mxu0 0
        %3300 = vmatprep.mubr.bf16.mxu0 0
        %3301 = vmatmul.mubr.bf16.gmra.mrb[0].mxu0 %v3263
        %v3302 = vpop.f32.mrb[0].mxu0
        %v3303 = vadd.f32 0.0, %v3302
        %v3304 = vpop.f32.mrb[0].mxu0
        %v3305 = vpop.f32.mrb[0].mxu0
        %v3306 = vadd.f32 0.0, %v3305
        %v3307 = vpop.f32.mrb[0].mxu0
        %3308 = vdwg.mxu0
        %3310 = vrot.lane.b32.xlu0 %v957, 120
        %v3311 = vpop.permute.xlu0 %3310
        %3313 = vrot.lane.b32.xlu0 %v973, 120
        %v3314 = vpop.permute.xlu0 %3313
        %v3316 = vsel %vm983, %v3311, 0
        %v3319 = vsel %vm983, %v3314, 0
        %3321 = vmatprep.subr.bf16.mxu0 0
        %3322 = vmatpush1.bf16.xpose.msra.mxu0 %v3319
        %3323 = vmatprep.subr.bf16.mxu0 0
        %3324 = vmatpush1.bf16.xpose.msra.mxu0 0
        %3325 = vmatprep.subr.bf16.mxu0 0
        %3326 = vmatpush1.bf16.xpose.msra.mxu0 0
        %3327 = vmatprep.subr.bf16.mxu0 0
        %3328 = vmatpush1.bf16.xpose.msra.mxu0 0
        %3329 = vmatprep.subr.bf16.mxu0 0
        %3330 = vmatpush1.bf16.xpose.msra.mxu0 0
        %3331 = vmatprep.subr.bf16.mxu0 0
        %3332 = vmatpush1.bf16.xpose.msra.mxu0 0
        %3333 = vmatprep.subr.bf16.mxu0 0
        %3334 = vmatpush1.bf16.xpose.msra.mxu0 0
        %3335 = vmatprep.subr.bf16.mxu0 0
        %3336 = vmatpush1.bf16.xpose.msra.mxu0 0
        %3337 = vmatprep.subr.bf16.mxu0 0
        %3338 = vmatpush1.bf16.xpose.msra.mxu0 0
        %3339 = vmatprep.subr.bf16.mxu0 0
        %3340 = vmatpush1.bf16.xpose.msra.mxu0 0
        %3341 = vmatprep.subr.bf16.mxu0 0
        %3342 = vmatpush1.bf16.xpose.msra.mxu0 0
        %3343 = vmatprep.subr.bf16.mxu0 0
        %3344 = vmatpush1.bf16.xpose.msra.mxu0 0
        %3345 = vmatprep.subr.bf16.mxu0 0
        %3346 = vmatpush1.bf16.xpose.msra.mxu0 0
        %3347 = vmatprep.subr.bf16.mxu0 0
        %3348 = vmatpush1.bf16.xpose.msra.mxu0 0
        %3349 = vmatprep.subr.bf16.mxu0 0
        %3350 = vmatpush1.bf16.xpose.msra.mxu0 0
        %3351 = vmatprep.subr.bf16.mxu0 0
        %3352 = vmatpush1.bf16.xpose.msra.mxu0 0
        %3353 = vmatprep.mubr.bf16.mxu0 0
        %3354 = vmatmul.mubr.bf16.gmra.mrb[0].mxu0 %v3316
        %v3355 = vpop.f32.mrb[0].mxu0
        %v3356 = vadd.f32 0.0, %v3355
        %v3357 = vpop.f32.mrb[0].mxu0
        %v3358 = vpop.f32.mrb[0].mxu0
        %v3359 = vadd.f32 0.0, %v3358
        %v3360 = vpop.f32.mrb[0].mxu0
        %3361 = vdwg.mxu0
        %3363 = vrot.lane.b32.xlu0 %v958, 120
        %v3364 = vpop.permute.xlu0 %3363
        %3366 = vrot.lane.b32.xlu0 %v974, 120
        %v3367 = vpop.permute.xlu0 %3366
        %v3369 = vsel %vm983, %v3364, 0
        %v3372 = vsel %vm983, %v3367, 0
        %3374 = vmatprep.subr.bf16.mxu0 0
        %3375 = vmatpush1.bf16.xpose.msra.mxu0 %v3372
        %3376 = vmatprep.subr.bf16.mxu0 0
        %3377 = vmatpush1.bf16.xpose.msra.mxu0 0
        %3378 = vmatprep.subr.bf16.mxu0 0
        %3379 = vmatpush1.bf16.xpose.msra.mxu0 0
        %3380 = vmatprep.subr.bf16.mxu0 0
        %3381 = vmatpush1.bf16.xpose.msra.mxu0 0
        %3382 = vmatprep.subr.bf16.mxu0 0
        %3383 = vmatpush1.bf16.xpose.msra.mxu0 0
        %3384 = vmatprep.subr.bf16.mxu0 0
        %3385 = vmatpush1.bf16.xpose.msra.mxu0 0
        %3386 = vmatprep.subr.bf16.mxu0 0
        %3387 = vmatpush1.bf16.xpose.msra.mxu0 0
        %3388 = vmatprep.subr.bf16.mxu0 0
        %3389 = vmatpush1.bf16.xpose.msra.mxu0 0
        %3390 = vmatprep.subr.bf16.mxu0 0
        %3391 = vmatpush1.bf16.xpose.msra.mxu0 0
        %3392 = vmatprep.subr.bf16.mxu0 0
        %3393 = vmatpush1.bf16.xpose.msra.mxu0 0
        %3394 = vmatprep.subr.bf16.mxu0 0
        %3395 = vmatpush1.bf16.xpose.msra.mxu0 0
        %3396 = vmatprep.subr.bf16.mxu0 0
        %3397 = vmatpush1.bf16.xpose.msra.mxu0 0
        %3398 = vmatprep.subr.bf16.mxu0 0
        %3399 = vmatpush1.bf16.xpose.msra.mxu0 0
        %3400 = vmatprep.subr.bf16.mxu0 0
        %3401 = vmatpush1.bf16.xpose.msra.mxu0 0
        %3402 = vmatprep.subr.bf16.mxu0 0
        %3403 = vmatpush1.bf16.xpose.msra.mxu0 0
        %3404 = vmatprep.subr.bf16.mxu0 0
        %3405 = vmatpush1.bf16.xpose.msra.mxu0 0
        %3406 = vmatprep.mubr.bf16.mxu0 0
        %3407 = vmatmul.mubr.bf16.gmra.mrb[0].mxu0 %v3369
        %v3408 = vpop.f32.mrb[0].mxu0
        %v3409 = vadd.f32 0.0, %v3408
        %v3410 = vpop.f32.mrb[0].mxu0
        %v3411 = vpop.f32.mrb[0].mxu0
        %v3412 = vadd.f32 0.0, %v3411
        %v3413 = vpop.f32.mrb[0].mxu0
        %3414 = vdwg.mxu0
        %3416 = vrot.lane.b32.xlu0 %v959, 120
        %v3417 = vpop.permute.xlu0 %3416
        %3419 = vrot.lane.b32.xlu0 %v975, 120
        %v3420 = vpop.permute.xlu0 %3419
        %v3422 = vsel %vm983, %v3417, 0
        %v3425 = vsel %vm983, %v3420, 0
        %3427 = vmatprep.subr.bf16.mxu0 0
        %3428 = vmatpush1.bf16.xpose.msra.mxu0 %v3425
        %3429 = vmatprep.subr.bf16.mxu0 0
        %3430 = vmatpush1.bf16.xpose.msra.mxu0 0
        %3431 = vmatprep.subr.bf16.mxu0 0
        %3432 = vmatpush1.bf16.xpose.msra.mxu0 0
        %3433 = vmatprep.subr.bf16.mxu0 0
        %3434 = vmatpush1.bf16.xpose.msra.mxu0 0
        %3435 = vmatprep.subr.bf16.mxu0 0
        %3436 = vmatpush1.bf16.xpose.msra.mxu0 0
        %3437 = vmatprep.subr.bf16.mxu0 0
        %3438 = vmatpush1.bf16.xpose.msra.mxu0 0
        %3439 = vmatprep.subr.bf16.mxu0 0
        %3440 = vmatpush1.bf16.xpose.msra.mxu0 0
        %3441 = vmatprep.subr.bf16.mxu0 0
        %3442 = vmatpush1.bf16.xpose.msra.mxu0 0
        %3443 = vmatprep.subr.bf16.mxu0 0
        %3444 = vmatpush1.bf16.xpose.msra.mxu0 0
        %3445 = vmatprep.subr.bf16.mxu0 0
        %3446 = vmatpush1.bf16.xpose.msra.mxu0 0
        %3447 = vmatprep.subr.bf16.mxu0 0
        %3448 = vmatpush1.bf16.xpose.msra.mxu0 0
        %3449 = vmatprep.subr.bf16.mxu0 0
        %3450 = vmatpush1.bf16.xpose.msra.mxu0 0
        %3451 = vmatprep.subr.bf16.mxu0 0
        %3452 = vmatpush1.bf16.xpose.msra.mxu0 0
        %3453 = vmatprep.subr.bf16.mxu0 0
        %3454 = vmatpush1.bf16.xpose.msra.mxu0 0
        %3455 = vmatprep.subr.bf16.mxu0 0
        %3456 = vmatpush1.bf16.xpose.msra.mxu0 0
        %3457 = vmatprep.subr.bf16.mxu0 0
        %3458 = vmatpush1.bf16.xpose.msra.mxu0 0
        %3459 = vmatprep.mubr.bf16.mxu0 0
        %3460 = vmatmul.mubr.bf16.gmra.mrb[0].mxu0 %v3422
        %v3461 = vpop.f32.mrb[0].mxu0
        %v3462 = vadd.f32 0.0, %v3461
        %v3463 = vpop.f32.mrb[0].mxu0
        %v3464 = vpop.f32.mrb[0].mxu0
        %v3465 = vadd.f32 0.0, %v3464
        %v3466 = vpop.f32.mrb[0].mxu0
        %3467 = vdwg.mxu0
        %3469 = vrot.lane.b32.xlu0 %v960, 120
        %v3470 = vpop.permute.xlu0 %3469
        %3472 = vrot.lane.b32.xlu0 %v976, 120
        %v3473 = vpop.permute.xlu0 %3472
        %v3475 = vsel %vm983, %v3470, 0
        %v3478 = vsel %vm983, %v3473, 0
        %3480 = vmatprep.subr.bf16.mxu0 0
        %3481 = vmatpush1.bf16.xpose.msra.mxu0 %v3478
        %3482 = vmatprep.subr.bf16.mxu0 0
        %3483 = vmatpush1.bf16.xpose.msra.mxu0 0
        %3484 = vmatprep.subr.bf16.mxu0 0
        %3485 = vmatpush1.bf16.xpose.msra.mxu0 0
        %3486 = vmatprep.subr.bf16.mxu0 0
        %3487 = vmatpush1.bf16.xpose.msra.mxu0 0
        %3488 = vmatprep.subr.bf16.mxu0 0
        %3489 = vmatpush1.bf16.xpose.msra.mxu0 0
        %3490 = vmatprep.subr.bf16.mxu0 0
        %3491 = vmatpush1.bf16.xpose.msra.mxu0 0
        %3492 = vmatprep.subr.bf16.mxu0 0
        %3493 = vmatpush1.bf16.xpose.msra.mxu0 0
        %3494 = vmatprep.subr.bf16.mxu0 0
        %3495 = vmatpush1.bf16.xpose.msra.mxu0 0
        %3496 = vmatprep.subr.bf16.mxu0 0
        %3497 = vmatpush1.bf16.xpose.msra.mxu0 0
        %3498 = vmatprep.subr.bf16.mxu0 0
        %3499 = vmatpush1.bf16.xpose.msra.mxu0 0
        %3500 = vmatprep.subr.bf16.mxu0 0
        %3501 = vmatpush1.bf16.xpose.msra.mxu0 0
        %3502 = vmatprep.subr.bf16.mxu0 0
        %3503 = vmatpush1.bf16.xpose.msra.mxu0 0
        %3504 = vmatprep.subr.bf16.mxu0 0
        %3505 = vmatpush1.bf16.xpose.msra.mxu0 0
        %3506 = vmatprep.subr.bf16.mxu0 0
        %3507 = vmatpush1.bf16.xpose.msra.mxu0 0
        %3508 = vmatprep.subr.bf16.mxu0 0
        %3509 = vmatpush1.bf16.xpose.msra.mxu0 0
        %3510 = vmatprep.subr.bf16.mxu0 0
        %3511 = vmatpush1.bf16.xpose.msra.mxu0 0
        %3512 = vmatprep.mubr.bf16.mxu0 0
        %3513 = vmatmul.mubr.bf16.gmra.mrb[0].mxu0 %v3475
        %v3514 = vpop.f32.mrb[0].mxu0
        %v3515 = vadd.f32 0.0, %v3514
        %v3516 = vpop.f32.mrb[0].mxu0
        %v3517 = vpop.f32.mrb[0].mxu0
        %v3518 = vadd.f32 0.0, %v3517
        %v3519 = vpop.f32.mrb[0].mxu0
        %3520 = vdwg.mxu0
        %3522 = vrot.lane.b32.xlu0 %v961, 120
        %v3523 = vpop.permute.xlu0 %3522
        %3525 = vrot.lane.b32.xlu0 %v977, 120
        %v3526 = vpop.permute.xlu0 %3525
        %v3528 = vsel %vm983, %v3523, 0
        %v3531 = vsel %vm983, %v3526, 0
        %3533 = vmatprep.subr.bf16.mxu0 0
        %3534 = vmatpush1.bf16.xpose.msra.mxu0 %v3531
        %3535 = vmatprep.subr.bf16.mxu0 0
        %3536 = vmatpush1.bf16.xpose.msra.mxu0 0
        %3537 = vmatprep.subr.bf16.mxu0 0
        %3538 = vmatpush1.bf16.xpose.msra.mxu0 0
        %3539 = vmatprep.subr.bf16.mxu0 0
        %3540 = vmatpush1.bf16.xpose.msra.mxu0 0
        %3541 = vmatprep.subr.bf16.mxu0 0
        %3542 = vmatpush1.bf16.xpose.msra.mxu0 0
        %3543 = vmatprep.subr.bf16.mxu0 0
        %3544 = vmatpush1.bf16.xpose.msra.mxu0 0
        %3545 = vmatprep.subr.bf16.mxu0 0
        %3546 = vmatpush1.bf16.xpose.msra.mxu0 0
        %3547 = vmatprep.subr.bf16.mxu0 0
        %3548 = vmatpush1.bf16.xpose.msra.mxu0 0
        %3549 = vmatprep.subr.bf16.mxu0 0
        %3550 = vmatpush1.bf16.xpose.msra.mxu0 0
        %3551 = vmatprep.subr.bf16.mxu0 0
        %3552 = vmatpush1.bf16.xpose.msra.mxu0 0
        %3553 = vmatprep.subr.bf16.mxu0 0
        %3554 = vmatpush1.bf16.xpose.msra.mxu0 0
        %3555 = vmatprep.subr.bf16.mxu0 0
        %3556 = vmatpush1.bf16.xpose.msra.mxu0 0
        %3557 = vmatprep.subr.bf16.mxu0 0
        %3558 = vmatpush1.bf16.xpose.msra.mxu0 0
        %3559 = vmatprep.subr.bf16.mxu0 0
        %3560 = vmatpush1.bf16.xpose.msra.mxu0 0
        %3561 = vmatprep.subr.bf16.mxu0 0
        %3562 = vmatpush1.bf16.xpose.msra.mxu0 0
        %3563 = vmatprep.subr.bf16.mxu0 0
        %3564 = vmatpush1.bf16.xpose.msra.mxu0 0
        %3565 = vmatprep.mubr.bf16.mxu0 0
        %3566 = vmatmul.mubr.bf16.gmra.mrb[0].mxu0 %v3528
        %v3567 = vpop.f32.mrb[0].mxu0
        %v3568 = vadd.f32 0.0, %v3567
        %v3569 = vpop.f32.mrb[0].mxu0
        %v3570 = vpop.f32.mrb[0].mxu0
        %v3571 = vadd.f32 0.0, %v3570
        %v3572 = vpop.f32.mrb[0].mxu0
        %3573 = vdwg.mxu0
        %3575 = vrot.lane.b32.xlu0 %v962, 120
        %v3576 = vpop.permute.xlu0 %3575
        %3578 = vrot.lane.b32.xlu0 %v978, 120
        %v3579 = vpop.permute.xlu0 %3578
        %v3581 = vsel %vm983, %v3576, 0
        %v3584 = vsel %vm983, %v3579, 0
        %3586 = vmatprep.subr.bf16.mxu0 0
        %3587 = vmatpush1.bf16.xpose.msra.mxu0 %v3584
        %3588 = vmatprep.subr.bf16.mxu0 0
        %3589 = vmatpush1.bf16.xpose.msra.mxu0 0
        %3590 = vmatprep.subr.bf16.mxu0 0
        %3591 = vmatpush1.bf16.xpose.msra.mxu0 0
        %3592 = vmatprep.subr.bf16.mxu0 0
        %3593 = vmatpush1.bf16.xpose.msra.mxu0 0
        %3594 = vmatprep.subr.bf16.mxu0 0
        %3595 = vmatpush1.bf16.xpose.msra.mxu0 0
        %3596 = vmatprep.subr.bf16.mxu0 0
        %3597 = vmatpush1.bf16.xpose.msra.mxu0 0
        %3598 = vmatprep.subr.bf16.mxu0 0
        %3599 = vmatpush1.bf16.xpose.msra.mxu0 0
        %3600 = vmatprep.subr.bf16.mxu0 0
        %3601 = vmatpush1.bf16.xpose.msra.mxu0 0
        %3602 = vmatprep.subr.bf16.mxu0 0
        %3603 = vmatpush1.bf16.xpose.msra.mxu0 0
        %3604 = vmatprep.subr.bf16.mxu0 0
        %3605 = vmatpush1.bf16.xpose.msra.mxu0 0
        %3606 = vmatprep.subr.bf16.mxu0 0
        %3607 = vmatpush1.bf16.xpose.msra.mxu0 0
        %3608 = vmatprep.subr.bf16.mxu0 0
        %3609 = vmatpush1.bf16.xpose.msra.mxu0 0
        %3610 = vmatprep.subr.bf16.mxu0 0
        %3611 = vmatpush1.bf16.xpose.msra.mxu0 0
        %3612 = vmatprep.subr.bf16.mxu0 0
        %3613 = vmatpush1.bf16.xpose.msra.mxu0 0
        %3614 = vmatprep.subr.bf16.mxu0 0
        %3615 = vmatpush1.bf16.xpose.msra.mxu0 0
        %3616 = vmatprep.subr.bf16.mxu0 0
        %3617 = vmatpush1.bf16.xpose.msra.mxu0 0
        %3618 = vmatprep.mubr.bf16.mxu0 0
        %3619 = vmatmul.mubr.bf16.gmra.mrb[0].mxu0 %v3581
        %v3620 = vpop.f32.mrb[0].mxu0
        %v3621 = vadd.f32 0.0, %v3620
        %v3622 = vpop.f32.mrb[0].mxu0
        %v3623 = vpop.f32.mrb[0].mxu0
        %v3624 = vadd.f32 0.0, %v3623
        %v3625 = vpop.f32.mrb[0].mxu0
        %3626 = vdwg.mxu0
        %3628 = vrot.lane.b32.xlu0 %v963, 120
        %v3629 = vpop.permute.xlu0 %3628
        %3631 = vrot.lane.b32.xlu0 %v979, 120
        %v3632 = vpop.permute.xlu0 %3631
        %v3634 = vsel %vm983, %v3629, 0
        %v3637 = vsel %vm983, %v3632, 0
        %3639 = vmatprep.subr.bf16.mxu0 0
        %3640 = vmatpush1.bf16.xpose.msra.mxu0 %v3637
        %3641 = vmatprep.subr.bf16.mxu0 0
        %3642 = vmatpush1.bf16.xpose.msra.mxu0 0
        %3643 = vmatprep.subr.bf16.mxu0 0
        %3644 = vmatpush1.bf16.xpose.msra.mxu0 0
        %3645 = vmatprep.subr.bf16.mxu0 0
        %3646 = vmatpush1.bf16.xpose.msra.mxu0 0
        %3647 = vmatprep.subr.bf16.mxu0 0
        %3648 = vmatpush1.bf16.xpose.msra.mxu0 0
        %3649 = vmatprep.subr.bf16.mxu0 0
        %3650 = vmatpush1.bf16.xpose.msra.mxu0 0
        %3651 = vmatprep.subr.bf16.mxu0 0
        %3652 = vmatpush1.bf16.xpose.msra.mxu0 0
        %3653 = vmatprep.subr.bf16.mxu0 0
        %3654 = vmatpush1.bf16.xpose.msra.mxu0 0
        %3655 = vmatprep.subr.bf16.mxu0 0
        %3656 = vmatpush1.bf16.xpose.msra.mxu0 0
        %3657 = vmatprep.subr.bf16.mxu0 0
        %3658 = vmatpush1.bf16.xpose.msra.mxu0 0
        %3659 = vmatprep.subr.bf16.mxu0 0
        %3660 = vmatpush1.bf16.xpose.msra.mxu0 0
        %3661 = vmatprep.subr.bf16.mxu0 0
        %3662 = vmatpush1.bf16.xpose.msra.mxu0 0
        %3663 = vmatprep.subr.bf16.mxu0 0
        %3664 = vmatpush1.bf16.xpose.msra.mxu0 0
        %3665 = vmatprep.subr.bf16.mxu0 0
        %3666 = vmatpush1.bf16.xpose.msra.mxu0 0
        %3667 = vmatprep.subr.bf16.mxu0 0
        %3668 = vmatpush1.bf16.xpose.msra.mxu0 0
        %3669 = vmatprep.subr.bf16.mxu0 0
        %3670 = vmatpush1.bf16.xpose.msra.mxu0 0
        %3671 = vmatprep.mubr.bf16.mxu0 0
        %3672 = vmatmul.mubr.bf16.gmra.mrb[0].mxu0 %v3634
        %v3673 = vpop.f32.mrb[0].mxu0
        %v3674 = vadd.f32 0.0, %v3673
        %v3675 = vpop.f32.mrb[0].mxu0
        %v3676 = vpop.f32.mrb[0].mxu0
        %v3677 = vadd.f32 0.0, %v3676
        %v3678 = vpop.f32.mrb[0].mxu0
        %3679 = vdwg.mxu0
        %3681 = vrot.lane.b32.xlu0 %v964, 120
        %v3682 = vpop.permute.xlu0 %3681
        %3684 = vrot.lane.b32.xlu0 %v980, 120
        %v3685 = vpop.permute.xlu0 %3684
        %v3687 = vsel %vm983, %v3682, 0
        %v3690 = vsel %vm983, %v3685, 0
        %3692 = vmatprep.subr.bf16.mxu0 0
        %3693 = vmatpush1.bf16.xpose.msra.mxu0 %v3690
        %3694 = vmatprep.subr.bf16.mxu0 0
        %3695 = vmatpush1.bf16.xpose.msra.mxu0 0
        %3696 = vmatprep.subr.bf16.mxu0 0
        %3697 = vmatpush1.bf16.xpose.msra.mxu0 0
        %3698 = vmatprep.subr.bf16.mxu0 0
        %3699 = vmatpush1.bf16.xpose.msra.mxu0 0
        %3700 = vmatprep.subr.bf16.mxu0 0
        %3701 = vmatpush1.bf16.xpose.msra.mxu0 0
        %3702 = vmatprep.subr.bf16.mxu0 0
        %3703 = vmatpush1.bf16.xpose.msra.mxu0 0
        %3704 = vmatprep.subr.bf16.mxu0 0
        %3705 = vmatpush1.bf16.xpose.msra.mxu0 0
        %3706 = vmatprep.subr.bf16.mxu0 0
        %3707 = vmatpush1.bf16.xpose.msra.mxu0 0
        %3708 = vmatprep.subr.bf16.mxu0 0
        %3709 = vmatpush1.bf16.xpose.msra.mxu0 0
        %3710 = vmatprep.subr.bf16.mxu0 0
        %3711 = vmatpush1.bf16.xpose.msra.mxu0 0
        %3712 = vmatprep.subr.bf16.mxu0 0
        %3713 = vmatpush1.bf16.xpose.msra.mxu0 0
        %3714 = vmatprep.subr.bf16.mxu0 0
        %3715 = vmatpush1.bf16.xpose.msra.mxu0 0
        %3716 = vmatprep.subr.bf16.mxu0 0
        %3717 = vmatpush1.bf16.xpose.msra.mxu0 0
        %3718 = vmatprep.subr.bf16.mxu0 0
        %3719 = vmatpush1.bf16.xpose.msra.mxu0 0
        %3720 = vmatprep.subr.bf16.mxu0 0
        %3721 = vmatpush1.bf16.xpose.msra.mxu0 0
        %3722 = vmatprep.subr.bf16.mxu0 0
        %3723 = vmatpush1.bf16.xpose.msra.mxu0 0
        %3724 = vmatprep.mubr.bf16.mxu0 0
        %3725 = vmatmul.mubr.bf16.gmra.mrb[0].mxu0 %v3687
        %v3726 = vpop.f32.mrb[0].mxu0
        %v3727 = vadd.f32 0.0, %v3726
        %v3728 = vpop.f32.mrb[0].mxu0
        %v3729 = vpop.f32.mrb[0].mxu0
        %v3730 = vadd.f32 0.0, %v3729
        %v3731 = vpop.f32.mrb[0].mxu0
        %3732 = vdwg.mxu0
        %3734 = vrot.lane.b32.xlu0 %v965, 120
        %v3735 = vpop.permute.xlu0 %3734
        %3737 = vrot.lane.b32.xlu0 %v981, 120
        %v3738 = vpop.permute.xlu0 %3737
        %v3740 = vsel %vm983, %v3735, 0
        %v3743 = vsel %vm983, %v3738, 0
        %3745 = vmatprep.subr.bf16.mxu0 0
        %3746 = vmatpush1.bf16.xpose.msra.mxu0 %v3743
        %3747 = vmatprep.subr.bf16.mxu0 0
        %3748 = vmatpush1.bf16.xpose.msra.mxu0 0
        %3749 = vmatprep.subr.bf16.mxu0 0
        %3750 = vmatpush1.bf16.xpose.msra.mxu0 0
        %3751 = vmatprep.subr.bf16.mxu0 0
        %3752 = vmatpush1.bf16.xpose.msra.mxu0 0
        %3753 = vmatprep.subr.bf16.mxu0 0
        %3754 = vmatpush1.bf16.xpose.msra.mxu0 0
        %3755 = vmatprep.subr.bf16.mxu0 0
        %3756 = vmatpush1.bf16.xpose.msra.mxu0 0
        %3757 = vmatprep.subr.bf16.mxu0 0
        %3758 = vmatpush1.bf16.xpose.msra.mxu0 0
        %3759 = vmatprep.subr.bf16.mxu0 0
        %3760 = vmatpush1.bf16.xpose.msra.mxu0 0
        %3761 = vmatprep.subr.bf16.mxu0 0
        %3762 = vmatpush1.bf16.xpose.msra.mxu0 0
        %3763 = vmatprep.subr.bf16.mxu0 0
        %3764 = vmatpush1.bf16.xpose.msra.mxu0 0
        %3765 = vmatprep.subr.bf16.mxu0 0
        %3766 = vmatpush1.bf16.xpose.msra.mxu0 0
        %3767 = vmatprep.subr.bf16.mxu0 0
        %3768 = vmatpush1.bf16.xpose.msra.mxu0 0
        %3769 = vmatprep.subr.bf16.mxu0 0
        %3770 = vmatpush1.bf16.xpose.msra.mxu0 0
        %3771 = vmatprep.subr.bf16.mxu0 0
        %3772 = vmatpush1.bf16.xpose.msra.mxu0 0
        %3773 = vmatprep.subr.bf16.mxu0 0
        %3774 = vmatpush1.bf16.xpose.msra.mxu0 0
        %3775 = vmatprep.subr.bf16.mxu0 0
        %3776 = vmatpush1.bf16.xpose.msra.mxu0 0
        %3777 = vmatprep.mubr.bf16.mxu0 0
        %3778 = vmatmul.mubr.bf16.gmra.mrb[0].mxu0 %v3740
        %v3779 = vpop.f32.mrb[0].mxu0
        %v3780 = vadd.f32 0.0, %v3779
        %v3781 = vpop.f32.mrb[0].mxu0
        %v3782 = vpop.f32.mrb[0].mxu0
        %v3783 = vadd.f32 0.0, %v3782
        %v3784 = vpop.f32.mrb[0].mxu0
        %3785 = vdwg.mxu0
        %3787 = vrot.lane.b32.xlu0 %v966, 120
        %v3788 = vpop.permute.xlu0 %3787
        %3790 = vrot.lane.b32.xlu0 %v982, 120
        %v3791 = vpop.permute.xlu0 %3790
        %v3793 = vsel %vm983, %v3788, 0
        %v3796 = vsel %vm983, %v3791, 0
        %3798 = vmatprep.subr.bf16.mxu0 0
        %3799 = vmatpush1.bf16.xpose.msra.mxu0 %v3796
        %3800 = vmatprep.subr.bf16.mxu0 0
        %3801 = vmatpush1.bf16.xpose.msra.mxu0 0
        %3802 = vmatprep.subr.bf16.mxu0 0
        %3803 = vmatpush1.bf16.xpose.msra.mxu0 0
        %3804 = vmatprep.subr.bf16.mxu0 0
        %3805 = vmatpush1.bf16.xpose.msra.mxu0 0
        %3806 = vmatprep.subr.bf16.mxu0 0
        %3807 = vmatpush1.bf16.xpose.msra.mxu0 0
        %3808 = vmatprep.subr.bf16.mxu0 0
        %3809 = vmatpush1.bf16.xpose.msra.mxu0 0
        %3810 = vmatprep.subr.bf16.mxu0 0
        %3811 = vmatpush1.bf16.xpose.msra.mxu0 0
        %3812 = vmatprep.subr.bf16.mxu0 0
        %3813 = vmatpush1.bf16.xpose.msra.mxu0 0
        %3814 = vmatprep.subr.bf16.mxu0 0
        %3815 = vmatpush1.bf16.xpose.msra.mxu0 0
        %3816 = vmatprep.subr.bf16.mxu0 0
        %3817 = vmatpush1.bf16.xpose.msra.mxu0 0
        %3818 = vmatprep.subr.bf16.mxu0 0
        %3819 = vmatpush1.bf16.xpose.msra.mxu0 0
        %3820 = vmatprep.subr.bf16.mxu0 0
        %3821 = vmatpush1.bf16.xpose.msra.mxu0 0
        %3822 = vmatprep.subr.bf16.mxu0 0
        %3823 = vmatpush1.bf16.xpose.msra.mxu0 0
        %3824 = vmatprep.subr.bf16.mxu0 0
        %3825 = vmatpush1.bf16.xpose.msra.mxu0 0
        %3826 = vmatprep.subr.bf16.mxu0 0
        %3827 = vmatpush1.bf16.xpose.msra.mxu0 0
        %3828 = vmatprep.subr.bf16.mxu0 0
        %3829 = vmatpush1.bf16.xpose.msra.mxu0 0
        %3830 = vmatprep.mubr.bf16.mxu0 0
        %3831 = vmatmul.mubr.bf16.gmra.mrb[0].mxu0 %v3793
        %v3832 = vpop.f32.mrb[0].mxu0
        %v3833 = vadd.f32 0.0, %v3832
        %v3834 = vpop.f32.mrb[0].mxu0
        %v3835 = vpop.f32.mrb[0].mxu0
        %v3836 = vadd.f32 0.0, %v3835
        %v3837 = vpop.f32.mrb[0].mxu0
        %3838 = vdwg.mxu0
        %v3839 = vsel %vm1736, %v3038, -inf
        %3840 = vmax.xlane.f32.xlu0 %v3839
        %v3841 = vpop.xlane.xlu0 %3840
        %v3842 = vsel %vm1736, %v3041, -inf
        %3843 = vmax.xlane.f32.xlu0 %v3842
        %v3844 = vpop.xlane.xlu0 %3843
        %v3845 = vsel %vm1736, %v3091, -inf
        %3846 = vmax.xlane.f32.xlu0 %v3845
        %v3847 = vpop.xlane.xlu0 %3846
        %v3848 = vsel %vm1736, %v3094, -inf
        %3849 = vmax.xlane.f32.xlu0 %v3848
        %v3850 = vpop.xlane.xlu0 %3849
        %v3851 = vsel %vm1736, %v3144, -inf
        %3852 = vmax.xlane.f32.xlu0 %v3851
        %v3853 = vpop.xlane.xlu0 %3852
        %v3854 = vsel %vm1736, %v3147, -inf
        %3855 = vmax.xlane.f32.xlu0 %v3854
        %v3856 = vpop.xlane.xlu0 %3855
        %v3857 = vsel %vm1736, %v3197, -inf
        %3858 = vmax.xlane.f32.xlu0 %v3857
        %v3859 = vpop.xlane.xlu0 %3858
        %v3860 = vsel %vm1736, %v3200, -inf
        %3861 = vmax.xlane.f32.xlu0 %v3860
        %v3862 = vpop.xlane.xlu0 %3861
        %v3863 = vsel %vm1736, %v3250, -inf
        %3864 = vmax.xlane.f32.xlu0 %v3863
        %v3865 = vpop.xlane.xlu0 %3864
        %v3866 = vsel %vm1736, %v3253, -inf
        %3867 = vmax.xlane.f32.xlu0 %v3866
        %v3868 = vpop.xlane.xlu0 %3867
        %v3869 = vsel %vm1736, %v3303, -inf
        %3870 = vmax.xlane.f32.xlu0 %v3869
        %v3871 = vpop.xlane.xlu0 %3870
        %v3872 = vsel %vm1736, %v3306, -inf
        %3873 = vmax.xlane.f32.xlu0 %v3872
        %v3874 = vpop.xlane.xlu0 %3873
        %v3875 = vsel %vm1736, %v3356, -inf
        %3876 = vmax.xlane.f32.xlu0 %v3875
        %v3877 = vpop.xlane.xlu0 %3876
        %v3878 = vsel %vm1736, %v3359, -inf
        %3879 = vmax.xlane.f32.xlu0 %v3878
        %v3880 = vpop.xlane.xlu0 %3879
        %v3881 = vsel %vm1736, %v3409, -inf
        %3882 = vmax.xlane.f32.xlu0 %v3881
        %v3883 = vpop.xlane.xlu0 %3882
        %v3884 = vsel %vm1736, %v3412, -inf
        %3885 = vmax.xlane.f32.xlu0 %v3884
        %v3886 = vpop.xlane.xlu0 %3885
        %v3887 = vsel %vm1736, %v3462, -inf
        %3888 = vmax.xlane.f32.xlu0 %v3887
        %v3889 = vpop.xlane.xlu0 %3888
        %v3890 = vsel %vm1736, %v3465, -inf
        %3891 = vmax.xlane.f32.xlu0 %v3890
        %v3892 = vpop.xlane.xlu0 %3891
        %v3893 = vsel %vm1736, %v3515, -inf
        %3894 = vmax.xlane.f32.xlu0 %v3893
        %v3895 = vpop.xlane.xlu0 %3894
        %v3896 = vsel %vm1736, %v3518, -inf
        %3897 = vmax.xlane.f32.xlu0 %v3896
        %v3898 = vpop.xlane.xlu0 %3897
        %v3899 = vsel %vm1736, %v3568, -inf
        %3900 = vmax.xlane.f32.xlu0 %v3899
        %v3901 = vpop.xlane.xlu0 %3900
        %v3902 = vsel %vm1736, %v3571, -inf
        %3903 = vmax.xlane.f32.xlu0 %v3902
        %v3904 = vpop.xlane.xlu0 %3903
        %v3905 = vsel %vm1736, %v3621, -inf
        %3906 = vmax.xlane.f32.xlu0 %v3905
        %v3907 = vpop.xlane.xlu0 %3906
        %v3908 = vsel %vm1736, %v3624, -inf
        %3909 = vmax.xlane.f32.xlu0 %v3908
        %v3910 = vpop.xlane.xlu0 %3909
        %v3911 = vsel %vm1736, %v3674, -inf
        %3912 = vmax.xlane.f32.xlu0 %v3911
        %v3913 = vpop.xlane.xlu0 %3912
        %v3914 = vsel %vm1736, %v3677, -inf
        %3915 = vmax.xlane.f32.xlu0 %v3914
        %v3916 = vpop.xlane.xlu0 %3915
        %v3917 = vsel %vm1736, %v3727, -inf
        %3918 = vmax.xlane.f32.xlu0 %v3917
        %v3919 = vpop.xlane.xlu0 %3918
        %v3920 = vsel %vm1736, %v3730, -inf
        %3921 = vmax.xlane.f32.xlu0 %v3920
        %v3922 = vpop.xlane.xlu0 %3921
        %v3923 = vsel %vm1736, %v3780, -inf
        %3924 = vmax.xlane.f32.xlu0 %v3923
        %v3925 = vpop.xlane.xlu0 %3924
        %v3926 = vsel %vm1736, %v3783, -inf
        %3927 = vmax.xlane.f32.xlu0 %v3926
        %v3928 = vpop.xlane.xlu0 %3927
        %v3929 = vsel %vm1736, %v3833, -inf
        %3930 = vmax.xlane.f32.xlu0 %v3929
        %v3931 = vpop.xlane.xlu0 %3930
        %v3932 = vsel %vm1736, %v3836, -inf
        %3933 = vmax.xlane.f32.xlu0 %v3932
        %v3934 = vpop.xlane.xlu0 %3933
        %v3935 = vsub.f32 %v3038, %v3841
        %v3936 = vsub.f32 %v3041, %v3844
        %v3937 = vsub.f32 %v3091, %v3847
        %v3938 = vsub.f32 %v3094, %v3850
        %v3939 = vsub.f32 %v3144, %v3853
        %v3940 = vsub.f32 %v3147, %v3856
        %v3941 = vsub.f32 %v3197, %v3859
        %v3942 = vsub.f32 %v3200, %v3862
        %v3943 = vsub.f32 %v3250, %v3865
        %v3944 = vsub.f32 %v3253, %v3868
        %v3945 = vsub.f32 %v3303, %v3871
        %v3946 = vsub.f32 %v3306, %v3874
        %v3947 = vsub.f32 %v3356, %v3877
        %v3948 = vsub.f32 %v3359, %v3880
        %v3949 = vsub.f32 %v3409, %v3883
        %v3950 = vsub.f32 %v3412, %v3886
        %v3951 = vsub.f32 %v3462, %v3889
        %v3952 = vsub.f32 %v3465, %v3892
        %v3953 = vsub.f32 %v3515, %v3895
        %v3954 = vsub.f32 %v3518, %v3898
        %v3955 = vsub.f32 %v3568, %v3901
        %v3956 = vsub.f32 %v3571, %v3904
        %v3957 = vsub.f32 %v3621, %v3907
        %v3958 = vsub.f32 %v3624, %v3910
        %v3959 = vsub.f32 %v3674, %v3913
        %v3960 = vsub.f32 %v3677, %v3916
        %v3961 = vsub.f32 %v3727, %v3919
        %v3962 = vsub.f32 %v3730, %v3922
        %v3963 = vsub.f32 %v3780, %v3925
        %v3964 = vsub.f32 %v3783, %v3928
        %v3965 = vsub.f32 %v3833, %v3931
        %v3966 = vsub.f32 %v3836, %v3934
        %v3967 = vmul.f32 %v3935, 1.442695
        %v3968 = vpow.pop %v3967
        %v3969 = vmul.f32 %v3936, 1.442695
        %v3970 = vpow.pop %v3969
        %v3971 = vmul.f32 %v3937, 1.442695
        %v3972 = vpow.pop %v3971
        %v3973 = vmul.f32 %v3938, 1.442695
        %v3974 = vpow.pop %v3973
        %v3975 = vmul.f32 %v3939, 1.442695
        %v3976 = vpow.pop %v3975
        %v3977 = vmul.f32 %v3940, 1.442695
        %v3978 = vpow.pop %v3977
        %v3979 = vmul.f32 %v3941, 1.442695
        %v3980 = vpow.pop %v3979
        %v3981 = vmul.f32 %v3942, 1.442695
        %v3982 = vpow.pop %v3981
        %v3983 = vmul.f32 %v3943, 1.442695
        %v3984 = vpow.pop %v3983
        %v3985 = vmul.f32 %v3944, 1.442695
        %v3986 = vpow.pop %v3985
        %v3987 = vmul.f32 %v3945, 1.442695
        %v3988 = vpow.pop %v3987
        %v3989 = vmul.f32 %v3946, 1.442695
        %v3990 = vpow.pop %v3989
        %v3991 = vmul.f32 %v3947, 1.442695
        %v3992 = vpow.pop %v3991
        %v3993 = vmul.f32 %v3948, 1.442695
        %v3994 = vpow.pop %v3993
        %v3995 = vmul.f32 %v3949, 1.442695
        %v3996 = vpow.pop %v3995
        %v3997 = vmul.f32 %v3950, 1.442695
        %v3998 = vpow.pop %v3997
        %v3999 = vmul.f32 %v3951, 1.442695
        %v4000 = vpow.pop %v3999
        %v4001 = vmul.f32 %v3952, 1.442695
        %v4002 = vpow.pop %v4001
        %v4003 = vmul.f32 %v3953, 1.442695
        %v4004 = vpow.pop %v4003
        %v4005 = vmul.f32 %v3954, 1.442695
        %v4006 = vpow.pop %v4005
        %v4007 = vmul.f32 %v3955, 1.442695
        %v4008 = vpow.pop %v4007
        %v4009 = vmul.f32 %v3956, 1.442695
        %v4010 = vpow.pop %v4009
        %v4011 = vmul.f32 %v3957, 1.442695
        %v4012 = vpow.pop %v4011
        %v4013 = vmul.f32 %v3958, 1.442695
        %v4014 = vpow.pop %v4013
        %v4015 = vmul.f32 %v3959, 1.442695
        %v4016 = vpow.pop %v4015
        %v4017 = vmul.f32 %v3960, 1.442695
        %v4018 = vpow.pop %v4017
        %v4019 = vmul.f32 %v3961, 1.442695
        %v4020 = vpow.pop %v4019
        %v4021 = vmul.f32 %v3962, 1.442695
        %v4022 = vpow.pop %v4021
        %v4023 = vmul.f32 %v3963, 1.442695
        %v4024 = vpow.pop %v4023
        %v4025 = vmul.f32 %v3964, 1.442695
        %v4026 = vpow.pop %v4025
        %v4027 = vmul.f32 %v3965, 1.442695
        %v4028 = vpow.pop %v4027
        %v4029 = vmul.f32 %v3966, 1.442695
        %v4030 = vpow.pop %v4029
        %v4031 = vsel %vm1736, %v3968, 0.0
        %4032 = vadd.xlane.f32.xlu0 %v4031
        %v4033 = vpop.xlane.xlu0 %4032
        %v4034 = vsel %vm1736, %v3970, 0.0
        %4035 = vadd.xlane.f32.xlu0 %v4034
        %v4036 = vpop.xlane.xlu0 %4035
        %v4037 = vsel %vm1736, %v3972, 0.0
        %4038 = vadd.xlane.f32.xlu0 %v4037
        %v4039 = vpop.xlane.xlu0 %4038
        %v4040 = vsel %vm1736, %v3974, 0.0
        %4041 = vadd.xlane.f32.xlu0 %v4040
        %v4042 = vpop.xlane.xlu0 %4041
        %v4043 = vsel %vm1736, %v3976, 0.0
        %4044 = vadd.xlane.f32.xlu0 %v4043
        %v4045 = vpop.xlane.xlu0 %4044
        %v4046 = vsel %vm1736, %v3978, 0.0
        %4047 = vadd.xlane.f32.xlu0 %v4046
        %v4048 = vpop.xlane.xlu0 %4047
        %v4049 = vsel %vm1736, %v3980, 0.0
        %4050 = vadd.xlane.f32.xlu0 %v4049
        %v4051 = vpop.xlane.xlu0 %4050
        %v4052 = vsel %vm1736, %v3982, 0.0
        %4053 = vadd.xlane.f32.xlu0 %v4052
        %v4054 = vpop.xlane.xlu0 %4053
        %v4055 = vsel %vm1736, %v3984, 0.0
        %4056 = vadd.xlane.f32.xlu0 %v4055
        %v4057 = vpop.xlane.xlu0 %4056
        %v4058 = vsel %vm1736, %v3986, 0.0
        %4059 = vadd.xlane.f32.xlu0 %v4058
        %v4060 = vpop.xlane.xlu0 %4059
        %v4061 = vsel %vm1736, %v3988, 0.0
        %4062 = vadd.xlane.f32.xlu0 %v4061
        %v4063 = vpop.xlane.xlu0 %4062
        %v4064 = vsel %vm1736, %v3990, 0.0
        %4065 = vadd.xlane.f32.xlu0 %v4064
        %v4066 = vpop.xlane.xlu0 %4065
        %v4067 = vsel %vm1736, %v3992, 0.0
        %4068 = vadd.xlane.f32.xlu0 %v4067
        %v4069 = vpop.xlane.xlu0 %4068
        %v4070 = vsel %vm1736, %v3994, 0.0
        %4071 = vadd.xlane.f32.xlu0 %v4070
        %v4072 = vpop.xlane.xlu0 %4071
        %v4073 = vsel %vm1736, %v3996, 0.0
        %4074 = vadd.xlane.f32.xlu0 %v4073
        %v4075 = vpop.xlane.xlu0 %4074
        %v4076 = vsel %vm1736, %v3998, 0.0
        %4077 = vadd.xlane.f32.xlu0 %v4076
        %v4078 = vpop.xlane.xlu0 %4077
        %v4079 = vsel %vm1736, %v4000, 0.0
        %4080 = vadd.xlane.f32.xlu0 %v4079
        %v4081 = vpop.xlane.xlu0 %4080
        %v4082 = vsel %vm1736, %v4002, 0.0
        %4083 = vadd.xlane.f32.xlu0 %v4082
        %v4084 = vpop.xlane.xlu0 %4083
        %v4085 = vsel %vm1736, %v4004, 0.0
        %4086 = vadd.xlane.f32.xlu0 %v4085
        %v4087 = vpop.xlane.xlu0 %4086
        %v4088 = vsel %vm1736, %v4006, 0.0
        %4089 = vadd.xlane.f32.xlu0 %v4088
        %v4090 = vpop.xlane.xlu0 %4089
        %v4091 = vsel %vm1736, %v4008, 0.0
        %4092 = vadd.xlane.f32.xlu0 %v4091
        %v4093 = vpop.xlane.xlu0 %4092
        %v4094 = vsel %vm1736, %v4010, 0.0
        %4095 = vadd.xlane.f32.xlu0 %v4094
        %v4096 = vpop.xlane.xlu0 %4095
        %v4097 = vsel %vm1736, %v4012, 0.0
        %4098 = vadd.xlane.f32.xlu0 %v4097
        %v4099 = vpop.xlane.xlu0 %4098
        %v4100 = vsel %vm1736, %v4014, 0.0
        %4101 = vadd.xlane.f32.xlu0 %v4100
        %v4102 = vpop.xlane.xlu0 %4101
        %v4103 = vsel %vm1736, %v4016, 0.0
        %4104 = vadd.xlane.f32.xlu0 %v4103
        %v4105 = vpop.xlane.xlu0 %4104
        %v4106 = vsel %vm1736, %v4018, 0.0
        %4107 = vadd.xlane.f32.xlu0 %v4106
        %v4108 = vpop.xlane.xlu0 %4107
        %v4109 = vsel %vm1736, %v4020, 0.0
        %4110 = vadd.xlane.f32.xlu0 %v4109
        %v4111 = vpop.xlane.xlu0 %4110
        %v4112 = vsel %vm1736, %v4022, 0.0
        %4113 = vadd.xlane.f32.xlu0 %v4112
        %v4114 = vpop.xlane.xlu0 %4113
        %v4115 = vsel %vm1736, %v4024, 0.0
        %4116 = vadd.xlane.f32.xlu0 %v4115
        %v4117 = vpop.xlane.xlu0 %4116
        %v4118 = vsel %vm1736, %v4026, 0.0
        %4119 = vadd.xlane.f32.xlu0 %v4118
        %v4120 = vpop.xlane.xlu0 %4119
        %v4121 = vsel %vm1736, %v4028, 0.0
        %4122 = vadd.xlane.f32.xlu0 %v4121
        %v4123 = vpop.xlane.xlu0 %4122
        %v4124 = vsel %vm1736, %v4030, 0.0
        %4125 = vadd.xlane.f32.xlu0 %v4124
        %v4126 = vpop.xlane.xlu0 %4125
        %v4127 = vrcp.pop %v4033
        %v4128 = vmul.f32 %v3968, %v4127
        %v4129 = vrcp.pop %v4036
        %v4130 = vmul.f32 %v3970, %v4129
        %v4131 = vrcp.pop %v4039
        %v4132 = vmul.f32 %v3972, %v4131
        %v4133 = vrcp.pop %v4042
        %v4134 = vmul.f32 %v3974, %v4133
        %v4135 = vrcp.pop %v4045
        %v4136 = vmul.f32 %v3976, %v4135
        %v4137 = vrcp.pop %v4048
        %v4138 = vmul.f32 %v3978, %v4137
        %v4139 = vrcp.pop %v4051
        %v4140 = vmul.f32 %v3980, %v4139
        %v4141 = vrcp.pop %v4054
        %v4142 = vmul.f32 %v3982, %v4141
        %v4143 = vrcp.pop %v4057
        %v4144 = vmul.f32 %v3984, %v4143
        %v4145 = vrcp.pop %v4060
        %v4146 = vmul.f32 %v3986, %v4145
        %v4147 = vrcp.pop %v4063
        %v4148 = vmul.f32 %v3988, %v4147
        %v4149 = vrcp.pop %v4066
        %v4150 = vmul.f32 %v3990, %v4149
        %v4151 = vrcp.pop %v4069
        %v4152 = vmul.f32 %v3992, %v4151
        %v4153 = vrcp.pop %v4072
        %v4154 = vmul.f32 %v3994, %v4153
        %v4155 = vrcp.pop %v4075
        %v4156 = vmul.f32 %v3996, %v4155
        %v4157 = vrcp.pop %v4078
        %v4158 = vmul.f32 %v3998, %v4157
        %v4159 = vrcp.pop %v4081
        %v4160 = vmul.f32 %v4000, %v4159
        %v4161 = vrcp.pop %v4084
        %v4162 = vmul.f32 %v4002, %v4161
        %v4163 = vrcp.pop %v4087
        %v4164 = vmul.f32 %v4004, %v4163
        %v4165 = vrcp.pop %v4090
        %v4166 = vmul.f32 %v4006, %v4165
        %v4167 = vrcp.pop %v4093
        %v4168 = vmul.f32 %v4008, %v4167
        %v4169 = vrcp.pop %v4096
        %v4170 = vmul.f32 %v4010, %v4169
        %v4171 = vrcp.pop %v4099
        %v4172 = vmul.f32 %v4012, %v4171
        %v4173 = vrcp.pop %v4102
        %v4174 = vmul.f32 %v4014, %v4173
        %v4175 = vrcp.pop %v4105
        %v4176 = vmul.f32 %v4016, %v4175
        %v4177 = vrcp.pop %v4108
        %v4178 = vmul.f32 %v4018, %v4177
        %v4179 = vrcp.pop %v4111
        %v4180 = vmul.f32 %v4020, %v4179
        %v4181 = vrcp.pop %v4114
        %v4182 = vmul.f32 %v4022, %v4181
        %v4183 = vrcp.pop %v4117
        %v4184 = vmul.f32 %v4024, %v4183
        %v4185 = vrcp.pop %v4120
        %v4186 = vmul.f32 %v4026, %v4185
        %v4187 = vrcp.pop %v4123
        %v4188 = vmul.f32 %v4028, %v4187
        %v4189 = vrcp.pop %v4126
        %v4190 = vmul.f32 %v4030, %v4189
        %v4191 = vpack.c.bf16 %v4130, %v4128
        %v4192 = vpack.c.bf16 %v4134, %v4132
        %v4193 = vpack.c.bf16 %v4138, %v4136
        %v4194 = vpack.c.bf16 %v4142, %v4140
        %v4195 = vpack.c.bf16 %v4146, %v4144
        %v4196 = vpack.c.bf16 %v4150, %v4148
        %v4197 = vpack.c.bf16 %v4154, %v4152
        %v4198 = vpack.c.bf16 %v4158, %v4156
        %v4199 = vpack.c.bf16 %v4162, %v4160
        %v4200 = vpack.c.bf16 %v4166, %v4164
        %v4201 = vpack.c.bf16 %v4170, %v4168
        %v4202 = vpack.c.bf16 %v4174, %v4172
        %v4203 = vpack.c.bf16 %v4178, %v4176
        %v4204 = vpack.c.bf16 %v4182, %v4180
        %v4205 = vpack.c.bf16 %v4186, %v4184
        %v4206 = vpack.c.bf16 %v4190, %v4188
        %4208 = vrot.lane.b32.xlu0 %v2105, 120
        %v4209 = vpop.permute.xlu0 %4208
        %v4212 = vsel %vm1736, %v4191, 0
        %4214 = vmatprep.subr.bf16.mxu0 0
        %4215 = vmatpush1.bf16.msra.mxu0 %v4209
        %4216 = vmatprep.subr.bf16.mxu0 0
        %4217 = vmatpush1.bf16.msra.mxu0 0
        %4218 = vmatprep.subr.bf16.mxu0 0
        %4219 = vmatpush1.bf16.msra.mxu0 0
        %4220 = vmatprep.subr.bf16.mxu0 0
        %4221 = vmatpush1.bf16.msra.mxu0 0
        %4222 = vmatprep.subr.bf16.mxu0 0
        %4223 = vmatpush1.bf16.msra.mxu0 0
        %4224 = vmatprep.subr.bf16.mxu0 0
        %4225 = vmatpush1.bf16.msra.mxu0 0
        %4226 = vmatprep.subr.bf16.mxu0 0
        %4227 = vmatpush1.bf16.msra.mxu0 0
        %4228 = vmatprep.subr.bf16.mxu0 0
        %4229 = vmatpush1.bf16.msra.mxu0 0
        %4230 = vmatprep.subr.bf16.mxu0 0
        %4231 = vmatpush1.bf16.msra.mxu0 0
        %4232 = vmatprep.subr.bf16.mxu0 0
        %4233 = vmatpush1.bf16.msra.mxu0 0
        %4234 = vmatprep.subr.bf16.mxu0 0
        %4235 = vmatpush1.bf16.msra.mxu0 0
        %4236 = vmatprep.subr.bf16.mxu0 0
        %4237 = vmatpush1.bf16.msra.mxu0 0
        %4238 = vmatprep.subr.bf16.mxu0 0
        %4239 = vmatpush1.bf16.msra.mxu0 0
        %4240 = vmatprep.subr.bf16.mxu0 0
        %4241 = vmatpush1.bf16.msra.mxu0 0
        %4242 = vmatprep.subr.bf16.mxu0 0
        %4243 = vmatpush1.bf16.msra.mxu0 0
        %4244 = vmatprep.subr.bf16.mxu0 0
        %4245 = vmatpush1.bf16.msra.mxu0 0
        %4246 = vmatprep.mubr.bf16.mxu0 0
        %4247 = vmatmul.mubr.bf16.gmra.mrb[0].mxu0 %v4212
        %v4248 = vpop.f32.mrb[0].mxu0
        %v4249 = vadd.f32 0.0, %v4248
        %v4250 = vpop.f32.mrb[0].mxu0
        %v4251 = vpop.f32.mrb[0].mxu0
        %v4252 = vadd.f32 0.0, %v4251
        %v4253 = vpop.f32.mrb[0].mxu0
        %4254 = vdwg.mxu0
        %4256 = vrot.lane.b32.xlu0 %v2106, 120
        %v4257 = vpop.permute.xlu0 %4256
        %v4260 = vsel %vm1736, %v4192, 0
        %4262 = vmatprep.subr.bf16.mxu0 0
        %4263 = vmatpush1.bf16.msra.mxu0 %v4257
        %4264 = vmatprep.subr.bf16.mxu0 0
        %4265 = vmatpush1.bf16.msra.mxu0 0
        %4266 = vmatprep.subr.bf16.mxu0 0
        %4267 = vmatpush1.bf16.msra.mxu0 0
        %4268 = vmatprep.subr.bf16.mxu0 0
        %4269 = vmatpush1.bf16.msra.mxu0 0
        %4270 = vmatprep.subr.bf16.mxu0 0
        %4271 = vmatpush1.bf16.msra.mxu0 0
        %4272 = vmatprep.subr.bf16.mxu0 0
        %4273 = vmatpush1.bf16.msra.mxu0 0
        %4274 = vmatprep.subr.bf16.mxu0 0
        %4275 = vmatpush1.bf16.msra.mxu0 0
        %4276 = vmatprep.subr.bf16.mxu0 0
        %4277 = vmatpush1.bf16.msra.mxu0 0
        %4278 = vmatprep.subr.bf16.mxu0 0
        %4279 = vmatpush1.bf16.msra.mxu0 0
        %4280 = vmatprep.subr.bf16.mxu0 0
        %4281 = vmatpush1.bf16.msra.mxu0 0
        %4282 = vmatprep.subr.bf16.mxu0 0
        %4283 = vmatpush1.bf16.msra.mxu0 0
        %4284 = vmatprep.subr.bf16.mxu0 0
        %4285 = vmatpush1.bf16.msra.mxu0 0
        %4286 = vmatprep.subr.bf16.mxu0 0
        %4287 = vmatpush1.bf16.msra.mxu0 0
        %4288 = vmatprep.subr.bf16.mxu0 0
        %4289 = vmatpush1.bf16.msra.mxu0 0
        %4290 = vmatprep.subr.bf16.mxu0 0
        %4291 = vmatpush1.bf16.msra.mxu0 0
        %4292 = vmatprep.subr.bf16.mxu0 0
        %4293 = vmatpush1.bf16.msra.mxu0 0
        %4294 = vmatprep.mubr.bf16.mxu0 0
        %4295 = vmatmul.mubr.bf16.gmra.mrb[0].mxu0 %v4260
        %v4296 = vpop.f32.mrb[0].mxu0
        %v4297 = vadd.f32 0.0, %v4296
        %v4298 = vpop.f32.mrb[0].mxu0
        %v4299 = vpop.f32.mrb[0].mxu0
        %v4300 = vadd.f32 0.0, %v4299
        %v4301 = vpop.f32.mrb[0].mxu0
        %4302 = vdwg.mxu0
        %4304 = vrot.lane.b32.xlu0 %v2107, 120
        %v4305 = vpop.permute.xlu0 %4304
        %v4308 = vsel %vm1736, %v4193, 0
        %4310 = vmatprep.subr.bf16.mxu0 0
        %4311 = vmatpush1.bf16.msra.mxu0 %v4305
        %4312 = vmatprep.subr.bf16.mxu0 0
        %4313 = vmatpush1.bf16.msra.mxu0 0
        %4314 = vmatprep.subr.bf16.mxu0 0
        %4315 = vmatpush1.bf16.msra.mxu0 0
        %4316 = vmatprep.subr.bf16.mxu0 0
        %4317 = vmatpush1.bf16.msra.mxu0 0
        %4318 = vmatprep.subr.bf16.mxu0 0
        %4319 = vmatpush1.bf16.msra.mxu0 0
        %4320 = vmatprep.subr.bf16.mxu0 0
        %4321 = vmatpush1.bf16.msra.mxu0 0
        %4322 = vmatprep.subr.bf16.mxu0 0
        %4323 = vmatpush1.bf16.msra.mxu0 0
        %4324 = vmatprep.subr.bf16.mxu0 0
        %4325 = vmatpush1.bf16.msra.mxu0 0
        %4326 = vmatprep.subr.bf16.mxu0 0
        %4327 = vmatpush1.bf16.msra.mxu0 0
        %4328 = vmatprep.subr.bf16.mxu0 0
        %4329 = vmatpush1.bf16.msra.mxu0 0
        %4330 = vmatprep.subr.bf16.mxu0 0
        %4331 = vmatpush1.bf16.msra.mxu0 0
        %4332 = vmatprep.subr.bf16.mxu0 0
        %4333 = vmatpush1.bf16.msra.mxu0 0
        %4334 = vmatprep.subr.bf16.mxu0 0
        %4335 = vmatpush1.bf16.msra.mxu0 0
        %4336 = vmatprep.subr.bf16.mxu0 0
        %4337 = vmatpush1.bf16.msra.mxu0 0
        %4338 = vmatprep.subr.bf16.mxu0 0
        %4339 = vmatpush1.bf16.msra.mxu0 0
        %4340 = vmatprep.subr.bf16.mxu0 0
        %4341 = vmatpush1.bf16.msra.mxu0 0
        %4342 = vmatprep.mubr.bf16.mxu0 0
        %4343 = vmatmul.mubr.bf16.gmra.mrb[0].mxu0 %v4308
        %v4344 = vpop.f32.mrb[0].mxu0
        %v4345 = vadd.f32 0.0, %v4344
        %v4346 = vpop.f32.mrb[0].mxu0
        %v4347 = vpop.f32.mrb[0].mxu0
        %v4348 = vadd.f32 0.0, %v4347
        %v4349 = vpop.f32.mrb[0].mxu0
        %4350 = vdwg.mxu0
        %4352 = vrot.lane.b32.xlu0 %v2108, 120
        %v4353 = vpop.permute.xlu0 %4352
        %v4356 = vsel %vm1736, %v4194, 0
        %4358 = vmatprep.subr.bf16.mxu0 0
        %4359 = vmatpush1.bf16.msra.mxu0 %v4353
        %4360 = vmatprep.subr.bf16.mxu0 0
        %4361 = vmatpush1.bf16.msra.mxu0 0
        %4362 = vmatprep.subr.bf16.mxu0 0
        %4363 = vmatpush1.bf16.msra.mxu0 0
        %4364 = vmatprep.subr.bf16.mxu0 0
        %4365 = vmatpush1.bf16.msra.mxu0 0
        %4366 = vmatprep.subr.bf16.mxu0 0
        %4367 = vmatpush1.bf16.msra.mxu0 0
        %4368 = vmatprep.subr.bf16.mxu0 0
        %4369 = vmatpush1.bf16.msra.mxu0 0
        %4370 = vmatprep.subr.bf16.mxu0 0
        %4371 = vmatpush1.bf16.msra.mxu0 0
        %4372 = vmatprep.subr.bf16.mxu0 0
        %4373 = vmatpush1.bf16.msra.mxu0 0
        %4374 = vmatprep.subr.bf16.mxu0 0
        %4375 = vmatpush1.bf16.msra.mxu0 0
        %4376 = vmatprep.subr.bf16.mxu0 0
        %4377 = vmatpush1.bf16.msra.mxu0 0
        %4378 = vmatprep.subr.bf16.mxu0 0
        %4379 = vmatpush1.bf16.msra.mxu0 0
        %4380 = vmatprep.subr.bf16.mxu0 0
        %4381 = vmatpush1.bf16.msra.mxu0 0
        %4382 = vmatprep.subr.bf16.mxu0 0
        %4383 = vmatpush1.bf16.msra.mxu0 0
        %4384 = vmatprep.subr.bf16.mxu0 0
        %4385 = vmatpush1.bf16.msra.mxu0 0
        %4386 = vmatprep.subr.bf16.mxu0 0
        %4387 = vmatpush1.bf16.msra.mxu0 0
        %4388 = vmatprep.subr.bf16.mxu0 0
        %4389 = vmatpush1.bf16.msra.mxu0 0
        %4390 = vmatprep.mubr.bf16.mxu0 0
        %4391 = vmatmul.mubr.bf16.gmra.mrb[0].mxu0 %v4356
        %v4392 = vpop.f32.mrb[0].mxu0
        %v4393 = vadd.f32 0.0, %v4392
        %v4394 = vpop.f32.mrb[0].mxu0
        %v4395 = vpop.f32.mrb[0].mxu0
        %v4396 = vadd.f32 0.0, %v4395
        %v4397 = vpop.f32.mrb[0].mxu0
        %4398 = vdwg.mxu0
        %4400 = vrot.lane.b32.xlu0 %v2109, 120
        %v4401 = vpop.permute.xlu0 %4400
        %v4404 = vsel %vm1736, %v4195, 0
        %4406 = vmatprep.subr.bf16.mxu0 0
        %4407 = vmatpush1.bf16.msra.mxu0 %v4401
        %4408 = vmatprep.subr.bf16.mxu0 0
        %4409 = vmatpush1.bf16.msra.mxu0 0
        %4410 = vmatprep.subr.bf16.mxu0 0
        %4411 = vmatpush1.bf16.msra.mxu0 0
        %4412 = vmatprep.subr.bf16.mxu0 0
        %4413 = vmatpush1.bf16.msra.mxu0 0
        %4414 = vmatprep.subr.bf16.mxu0 0
        %4415 = vmatpush1.bf16.msra.mxu0 0
        %4416 = vmatprep.subr.bf16.mxu0 0
        %4417 = vmatpush1.bf16.msra.mxu0 0
        %4418 = vmatprep.subr.bf16.mxu0 0
        %4419 = vmatpush1.bf16.msra.mxu0 0
        %4420 = vmatprep.subr.bf16.mxu0 0
        %4421 = vmatpush1.bf16.msra.mxu0 0
        %4422 = vmatprep.subr.bf16.mxu0 0
        %4423 = vmatpush1.bf16.msra.mxu0 0
        %4424 = vmatprep.subr.bf16.mxu0 0
        %4425 = vmatpush1.bf16.msra.mxu0 0
        %4426 = vmatprep.subr.bf16.mxu0 0
        %4427 = vmatpush1.bf16.msra.mxu0 0
        %4428 = vmatprep.subr.bf16.mxu0 0
        %4429 = vmatpush1.bf16.msra.mxu0 0
        %4430 = vmatprep.subr.bf16.mxu0 0
        %4431 = vmatpush1.bf16.msra.mxu0 0
        %4432 = vmatprep.subr.bf16.mxu0 0
        %4433 = vmatpush1.bf16.msra.mxu0 0
        %4434 = vmatprep.subr.bf16.mxu0 0
        %4435 = vmatpush1.bf16.msra.mxu0 0
        %4436 = vmatprep.subr.bf16.mxu0 0
        %4437 = vmatpush1.bf16.msra.mxu0 0
        %4438 = vmatprep.mubr.bf16.mxu0 0
        %4439 = vmatmul.mubr.bf16.gmra.mrb[0].mxu0 %v4404
        %v4440 = vpop.f32.mrb[0].mxu0
        %v4441 = vadd.f32 0.0, %v4440
        %v4442 = vpop.f32.mrb[0].mxu0
        %v4443 = vpop.f32.mrb[0].mxu0
        %v4444 = vadd.f32 0.0, %v4443
        %v4445 = vpop.f32.mrb[0].mxu0
        %4446 = vdwg.mxu0
        %4448 = vrot.lane.b32.xlu0 %v2110, 120
        %v4449 = vpop.permute.xlu0 %4448
        %v4452 = vsel %vm1736, %v4196, 0
        %4454 = vmatprep.subr.bf16.mxu0 0
        %4455 = vmatpush1.bf16.msra.mxu0 %v4449
        %4456 = vmatprep.subr.bf16.mxu0 0
        %4457 = vmatpush1.bf16.msra.mxu0 0
        %4458 = vmatprep.subr.bf16.mxu0 0
        %4459 = vmatpush1.bf16.msra.mxu0 0
        %4460 = vmatprep.subr.bf16.mxu0 0
        %4461 = vmatpush1.bf16.msra.mxu0 0
        %4462 = vmatprep.subr.bf16.mxu0 0
        %4463 = vmatpush1.bf16.msra.mxu0 0
        %4464 = vmatprep.subr.bf16.mxu0 0
        %4465 = vmatpush1.bf16.msra.mxu0 0
        %4466 = vmatprep.subr.bf16.mxu0 0
        %4467 = vmatpush1.bf16.msra.mxu0 0
        %4468 = vmatprep.subr.bf16.mxu0 0
        %4469 = vmatpush1.bf16.msra.mxu0 0
        %4470 = vmatprep.subr.bf16.mxu0 0
        %4471 = vmatpush1.bf16.msra.mxu0 0
        %4472 = vmatprep.subr.bf16.mxu0 0
        %4473 = vmatpush1.bf16.msra.mxu0 0
        %4474 = vmatprep.subr.bf16.mxu0 0
        %4475 = vmatpush1.bf16.msra.mxu0 0
        %4476 = vmatprep.subr.bf16.mxu0 0
        %4477 = vmatpush1.bf16.msra.mxu0 0
        %4478 = vmatprep.subr.bf16.mxu0 0
        %4479 = vmatpush1.bf16.msra.mxu0 0
        %4480 = vmatprep.subr.bf16.mxu0 0
        %4481 = vmatpush1.bf16.msra.mxu0 0
        %4482 = vmatprep.subr.bf16.mxu0 0
        %4483 = vmatpush1.bf16.msra.mxu0 0
        %4484 = vmatprep.subr.bf16.mxu0 0
        %4485 = vmatpush1.bf16.msra.mxu0 0
        %4486 = vmatprep.mubr.bf16.mxu0 0
        %4487 = vmatmul.mubr.bf16.gmra.mrb[0].mxu0 %v4452
        %v4488 = vpop.f32.mrb[0].mxu0
        %v4489 = vadd.f32 0.0, %v4488
        %v4490 = vpop.f32.mrb[0].mxu0
        %v4491 = vpop.f32.mrb[0].mxu0
        %v4492 = vadd.f32 0.0, %v4491
        %v4493 = vpop.f32.mrb[0].mxu0
        %4494 = vdwg.mxu0
        %4496 = vrot.lane.b32.xlu0 %v2111, 120
        %v4497 = vpop.permute.xlu0 %4496
        %v4500 = vsel %vm1736, %v4197, 0
        %4502 = vmatprep.subr.bf16.mxu0 0
        %4503 = vmatpush1.bf16.msra.mxu0 %v4497
        %4504 = vmatprep.subr.bf16.mxu0 0
        %4505 = vmatpush1.bf16.msra.mxu0 0
        %4506 = vmatprep.subr.bf16.mxu0 0
        %4507 = vmatpush1.bf16.msra.mxu0 0
        %4508 = vmatprep.subr.bf16.mxu0 0
        %4509 = vmatpush1.bf16.msra.mxu0 0
        %4510 = vmatprep.subr.bf16.mxu0 0
        %4511 = vmatpush1.bf16.msra.mxu0 0
        %4512 = vmatprep.subr.bf16.mxu0 0
        %4513 = vmatpush1.bf16.msra.mxu0 0
        %4514 = vmatprep.subr.bf16.mxu0 0
        %4515 = vmatpush1.bf16.msra.mxu0 0
        %4516 = vmatprep.subr.bf16.mxu0 0
        %4517 = vmatpush1.bf16.msra.mxu0 0
        %4518 = vmatprep.subr.bf16.mxu0 0
        %4519 = vmatpush1.bf16.msra.mxu0 0
        %4520 = vmatprep.subr.bf16.mxu0 0
        %4521 = vmatpush1.bf16.msra.mxu0 0
        %4522 = vmatprep.subr.bf16.mxu0 0
        %4523 = vmatpush1.bf16.msra.mxu0 0
        %4524 = vmatprep.subr.bf16.mxu0 0
        %4525 = vmatpush1.bf16.msra.mxu0 0
        %4526 = vmatprep.subr.bf16.mxu0 0
        %4527 = vmatpush1.bf16.msra.mxu0 0
        %4528 = vmatprep.subr.bf16.mxu0 0
        %4529 = vmatpush1.bf16.msra.mxu0 0
        %4530 = vmatprep.subr.bf16.mxu0 0
        %4531 = vmatpush1.bf16.msra.mxu0 0
        %4532 = vmatprep.subr.bf16.mxu0 0
        %4533 = vmatpush1.bf16.msra.mxu0 0
        %4534 = vmatprep.mubr.bf16.mxu0 0
        %4535 = vmatmul.mubr.bf16.gmra.mrb[0].mxu0 %v4500
        %v4536 = vpop.f32.mrb[0].mxu0
        %v4537 = vadd.f32 0.0, %v4536
        %v4538 = vpop.f32.mrb[0].mxu0
        %v4539 = vpop.f32.mrb[0].mxu0
        %v4540 = vadd.f32 0.0, %v4539
        %v4541 = vpop.f32.mrb[0].mxu0
        %4542 = vdwg.mxu0
        %4544 = vrot.lane.b32.xlu0 %v2112, 120
        %v4545 = vpop.permute.xlu0 %4544
        %v4548 = vsel %vm1736, %v4198, 0
        %4550 = vmatprep.subr.bf16.mxu0 0
        %4551 = vmatpush1.bf16.msra.mxu0 %v4545
        %4552 = vmatprep.subr.bf16.mxu0 0
        %4553 = vmatpush1.bf16.msra.mxu0 0
        %4554 = vmatprep.subr.bf16.mxu0 0
        %4555 = vmatpush1.bf16.msra.mxu0 0
        %4556 = vmatprep.subr.bf16.mxu0 0
        %4557 = vmatpush1.bf16.msra.mxu0 0
        %4558 = vmatprep.subr.bf16.mxu0 0
        %4559 = vmatpush1.bf16.msra.mxu0 0
        %4560 = vmatprep.subr.bf16.mxu0 0
        %4561 = vmatpush1.bf16.msra.mxu0 0
        %4562 = vmatprep.subr.bf16.mxu0 0
        %4563 = vmatpush1.bf16.msra.mxu0 0
        %4564 = vmatprep.subr.bf16.mxu0 0
        %4565 = vmatpush1.bf16.msra.mxu0 0
        %4566 = vmatprep.subr.bf16.mxu0 0
        %4567 = vmatpush1.bf16.msra.mxu0 0
        %4568 = vmatprep.subr.bf16.mxu0 0
        %4569 = vmatpush1.bf16.msra.mxu0 0
        %4570 = vmatprep.subr.bf16.mxu0 0
        %4571 = vmatpush1.bf16.msra.mxu0 0
        %4572 = vmatprep.subr.bf16.mxu0 0
        %4573 = vmatpush1.bf16.msra.mxu0 0
        %4574 = vmatprep.subr.bf16.mxu0 0
        %4575 = vmatpush1.bf16.msra.mxu0 0
        %4576 = vmatprep.subr.bf16.mxu0 0
        %4577 = vmatpush1.bf16.msra.mxu0 0
        %4578 = vmatprep.subr.bf16.mxu0 0
        %4579 = vmatpush1.bf16.msra.mxu0 0
        %4580 = vmatprep.subr.bf16.mxu0 0
        %4581 = vmatpush1.bf16.msra.mxu0 0
        %4582 = vmatprep.mubr.bf16.mxu0 0
        %4583 = vmatmul.mubr.bf16.gmra.mrb[0].mxu0 %v4548
        %v4584 = vpop.f32.mrb[0].mxu0
        %v4585 = vadd.f32 0.0, %v4584
        %v4586 = vpop.f32.mrb[0].mxu0
        %v4587 = vpop.f32.mrb[0].mxu0
        %v4588 = vadd.f32 0.0, %v4587
        %v4589 = vpop.f32.mrb[0].mxu0
        %4590 = vdwg.mxu0
        %4592 = vrot.lane.b32.xlu0 %v2113, 120
        %v4593 = vpop.permute.xlu0 %4592
        %v4596 = vsel %vm1736, %v4199, 0
        %4598 = vmatprep.subr.bf16.mxu0 0
        %4599 = vmatpush1.bf16.msra.mxu0 %v4593
        %4600 = vmatprep.subr.bf16.mxu0 0
        %4601 = vmatpush1.bf16.msra.mxu0 0
        %4602 = vmatprep.subr.bf16.mxu0 0
        %4603 = vmatpush1.bf16.msra.mxu0 0
        %4604 = vmatprep.subr.bf16.mxu0 0
        %4605 = vmatpush1.bf16.msra.mxu0 0
        %4606 = vmatprep.subr.bf16.mxu0 0
        %4607 = vmatpush1.bf16.msra.mxu0 0
        %4608 = vmatprep.subr.bf16.mxu0 0
        %4609 = vmatpush1.bf16.msra.mxu0 0
        %4610 = vmatprep.subr.bf16.mxu0 0
        %4611 = vmatpush1.bf16.msra.mxu0 0
        %4612 = vmatprep.subr.bf16.mxu0 0
        %4613 = vmatpush1.bf16.msra.mxu0 0
        %4614 = vmatprep.subr.bf16.mxu0 0
        %4615 = vmatpush1.bf16.msra.mxu0 0
        %4616 = vmatprep.subr.bf16.mxu0 0
        %4617 = vmatpush1.bf16.msra.mxu0 0
        %4618 = vmatprep.subr.bf16.mxu0 0
        %4619 = vmatpush1.bf16.msra.mxu0 0
        %4620 = vmatprep.subr.bf16.mxu0 0
        %4621 = vmatpush1.bf16.msra.mxu0 0
        %4622 = vmatprep.subr.bf16.mxu0 0
        %4623 = vmatpush1.bf16.msra.mxu0 0
        %4624 = vmatprep.subr.bf16.mxu0 0
        %4625 = vmatpush1.bf16.msra.mxu0 0
        %4626 = vmatprep.subr.bf16.mxu0 0
        %4627 = vmatpush1.bf16.msra.mxu0 0
        %4628 = vmatprep.subr.bf16.mxu0 0
        %4629 = vmatpush1.bf16.msra.mxu0 0
        %4630 = vmatprep.mubr.bf16.mxu0 0
        %4631 = vmatmul.mubr.bf16.gmra.mrb[0].mxu0 %v4596
        %v4632 = vpop.f32.mrb[0].mxu0
        %v4633 = vadd.f32 0.0, %v4632
        %v4634 = vpop.f32.mrb[0].mxu0
        %v4635 = vpop.f32.mrb[0].mxu0
        %v4636 = vadd.f32 0.0, %v4635
        %v4637 = vpop.f32.mrb[0].mxu0
        %4638 = vdwg.mxu0
        %4640 = vrot.lane.b32.xlu0 %v2114, 120
        %v4641 = vpop.permute.xlu0 %4640
        %v4644 = vsel %vm1736, %v4200, 0
        %4646 = vmatprep.subr.bf16.mxu0 0
        %4647 = vmatpush1.bf16.msra.mxu0 %v4641
        %4648 = vmatprep.subr.bf16.mxu0 0
        %4649 = vmatpush1.bf16.msra.mxu0 0
        %4650 = vmatprep.subr.bf16.mxu0 0
        %4651 = vmatpush1.bf16.msra.mxu0 0
        %4652 = vmatprep.subr.bf16.mxu0 0
        %4653 = vmatpush1.bf16.msra.mxu0 0
        %4654 = vmatprep.subr.bf16.mxu0 0
        %4655 = vmatpush1.bf16.msra.mxu0 0
        %4656 = vmatprep.subr.bf16.mxu0 0
        %4657 = vmatpush1.bf16.msra.mxu0 0
        %4658 = vmatprep.subr.bf16.mxu0 0
        %4659 = vmatpush1.bf16.msra.mxu0 0
        %4660 = vmatprep.subr.bf16.mxu0 0
        %4661 = vmatpush1.bf16.msra.mxu0 0
        %4662 = vmatprep.subr.bf16.mxu0 0
        %4663 = vmatpush1.bf16.msra.mxu0 0
        %4664 = vmatprep.subr.bf16.mxu0 0
        %4665 = vmatpush1.bf16.msra.mxu0 0
        %4666 = vmatprep.subr.bf16.mxu0 0
        %4667 = vmatpush1.bf16.msra.mxu0 0
        %4668 = vmatprep.subr.bf16.mxu0 0
        %4669 = vmatpush1.bf16.msra.mxu0 0
        %4670 = vmatprep.subr.bf16.mxu0 0
        %4671 = vmatpush1.bf16.msra.mxu0 0
        %4672 = vmatprep.subr.bf16.mxu0 0
        %4673 = vmatpush1.bf16.msra.mxu0 0
        %4674 = vmatprep.subr.bf16.mxu0 0
        %4675 = vmatpush1.bf16.msra.mxu0 0
        %4676 = vmatprep.subr.bf16.mxu0 0
        %4677 = vmatpush1.bf16.msra.mxu0 0
        %4678 = vmatprep.mubr.bf16.mxu0 0
        %4679 = vmatmul.mubr.bf16.gmra.mrb[0].mxu0 %v4644
        %v4680 = vpop.f32.mrb[0].mxu0
        %v4681 = vadd.f32 0.0, %v4680
        %v4682 = vpop.f32.mrb[0].mxu0
        %v4683 = vpop.f32.mrb[0].mxu0
        %v4684 = vadd.f32 0.0, %v4683
        %v4685 = vpop.f32.mrb[0].mxu0
        %4686 = vdwg.mxu0
        %4688 = vrot.lane.b32.xlu0 %v2115, 120
        %v4689 = vpop.permute.xlu0 %4688
        %v4692 = vsel %vm1736, %v4201, 0
        %4694 = vmatprep.subr.bf16.mxu0 0
        %4695 = vmatpush1.bf16.msra.mxu0 %v4689
        %4696 = vmatprep.subr.bf16.mxu0 0
        %4697 = vmatpush1.bf16.msra.mxu0 0
        %4698 = vmatprep.subr.bf16.mxu0 0
        %4699 = vmatpush1.bf16.msra.mxu0 0
        %4700 = vmatprep.subr.bf16.mxu0 0
        %4701 = vmatpush1.bf16.msra.mxu0 0
        %4702 = vmatprep.subr.bf16.mxu0 0
        %4703 = vmatpush1.bf16.msra.mxu0 0
        %4704 = vmatprep.subr.bf16.mxu0 0
        %4705 = vmatpush1.bf16.msra.mxu0 0
        %4706 = vmatprep.subr.bf16.mxu0 0
        %4707 = vmatpush1.bf16.msra.mxu0 0
        %4708 = vmatprep.subr.bf16.mxu0 0
        %4709 = vmatpush1.bf16.msra.mxu0 0
        %4710 = vmatprep.subr.bf16.mxu0 0
        %4711 = vmatpush1.bf16.msra.mxu0 0
        %4712 = vmatprep.subr.bf16.mxu0 0
        %4713 = vmatpush1.bf16.msra.mxu0 0
        %4714 = vmatprep.subr.bf16.mxu0 0
        %4715 = vmatpush1.bf16.msra.mxu0 0
        %4716 = vmatprep.subr.bf16.mxu0 0
        %4717 = vmatpush1.bf16.msra.mxu0 0
        %4718 = vmatprep.subr.bf16.mxu0 0
        %4719 = vmatpush1.bf16.msra.mxu0 0
        %4720 = vmatprep.subr.bf16.mxu0 0
        %4721 = vmatpush1.bf16.msra.mxu0 0
        %4722 = vmatprep.subr.bf16.mxu0 0
        %4723 = vmatpush1.bf16.msra.mxu0 0
        %4724 = vmatprep.subr.bf16.mxu0 0
        %4725 = vmatpush1.bf16.msra.mxu0 0
        %4726 = vmatprep.mubr.bf16.mxu0 0
        %4727 = vmatmul.mubr.bf16.gmra.mrb[0].mxu0 %v4692
        %v4728 = vpop.f32.mrb[0].mxu0
        %v4729 = vadd.f32 0.0, %v4728
        %v4730 = vpop.f32.mrb[0].mxu0
        %v4731 = vpop.f32.mrb[0].mxu0
        %v4732 = vadd.f32 0.0, %v4731
        %v4733 = vpop.f32.mrb[0].mxu0
        %4734 = vdwg.mxu0
        %4736 = vrot.lane.b32.xlu0 %v2116, 120
        %v4737 = vpop.permute.xlu0 %4736
        %v4740 = vsel %vm1736, %v4202, 0
        %4742 = vmatprep.subr.bf16.mxu0 0
        %4743 = vmatpush1.bf16.msra.mxu0 %v4737
        %4744 = vmatprep.subr.bf16.mxu0 0
        %4745 = vmatpush1.bf16.msra.mxu0 0
        %4746 = vmatprep.subr.bf16.mxu0 0
        %4747 = vmatpush1.bf16.msra.mxu0 0
        %4748 = vmatprep.subr.bf16.mxu0 0
        %4749 = vmatpush1.bf16.msra.mxu0 0
        %4750 = vmatprep.subr.bf16.mxu0 0
        %4751 = vmatpush1.bf16.msra.mxu0 0
        %4752 = vmatprep.subr.bf16.mxu0 0
        %4753 = vmatpush1.bf16.msra.mxu0 0
        %4754 = vmatprep.subr.bf16.mxu0 0
        %4755 = vmatpush1.bf16.msra.mxu0 0
        %4756 = vmatprep.subr.bf16.mxu0 0
        %4757 = vmatpush1.bf16.msra.mxu0 0
        %4758 = vmatprep.subr.bf16.mxu0 0
        %4759 = vmatpush1.bf16.msra.mxu0 0
        %4760 = vmatprep.subr.bf16.mxu0 0
        %4761 = vmatpush1.bf16.msra.mxu0 0
        %4762 = vmatprep.subr.bf16.mxu0 0
        %4763 = vmatpush1.bf16.msra.mxu0 0
        %4764 = vmatprep.subr.bf16.mxu0 0
        %4765 = vmatpush1.bf16.msra.mxu0 0
        %4766 = vmatprep.subr.bf16.mxu0 0
        %4767 = vmatpush1.bf16.msra.mxu0 0
        %4768 = vmatprep.subr.bf16.mxu0 0
        %4769 = vmatpush1.bf16.msra.mxu0 0
        %4770 = vmatprep.subr.bf16.mxu0 0
        %4771 = vmatpush1.bf16.msra.mxu0 0
        %4772 = vmatprep.subr.bf16.mxu0 0
        %4773 = vmatpush1.bf16.msra.mxu0 0
        %4774 = vmatprep.mubr.bf16.mxu0 0
        %4775 = vmatmul.mubr.bf16.gmra.mrb[0].mxu0 %v4740
        %v4776 = vpop.f32.mrb[0].mxu0
        %v4777 = vadd.f32 0.0, %v4776
        %v4778 = vpop.f32.mrb[0].mxu0
        %v4779 = vpop.f32.mrb[0].mxu0
        %v4780 = vadd.f32 0.0, %v4779
        %v4781 = vpop.f32.mrb[0].mxu0
        %4782 = vdwg.mxu0
        %4784 = vrot.lane.b32.xlu0 %v2117, 120
        %v4785 = vpop.permute.xlu0 %4784
        %v4788 = vsel %vm1736, %v4203, 0
        %4790 = vmatprep.subr.bf16.mxu0 0
        %4791 = vmatpush1.bf16.msra.mxu0 %v4785
        %4792 = vmatprep.subr.bf16.mxu0 0
        %4793 = vmatpush1.bf16.msra.mxu0 0
        %4794 = vmatprep.subr.bf16.mxu0 0
        %4795 = vmatpush1.bf16.msra.mxu0 0
        %4796 = vmatprep.subr.bf16.mxu0 0
        %4797 = vmatpush1.bf16.msra.mxu0 0
        %4798 = vmatprep.subr.bf16.mxu0 0
        %4799 = vmatpush1.bf16.msra.mxu0 0
        %4800 = vmatprep.subr.bf16.mxu0 0
        %4801 = vmatpush1.bf16.msra.mxu0 0
        %4802 = vmatprep.subr.bf16.mxu0 0
        %4803 = vmatpush1.bf16.msra.mxu0 0
        %4804 = vmatprep.subr.bf16.mxu0 0
        %4805 = vmatpush1.bf16.msra.mxu0 0
        %4806 = vmatprep.subr.bf16.mxu0 0
        %4807 = vmatpush1.bf16.msra.mxu0 0
        %4808 = vmatprep.subr.bf16.mxu0 0
        %4809 = vmatpush1.bf16.msra.mxu0 0
        %4810 = vmatprep.subr.bf16.mxu0 0
        %4811 = vmatpush1.bf16.msra.mxu0 0
        %4812 = vmatprep.subr.bf16.mxu0 0
        %4813 = vmatpush1.bf16.msra.mxu0 0
        %4814 = vmatprep.subr.bf16.mxu0 0
        %4815 = vmatpush1.bf16.msra.mxu0 0
        %4816 = vmatprep.subr.bf16.mxu0 0
        %4817 = vmatpush1.bf16.msra.mxu0 0
        %4818 = vmatprep.subr.bf16.mxu0 0
        %4819 = vmatpush1.bf16.msra.mxu0 0
        %4820 = vmatprep.subr.bf16.mxu0 0
        %4821 = vmatpush1.bf16.msra.mxu0 0
        %4822 = vmatprep.mubr.bf16.mxu0 0
        %4823 = vmatmul.mubr.bf16.gmra.mrb[0].mxu0 %v4788
        %v4824 = vpop.f32.mrb[0].mxu0
        %v4825 = vadd.f32 0.0, %v4824
        %v4826 = vpop.f32.mrb[0].mxu0
        %v4827 = vpop.f32.mrb[0].mxu0
        %v4828 = vadd.f32 0.0, %v4827
        %v4829 = vpop.f32.mrb[0].mxu0
        %4830 = vdwg.mxu0
        %4832 = vrot.lane.b32.xlu0 %v2118, 120
        %v4833 = vpop.permute.xlu0 %4832
        %v4836 = vsel %vm1736, %v4204, 0
        %4838 = vmatprep.subr.bf16.mxu0 0
        %4839 = vmatpush1.bf16.msra.mxu0 %v4833
        %4840 = vmatprep.subr.bf16.mxu0 0
        %4841 = vmatpush1.bf16.msra.mxu0 0
        %4842 = vmatprep.subr.bf16.mxu0 0
        %4843 = vmatpush1.bf16.msra.mxu0 0
        %4844 = vmatprep.subr.bf16.mxu0 0
        %4845 = vmatpush1.bf16.msra.mxu0 0
        %4846 = vmatprep.subr.bf16.mxu0 0
        %4847 = vmatpush1.bf16.msra.mxu0 0
        %4848 = vmatprep.subr.bf16.mxu0 0
        %4849 = vmatpush1.bf16.msra.mxu0 0
        %4850 = vmatprep.subr.bf16.mxu0 0
        %4851 = vmatpush1.bf16.msra.mxu0 0
        %4852 = vmatprep.subr.bf16.mxu0 0
        %4853 = vmatpush1.bf16.msra.mxu0 0
        %4854 = vmatprep.subr.bf16.mxu0 0
        %4855 = vmatpush1.bf16.msra.mxu0 0
        %4856 = vmatprep.subr.bf16.mxu0 0
        %4857 = vmatpush1.bf16.msra.mxu0 0
        %4858 = vmatprep.subr.bf16.mxu0 0
        %4859 = vmatpush1.bf16.msra.mxu0 0
        %4860 = vmatprep.subr.bf16.mxu0 0
        %4861 = vmatpush1.bf16.msra.mxu0 0
        %4862 = vmatprep.subr.bf16.mxu0 0
        %4863 = vmatpush1.bf16.msra.mxu0 0
        %4864 = vmatprep.subr.bf16.mxu0 0
        %4865 = vmatpush1.bf16.msra.mxu0 0
        %4866 = vmatprep.subr.bf16.mxu0 0
        %4867 = vmatpush1.bf16.msra.mxu0 0
        %4868 = vmatprep.subr.bf16.mxu0 0
        %4869 = vmatpush1.bf16.msra.mxu0 0
        %4870 = vmatprep.mubr.bf16.mxu0 0
        %4871 = vmatmul.mubr.bf16.gmra.mrb[0].mxu0 %v4836
        %v4872 = vpop.f32.mrb[0].mxu0
        %v4873 = vadd.f32 0.0, %v4872
        %v4874 = vpop.f32.mrb[0].mxu0
        %v4875 = vpop.f32.mrb[0].mxu0
        %v4876 = vadd.f32 0.0, %v4875
        %v4877 = vpop.f32.mrb[0].mxu0
        %4878 = vdwg.mxu0
        %4880 = vrot.lane.b32.xlu0 %v2119, 120
        %v4881 = vpop.permute.xlu0 %4880
        %v4884 = vsel %vm1736, %v4205, 0
        %4886 = vmatprep.subr.bf16.mxu0 0
        %4887 = vmatpush1.bf16.msra.mxu0 %v4881
        %4888 = vmatprep.subr.bf16.mxu0 0
        %4889 = vmatpush1.bf16.msra.mxu0 0
        %4890 = vmatprep.subr.bf16.mxu0 0
        %4891 = vmatpush1.bf16.msra.mxu0 0
        %4892 = vmatprep.subr.bf16.mxu0 0
        %4893 = vmatpush1.bf16.msra.mxu0 0
        %4894 = vmatprep.subr.bf16.mxu0 0
        %4895 = vmatpush1.bf16.msra.mxu0 0
        %4896 = vmatprep.subr.bf16.mxu0 0
        %4897 = vmatpush1.bf16.msra.mxu0 0
        %4898 = vmatprep.subr.bf16.mxu0 0
        %4899 = vmatpush1.bf16.msra.mxu0 0
        %4900 = vmatprep.subr.bf16.mxu0 0
        %4901 = vmatpush1.bf16.msra.mxu0 0
        %4902 = vmatprep.subr.bf16.mxu0 0
        %4903 = vmatpush1.bf16.msra.mxu0 0
        %4904 = vmatprep.subr.bf16.mxu0 0
        %4905 = vmatpush1.bf16.msra.mxu0 0
        %4906 = vmatprep.subr.bf16.mxu0 0
        %4907 = vmatpush1.bf16.msra.mxu0 0
        %4908 = vmatprep.subr.bf16.mxu0 0
        %4909 = vmatpush1.bf16.msra.mxu0 0
        %4910 = vmatprep.subr.bf16.mxu0 0
        %4911 = vmatpush1.bf16.msra.mxu0 0
        %4912 = vmatprep.subr.bf16.mxu0 0
        %4913 = vmatpush1.bf16.msra.mxu0 0
        %4914 = vmatprep.subr.bf16.mxu0 0
        %4915 = vmatpush1.bf16.msra.mxu0 0
        %4916 = vmatprep.subr.bf16.mxu0 0
        %4917 = vmatpush1.bf16.msra.mxu0 0
        %4918 = vmatprep.mubr.bf16.mxu0 0
        %4919 = vmatmul.mubr.bf16.gmra.mrb[0].mxu0 %v4884
        %v4920 = vpop.f32.mrb[0].mxu0
        %v4921 = vadd.f32 0.0, %v4920
        %v4922 = vpop.f32.mrb[0].mxu0
        %v4923 = vpop.f32.mrb[0].mxu0
        %v4924 = vadd.f32 0.0, %v4923
        %v4925 = vpop.f32.mrb[0].mxu0
        %4926 = vdwg.mxu0
        %4928 = vrot.lane.b32.xlu0 %v2120, 120
        %v4929 = vpop.permute.xlu0 %4928
        %v4932 = vsel %vm1736, %v4206, 0
        %4934 = vmatprep.subr.bf16.mxu0 0
        %4935 = vmatpush1.bf16.msra.mxu0 %v4929
        %4936 = vmatprep.subr.bf16.mxu0 0
        %4937 = vmatpush1.bf16.msra.mxu0 0
        %4938 = vmatprep.subr.bf16.mxu0 0
        %4939 = vmatpush1.bf16.msra.mxu0 0
        %4940 = vmatprep.subr.bf16.mxu0 0
        %4941 = vmatpush1.bf16.msra.mxu0 0
        %4942 = vmatprep.subr.bf16.mxu0 0
        %4943 = vmatpush1.bf16.msra.mxu0 0
        %4944 = vmatprep.subr.bf16.mxu0 0
        %4945 = vmatpush1.bf16.msra.mxu0 0
        %4946 = vmatprep.subr.bf16.mxu0 0
        %4947 = vmatpush1.bf16.msra.mxu0 0
        %4948 = vmatprep.subr.bf16.mxu0 0
        %4949 = vmatpush1.bf16.msra.mxu0 0
        %4950 = vmatprep.subr.bf16.mxu0 0
        %4951 = vmatpush1.bf16.msra.mxu0 0
        %4952 = vmatprep.subr.bf16.mxu0 0
        %4953 = vmatpush1.bf16.msra.mxu0 0
        %4954 = vmatprep.subr.bf16.mxu0 0
        %4955 = vmatpush1.bf16.msra.mxu0 0
        %4956 = vmatprep.subr.bf16.mxu0 0
        %4957 = vmatpush1.bf16.msra.mxu0 0
        %4958 = vmatprep.subr.bf16.mxu0 0
        %4959 = vmatpush1.bf16.msra.mxu0 0
        %4960 = vmatprep.subr.bf16.mxu0 0
        %4961 = vmatpush1.bf16.msra.mxu0 0
        %4962 = vmatprep.subr.bf16.mxu0 0
        %4963 = vmatpush1.bf16.msra.mxu0 0
        %4964 = vmatprep.subr.bf16.mxu0 0
        %4965 = vmatpush1.bf16.msra.mxu0 0
        %4966 = vmatprep.mubr.bf16.mxu0 0
        %4967 = vmatmul.mubr.bf16.gmra.mrb[0].mxu0 %v4932
        %v4968 = vpop.f32.mrb[0].mxu0
        %v4969 = vadd.f32 0.0, %v4968
        %v4970 = vpop.f32.mrb[0].mxu0
        %v4971 = vpop.f32.mrb[0].mxu0
        %v4972 = vadd.f32 0.0, %v4971
        %v4973 = vpop.f32.mrb[0].mxu0
        %4974 = vdwg.mxu0
        %4975 = vrot.lane.b32.xlu0 %v2829, 120
        %v4976 = vpop.permute.xlu0 %4975
        %v4978 = vmul.f32 %v4249, %v4976
        %v4979 = vmul.f32 %v4252, %v4976
        %v4980 = vmul.f32 %v4297, %v4976
        %v4981 = vmul.f32 %v4300, %v4976
        %v4982 = vmul.f32 %v4345, %v4976
        %v4983 = vmul.f32 %v4348, %v4976
        %v4984 = vmul.f32 %v4393, %v4976
        %v4985 = vmul.f32 %v4396, %v4976
        %v4986 = vmul.f32 %v4441, %v4976
        %v4987 = vmul.f32 %v4444, %v4976
        %v4988 = vmul.f32 %v4489, %v4976
        %v4989 = vmul.f32 %v4492, %v4976
        %v4990 = vmul.f32 %v4537, %v4976
        %v4991 = vmul.f32 %v4540, %v4976
        %v4992 = vmul.f32 %v4585, %v4976
        %v4993 = vmul.f32 %v4588, %v4976
        %v4994 = vmul.f32 %v4633, %v4976
        %v4995 = vmul.f32 %v4636, %v4976
        %v4996 = vmul.f32 %v4681, %v4976
        %v4997 = vmul.f32 %v4684, %v4976
        %v4998 = vmul.f32 %v4729, %v4976
        %v4999 = vmul.f32 %v4732, %v4976
        %v5000 = vmul.f32 %v4777, %v4976
        %v5001 = vmul.f32 %v4780, %v4976
        %v5002 = vmul.f32 %v4825, %v4976
        %v5003 = vmul.f32 %v4828, %v4976
        %v5004 = vmul.f32 %v4873, %v4976
        %v5005 = vmul.f32 %v4876, %v4976
        %v5006 = vmul.f32 %v4921, %v4976
        %v5007 = vmul.f32 %v4924, %v4976
        %v5008 = vmul.f32 %v4969, %v4976
        %v5009 = vmul.f32 %v4972, %v4976
        %v5010 = vsel %vm983, %v4978, 0.0
        %5011 = vadd.xlane.f32.xlu0 %v5010
        %v5012 = vpop.xlane.xlu0 %5011
        %v5013 = vsel %vm983, %v4979, 0.0
        %5014 = vadd.xlane.f32.xlu0 %v5013
        %v5015 = vpop.xlane.xlu0 %5014
        %v5016 = vsel %vm983, %v4980, 0.0
        %5017 = vadd.xlane.f32.xlu0 %v5016
        %v5018 = vpop.xlane.xlu0 %5017
        %v5019 = vsel %vm983, %v4981, 0.0
        %5020 = vadd.xlane.f32.xlu0 %v5019
        %v5021 = vpop.xlane.xlu0 %5020
        %v5022 = vsel %vm983, %v4982, 0.0
        %5023 = vadd.xlane.f32.xlu0 %v5022
        %v5024 = vpop.xlane.xlu0 %5023
        %v5025 = vsel %vm983, %v4983, 0.0
        %5026 = vadd.xlane.f32.xlu0 %v5025
        %v5027 = vpop.xlane.xlu0 %5026
        %v5028 = vsel %vm983, %v4984, 0.0
        %5029 = vadd.xlane.f32.xlu0 %v5028
        %v5030 = vpop.xlane.xlu0 %5029
        %v5031 = vsel %vm983, %v4985, 0.0
        %5032 = vadd.xlane.f32.xlu0 %v5031
        %v5033 = vpop.xlane.xlu0 %5032
        %v5034 = vsel %vm983, %v4986, 0.0
        %5035 = vadd.xlane.f32.xlu0 %v5034
        %v5036 = vpop.xlane.xlu0 %5035
        %v5037 = vsel %vm983, %v4987, 0.0
        %5038 = vadd.xlane.f32.xlu0 %v5037
        %v5039 = vpop.xlane.xlu0 %5038
        %v5040 = vsel %vm983, %v4988, 0.0
        %5041 = vadd.xlane.f32.xlu0 %v5040
        %v5042 = vpop.xlane.xlu0 %5041
        %v5043 = vsel %vm983, %v4989, 0.0
        %5044 = vadd.xlane.f32.xlu0 %v5043
        %v5045 = vpop.xlane.xlu0 %5044
        %v5046 = vsel %vm983, %v4990, 0.0
        %5047 = vadd.xlane.f32.xlu0 %v5046
        %v5048 = vpop.xlane.xlu0 %5047
        %v5049 = vsel %vm983, %v4991, 0.0
        %5050 = vadd.xlane.f32.xlu0 %v5049
        %v5051 = vpop.xlane.xlu0 %5050
        %v5052 = vsel %vm983, %v4992, 0.0
        %5053 = vadd.xlane.f32.xlu0 %v5052
        %v5054 = vpop.xlane.xlu0 %5053
        %v5055 = vsel %vm983, %v4993, 0.0
        %5056 = vadd.xlane.f32.xlu0 %v5055
        %v5057 = vpop.xlane.xlu0 %5056
        %v5058 = vsel %vm983, %v4994, 0.0
        %5059 = vadd.xlane.f32.xlu0 %v5058
        %v5060 = vpop.xlane.xlu0 %5059
        %v5061 = vsel %vm983, %v4995, 0.0
        %5062 = vadd.xlane.f32.xlu0 %v5061
        %v5063 = vpop.xlane.xlu0 %5062
        %v5064 = vsel %vm983, %v4996, 0.0
        %5065 = vadd.xlane.f32.xlu0 %v5064
        %v5066 = vpop.xlane.xlu0 %5065
        %v5067 = vsel %vm983, %v4997, 0.0
        %5068 = vadd.xlane.f32.xlu0 %v5067
        %v5069 = vpop.xlane.xlu0 %5068
        %v5070 = vsel %vm983, %v4998, 0.0
        %5071 = vadd.xlane.f32.xlu0 %v5070
        %v5072 = vpop.xlane.xlu0 %5071
        %v5073 = vsel %vm983, %v4999, 0.0
        %5074 = vadd.xlane.f32.xlu0 %v5073
        %v5075 = vpop.xlane.xlu0 %5074
        %v5076 = vsel %vm983, %v5000, 0.0
        %5077 = vadd.xlane.f32.xlu0 %v5076
        %v5078 = vpop.xlane.xlu0 %5077
        %v5079 = vsel %vm983, %v5001, 0.0
        %5080 = vadd.xlane.f32.xlu0 %v5079
        %v5081 = vpop.xlane.xlu0 %5080
        %v5082 = vsel %vm983, %v5002, 0.0
        %5083 = vadd.xlane.f32.xlu0 %v5082
        %v5084 = vpop.xlane.xlu0 %5083
        %v5085 = vsel %vm983, %v5003, 0.0
        %5086 = vadd.xlane.f32.xlu0 %v5085
        %v5087 = vpop.xlane.xlu0 %5086
        %v5088 = vsel %vm983, %v5004, 0.0
        %5089 = vadd.xlane.f32.xlu0 %v5088
        %v5090 = vpop.xlane.xlu0 %5089
        %v5091 = vsel %vm983, %v5005, 0.0
        %5092 = vadd.xlane.f32.xlu0 %v5091
        %v5093 = vpop.xlane.xlu0 %5092
        %v5094 = vsel %vm983, %v5006, 0.0
        %5095 = vadd.xlane.f32.xlu0 %v5094
        %v5096 = vpop.xlane.xlu0 %5095
        %v5097 = vsel %vm983, %v5007, 0.0
        %5098 = vadd.xlane.f32.xlu0 %v5097
        %v5099 = vpop.xlane.xlu0 %5098
        %v5100 = vsel %vm983, %v5008, 0.0
        %5101 = vadd.xlane.f32.xlu0 %v5100
        %v5102 = vpop.xlane.xlu0 %5101
        %v5103 = vsel %vm983, %v5009, 0.0
        %5104 = vadd.xlane.f32.xlu0 %v5103
        %v5105 = vpop.xlane.xlu0 %5104
        %v5106 = vadd.f32 %v2959, %v5012
        %v5107 = vadd.f32 %v2960, %v5015
        %v5108 = vadd.f32 %v2961, %v5018
        %v5109 = vadd.f32 %v2962, %v5021
        %v5110 = vadd.f32 %v2963, %v5024
        %v5111 = vadd.f32 %v2964, %v5027
        %v5112 = vadd.f32 %v2965, %v5030
        %v5113 = vadd.f32 %v2966, %v5033
        %v5114 = vadd.f32 %v2967, %v5036
        %v5115 = vadd.f32 %v2968, %v5039
        %v5116 = vadd.f32 %v2969, %v5042
        %v5117 = vadd.f32 %v2970, %v5045
        %v5118 = vadd.f32 %v2971, %v5048
        %v5119 = vadd.f32 %v2972, %v5051
        %v5120 = vadd.f32 %v2973, %v5054
        %v5121 = vadd.f32 %v2974, %v5057
        %v5122 = vadd.f32 %v2975, %v5060
        %v5123 = vadd.f32 %v2976, %v5063
        %v5124 = vadd.f32 %v2977, %v5066
        %v5125 = vadd.f32 %v2978, %v5069
        %v5126 = vadd.f32 %v2979, %v5072
        %v5127 = vadd.f32 %v2980, %v5075
        %v5128 = vadd.f32 %v2981, %v5078
        %v5129 = vadd.f32 %v2982, %v5081
        %v5130 = vadd.f32 %v2983, %v5084
        %v5131 = vadd.f32 %v2984, %v5087
        %v5132 = vadd.f32 %v2985, %v5090
        %v5133 = vadd.f32 %v2986, %v5093
        %v5134 = vadd.f32 %v2987, %v5096
        %v5135 = vadd.f32 %v2988, %v5099
        %v5136 = vadd.f32 %v2989, %v5102
        %v5137 = vadd.f32 %v2990, %v5105
        %5138 = vrot.lane.b32.xlu0 %v951, 112
        %v5139 = vpop.permute.xlu0 %5138
        %5140 = vrot.lane.b32.xlu0 %v967, 112
        %v5141 = vpop.permute.xlu0 %5140
        %v5143 = vsel %vm983, %v5139, 0
        %v5146 = vsel %vm983, %v5141, 0
        %5148 = vmatprep.subr.bf16.mxu0 0
        %5149 = vmatpush1.bf16.xpose.msra.mxu0 %v5146
        %5150 = vmatprep.subr.bf16.mxu0 0
        %5151 = vmatpush1.bf16.xpose.msra.mxu0 0
        %5152 = vmatprep.subr.bf16.mxu0 0
        %5153 = vmatpush1.bf16.xpose.msra.mxu0 0
        %5154 = vmatprep.subr.bf16.mxu0 0
        %5155 = vmatpush1.bf16.xpose.msra.mxu0 0
        %5156 = vmatprep.subr.bf16.mxu0 0
        %5157 = vmatpush1.bf16.xpose.msra.mxu0 0
        %5158 = vmatprep.subr.bf16.mxu0 0
        %5159 = vmatpush1.bf16.xpose.msra.mxu0 0
        %5160 = vmatprep.subr.bf16.mxu0 0
        %5161 = vmatpush1.bf16.xpose.msra.mxu0 0
        %5162 = vmatprep.subr.bf16.mxu0 0
        %5163 = vmatpush1.bf16.xpose.msra.mxu0 0
        %5164 = vmatprep.subr.bf16.mxu0 0
        %5165 = vmatpush1.bf16.xpose.msra.mxu0 0
        %5166 = vmatprep.subr.bf16.mxu0 0
        %5167 = vmatpush1.bf16.xpose.msra.mxu0 0
        %5168 = vmatprep.subr.bf16.mxu0 0
        %5169 = vmatpush1.bf16.xpose.msra.mxu0 0
        %5170 = vmatprep.subr.bf16.mxu0 0
        %5171 = vmatpush1.bf16.xpose.msra.mxu0 0
        %5172 = vmatprep.subr.bf16.mxu0 0
        %5173 = vmatpush1.bf16.xpose.msra.mxu0 0
        %5174 = vmatprep.subr.bf16.mxu0 0
        %5175 = vmatpush1.bf16.xpose.msra.mxu0 0
        %5176 = vmatprep.subr.bf16.mxu0 0
        %5177 = vmatpush1.bf16.xpose.msra.mxu0 0
        %5178 = vmatprep.subr.bf16.mxu0 0
        %5179 = vmatpush1.bf16.xpose.msra.mxu0 0
        %5180 = vmatprep.mubr.bf16.mxu0 0
        %5181 = vmatmul.mubr.bf16.gmra.mrb[0].mxu0 %v5143
        %v5182 = vpop.f32.mrb[0].mxu0
        %v5183 = vadd.f32 0.0, %v5182
        %v5184 = vpop.f32.mrb[0].mxu0
        %v5185 = vpop.f32.mrb[0].mxu0
        %v5186 = vadd.f32 0.0, %v5185
        %v5187 = vpop.f32.mrb[0].mxu0
        %5188 = vdwg.mxu0
        %5189 = vrot.lane.b32.xlu0 %v952, 112
        %v5190 = vpop.permute.xlu0 %5189
        %5191 = vrot.lane.b32.xlu0 %v968, 112
        %v5192 = vpop.permute.xlu0 %5191
        %v5194 = vsel %vm983, %v5190, 0
        %v5197 = vsel %vm983, %v5192, 0
        %5199 = vmatprep.subr.bf16.mxu0 0
        %5200 = vmatpush1.bf16.xpose.msra.mxu0 %v5197
        %5201 = vmatprep.subr.bf16.mxu0 0
        %5202 = vmatpush1.bf16.xpose.msra.mxu0 0
        %5203 = vmatprep.subr.bf16.mxu0 0
        %5204 = vmatpush1.bf16.xpose.msra.mxu0 0
        %5205 = vmatprep.subr.bf16.mxu0 0
        %5206 = vmatpush1.bf16.xpose.msra.mxu0 0
        %5207 = vmatprep.subr.bf16.mxu0 0
        %5208 = vmatpush1.bf16.xpose.msra.mxu0 0
        %5209 = vmatprep.subr.bf16.mxu0 0
        %5210 = vmatpush1.bf16.xpose.msra.mxu0 0
        %5211 = vmatprep.subr.bf16.mxu0 0
        %5212 = vmatpush1.bf16.xpose.msra.mxu0 0
        %5213 = vmatprep.subr.bf16.mxu0 0
        %5214 = vmatpush1.bf16.xpose.msra.mxu0 0
        %5215 = vmatprep.subr.bf16.mxu0 0
        %5216 = vmatpush1.bf16.xpose.msra.mxu0 0
        %5217 = vmatprep.subr.bf16.mxu0 0
        %5218 = vmatpush1.bf16.xpose.msra.mxu0 0
        %5219 = vmatprep.subr.bf16.mxu0 0
        %5220 = vmatpush1.bf16.xpose.msra.mxu0 0
        %5221 = vmatprep.subr.bf16.mxu0 0
        %5222 = vmatpush1.bf16.xpose.msra.mxu0 0
        %5223 = vmatprep.subr.bf16.mxu0 0
        %5224 = vmatpush1.bf16.xpose.msra.mxu0 0
        %5225 = vmatprep.subr.bf16.mxu0 0
        %5226 = vmatpush1.bf16.xpose.msra.mxu0 0
        %5227 = vmatprep.subr.bf16.mxu0 0
        %5228 = vmatpush1.bf16.xpose.msra.mxu0 0
        %5229 = vmatprep.subr.bf16.mxu0 0
        %5230 = vmatpush1.bf16.xpose.msra.mxu0 0
        %5231 = vmatprep.mubr.bf16.mxu0 0
        %5232 = vmatmul.mubr.bf16.gmra.mrb[0].mxu0 %v5194
        %v5233 = vpop.f32.mrb[0].mxu0
        %v5234 = vadd.f32 0.0, %v5233
        %v5235 = vpop.f32.mrb[0].mxu0
        %v5236 = vpop.f32.mrb[0].mxu0
        %v5237 = vadd.f32 0.0, %v5236
        %v5238 = vpop.f32.mrb[0].mxu0
        %5239 = vdwg.mxu0
        %5240 = vrot.lane.b32.xlu0 %v953, 112
        %v5241 = vpop.permute.xlu0 %5240
        %5242 = vrot.lane.b32.xlu0 %v969, 112
        %v5243 = vpop.permute.xlu0 %5242
        %v5245 = vsel %vm983, %v5241, 0
        %v5248 = vsel %vm983, %v5243, 0
        %5250 = vmatprep.subr.bf16.mxu0 0
        %5251 = vmatpush1.bf16.xpose.msra.mxu0 %v5248
        %5252 = vmatprep.subr.bf16.mxu0 0
        %5253 = vmatpush1.bf16.xpose.msra.mxu0 0
        %5254 = vmatprep.subr.bf16.mxu0 0
        %5255 = vmatpush1.bf16.xpose.msra.mxu0 0
        %5256 = vmatprep.subr.bf16.mxu0 0
        %5257 = vmatpush1.bf16.xpose.msra.mxu0 0
        %5258 = vmatprep.subr.bf16.mxu0 0
        %5259 = vmatpush1.bf16.xpose.msra.mxu0 0
        %5260 = vmatprep.subr.bf16.mxu0 0
        %5261 = vmatpush1.bf16.xpose.msra.mxu0 0
        %5262 = vmatprep.subr.bf16.mxu0 0
        %5263 = vmatpush1.bf16.xpose.msra.mxu0 0
        %5264 = vmatprep.subr.bf16.mxu0 0
        %5265 = vmatpush1.bf16.xpose.msra.mxu0 0
        %5266 = vmatprep.subr.bf16.mxu0 0
        %5267 = vmatpush1.bf16.xpose.msra.mxu0 0
        %5268 = vmatprep.subr.bf16.mxu0 0
        %5269 = vmatpush1.bf16.xpose.msra.mxu0 0
        %5270 = vmatprep.subr.bf16.mxu0 0
        %5271 = vmatpush1.bf16.xpose.msra.mxu0 0
        %5272 = vmatprep.subr.bf16.mxu0 0
        %5273 = vmatpush1.bf16.xpose.msra.mxu0 0
        %5274 = vmatprep.subr.bf16.mxu0 0
        %5275 = vmatpush1.bf16.xpose.msra.mxu0 0
        %5276 = vmatprep.subr.bf16.mxu0 0
        %5277 = vmatpush1.bf16.xpose.msra.mxu0 0
        %5278 = vmatprep.subr.bf16.mxu0 0
        %5279 = vmatpush1.bf16.xpose.msra.mxu0 0
        %5280 = vmatprep.subr.bf16.mxu0 0
        %5281 = vmatpush1.bf16.xpose.msra.mxu0 0
        %5282 = vmatprep.mubr.bf16.mxu0 0
        %5283 = vmatmul.mubr.bf16.gmra.mrb[0].mxu0 %v5245
        %v5284 = vpop.f32.mrb[0].mxu0
        %v5285 = vadd.f32 0.0, %v5284
        %v5286 = vpop.f32.mrb[0].mxu0
        %v5287 = vpop.f32.mrb[0].mxu0
        %v5288 = vadd.f32 0.0, %v5287
        %v5289 = vpop.f32.mrb[0].mxu0
        %5290 = vdwg.mxu0
        %5291 = vrot.lane.b32.xlu0 %v954, 112
        %v5292 = vpop.permute.xlu0 %5291
        %5293 = vrot.lane.b32.xlu0 %v970, 112
        %v5294 = vpop.permute.xlu0 %5293
        %v5296 = vsel %vm983, %v5292, 0
        %v5299 = vsel %vm983, %v5294, 0
        %5301 = vmatprep.subr.bf16.mxu0 0
        %5302 = vmatpush1.bf16.xpose.msra.mxu0 %v5299
        %5303 = vmatprep.subr.bf16.mxu0 0
        %5304 = vmatpush1.bf16.xpose.msra.mxu0 0
        %5305 = vmatprep.subr.bf16.mxu0 0
        %5306 = vmatpush1.bf16.xpose.msra.mxu0 0
        %5307 = vmatprep.subr.bf16.mxu0 0
        %5308 = vmatpush1.bf16.xpose.msra.mxu0 0
        %5309 = vmatprep.subr.bf16.mxu0 0
        %5310 = vmatpush1.bf16.xpose.msra.mxu0 0
        %5311 = vmatprep.subr.bf16.mxu0 0
        %5312 = vmatpush1.bf16.xpose.msra.mxu0 0
        %5313 = vmatprep.subr.bf16.mxu0 0
        %5314 = vmatpush1.bf16.xpose.msra.mxu0 0
        %5315 = vmatprep.subr.bf16.mxu0 0
        %5316 = vmatpush1.bf16.xpose.msra.mxu0 0
        %5317 = vmatprep.subr.bf16.mxu0 0
        %5318 = vmatpush1.bf16.xpose.msra.mxu0 0
        %5319 = vmatprep.subr.bf16.mxu0 0
        %5320 = vmatpush1.bf16.xpose.msra.mxu0 0
        %5321 = vmatprep.subr.bf16.mxu0 0
        %5322 = vmatpush1.bf16.xpose.msra.mxu0 0
        %5323 = vmatprep.subr.bf16.mxu0 0
        %5324 = vmatpush1.bf16.xpose.msra.mxu0 0
        %5325 = vmatprep.subr.bf16.mxu0 0
        %5326 = vmatpush1.bf16.xpose.msra.mxu0 0
        %5327 = vmatprep.subr.bf16.mxu0 0
        %5328 = vmatpush1.bf16.xpose.msra.mxu0 0
        %5329 = vmatprep.subr.bf16.mxu0 0
        %5330 = vmatpush1.bf16.xpose.msra.mxu0 0
        %5331 = vmatprep.subr.bf16.mxu0 0
        %5332 = vmatpush1.bf16.xpose.msra.mxu0 0
        %5333 = vmatprep.mubr.bf16.mxu0 0
        %5334 = vmatmul.mubr.bf16.gmra.mrb[0].mxu0 %v5296
        %v5335 = vpop.f32.mrb[0].mxu0
        %v5336 = vadd.f32 0.0, %v5335
        %v5337 = vpop.f32.mrb[0].mxu0
        %v5338 = vpop.f32.mrb[0].mxu0
        %v5339 = vadd.f32 0.0, %v5338
        %v5340 = vpop.f32.mrb[0].mxu0
        %5341 = vdwg.mxu0
        %5342 = vrot.lane.b32.xlu0 %v955, 112
        %v5343 = vpop.permute.xlu0 %5342
        %5344 = vrot.lane.b32.xlu0 %v971, 112
        %v5345 = vpop.permute.xlu0 %5344
        %v5347 = vsel %vm983, %v5343, 0
        %v5350 = vsel %vm983, %v5345, 0
        %5352 = vmatprep.subr.bf16.mxu0 0
        %5353 = vmatpush1.bf16.xpose.msra.mxu0 %v5350
        %5354 = vmatprep.subr.bf16.mxu0 0
        %5355 = vmatpush1.bf16.xpose.msra.mxu0 0
        %5356 = vmatprep.subr.bf16.mxu0 0
        %5357 = vmatpush1.bf16.xpose.msra.mxu0 0
        %5358 = vmatprep.subr.bf16.mxu0 0
        %5359 = vmatpush1.bf16.xpose.msra.mxu0 0
        %5360 = vmatprep.subr.bf16.mxu0 0
        %5361 = vmatpush1.bf16.xpose.msra.mxu0 0
        %5362 = vmatprep.subr.bf16.mxu0 0
        %5363 = vmatpush1.bf16.xpose.msra.mxu0 0
        %5364 = vmatprep.subr.bf16.mxu0 0
        %5365 = vmatpush1.bf16.xpose.msra.mxu0 0
        %5366 = vmatprep.subr.bf16.mxu0 0
        %5367 = vmatpush1.bf16.xpose.msra.mxu0 0
        %5368 = vmatprep.subr.bf16.mxu0 0
        %5369 = vmatpush1.bf16.xpose.msra.mxu0 0
        %5370 = vmatprep.subr.bf16.mxu0 0
        %5371 = vmatpush1.bf16.xpose.msra.mxu0 0
        %5372 = vmatprep.subr.bf16.mxu0 0
        %5373 = vmatpush1.bf16.xpose.msra.mxu0 0
        %5374 = vmatprep.subr.bf16.mxu0 0
        %5375 = vmatpush1.bf16.xpose.msra.mxu0 0
        %5376 = vmatprep.subr.bf16.mxu0 0
        %5377 = vmatpush1.bf16.xpose.msra.mxu0 0
        %5378 = vmatprep.subr.bf16.mxu0 0
        %5379 = vmatpush1.bf16.xpose.msra.mxu0 0
        %5380 = vmatprep.subr.bf16.mxu0 0
        %5381 = vmatpush1.bf16.xpose.msra.mxu0 0
        %5382 = vmatprep.subr.bf16.mxu0 0
        %5383 = vmatpush1.bf16.xpose.msra.mxu0 0
        %5384 = vmatprep.mubr.bf16.mxu0 0
        %5385 = vmatmul.mubr.bf16.gmra.mrb[0].mxu0 %v5347
        %v5386 = vpop.f32.mrb[0].mxu0
        %v5387 = vadd.f32 0.0, %v5386
        %v5388 = vpop.f32.mrb[0].mxu0
        %v5389 = vpop.f32.mrb[0].mxu0
        %v5390 = vadd.f32 0.0, %v5389
        %v5391 = vpop.f32.mrb[0].mxu0
        %5392 = vdwg.mxu0
        %5393 = vrot.lane.b32.xlu0 %v956, 112
        %v5394 = vpop.permute.xlu0 %5393
        %5395 = vrot.lane.b32.xlu0 %v972, 112
        %v5396 = vpop.permute.xlu0 %5395
        %v5398 = vsel %vm983, %v5394, 0
        %v5401 = vsel %vm983, %v5396, 0
        %5403 = vmatprep.subr.bf16.mxu0 0
        %5404 = vmatpush1.bf16.xpose.msra.mxu0 %v5401
        %5405 = vmatprep.subr.bf16.mxu0 0
        %5406 = vmatpush1.bf16.xpose.msra.mxu0 0
        %5407 = vmatprep.subr.bf16.mxu0 0
        %5408 = vmatpush1.bf16.xpose.msra.mxu0 0
        %5409 = vmatprep.subr.bf16.mxu0 0
        %5410 = vmatpush1.bf16.xpose.msra.mxu0 0
        %5411 = vmatprep.subr.bf16.mxu0 0
        %5412 = vmatpush1.bf16.xpose.msra.mxu0 0
        %5413 = vmatprep.subr.bf16.mxu0 0
        %5414 = vmatpush1.bf16.xpose.msra.mxu0 0
        %5415 = vmatprep.subr.bf16.mxu0 0
        %5416 = vmatpush1.bf16.xpose.msra.mxu0 0
        %5417 = vmatprep.subr.bf16.mxu0 0
        %5418 = vmatpush1.bf16.xpose.msra.mxu0 0
        %5419 = vmatprep.subr.bf16.mxu0 0
        %5420 = vmatpush1.bf16.xpose.msra.mxu0 0
        %5421 = vmatprep.subr.bf16.mxu0 0
        %5422 = vmatpush1.bf16.xpose.msra.mxu0 0
        %5423 = vmatprep.subr.bf16.mxu0 0
        %5424 = vmatpush1.bf16.xpose.msra.mxu0 0
        %5425 = vmatprep.subr.bf16.mxu0 0
        %5426 = vmatpush1.bf16.xpose.msra.mxu0 0
        %5427 = vmatprep.subr.bf16.mxu0 0
        %5428 = vmatpush1.bf16.xpose.msra.mxu0 0
        %5429 = vmatprep.subr.bf16.mxu0 0
        %5430 = vmatpush1.bf16.xpose.msra.mxu0 0
        %5431 = vmatprep.subr.bf16.mxu0 0
        %5432 = vmatpush1.bf16.xpose.msra.mxu0 0
        %5433 = vmatprep.subr.bf16.mxu0 0
        %5434 = vmatpush1.bf16.xpose.msra.mxu0 0
        %5435 = vmatprep.mubr.bf16.mxu0 0
        %5436 = vmatmul.mubr.bf16.gmra.mrb[0].mxu0 %v5398
        %v5437 = vpop.f32.mrb[0].mxu0
        %v5438 = vadd.f32 0.0, %v5437
        %v5439 = vpop.f32.mrb[0].mxu0
        %v5440 = vpop.f32.mrb[0].mxu0
        %v5441 = vadd.f32 0.0, %v5440
        %v5442 = vpop.f32.mrb[0].mxu0
        %5443 = vdwg.mxu0
        %5444 = vrot.lane.b32.xlu0 %v957, 112
        %v5445 = vpop.permute.xlu0 %5444
        %5446 = vrot.lane.b32.xlu0 %v973, 112
        %v5447 = vpop.permute.xlu0 %5446
        %v5449 = vsel %vm983, %v5445, 0
        %v5452 = vsel %vm983, %v5447, 0
        %5454 = vmatprep.subr.bf16.mxu0 0
        %5455 = vmatpush1.bf16.xpose.msra.mxu0 %v5452
        %5456 = vmatprep.subr.bf16.mxu0 0
        %5457 = vmatpush1.bf16.xpose.msra.mxu0 0
        %5458 = vmatprep.subr.bf16.mxu0 0
        %5459 = vmatpush1.bf16.xpose.msra.mxu0 0
        %5460 = vmatprep.subr.bf16.mxu0 0
        %5461 = vmatpush1.bf16.xpose.msra.mxu0 0
        %5462 = vmatprep.subr.bf16.mxu0 0
        %5463 = vmatpush1.bf16.xpose.msra.mxu0 0
        %5464 = vmatprep.subr.bf16.mxu0 0
        %5465 = vmatpush1.bf16.xpose.msra.mxu0 0
        %5466 = vmatprep.subr.bf16.mxu0 0
        %5467 = vmatpush1.bf16.xpose.msra.mxu0 0
        %5468 = vmatprep.subr.bf16.mxu0 0
        %5469 = vmatpush1.bf16.xpose.msra.mxu0 0
        %5470 = vmatprep.subr.bf16.mxu0 0
        %5471 = vmatpush1.bf16.xpose.msra.mxu0 0
        %5472 = vmatprep.subr.bf16.mxu0 0
        %5473 = vmatpush1.bf16.xpose.msra.mxu0 0
        %5474 = vmatprep.subr.bf16.mxu0 0
        %5475 = vmatpush1.bf16.xpose.msra.mxu0 0
        %5476 = vmatprep.subr.bf16.mxu0 0
        %5477 = vmatpush1.bf16.xpose.msra.mxu0 0
        %5478 = vmatprep.subr.bf16.mxu0 0
        %5479 = vmatpush1.bf16.xpose.msra.mxu0 0
        %5480 = vmatprep.subr.bf16.mxu0 0
        %5481 = vmatpush1.bf16.xpose.msra.mxu0 0
        %5482 = vmatprep.subr.bf16.mxu0 0
        %5483 = vmatpush1.bf16.xpose.msra.mxu0 0
        %5484 = vmatprep.subr.bf16.mxu0 0
        %5485 = vmatpush1.bf16.xpose.msra.mxu0 0
        %5486 = vmatprep.mubr.bf16.mxu0 0
        %5487 = vmatmul.mubr.bf16.gmra.mrb[0].mxu0 %v5449
        %v5488 = vpop.f32.mrb[0].mxu0
        %v5489 = vadd.f32 0.0, %v5488
        %v5490 = vpop.f32.mrb[0].mxu0
        %v5491 = vpop.f32.mrb[0].mxu0
        %v5492 = vadd.f32 0.0, %v5491
        %v5493 = vpop.f32.mrb[0].mxu0
        %5494 = vdwg.mxu0
        %5495 = vrot.lane.b32.xlu0 %v958, 112
        %v5496 = vpop.permute.xlu0 %5495
        %5497 = vrot.lane.b32.xlu0 %v974, 112
        %v5498 = vpop.permute.xlu0 %5497
        %v5500 = vsel %vm983, %v5496, 0
        %v5503 = vsel %vm983, %v5498, 0
        %5505 = vmatprep.subr.bf16.mxu0 0
        %5506 = vmatpush1.bf16.xpose.msra.mxu0 %v5503
        %5507 = vmatprep.subr.bf16.mxu0 0
        %5508 = vmatpush1.bf16.xpose.msra.mxu0 0
        %5509 = vmatprep.subr.bf16.mxu0 0
        %5510 = vmatpush1.bf16.xpose.msra.mxu0 0
        %5511 = vmatprep.subr.bf16.mxu0 0
        %5512 = vmatpush1.bf16.xpose.msra.mxu0 0
        %5513 = vmatprep.subr.bf16.mxu0 0
        %5514 = vmatpush1.bf16.xpose.msra.mxu0 0
        %5515 = vmatprep.subr.bf16.mxu0 0
        %5516 = vmatpush1.bf16.xpose.msra.mxu0 0
        %5517 = vmatprep.subr.bf16.mxu0 0
        %5518 = vmatpush1.bf16.xpose.msra.mxu0 0
        %5519 = vmatprep.subr.bf16.mxu0 0
        %5520 = vmatpush1.bf16.xpose.msra.mxu0 0
        %5521 = vmatprep.subr.bf16.mxu0 0
        %5522 = vmatpush1.bf16.xpose.msra.mxu0 0
        %5523 = vmatprep.subr.bf16.mxu0 0
        %5524 = vmatpush1.bf16.xpose.msra.mxu0 0
        %5525 = vmatprep.subr.bf16.mxu0 0
        %5526 = vmatpush1.bf16.xpose.msra.mxu0 0
        %5527 = vmatprep.subr.bf16.mxu0 0
        %5528 = vmatpush1.bf16.xpose.msra.mxu0 0
        %5529 = vmatprep.subr.bf16.mxu0 0
        %5530 = vmatpush1.bf16.xpose.msra.mxu0 0
        %5531 = vmatprep.subr.bf16.mxu0 0
        %5532 = vmatpush1.bf16.xpose.msra.mxu0 0
        %5533 = vmatprep.subr.bf16.mxu0 0
        %5534 = vmatpush1.bf16.xpose.msra.mxu0 0
        %5535 = vmatprep.subr.bf16.mxu0 0
        %5536 = vmatpush1.bf16.xpose.msra.mxu0 0
        %5537 = vmatprep.mubr.bf16.mxu0 0
        %5538 = vmatmul.mubr.bf16.gmra.mrb[0].mxu0 %v5500
        %v5539 = vpop.f32.mrb[0].mxu0
        %v5540 = vadd.f32 0.0, %v5539
        %v5541 = vpop.f32.mrb[0].mxu0
        %v5542 = vpop.f32.mrb[0].mxu0
        %v5543 = vadd.f32 0.0, %v5542
        %v5544 = vpop.f32.mrb[0].mxu0
        %5545 = vdwg.mxu0
        %5546 = vrot.lane.b32.xlu0 %v959, 112
        %v5547 = vpop.permute.xlu0 %5546
        %5548 = vrot.lane.b32.xlu0 %v975, 112
        %v5549 = vpop.permute.xlu0 %5548
        %v5551 = vsel %vm983, %v5547, 0
        %v5554 = vsel %vm983, %v5549, 0
        %5556 = vmatprep.subr.bf16.mxu0 0
        %5557 = vmatpush1.bf16.xpose.msra.mxu0 %v5554
        %5558 = vmatprep.subr.bf16.mxu0 0
        %5559 = vmatpush1.bf16.xpose.msra.mxu0 0
        %5560 = vmatprep.subr.bf16.mxu0 0
        %5561 = vmatpush1.bf16.xpose.msra.mxu0 0
        %5562 = vmatprep.subr.bf16.mxu0 0
        %5563 = vmatpush1.bf16.xpose.msra.mxu0 0
        %5564 = vmatprep.subr.bf16.mxu0 0
        %5565 = vmatpush1.bf16.xpose.msra.mxu0 0
        %5566 = vmatprep.subr.bf16.mxu0 0
        %5567 = vmatpush1.bf16.xpose.msra.mxu0 0
        %5568 = vmatprep.subr.bf16.mxu0 0
        %5569 = vmatpush1.bf16.xpose.msra.mxu0 0
        %5570 = vmatprep.subr.bf16.mxu0 0
        %5571 = vmatpush1.bf16.xpose.msra.mxu0 0
        %5572 = vmatprep.subr.bf16.mxu0 0
        %5573 = vmatpush1.bf16.xpose.msra.mxu0 0
        %5574 = vmatprep.subr.bf16.mxu0 0
        %5575 = vmatpush1.bf16.xpose.msra.mxu0 0
        %5576 = vmatprep.subr.bf16.mxu0 0
        %5577 = vmatpush1.bf16.xpose.msra.mxu0 0
        %5578 = vmatprep.subr.bf16.mxu0 0
        %5579 = vmatpush1.bf16.xpose.msra.mxu0 0
        %5580 = vmatprep.subr.bf16.mxu0 0
        %5581 = vmatpush1.bf16.xpose.msra.mxu0 0
        %5582 = vmatprep.subr.bf16.mxu0 0
        %5583 = vmatpush1.bf16.xpose.msra.mxu0 0
        %5584 = vmatprep.subr.bf16.mxu0 0
        %5585 = vmatpush1.bf16.xpose.msra.mxu0 0
        %5586 = vmatprep.subr.bf16.mxu0 0
        %5587 = vmatpush1.bf16.xpose.msra.mxu0 0
        %5588 = vmatprep.mubr.bf16.mxu0 0
        %5589 = vmatmul.mubr.bf16.gmra.mrb[0].mxu0 %v5551
        %v5590 = vpop.f32.mrb[0].mxu0
        %v5591 = vadd.f32 0.0, %v5590
        %v5592 = vpop.f32.mrb[0].mxu0
        %v5593 = vpop.f32.mrb[0].mxu0
        %v5594 = vadd.f32 0.0, %v5593
        %v5595 = vpop.f32.mrb[0].mxu0
        %5596 = vdwg.mxu0
        %5597 = vrot.lane.b32.xlu0 %v960, 112
        %v5598 = vpop.permute.xlu0 %5597
        %5599 = vrot.lane.b32.xlu0 %v976, 112
        %v5600 = vpop.permute.xlu0 %5599
        %v5602 = vsel %vm983, %v5598, 0
        %v5605 = vsel %vm983, %v5600, 0
        %5607 = vmatprep.subr.bf16.mxu0 0
        %5608 = vmatpush1.bf16.xpose.msra.mxu0 %v5605
        %5609 = vmatprep.subr.bf16.mxu0 0
        %5610 = vmatpush1.bf16.xpose.msra.mxu0 0
        %5611 = vmatprep.subr.bf16.mxu0 0
        %5612 = vmatpush1.bf16.xpose.msra.mxu0 0
        %5613 = vmatprep.subr.bf16.mxu0 0
        %5614 = vmatpush1.bf16.xpose.msra.mxu0 0
        %5615 = vmatprep.subr.bf16.mxu0 0
        %5616 = vmatpush1.bf16.xpose.msra.mxu0 0
        %5617 = vmatprep.subr.bf16.mxu0 0
        %5618 = vmatpush1.bf16.xpose.msra.mxu0 0
        %5619 = vmatprep.subr.bf16.mxu0 0
        %5620 = vmatpush1.bf16.xpose.msra.mxu0 0
        %5621 = vmatprep.subr.bf16.mxu0 0
        %5622 = vmatpush1.bf16.xpose.msra.mxu0 0
        %5623 = vmatprep.subr.bf16.mxu0 0
        %5624 = vmatpush1.bf16.xpose.msra.mxu0 0
        %5625 = vmatprep.subr.bf16.mxu0 0
        %5626 = vmatpush1.bf16.xpose.msra.mxu0 0
        %5627 = vmatprep.subr.bf16.mxu0 0
        %5628 = vmatpush1.bf16.xpose.msra.mxu0 0
        %5629 = vmatprep.subr.bf16.mxu0 0
        %5630 = vmatpush1.bf16.xpose.msra.mxu0 0
        %5631 = vmatprep.subr.bf16.mxu0 0
        %5632 = vmatpush1.bf16.xpose.msra.mxu0 0
        %5633 = vmatprep.subr.bf16.mxu0 0
        %5634 = vmatpush1.bf16.xpose.msra.mxu0 0
        %5635 = vmatprep.subr.bf16.mxu0 0
        %5636 = vmatpush1.bf16.xpose.msra.mxu0 0
        %5637 = vmatprep.subr.bf16.mxu0 0
        %5638 = vmatpush1.bf16.xpose.msra.mxu0 0
        %5639 = vmatprep.mubr.bf16.mxu0 0
        %5640 = vmatmul.mubr.bf16.gmra.mrb[0].mxu0 %v5602
        %v5641 = vpop.f32.mrb[0].mxu0
        %v5642 = vadd.f32 0.0, %v5641
        %v5643 = vpop.f32.mrb[0].mxu0
        %v5644 = vpop.f32.mrb[0].mxu0
        %v5645 = vadd.f32 0.0, %v5644
        %v5646 = vpop.f32.mrb[0].mxu0
        %5647 = vdwg.mxu0
        %5648 = vrot.lane.b32.xlu0 %v961, 112
        %v5649 = vpop.permute.xlu0 %5648
        %5650 = vrot.lane.b32.xlu0 %v977, 112
        %v5651 = vpop.permute.xlu0 %5650
        %v5653 = vsel %vm983, %v5649, 0
        %v5656 = vsel %vm983, %v5651, 0
        %5658 = vmatprep.subr.bf16.mxu0 0
        %5659 = vmatpush1.bf16.xpose.msra.mxu0 %v5656
        %5660 = vmatprep.subr.bf16.mxu0 0
        %5661 = vmatpush1.bf16.xpose.msra.mxu0 0
        %5662 = vmatprep.subr.bf16.mxu0 0
        %5663 = vmatpush1.bf16.xpose.msra.mxu0 0
        %5664 = vmatprep.subr.bf16.mxu0 0
        %5665 = vmatpush1.bf16.xpose.msra.mxu0 0
        %5666 = vmatprep.subr.bf16.mxu0 0
        %5667 = vmatpush1.bf16.xpose.msra.mxu0 0
        %5668 = vmatprep.subr.bf16.mxu0 0
        %5669 = vmatpush1.bf16.xpose.msra.mxu0 0
        %5670 = vmatprep.subr.bf16.mxu0 0
        %5671 = vmatpush1.bf16.xpose.msra.mxu0 0
        %5672 = vmatprep.subr.bf16.mxu0 0
        %5673 = vmatpush1.bf16.xpose.msra.mxu0 0
        %5674 = vmatprep.subr.bf16.mxu0 0
        %5675 = vmatpush1.bf16.xpose.msra.mxu0 0
        %5676 = vmatprep.subr.bf16.mxu0 0
        %5677 = vmatpush1.bf16.xpose.msra.mxu0 0
        %5678 = vmatprep.subr.bf16.mxu0 0
        %5679 = vmatpush1.bf16.xpose.msra.mxu0 0
        %5680 = vmatprep.subr.bf16.mxu0 0
        %5681 = vmatpush1.bf16.xpose.msra.mxu0 0
        %5682 = vmatprep.subr.bf16.mxu0 0
        %5683 = vmatpush1.bf16.xpose.msra.mxu0 0
        %5684 = vmatprep.subr.bf16.mxu0 0
        %5685 = vmatpush1.bf16.xpose.msra.mxu0 0
        %5686 = vmatprep.subr.bf16.mxu0 0
        %5687 = vmatpush1.bf16.xpose.msra.mxu0 0
        %5688 = vmatprep.subr.bf16.mxu0 0
        %5689 = vmatpush1.bf16.xpose.msra.mxu0 0
        %5690 = vmatprep.mubr.bf16.mxu0 0
        %5691 = vmatmul.mubr.bf16.gmra.mrb[0].mxu0 %v5653
        %v5692 = vpop.f32.mrb[0].mxu0
        %v5693 = vadd.f32 0.0, %v5692
        %v5694 = vpop.f32.mrb[0].mxu0
        %v5695 = vpop.f32.mrb[0].mxu0
        %v5696 = vadd.f32 0.0, %v5695
        %v5697 = vpop.f32.mrb[0].mxu0
        %5698 = vdwg.mxu0
        %5699 = vrot.lane.b32.xlu0 %v962, 112
        %v5700 = vpop.permute.xlu0 %5699
        %5701 = vrot.lane.b32.xlu0 %v978, 112
        %v5702 = vpop.permute.xlu0 %5701
        %v5704 = vsel %vm983, %v5700, 0
        %v5707 = vsel %vm983, %v5702, 0
        %5709 = vmatprep.subr.bf16.mxu0 0
        %5710 = vmatpush1.bf16.xpose.msra.mxu0 %v5707
        %5711 = vmatprep.subr.bf16.mxu0 0
        %5712 = vmatpush1.bf16.xpose.msra.mxu0 0
        %5713 = vmatprep.subr.bf16.mxu0 0
        %5714 = vmatpush1.bf16.xpose.msra.mxu0 0
        %5715 = vmatprep.subr.bf16.mxu0 0
        %5716 = vmatpush1.bf16.xpose.msra.mxu0 0
        %5717 = vmatprep.subr.bf16.mxu0 0
        %5718 = vmatpush1.bf16.xpose.msra.mxu0 0
        %5719 = vmatprep.subr.bf16.mxu0 0
        %5720 = vmatpush1.bf16.xpose.msra.mxu0 0
        %5721 = vmatprep.subr.bf16.mxu0 0
        %5722 = vmatpush1.bf16.xpose.msra.mxu0 0
        %5723 = vmatprep.subr.bf16.mxu0 0
        %5724 = vmatpush1.bf16.xpose.msra.mxu0 0
        %5725 = vmatprep.subr.bf16.mxu0 0
        %5726 = vmatpush1.bf16.xpose.msra.mxu0 0
        %5727 = vmatprep.subr.bf16.mxu0 0
        %5728 = vmatpush1.bf16.xpose.msra.mxu0 0
        %5729 = vmatprep.subr.bf16.mxu0 0
        %5730 = vmatpush1.bf16.xpose.msra.mxu0 0
        %5731 = vmatprep.subr.bf16.mxu0 0
        %5732 = vmatpush1.bf16.xpose.msra.mxu0 0
        %5733 = vmatprep.subr.bf16.mxu0 0
        %5734 = vmatpush1.bf16.xpose.msra.mxu0 0
        %5735 = vmatprep.subr.bf16.mxu0 0
        %5736 = vmatpush1.bf16.xpose.msra.mxu0 0
        %5737 = vmatprep.subr.bf16.mxu0 0
        %5738 = vmatpush1.bf16.xpose.msra.mxu0 0
        %5739 = vmatprep.subr.bf16.mxu0 0
        %5740 = vmatpush1.bf16.xpose.msra.mxu0 0
        %5741 = vmatprep.mubr.bf16.mxu0 0
        %5742 = vmatmul.mubr.bf16.gmra.mrb[0].mxu0 %v5704
        %v5743 = vpop.f32.mrb[0].mxu0
        %v5744 = vadd.f32 0.0, %v5743
        %v5745 = vpop.f32.mrb[0].mxu0
        %v5746 = vpop.f32.mrb[0].mxu0
        %v5747 = vadd.f32 0.0, %v5746
        %v5748 = vpop.f32.mrb[0].mxu0
        %5749 = vdwg.mxu0
        %5750 = vrot.lane.b32.xlu0 %v963, 112
        %v5751 = vpop.permute.xlu0 %5750
        %5752 = vrot.lane.b32.xlu0 %v979, 112
        %v5753 = vpop.permute.xlu0 %5752
        %v5755 = vsel %vm983, %v5751, 0
        %v5758 = vsel %vm983, %v5753, 0
        %5760 = vmatprep.subr.bf16.mxu0 0
        %5761 = vmatpush1.bf16.xpose.msra.mxu0 %v5758
        %5762 = vmatprep.subr.bf16.mxu0 0
        %5763 = vmatpush1.bf16.xpose.msra.mxu0 0
        %5764 = vmatprep.subr.bf16.mxu0 0
        %5765 = vmatpush1.bf16.xpose.msra.mxu0 0
        %5766 = vmatprep.subr.bf16.mxu0 0
        %5767 = vmatpush1.bf16.xpose.msra.mxu0 0
        %5768 = vmatprep.subr.bf16.mxu0 0
        %5769 = vmatpush1.bf16.xpose.msra.mxu0 0
        %5770 = vmatprep.subr.bf16.mxu0 0
        %5771 = vmatpush1.bf16.xpose.msra.mxu0 0
        %5772 = vmatprep.subr.bf16.mxu0 0
        %5773 = vmatpush1.bf16.xpose.msra.mxu0 0
        %5774 = vmatprep.subr.bf16.mxu0 0
        %5775 = vmatpush1.bf16.xpose.msra.mxu0 0
        %5776 = vmatprep.subr.bf16.mxu0 0
        %5777 = vmatpush1.bf16.xpose.msra.mxu0 0
        %5778 = vmatprep.subr.bf16.mxu0 0
        %5779 = vmatpush1.bf16.xpose.msra.mxu0 0
        %5780 = vmatprep.subr.bf16.mxu0 0
        %5781 = vmatpush1.bf16.xpose.msra.mxu0 0
        %5782 = vmatprep.subr.bf16.mxu0 0
        %5783 = vmatpush1.bf16.xpose.msra.mxu0 0
        %5784 = vmatprep.subr.bf16.mxu0 0
        %5785 = vmatpush1.bf16.xpose.msra.mxu0 0
        %5786 = vmatprep.subr.bf16.mxu0 0
        %5787 = vmatpush1.bf16.xpose.msra.mxu0 0
        %5788 = vmatprep.subr.bf16.mxu0 0
        %5789 = vmatpush1.bf16.xpose.msra.mxu0 0
        %5790 = vmatprep.subr.bf16.mxu0 0
        %5791 = vmatpush1.bf16.xpose.msra.mxu0 0
        %5792 = vmatprep.mubr.bf16.mxu0 0
        %5793 = vmatmul.mubr.bf16.gmra.mrb[0].mxu0 %v5755
        %v5794 = vpop.f32.mrb[0].mxu0
        %v5795 = vadd.f32 0.0, %v5794
        %v5796 = vpop.f32.mrb[0].mxu0
        %v5797 = vpop.f32.mrb[0].mxu0
        %v5798 = vadd.f32 0.0, %v5797
        %v5799 = vpop.f32.mrb[0].mxu0
        %5800 = vdwg.mxu0
        %5801 = vrot.lane.b32.xlu0 %v964, 112
        %v5802 = vpop.permute.xlu0 %5801
        %5803 = vrot.lane.b32.xlu0 %v980, 112
        %v5804 = vpop.permute.xlu0 %5803
        %v5806 = vsel %vm983, %v5802, 0
        %v5809 = vsel %vm983, %v5804, 0
        %5811 = vmatprep.subr.bf16.mxu0 0
        %5812 = vmatpush1.bf16.xpose.msra.mxu0 %v5809
        %5813 = vmatprep.subr.bf16.mxu0 0
        %5814 = vmatpush1.bf16.xpose.msra.mxu0 0
        %5815 = vmatprep.subr.bf16.mxu0 0
        %5816 = vmatpush1.bf16.xpose.msra.mxu0 0
        %5817 = vmatprep.subr.bf16.mxu0 0
        %5818 = vmatpush1.bf16.xpose.msra.mxu0 0
        %5819 = vmatprep.subr.bf16.mxu0 0
        %5820 = vmatpush1.bf16.xpose.msra.mxu0 0
        %5821 = vmatprep.subr.bf16.mxu0 0
        %5822 = vmatpush1.bf16.xpose.msra.mxu0 0
        %5823 = vmatprep.subr.bf16.mxu0 0
        %5824 = vmatpush1.bf16.xpose.msra.mxu0 0
        %5825 = vmatprep.subr.bf16.mxu0 0
        %5826 = vmatpush1.bf16.xpose.msra.mxu0 0
        %5827 = vmatprep.subr.bf16.mxu0 0
        %5828 = vmatpush1.bf16.xpose.msra.mxu0 0
        %5829 = vmatprep.subr.bf16.mxu0 0
        %5830 = vmatpush1.bf16.xpose.msra.mxu0 0
        %5831 = vmatprep.subr.bf16.mxu0 0
        %5832 = vmatpush1.bf16.xpose.msra.mxu0 0
        %5833 = vmatprep.subr.bf16.mxu0 0
        %5834 = vmatpush1.bf16.xpose.msra.mxu0 0
        %5835 = vmatprep.subr.bf16.mxu0 0
        %5836 = vmatpush1.bf16.xpose.msra.mxu0 0
        %5837 = vmatprep.subr.bf16.mxu0 0
        %5838 = vmatpush1.bf16.xpose.msra.mxu0 0
        %5839 = vmatprep.subr.bf16.mxu0 0
        %5840 = vmatpush1.bf16.xpose.msra.mxu0 0
        %5841 = vmatprep.subr.bf16.mxu0 0
        %5842 = vmatpush1.bf16.xpose.msra.mxu0 0
        %5843 = vmatprep.mubr.bf16.mxu0 0
        %5844 = vmatmul.mubr.bf16.gmra.mrb[0].mxu0 %v5806
        %v5845 = vpop.f32.mrb[0].mxu0
        %v5846 = vadd.f32 0.0, %v5845
        %v5847 = vpop.f32.mrb[0].mxu0
        %v5848 = vpop.f32.mrb[0].mxu0
        %v5849 = vadd.f32 0.0, %v5848
        %v5850 = vpop.f32.mrb[0].mxu0
        %5851 = vdwg.mxu0
        %5852 = vrot.lane.b32.xlu0 %v965, 112
        %v5853 = vpop.permute.xlu0 %5852
        %5854 = vrot.lane.b32.xlu0 %v981, 112
        %v5855 = vpop.permute.xlu0 %5854
        %v5857 = vsel %vm983, %v5853, 0
        %v5860 = vsel %vm983, %v5855, 0
        %5862 = vmatprep.subr.bf16.mxu0 0
        %5863 = vmatpush1.bf16.xpose.msra.mxu0 %v5860
        %5864 = vmatprep.subr.bf16.mxu0 0
        %5865 = vmatpush1.bf16.xpose.msra.mxu0 0
        %5866 = vmatprep.subr.bf16.mxu0 0
        %5867 = vmatpush1.bf16.xpose.msra.mxu0 0
        %5868 = vmatprep.subr.bf16.mxu0 0
        %5869 = vmatpush1.bf16.xpose.msra.mxu0 0
        %5870 = vmatprep.subr.bf16.mxu0 0
        %5871 = vmatpush1.bf16.xpose.msra.mxu0 0
        %5872 = vmatprep.subr.bf16.mxu0 0
        %5873 = vmatpush1.bf16.xpose.msra.mxu0 0
        %5874 = vmatprep.subr.bf16.mxu0 0
        %5875 = vmatpush1.bf16.xpose.msra.mxu0 0
        %5876 = vmatprep.subr.bf16.mxu0 0
        %5877 = vmatpush1.bf16.xpose.msra.mxu0 0
        %5878 = vmatprep.subr.bf16.mxu0 0
        %5879 = vmatpush1.bf16.xpose.msra.mxu0 0
        %5880 = vmatprep.subr.bf16.mxu0 0
        %5881 = vmatpush1.bf16.xpose.msra.mxu0 0
        %5882 = vmatprep.subr.bf16.mxu0 0
        %5883 = vmatpush1.bf16.xpose.msra.mxu0 0
        %5884 = vmatprep.subr.bf16.mxu0 0
        %5885 = vmatpush1.bf16.xpose.msra.mxu0 0
        %5886 = vmatprep.subr.bf16.mxu0 0
        %5887 = vmatpush1.bf16.xpose.msra.mxu0 0
        %5888 = vmatprep.subr.bf16.mxu0 0
        %5889 = vmatpush1.bf16.xpose.msra.mxu0 0
        %5890 = vmatprep.subr.bf16.mxu0 0
        %5891 = vmatpush1.bf16.xpose.msra.mxu0 0
        %5892 = vmatprep.subr.bf16.mxu0 0
        %5893 = vmatpush1.bf16.xpose.msra.mxu0 0
        %5894 = vmatprep.mubr.bf16.mxu0 0
        %5895 = vmatmul.mubr.bf16.gmra.mrb[0].mxu0 %v5857
        %v5896 = vpop.f32.mrb[0].mxu0
        %v5897 = vadd.f32 0.0, %v5896
        %v5898 = vpop.f32.mrb[0].mxu0
        %v5899 = vpop.f32.mrb[0].mxu0
        %v5900 = vadd.f32 0.0, %v5899
        %v5901 = vpop.f32.mrb[0].mxu0
        %5902 = vdwg.mxu0
        %5903 = vrot.lane.b32.xlu0 %v966, 112
        %v5904 = vpop.permute.xlu0 %5903
        %5905 = vrot.lane.b32.xlu0 %v982, 112
        %v5906 = vpop.permute.xlu0 %5905
        %v5908 = vsel %vm983, %v5904, 0
        %v5911 = vsel %vm983, %v5906, 0
        %5913 = vmatprep.subr.bf16.mxu0 0
        %5914 = vmatpush1.bf16.xpose.msra.mxu0 %v5911
        %5915 = vmatprep.subr.bf16.mxu0 0
        %5916 = vmatpush1.bf16.xpose.msra.mxu0 0
        %5917 = vmatprep.subr.bf16.mxu0 0
        %5918 = vmatpush1.bf16.xpose.msra.mxu0 0
        %5919 = vmatprep.subr.bf16.mxu0 0
        %5920 = vmatpush1.bf16.xpose.msra.mxu0 0
        %5921 = vmatprep.subr.bf16.mxu0 0
        %5922 = vmatpush1.bf16.xpose.msra.mxu0 0
        %5923 = vmatprep.subr.bf16.mxu0 0
        %5924 = vmatpush1.bf16.xpose.msra.mxu0 0
        %5925 = vmatprep.subr.bf16.mxu0 0
        %5926 = vmatpush1.bf16.xpose.msra.mxu0 0
        %5927 = vmatprep.subr.bf16.mxu0 0
        %5928 = vmatpush1.bf16.xpose.msra.mxu0 0
        %5929 = vmatprep.subr.bf16.mxu0 0
        %5930 = vmatpush1.bf16.xpose.msra.mxu0 0
        %5931 = vmatprep.subr.bf16.mxu0 0
        %5932 = vmatpush1.bf16.xpose.msra.mxu0 0
        %5933 = vmatprep.subr.bf16.mxu0 0
        %5934 = vmatpush1.bf16.xpose.msra.mxu0 0
        %5935 = vmatprep.subr.bf16.mxu0 0
        %5936 = vmatpush1.bf16.xpose.msra.mxu0 0
        %5937 = vmatprep.subr.bf16.mxu0 0
        %5938 = vmatpush1.bf16.xpose.msra.mxu0 0
        %5939 = vmatprep.subr.bf16.mxu0 0
        %5940 = vmatpush1.bf16.xpose.msra.mxu0 0
        %5941 = vmatprep.subr.bf16.mxu0 0
        %5942 = vmatpush1.bf16.xpose.msra.mxu0 0
        %5943 = vmatprep.subr.bf16.mxu0 0
        %5944 = vmatpush1.bf16.xpose.msra.mxu0 0
        %5945 = vmatprep.mubr.bf16.mxu0 0
        %5946 = vmatmul.mubr.bf16.gmra.mrb[0].mxu0 %v5908
        %v5947 = vpop.f32.mrb[0].mxu0
        %v5948 = vadd.f32 0.0, %v5947
        %v5949 = vpop.f32.mrb[0].mxu0
        %v5950 = vpop.f32.mrb[0].mxu0
        %v5951 = vadd.f32 0.0, %v5950
        %v5952 = vpop.f32.mrb[0].mxu0
        %5953 = vdwg.mxu0
        %v5954 = vsel %vm1736, %v5183, -inf
        %5955 = vmax.xlane.f32.xlu0 %v5954
        %v5956 = vpop.xlane.xlu0 %5955
        %v5957 = vsel %vm1736, %v5186, -inf
        %5958 = vmax.xlane.f32.xlu0 %v5957
        %v5959 = vpop.xlane.xlu0 %5958
        %v5960 = vsel %vm1736, %v5234, -inf
        %5961 = vmax.xlane.f32.xlu0 %v5960
        %v5962 = vpop.xlane.xlu0 %5961
        %v5963 = vsel %vm1736, %v5237, -inf
        %5964 = vmax.xlane.f32.xlu0 %v5963
        %v5965 = vpop.xlane.xlu0 %5964
        %v5966 = vsel %vm1736, %v5285, -inf
        %5967 = vmax.xlane.f32.xlu0 %v5966
        %v5968 = vpop.xlane.xlu0 %5967
        %v5969 = vsel %vm1736, %v5288, -inf
        %5970 = vmax.xlane.f32.xlu0 %v5969
        %v5971 = vpop.xlane.xlu0 %5970
        %v5972 = vsel %vm1736, %v5336, -inf
        %5973 = vmax.xlane.f32.xlu0 %v5972
        %v5974 = vpop.xlane.xlu0 %5973
        %v5975 = vsel %vm1736, %v5339, -inf
        %5976 = vmax.xlane.f32.xlu0 %v5975
        %v5977 = vpop.xlane.xlu0 %5976
        %v5978 = vsel %vm1736, %v5387, -inf
        %5979 = vmax.xlane.f32.xlu0 %v5978
        %v5980 = vpop.xlane.xlu0 %5979
        %v5981 = vsel %vm1736, %v5390, -inf
        %5982 = vmax.xlane.f32.xlu0 %v5981
        %v5983 = vpop.xlane.xlu0 %5982
        %v5984 = vsel %vm1736, %v5438, -inf
        %5985 = vmax.xlane.f32.xlu0 %v5984
        %v5986 = vpop.xlane.xlu0 %5985
        %v5987 = vsel %vm1736, %v5441, -inf
        %5988 = vmax.xlane.f32.xlu0 %v5987
        %v5989 = vpop.xlane.xlu0 %5988
        %v5990 = vsel %vm1736, %v5489, -inf
        %5991 = vmax.xlane.f32.xlu0 %v5990
        %v5992 = vpop.xlane.xlu0 %5991
        %v5993 = vsel %vm1736, %v5492, -inf
        %5994 = vmax.xlane.f32.xlu0 %v5993
        %v5995 = vpop.xlane.xlu0 %5994
        %v5996 = vsel %vm1736, %v5540, -inf
        %5997 = vmax.xlane.f32.xlu0 %v5996
        %v5998 = vpop.xlane.xlu0 %5997
        %v5999 = vsel %vm1736, %v5543, -inf
        %6000 = vmax.xlane.f32.xlu0 %v5999
        %v6001 = vpop.xlane.xlu0 %6000
        %v6002 = vsel %vm1736, %v5591, -inf
        %6003 = vmax.xlane.f32.xlu0 %v6002
        %v6004 = vpop.xlane.xlu0 %6003
        %v6005 = vsel %vm1736, %v5594, -inf
        %6006 = vmax.xlane.f32.xlu0 %v6005
        %v6007 = vpop.xlane.xlu0 %6006
        %v6008 = vsel %vm1736, %v5642, -inf
        %6009 = vmax.xlane.f32.xlu0 %v6008
        %v6010 = vpop.xlane.xlu0 %6009
        %v6011 = vsel %vm1736, %v5645, -inf
        %6012 = vmax.xlane.f32.xlu0 %v6011
        %v6013 = vpop.xlane.xlu0 %6012
        %v6014 = vsel %vm1736, %v5693, -inf
        %6015 = vmax.xlane.f32.xlu0 %v6014
        %v6016 = vpop.xlane.xlu0 %6015
        %v6017 = vsel %vm1736, %v5696, -inf
        %6018 = vmax.xlane.f32.xlu0 %v6017
        %v6019 = vpop.xlane.xlu0 %6018
        %v6020 = vsel %vm1736, %v5744, -inf
        %6021 = vmax.xlane.f32.xlu0 %v6020
        %v6022 = vpop.xlane.xlu0 %6021
        %v6023 = vsel %vm1736, %v5747, -inf
        %6024 = vmax.xlane.f32.xlu0 %v6023
        %v6025 = vpop.xlane.xlu0 %6024
        %v6026 = vsel %vm1736, %v5795, -inf
        %6027 = vmax.xlane.f32.xlu0 %v6026
        %v6028 = vpop.xlane.xlu0 %6027
        %v6029 = vsel %vm1736, %v5798, -inf
        %6030 = vmax.xlane.f32.xlu0 %v6029
        %v6031 = vpop.xlane.xlu0 %6030
        %v6032 = vsel %vm1736, %v5846, -inf
        %6033 = vmax.xlane.f32.xlu0 %v6032
        %v6034 = vpop.xlane.xlu0 %6033
        %v6035 = vsel %vm1736, %v5849, -inf
        %6036 = vmax.xlane.f32.xlu0 %v6035
        %v6037 = vpop.xlane.xlu0 %6036
        %v6038 = vsel %vm1736, %v5897, -inf
        %6039 = vmax.xlane.f32.xlu0 %v6038
        %v6040 = vpop.xlane.xlu0 %6039
        %v6041 = vsel %vm1736, %v5900, -inf
        %6042 = vmax.xlane.f32.xlu0 %v6041
        %v6043 = vpop.xlane.xlu0 %6042
        %v6044 = vsel %vm1736, %v5948, -inf
        %6045 = vmax.xlane.f32.xlu0 %v6044
        %v6046 = vpop.xlane.xlu0 %6045
        %v6047 = vsel %vm1736, %v5951, -inf
        %6048 = vmax.xlane.f32.xlu0 %v6047
        %v6049 = vpop.xlane.xlu0 %6048
        %v6050 = vsub.f32 %v5183, %v5956
        %v6051 = vsub.f32 %v5186, %v5959
        %v6052 = vsub.f32 %v5234, %v5962
        %v6053 = vsub.f32 %v5237, %v5965
        %v6054 = vsub.f32 %v5285, %v5968
        %v6055 = vsub.f32 %v5288, %v5971
        %v6056 = vsub.f32 %v5336, %v5974
        %v6057 = vsub.f32 %v5339, %v5977
        %v6058 = vsub.f32 %v5387, %v5980
        %v6059 = vsub.f32 %v5390, %v5983
        %v6060 = vsub.f32 %v5438, %v5986
        %v6061 = vsub.f32 %v5441, %v5989
        %v6062 = vsub.f32 %v5489, %v5992
        %v6063 = vsub.f32 %v5492, %v5995
        %v6064 = vsub.f32 %v5540, %v5998
        %v6065 = vsub.f32 %v5543, %v6001
        %v6066 = vsub.f32 %v5591, %v6004
        %v6067 = vsub.f32 %v5594, %v6007
        %v6068 = vsub.f32 %v5642, %v6010
        %v6069 = vsub.f32 %v5645, %v6013
        %v6070 = vsub.f32 %v5693, %v6016
        %v6071 = vsub.f32 %v5696, %v6019
        %v6072 = vsub.f32 %v5744, %v6022
        %v6073 = vsub.f32 %v5747, %v6025
        %v6074 = vsub.f32 %v5795, %v6028
        %v6075 = vsub.f32 %v5798, %v6031
        %v6076 = vsub.f32 %v5846, %v6034
        %v6077 = vsub.f32 %v5849, %v6037
        %v6078 = vsub.f32 %v5897, %v6040
        %v6079 = vsub.f32 %v5900, %v6043
        %v6080 = vsub.f32 %v5948, %v6046
        %v6081 = vsub.f32 %v5951, %v6049
        %v6082 = vmul.f32 %v6050, 1.442695
        %v6083 = vpow.pop %v6082
        %v6084 = vmul.f32 %v6051, 1.442695
        %v6085 = vpow.pop %v6084
        %v6086 = vmul.f32 %v6052, 1.442695
        %v6087 = vpow.pop %v6086
        %v6088 = vmul.f32 %v6053, 1.442695
        %v6089 = vpow.pop %v6088
        %v6090 = vmul.f32 %v6054, 1.442695
        %v6091 = vpow.pop %v6090
        %v6092 = vmul.f32 %v6055, 1.442695
        %v6093 = vpow.pop %v6092
        %v6094 = vmul.f32 %v6056, 1.442695
        %v6095 = vpow.pop %v6094
        %v6096 = vmul.f32 %v6057, 1.442695
        %v6097 = vpow.pop %v6096
        %v6098 = vmul.f32 %v6058, 1.442695
        %v6099 = vpow.pop %v6098
        %v6100 = vmul.f32 %v6059, 1.442695
        %v6101 = vpow.pop %v6100
        %v6102 = vmul.f32 %v6060, 1.442695
        %v6103 = vpow.pop %v6102
        %v6104 = vmul.f32 %v6061, 1.442695
        %v6105 = vpow.pop %v6104
        %v6106 = vmul.f32 %v6062, 1.442695
        %v6107 = vpow.pop %v6106
        %v6108 = vmul.f32 %v6063, 1.442695
        %v6109 = vpow.pop %v6108
        %v6110 = vmul.f32 %v6064, 1.442695
        %v6111 = vpow.pop %v6110
        %v6112 = vmul.f32 %v6065, 1.442695
        %v6113 = vpow.pop %v6112
        %v6114 = vmul.f32 %v6066, 1.442695
        %v6115 = vpow.pop %v6114
        %v6116 = vmul.f32 %v6067, 1.442695
        %v6117 = vpow.pop %v6116
        %v6118 = vmul.f32 %v6068, 1.442695
        %v6119 = vpow.pop %v6118
        %v6120 = vmul.f32 %v6069, 1.442695
        %v6121 = vpow.pop %v6120
        %v6122 = vmul.f32 %v6070, 1.442695
        %v6123 = vpow.pop %v6122
        %v6124 = vmul.f32 %v6071, 1.442695
        %v6125 = vpow.pop %v6124
        %v6126 = vmul.f32 %v6072, 1.442695
        %v6127 = vpow.pop %v6126
        %v6128 = vmul.f32 %v6073, 1.442695
        %v6129 = vpow.pop %v6128
        %v6130 = vmul.f32 %v6074, 1.442695
        %v6131 = vpow.pop %v6130
        %v6132 = vmul.f32 %v6075, 1.442695
        %v6133 = vpow.pop %v6132
        %v6134 = vmul.f32 %v6076, 1.442695
        %v6135 = vpow.pop %v6134
        %v6136 = vmul.f32 %v6077, 1.442695
        %v6137 = vpow.pop %v6136
        %v6138 = vmul.f32 %v6078, 1.442695
        %v6139 = vpow.pop %v6138
        %v6140 = vmul.f32 %v6079, 1.442695
        %v6141 = vpow.pop %v6140
        %v6142 = vmul.f32 %v6080, 1.442695
        %v6143 = vpow.pop %v6142
        %v6144 = vmul.f32 %v6081, 1.442695
        %v6145 = vpow.pop %v6144
        %v6146 = vsel %vm1736, %v6083, 0.0
        %6147 = vadd.xlane.f32.xlu0 %v6146
        %v6148 = vpop.xlane.xlu0 %6147
        %v6149 = vsel %vm1736, %v6085, 0.0
        %6150 = vadd.xlane.f32.xlu0 %v6149
        %v6151 = vpop.xlane.xlu0 %6150
        %v6152 = vsel %vm1736, %v6087, 0.0
        %6153 = vadd.xlane.f32.xlu0 %v6152
        %v6154 = vpop.xlane.xlu0 %6153
        %v6155 = vsel %vm1736, %v6089, 0.0
        %6156 = vadd.xlane.f32.xlu0 %v6155
        %v6157 = vpop.xlane.xlu0 %6156
        %v6158 = vsel %vm1736, %v6091, 0.0
        %6159 = vadd.xlane.f32.xlu0 %v6158
        %v6160 = vpop.xlane.xlu0 %6159
        %v6161 = vsel %vm1736, %v6093, 0.0
        %6162 = vadd.xlane.f32.xlu0 %v6161
        %v6163 = vpop.xlane.xlu0 %6162
        %v6164 = vsel %vm1736, %v6095, 0.0
        %6165 = vadd.xlane.f32.xlu0 %v6164
        %v6166 = vpop.xlane.xlu0 %6165
        %v6167 = vsel %vm1736, %v6097, 0.0
        %6168 = vadd.xlane.f32.xlu0 %v6167
        %v6169 = vpop.xlane.xlu0 %6168
        %v6170 = vsel %vm1736, %v6099, 0.0
        %6171 = vadd.xlane.f32.xlu0 %v6170
        %v6172 = vpop.xlane.xlu0 %6171
        %v6173 = vsel %vm1736, %v6101, 0.0
        %6174 = vadd.xlane.f32.xlu0 %v6173
        %v6175 = vpop.xlane.xlu0 %6174
        %v6176 = vsel %vm1736, %v6103, 0.0
        %6177 = vadd.xlane.f32.xlu0 %v6176
        %v6178 = vpop.xlane.xlu0 %6177
        %v6179 = vsel %vm1736, %v6105, 0.0
        %6180 = vadd.xlane.f32.xlu0 %v6179
        %v6181 = vpop.xlane.xlu0 %6180
        %v6182 = vsel %vm1736, %v6107, 0.0
        %6183 = vadd.xlane.f32.xlu0 %v6182
        %v6184 = vpop.xlane.xlu0 %6183
        %v6185 = vsel %vm1736, %v6109, 0.0
        %6186 = vadd.xlane.f32.xlu0 %v6185
        %v6187 = vpop.xlane.xlu0 %6186
        %v6188 = vsel %vm1736, %v6111, 0.0
        %6189 = vadd.xlane.f32.xlu0 %v6188
        %v6190 = vpop.xlane.xlu0 %6189
        %v6191 = vsel %vm1736, %v6113, 0.0
        %6192 = vadd.xlane.f32.xlu0 %v6191
        %v6193 = vpop.xlane.xlu0 %6192
        %v6194 = vsel %vm1736, %v6115, 0.0
        %6195 = vadd.xlane.f32.xlu0 %v6194
        %v6196 = vpop.xlane.xlu0 %6195
        %v6197 = vsel %vm1736, %v6117, 0.0
        %6198 = vadd.xlane.f32.xlu0 %v6197
        %v6199 = vpop.xlane.xlu0 %6198
        %v6200 = vsel %vm1736, %v6119, 0.0
        %6201 = vadd.xlane.f32.xlu0 %v6200
        %v6202 = vpop.xlane.xlu0 %6201
        %v6203 = vsel %vm1736, %v6121, 0.0
        %6204 = vadd.xlane.f32.xlu0 %v6203
        %v6205 = vpop.xlane.xlu0 %6204
        %v6206 = vsel %vm1736, %v6123, 0.0
        %6207 = vadd.xlane.f32.xlu0 %v6206
        %v6208 = vpop.xlane.xlu0 %6207
        %v6209 = vsel %vm1736, %v6125, 0.0
        %6210 = vadd.xlane.f32.xlu0 %v6209
        %v6211 = vpop.xlane.xlu0 %6210
        %v6212 = vsel %vm1736, %v6127, 0.0
        %6213 = vadd.xlane.f32.xlu0 %v6212
        %v6214 = vpop.xlane.xlu0 %6213
        %v6215 = vsel %vm1736, %v6129, 0.0
        %6216 = vadd.xlane.f32.xlu0 %v6215
        %v6217 = vpop.xlane.xlu0 %6216
        %v6218 = vsel %vm1736, %v6131, 0.0
        %6219 = vadd.xlane.f32.xlu0 %v6218
        %v6220 = vpop.xlane.xlu0 %6219
        %v6221 = vsel %vm1736, %v6133, 0.0
        %6222 = vadd.xlane.f32.xlu0 %v6221
        %v6223 = vpop.xlane.xlu0 %6222
        %v6224 = vsel %vm1736, %v6135, 0.0
        %6225 = vadd.xlane.f32.xlu0 %v6224
        %v6226 = vpop.xlane.xlu0 %6225
        %v6227 = vsel %vm1736, %v6137, 0.0
        %6228 = vadd.xlane.f32.xlu0 %v6227
        %v6229 = vpop.xlane.xlu0 %6228
        %v6230 = vsel %vm1736, %v6139, 0.0
        %6231 = vadd.xlane.f32.xlu0 %v6230
        %v6232 = vpop.xlane.xlu0 %6231
        %v6233 = vsel %vm1736, %v6141, 0.0
        %6234 = vadd.xlane.f32.xlu0 %v6233
        %v6235 = vpop.xlane.xlu0 %6234
        %v6236 = vsel %vm1736, %v6143, 0.0
        %6237 = vadd.xlane.f32.xlu0 %v6236
        %v6238 = vpop.xlane.xlu0 %6237
        %v6239 = vsel %vm1736, %v6145, 0.0
        %6240 = vadd.xlane.f32.xlu0 %v6239
        %v6241 = vpop.xlane.xlu0 %6240
        %v6242 = vrcp.pop %v6148
        %v6243 = vmul.f32 %v6083, %v6242
        %v6244 = vrcp.pop %v6151
        %v6245 = vmul.f32 %v6085, %v6244
        %v6246 = vrcp.pop %v6154
        %v6247 = vmul.f32 %v6087, %v6246
        %v6248 = vrcp.pop %v6157
        %v6249 = vmul.f32 %v6089, %v6248
        %v6250 = vrcp.pop %v6160
        %v6251 = vmul.f32 %v6091, %v6250
        %v6252 = vrcp.pop %v6163
        %v6253 = vmul.f32 %v6093, %v6252
        %v6254 = vrcp.pop %v6166
        %v6255 = vmul.f32 %v6095, %v6254
        %v6256 = vrcp.pop %v6169
        %v6257 = vmul.f32 %v6097, %v6256
        %v6258 = vrcp.pop %v6172
        %v6259 = vmul.f32 %v6099, %v6258
        %v6260 = vrcp.pop %v6175
        %v6261 = vmul.f32 %v6101, %v6260
        %v6262 = vrcp.pop %v6178
        %v6263 = vmul.f32 %v6103, %v6262
        %v6264 = vrcp.pop %v6181
        %v6265 = vmul.f32 %v6105, %v6264
        %v6266 = vrcp.pop %v6184
        %v6267 = vmul.f32 %v6107, %v6266
        %v6268 = vrcp.pop %v6187
        %v6269 = vmul.f32 %v6109, %v6268
        %v6270 = vrcp.pop %v6190
        %v6271 = vmul.f32 %v6111, %v6270
        %v6272 = vrcp.pop %v6193
        %v6273 = vmul.f32 %v6113, %v6272
        %v6274 = vrcp.pop %v6196
        %v6275 = vmul.f32 %v6115, %v6274
        %v6276 = vrcp.pop %v6199
        %v6277 = vmul.f32 %v6117, %v6276
        %v6278 = vrcp.pop %v6202
        %v6279 = vmul.f32 %v6119, %v6278
        %v6280 = vrcp.pop %v6205
        %v6281 = vmul.f32 %v6121, %v6280
        %v6282 = vrcp.pop %v6208
        %v6283 = vmul.f32 %v6123, %v6282
        %v6284 = vrcp.pop %v6211
        %v6285 = vmul.f32 %v6125, %v6284
        %v6286 = vrcp.pop %v6214
        %v6287 = vmul.f32 %v6127, %v6286
        %v6288 = vrcp.pop %v6217
        %v6289 = vmul.f32 %v6129, %v6288
        %v6290 = vrcp.pop %v6220
        %v6291 = vmul.f32 %v6131, %v6290
        %v6292 = vrcp.pop %v6223
        %v6293 = vmul.f32 %v6133, %v6292
        %v6294 = vrcp.pop %v6226
        %v6295 = vmul.f32 %v6135, %v6294
        %v6296 = vrcp.pop %v6229
        %v6297 = vmul.f32 %v6137, %v6296
        %v6298 = vrcp.pop %v6232
        %v6299 = vmul.f32 %v6139, %v6298
        %v6300 = vrcp.pop %v6235
        %v6301 = vmul.f32 %v6141, %v6300
        %v6302 = vrcp.pop %v6238
        %v6303 = vmul.f32 %v6143, %v6302
        %v6304 = vrcp.pop %v6241
        %v6305 = vmul.f32 %v6145, %v6304
        %v6306 = vpack.c.bf16 %v6245, %v6243
        %v6307 = vpack.c.bf16 %v6249, %v6247
        %v6308 = vpack.c.bf16 %v6253, %v6251
        %v6309 = vpack.c.bf16 %v6257, %v6255
        %v6310 = vpack.c.bf16 %v6261, %v6259
        %v6311 = vpack.c.bf16 %v6265, %v6263
        %v6312 = vpack.c.bf16 %v6269, %v6267
        %v6313 = vpack.c.bf16 %v6273, %v6271
        %v6314 = vpack.c.bf16 %v6277, %v6275
        %v6315 = vpack.c.bf16 %v6281, %v6279
        %v6316 = vpack.c.bf16 %v6285, %v6283
        %v6317 = vpack.c.bf16 %v6289, %v6287
        %v6318 = vpack.c.bf16 %v6293, %v6291
        %v6319 = vpack.c.bf16 %v6297, %v6295
        %v6320 = vpack.c.bf16 %v6301, %v6299
        %v6321 = vpack.c.bf16 %v6305, %v6303
        %6322 = vrot.lane.b32.xlu0 %v2105, 112
        %v6323 = vpop.permute.xlu0 %6322
        %v6326 = vsel %vm1736, %v6306, 0
        %6328 = vmatprep.subr.bf16.mxu0 0
        %6329 = vmatpush1.bf16.msra.mxu0 %v6323
        %6330 = vmatprep.subr.bf16.mxu0 0
        %6331 = vmatpush1.bf16.msra.mxu0 0
        %6332 = vmatprep.subr.bf16.mxu0 0
        %6333 = vmatpush1.bf16.msra.mxu0 0
        %6334 = vmatprep.subr.bf16.mxu0 0
        %6335 = vmatpush1.bf16.msra.mxu0 0
        %6336 = vmatprep.subr.bf16.mxu0 0
        %6337 = vmatpush1.bf16.msra.mxu0 0
        %6338 = vmatprep.subr.bf16.mxu0 0
        %6339 = vmatpush1.bf16.msra.mxu0 0
        %6340 = vmatprep.subr.bf16.mxu0 0
        %6341 = vmatpush1.bf16.msra.mxu0 0
        %6342 = vmatprep.subr.bf16.mxu0 0
        %6343 = vmatpush1.bf16.msra.mxu0 0
        %6344 = vmatprep.subr.bf16.mxu0 0
        %6345 = vmatpush1.bf16.msra.mxu0 0
        %6346 = vmatprep.subr.bf16.mxu0 0
        %6347 = vmatpush1.bf16.msra.mxu0 0
        %6348 = vmatprep.subr.bf16.mxu0 0
        %6349 = vmatpush1.bf16.msra.mxu0 0
        %6350 = vmatprep.subr.bf16.mxu0 0
        %6351 = vmatpush1.bf16.msra.mxu0 0
        %6352 = vmatprep.subr.bf16.mxu0 0
        %6353 = vmatpush1.bf16.msra.mxu0 0
        %6354 = vmatprep.subr.bf16.mxu0 0
        %6355 = vmatpush1.bf16.msra.mxu0 0
        %6356 = vmatprep.subr.bf16.mxu0 0
        %6357 = vmatpush1.bf16.msra.mxu0 0
        %6358 = vmatprep.subr.bf16.mxu0 0
        %6359 = vmatpush1.bf16.msra.mxu0 0
        %6360 = vmatprep.mubr.bf16.mxu0 0
        %6361 = vmatmul.mubr.bf16.gmra.mrb[0].mxu0 %v6326
        %v6362 = vpop.f32.mrb[0].mxu0
        %v6363 = vadd.f32 0.0, %v6362
        %v6364 = vpop.f32.mrb[0].mxu0
        %v6365 = vpop.f32.mrb[0].mxu0
        %v6366 = vadd.f32 0.0, %v6365
        %v6367 = vpop.f32.mrb[0].mxu0
        %6368 = vdwg.mxu0
        %6369 = vrot.lane.b32.xlu0 %v2106, 112
        %v6370 = vpop.permute.xlu0 %6369
        %v6373 = vsel %vm1736, %v6307, 0
        %6375 = vmatprep.subr.bf16.mxu0 0
        %6376 = vmatpush1.bf16.msra.mxu0 %v6370
        %6377 = vmatprep.subr.bf16.mxu0 0
        %6378 = vmatpush1.bf16.msra.mxu0 0
        %6379 = vmatprep.subr.bf16.mxu0 0
        %6380 = vmatpush1.bf16.msra.mxu0 0
        %6381 = vmatprep.subr.bf16.mxu0 0
        %6382 = vmatpush1.bf16.msra.mxu0 0
        %6383 = vmatprep.subr.bf16.mxu0 0
        %6384 = vmatpush1.bf16.msra.mxu0 0
        %6385 = vmatprep.subr.bf16.mxu0 0
        %6386 = vmatpush1.bf16.msra.mxu0 0
        %6387 = vmatprep.subr.bf16.mxu0 0
        %6388 = vmatpush1.bf16.msra.mxu0 0
        %6389 = vmatprep.subr.bf16.mxu0 0
        %6390 = vmatpush1.bf16.msra.mxu0 0
        %6391 = vmatprep.subr.bf16.mxu0 0
        %6392 = vmatpush1.bf16.msra.mxu0 0
        %6393 = vmatprep.subr.bf16.mxu0 0
        %6394 = vmatpush1.bf16.msra.mxu0 0
        %6395 = vmatprep.subr.bf16.mxu0 0
        %6396 = vmatpush1.bf16.msra.mxu0 0
        %6397 = vmatprep.subr.bf16.mxu0 0
        %6398 = vmatpush1.bf16.msra.mxu0 0
        %6399 = vmatprep.subr.bf16.mxu0 0
        %6400 = vmatpush1.bf16.msra.mxu0 0
        %6401 = vmatprep.subr.bf16.mxu0 0
        %6402 = vmatpush1.bf16.msra.mxu0 0
        %6403 = vmatprep.subr.bf16.mxu0 0
        %6404 = vmatpush1.bf16.msra.mxu0 0
        %6405 = vmatprep.subr.bf16.mxu0 0
        %6406 = vmatpush1.bf16.msra.mxu0 0
        %6407 = vmatprep.mubr.bf16.mxu0 0
        %6408 = vmatmul.mubr.bf16.gmra.mrb[0].mxu0 %v6373
        %v6409 = vpop.f32.mrb[0].mxu0
        %v6410 = vadd.f32 0.0, %v6409
        %v6411 = vpop.f32.mrb[0].mxu0
        %v6412 = vpop.f32.mrb[0].mxu0
        %v6413 = vadd.f32 0.0, %v6412
        %v6414 = vpop.f32.mrb[0].mxu0
        %6415 = vdwg.mxu0
        %6416 = vrot.lane.b32.xlu0 %v2107, 112
        %v6417 = vpop.permute.xlu0 %6416
        %v6420 = vsel %vm1736, %v6308, 0
        %6422 = vmatprep.subr.bf16.mxu0 0
        %6423 = vmatpush1.bf16.msra.mxu0 %v6417
        %6424 = vmatprep.subr.bf16.mxu0 0
        %6425 = vmatpush1.bf16.msra.mxu0 0
        %6426 = vmatprep.subr.bf16.mxu0 0
        %6427 = vmatpush1.bf16.msra.mxu0 0
        %6428 = vmatprep.subr.bf16.mxu0 0
        %6429 = vmatpush1.bf16.msra.mxu0 0
        %6430 = vmatprep.subr.bf16.mxu0 0
        %6431 = vmatpush1.bf16.msra.mxu0 0
        %6432 = vmatprep.subr.bf16.mxu0 0
        %6433 = vmatpush1.bf16.msra.mxu0 0
        %6434 = vmatprep.subr.bf16.mxu0 0
        %6435 = vmatpush1.bf16.msra.mxu0 0
        %6436 = vmatprep.subr.bf16.mxu0 0
        %6437 = vmatpush1.bf16.msra.mxu0 0
        %6438 = vmatprep.subr.bf16.mxu0 0
        %6439 = vmatpush1.bf16.msra.mxu0 0
        %6440 = vmatprep.subr.bf16.mxu0 0
        %6441 = vmatpush1.bf16.msra.mxu0 0
        %6442 = vmatprep.subr.bf16.mxu0 0
        %6443 = vmatpush1.bf16.msra.mxu0 0
        %6444 = vmatprep.subr.bf16.mxu0 0
        %6445 = vmatpush1.bf16.msra.mxu0 0
        %6446 = vmatprep.subr.bf16.mxu0 0
        %6447 = vmatpush1.bf16.msra.mxu0 0
        %6448 = vmatprep.subr.bf16.mxu0 0
        %6449 = vmatpush1.bf16.msra.mxu0 0
        %6450 = vmatprep.subr.bf16.mxu0 0
        %6451 = vmatpush1.bf16.msra.mxu0 0
        %6452 = vmatprep.subr.bf16.mxu0 0
        %6453 = vmatpush1.bf16.msra.mxu0 0
        %6454 = vmatprep.mubr.bf16.mxu0 0
        %6455 = vmatmul.mubr.bf16.gmra.mrb[0].mxu0 %v6420
        %v6456 = vpop.f32.mrb[0].mxu0
        %v6457 = vadd.f32 0.0, %v6456
        %v6458 = vpop.f32.mrb[0].mxu0
        %v6459 = vpop.f32.mrb[0].mxu0
        %v6460 = vadd.f32 0.0, %v6459
        %v6461 = vpop.f32.mrb[0].mxu0
        %6462 = vdwg.mxu0
        %6463 = vrot.lane.b32.xlu0 %v2108, 112
        %v6464 = vpop.permute.xlu0 %6463
        %v6467 = vsel %vm1736, %v6309, 0
        %6469 = vmatprep.subr.bf16.mxu0 0
        %6470 = vmatpush1.bf16.msra.mxu0 %v6464
        %6471 = vmatprep.subr.bf16.mxu0 0
        %6472 = vmatpush1.bf16.msra.mxu0 0
        %6473 = vmatprep.subr.bf16.mxu0 0
        %6474 = vmatpush1.bf16.msra.mxu0 0
        %6475 = vmatprep.subr.bf16.mxu0 0
        %6476 = vmatpush1.bf16.msra.mxu0 0
        %6477 = vmatprep.subr.bf16.mxu0 0
        %6478 = vmatpush1.bf16.msra.mxu0 0
        %6479 = vmatprep.subr.bf16.mxu0 0
        %6480 = vmatpush1.bf16.msra.mxu0 0
        %6481 = vmatprep.subr.bf16.mxu0 0
        %6482 = vmatpush1.bf16.msra.mxu0 0
        %6483 = vmatprep.subr.bf16.mxu0 0
        %6484 = vmatpush1.bf16.msra.mxu0 0
        %6485 = vmatprep.subr.bf16.mxu0 0
        %6486 = vmatpush1.bf16.msra.mxu0 0
        %6487 = vmatprep.subr.bf16.mxu0 0
        %6488 = vmatpush1.bf16.msra.mxu0 0
        %6489 = vmatprep.subr.bf16.mxu0 0
        %6490 = vmatpush1.bf16.msra.mxu0 0
        %6491 = vmatprep.subr.bf16.mxu0 0
        %6492 = vmatpush1.bf16.msra.mxu0 0
        %6493 = vmatprep.subr.bf16.mxu0 0
        %6494 = vmatpush1.bf16.msra.mxu0 0
        %6495 = vmatprep.subr.bf16.mxu0 0
        %6496 = vmatpush1.bf16.msra.mxu0 0
        %6497 = vmatprep.subr.bf16.mxu0 0
        %6498 = vmatpush1.bf16.msra.mxu0 0
        %6499 = vmatprep.subr.bf16.mxu0 0
        %6500 = vmatpush1.bf16.msra.mxu0 0
        %6501 = vmatprep.mubr.bf16.mxu0 0
        %6502 = vmatmul.mubr.bf16.gmra.mrb[0].mxu0 %v6467
        %v6503 = vpop.f32.mrb[0].mxu0
        %v6504 = vadd.f32 0.0, %v6503
        %v6505 = vpop.f32.mrb[0].mxu0
        %v6506 = vpop.f32.mrb[0].mxu0
        %v6507 = vadd.f32 0.0, %v6506
        %v6508 = vpop.f32.mrb[0].mxu0
        %6509 = vdwg.mxu0
        %6510 = vrot.lane.b32.xlu0 %v2109, 112
        %v6511 = vpop.permute.xlu0 %6510
        %v6514 = vsel %vm1736, %v6310, 0
        %6516 = vmatprep.subr.bf16.mxu0 0
        %6517 = vmatpush1.bf16.msra.mxu0 %v6511
        %6518 = vmatprep.subr.bf16.mxu0 0
        %6519 = vmatpush1.bf16.msra.mxu0 0
        %6520 = vmatprep.subr.bf16.mxu0 0
        %6521 = vmatpush1.bf16.msra.mxu0 0
        %6522 = vmatprep.subr.bf16.mxu0 0
        %6523 = vmatpush1.bf16.msra.mxu0 0
        %6524 = vmatprep.subr.bf16.mxu0 0
        %6525 = vmatpush1.bf16.msra.mxu0 0
        %6526 = vmatprep.subr.bf16.mxu0 0
        %6527 = vmatpush1.bf16.msra.mxu0 0
        %6528 = vmatprep.subr.bf16.mxu0 0
        %6529 = vmatpush1.bf16.msra.mxu0 0
        %6530 = vmatprep.subr.bf16.mxu0 0
        %6531 = vmatpush1.bf16.msra.mxu0 0
        %6532 = vmatprep.subr.bf16.mxu0 0
        %6533 = vmatpush1.bf16.msra.mxu0 0
        %6534 = vmatprep.subr.bf16.mxu0 0
        %6535 = vmatpush1.bf16.msra.mxu0 0
        %6536 = vmatprep.subr.bf16.mxu0 0
        %6537 = vmatpush1.bf16.msra.mxu0 0
        %6538 = vmatprep.subr.bf16.mxu0 0
        %6539 = vmatpush1.bf16.msra.mxu0 0
        %6540 = vmatprep.subr.bf16.mxu0 0
        %6541 = vmatpush1.bf16.msra.mxu0 0
        %6542 = vmatprep.subr.bf16.mxu0 0
        %6543 = vmatpush1.bf16.msra.mxu0 0
        %6544 = vmatprep.subr.bf16.mxu0 0
        %6545 = vmatpush1.bf16.msra.mxu0 0
        %6546 = vmatprep.subr.bf16.mxu0 0
        %6547 = vmatpush1.bf16.msra.mxu0 0
        %6548 = vmatprep.mubr.bf16.mxu0 0
        %6549 = vmatmul.mubr.bf16.gmra.mrb[0].mxu0 %v6514
        %v6550 = vpop.f32.mrb[0].mxu0
        %v6551 = vadd.f32 0.0, %v6550
        %v6552 = vpop.f32.mrb[0].mxu0
        %v6553 = vpop.f32.mrb[0].mxu0
        %v6554 = vadd.f32 0.0, %v6553
        %v6555 = vpop.f32.mrb[0].mxu0
        %6556 = vdwg.mxu0
        %6557 = vrot.lane.b32.xlu0 %v2110, 112
        %v6558 = vpop.permute.xlu0 %6557
        %v6561 = vsel %vm1736, %v6311, 0
        %6563 = vmatprep.subr.bf16.mxu0 0
        %6564 = vmatpush1.bf16.msra.mxu0 %v6558
        %6565 = vmatprep.subr.bf16.mxu0 0
        %6566 = vmatpush1.bf16.msra.mxu0 0
        %6567 = vmatprep.subr.bf16.mxu0 0
        %6568 = vmatpush1.bf16.msra.mxu0 0
        %6569 = vmatprep.subr.bf16.mxu0 0
        %6570 = vmatpush1.bf16.msra.mxu0 0
        %6571 = vmatprep.subr.bf16.mxu0 0
        %6572 = vmatpush1.bf16.msra.mxu0 0
        %6573 = vmatprep.subr.bf16.mxu0 0
        %6574 = vmatpush1.bf16.msra.mxu0 0
        %6575 = vmatprep.subr.bf16.mxu0 0
        %6576 = vmatpush1.bf16.msra.mxu0 0
        %6577 = vmatprep.subr.bf16.mxu0 0
        %6578 = vmatpush1.bf16.msra.mxu0 0
        %6579 = vmatprep.subr.bf16.mxu0 0
        %6580 = vmatpush1.bf16.msra.mxu0 0
        %6581 = vmatprep.subr.bf16.mxu0 0
        %6582 = vmatpush1.bf16.msra.mxu0 0
        %6583 = vmatprep.subr.bf16.mxu0 0
        %6584 = vmatpush1.bf16.msra.mxu0 0
        %6585 = vmatprep.subr.bf16.mxu0 0
        %6586 = vmatpush1.bf16.msra.mxu0 0
        %6587 = vmatprep.subr.bf16.mxu0 0
        %6588 = vmatpush1.bf16.msra.mxu0 0
        %6589 = vmatprep.subr.bf16.mxu0 0
        %6590 = vmatpush1.bf16.msra.mxu0 0
        %6591 = vmatprep.subr.bf16.mxu0 0
        %6592 = vmatpush1.bf16.msra.mxu0 0
        %6593 = vmatprep.subr.bf16.mxu0 0
        %6594 = vmatpush1.bf16.msra.mxu0 0
        %6595 = vmatprep.mubr.bf16.mxu0 0
        %6596 = vmatmul.mubr.bf16.gmra.mrb[0].mxu0 %v6561
        %v6597 = vpop.f32.mrb[0].mxu0
        %v6598 = vadd.f32 0.0, %v6597
        %v6599 = vpop.f32.mrb[0].mxu0
        %v6600 = vpop.f32.mrb[0].mxu0
        %v6601 = vadd.f32 0.0, %v6600
        %v6602 = vpop.f32.mrb[0].mxu0
        %6603 = vdwg.mxu0
        %6604 = vrot.lane.b32.xlu0 %v2111, 112
        %v6605 = vpop.permute.xlu0 %6604
        %v6608 = vsel %vm1736, %v6312, 0
        %6610 = vmatprep.subr.bf16.mxu0 0
        %6611 = vmatpush1.bf16.msra.mxu0 %v6605
        %6612 = vmatprep.subr.bf16.mxu0 0
        %6613 = vmatpush1.bf16.msra.mxu0 0
        %6614 = vmatprep.subr.bf16.mxu0 0
        %6615 = vmatpush1.bf16.msra.mxu0 0
        %6616 = vmatprep.subr.bf16.mxu0 0
        %6617 = vmatpush1.bf16.msra.mxu0 0
        %6618 = vmatprep.subr.bf16.mxu0 0
        %6619 = vmatpush1.bf16.msra.mxu0 0
        %6620 = vmatprep.subr.bf16.mxu0 0
        %6621 = vmatpush1.bf16.msra.mxu0 0
        %6622 = vmatprep.subr.bf16.mxu0 0
        %6623 = vmatpush1.bf16.msra.mxu0 0
        %6624 = vmatprep.subr.bf16.mxu0 0
        %6625 = vmatpush1.bf16.msra.mxu0 0
        %6626 = vmatprep.subr.bf16.mxu0 0
        %6627 = vmatpush1.bf16.msra.mxu0 0
        %6628 = vmatprep.subr.bf16.mxu0 0
        %6629 = vmatpush1.bf16.msra.mxu0 0
        %6630 = vmatprep.subr.bf16.mxu0 0
        %6631 = vmatpush1.bf16.msra.mxu0 0
        %6632 = vmatprep.subr.bf16.mxu0 0
        %6633 = vmatpush1.bf16.msra.mxu0 0
        %6634 = vmatprep.subr.bf16.mxu0 0
        %6635 = vmatpush1.bf16.msra.mxu0 0
        %6636 = vmatprep.subr.bf16.mxu0 0
        %6637 = vmatpush1.bf16.msra.mxu0 0
        %6638 = vmatprep.subr.bf16.mxu0 0
        %6639 = vmatpush1.bf16.msra.mxu0 0
        %6640 = vmatprep.subr.bf16.mxu0 0
        %6641 = vmatpush1.bf16.msra.mxu0 0
        %6642 = vmatprep.mubr.bf16.mxu0 0
        %6643 = vmatmul.mubr.bf16.gmra.mrb[0].mxu0 %v6608
        %v6644 = vpop.f32.mrb[0].mxu0
        %v6645 = vadd.f32 0.0, %v6644
        %v6646 = vpop.f32.mrb[0].mxu0
        %v6647 = vpop.f32.mrb[0].mxu0
        %v6648 = vadd.f32 0.0, %v6647
        %v6649 = vpop.f32.mrb[0].mxu0
        %6650 = vdwg.mxu0
        %6651 = vrot.lane.b32.xlu0 %v2112, 112
        %v6652 = vpop.permute.xlu0 %6651
        %v6655 = vsel %vm1736, %v6313, 0
        %6657 = vmatprep.subr.bf16.mxu0 0
        %6658 = vmatpush1.bf16.msra.mxu0 %v6652
        %6659 = vmatprep.subr.bf16.mxu0 0
        %6660 = vmatpush1.bf16.msra.mxu0 0
        %6661 = vmatprep.subr.bf16.mxu0 0
        %6662 = vmatpush1.bf16.msra.mxu0 0
        %6663 = vmatprep.subr.bf16.mxu0 0
        %6664 = vmatpush1.bf16.msra.mxu0 0
        %6665 = vmatprep.subr.bf16.mxu0 0
        %6666 = vmatpush1.bf16.msra.mxu0 0
        %6667 = vmatprep.subr.bf16.mxu0 0
        %6668 = vmatpush1.bf16.msra.mxu0 0
        %6669 = vmatprep.subr.bf16.mxu0 0
        %6670 = vmatpush1.bf16.msra.mxu0 0
        %6671 = vmatprep.subr.bf16.mxu0 0
        %6672 = vmatpush1.bf16.msra.mxu0 0
        %6673 = vmatprep.subr.bf16.mxu0 0
        %6674 = vmatpush1.bf16.msra.mxu0 0
        %6675 = vmatprep.subr.bf16.mxu0 0
        %6676 = vmatpush1.bf16.msra.mxu0 0
        %6677 = vmatprep.subr.bf16.mxu0 0
        %6678 = vmatpush1.bf16.msra.mxu0 0
        %6679 = vmatprep.subr.bf16.mxu0 0
        %6680 = vmatpush1.bf16.msra.mxu0 0
        %6681 = vmatprep.subr.bf16.mxu0 0
        %6682 = vmatpush1.bf16.msra.mxu0 0
        %6683 = vmatprep.subr.bf16.mxu0 0
        %6684 = vmatpush1.bf16.msra.mxu0 0
        %6685 = vmatprep.subr.bf16.mxu0 0
        %6686 = vmatpush1.bf16.msra.mxu0 0
        %6687 = vmatprep.subr.bf16.mxu0 0
        %6688 = vmatpush1.bf16.msra.mxu0 0
        %6689 = vmatprep.mubr.bf16.mxu0 0
        %6690 = vmatmul.mubr.bf16.gmra.mrb[0].mxu0 %v6655
        %v6691 = vpop.f32.mrb[0].mxu0
        %v6692 = vadd.f32 0.0, %v6691
        %v6693 = vpop.f32.mrb[0].mxu0
        %v6694 = vpop.f32.mrb[0].mxu0
        %v6695 = vadd.f32 0.0, %v6694
        %v6696 = vpop.f32.mrb[0].mxu0
        %6697 = vdwg.mxu0
        %6698 = vrot.lane.b32.xlu0 %v2113, 112
        %v6699 = vpop.permute.xlu0 %6698
        %v6702 = vsel %vm1736, %v6314, 0
        %6704 = vmatprep.subr.bf16.mxu0 0
        %6705 = vmatpush1.bf16.msra.mxu0 %v6699
        %6706 = vmatprep.subr.bf16.mxu0 0
        %6707 = vmatpush1.bf16.msra.mxu0 0
        %6708 = vmatprep.subr.bf16.mxu0 0
        %6709 = vmatpush1.bf16.msra.mxu0 0
        %6710 = vmatprep.subr.bf16.mxu0 0
        %6711 = vmatpush1.bf16.msra.mxu0 0
        %6712 = vmatprep.subr.bf16.mxu0 0
        %6713 = vmatpush1.bf16.msra.mxu0 0
        %6714 = vmatprep.subr.bf16.mxu0 0
        %6715 = vmatpush1.bf16.msra.mxu0 0
        %6716 = vmatprep.subr.bf16.mxu0 0
        %6717 = vmatpush1.bf16.msra.mxu0 0
        %6718 = vmatprep.subr.bf16.mxu0 0
        %6719 = vmatpush1.bf16.msra.mxu0 0
        %6720 = vmatprep.subr.bf16.mxu0 0
        %6721 = vmatpush1.bf16.msra.mxu0 0
        %6722 = vmatprep.subr.bf16.mxu0 0
        %6723 = vmatpush1.bf16.msra.mxu0 0
        %6724 = vmatprep.subr.bf16.mxu0 0
        %6725 = vmatpush1.bf16.msra.mxu0 0
        %6726 = vmatprep.subr.bf16.mxu0 0
        %6727 = vmatpush1.bf16.msra.mxu0 0
        %6728 = vmatprep.subr.bf16.mxu0 0
        %6729 = vmatpush1.bf16.msra.mxu0 0
        %6730 = vmatprep.subr.bf16.mxu0 0
        %6731 = vmatpush1.bf16.msra.mxu0 0
        %6732 = vmatprep.subr.bf16.mxu0 0
        %6733 = vmatpush1.bf16.msra.mxu0 0
        %6734 = vmatprep.subr.bf16.mxu0 0
        %6735 = vmatpush1.bf16.msra.mxu0 0
        %6736 = vmatprep.mubr.bf16.mxu0 0
        %6737 = vmatmul.mubr.bf16.gmra.mrb[0].mxu0 %v6702
        %v6738 = vpop.f32.mrb[0].mxu0
        %v6739 = vadd.f32 0.0, %v6738
        %v6740 = vpop.f32.mrb[0].mxu0
        %v6741 = vpop.f32.mrb[0].mxu0
        %v6742 = vadd.f32 0.0, %v6741
        %v6743 = vpop.f32.mrb[0].mxu0
        %6744 = vdwg.mxu0
        %6745 = vrot.lane.b32.xlu0 %v2114, 112
        %v6746 = vpop.permute.xlu0 %6745
        %v6749 = vsel %vm1736, %v6315, 0
        %6751 = vmatprep.subr.bf16.mxu0 0
        %6752 = vmatpush1.bf16.msra.mxu0 %v6746
        %6753 = vmatprep.subr.bf16.mxu0 0
        %6754 = vmatpush1.bf16.msra.mxu0 0
        %6755 = vmatprep.subr.bf16.mxu0 0
        %6756 = vmatpush1.bf16.msra.mxu0 0
        %6757 = vmatprep.subr.bf16.mxu0 0
        %6758 = vmatpush1.bf16.msra.mxu0 0
        %6759 = vmatprep.subr.bf16.mxu0 0
        %6760 = vmatpush1.bf16.msra.mxu0 0
        %6761 = vmatprep.subr.bf16.mxu0 0
        %6762 = vmatpush1.bf16.msra.mxu0 0
        %6763 = vmatprep.subr.bf16.mxu0 0
        %6764 = vmatpush1.bf16.msra.mxu0 0
        %6765 = vmatprep.subr.bf16.mxu0 0
        %6766 = vmatpush1.bf16.msra.mxu0 0
        %6767 = vmatprep.subr.bf16.mxu0 0
        %6768 = vmatpush1.bf16.msra.mxu0 0
        %6769 = vmatprep.subr.bf16.mxu0 0
        %6770 = vmatpush1.bf16.msra.mxu0 0
        %6771 = vmatprep.subr.bf16.mxu0 0
        %6772 = vmatpush1.bf16.msra.mxu0 0
        %6773 = vmatprep.subr.bf16.mxu0 0
        %6774 = vmatpush1.bf16.msra.mxu0 0
        %6775 = vmatprep.subr.bf16.mxu0 0
        %6776 = vmatpush1.bf16.msra.mxu0 0
        %6777 = vmatprep.subr.bf16.mxu0 0
        %6778 = vmatpush1.bf16.msra.mxu0 0
        %6779 = vmatprep.subr.bf16.mxu0 0
        %6780 = vmatpush1.bf16.msra.mxu0 0
        %6781 = vmatprep.subr.bf16.mxu0 0
        %6782 = vmatpush1.bf16.msra.mxu0 0
        %6783 = vmatprep.mubr.bf16.mxu0 0
        %6784 = vmatmul.mubr.bf16.gmra.mrb[0].mxu0 %v6749
        %v6785 = vpop.f32.mrb[0].mxu0
        %v6786 = vadd.f32 0.0, %v6785
        %v6787 = vpop.f32.mrb[0].mxu0
        %v6788 = vpop.f32.mrb[0].mxu0
        %v6789 = vadd.f32 0.0, %v6788
        %v6790 = vpop.f32.mrb[0].mxu0
        %6791 = vdwg.mxu0
        %6792 = vrot.lane.b32.xlu0 %v2115, 112
        %v6793 = vpop.permute.xlu0 %6792
        %v6796 = vsel %vm1736, %v6316, 0
        %6798 = vmatprep.subr.bf16.mxu0 0
        %6799 = vmatpush1.bf16.msra.mxu0 %v6793
        %6800 = vmatprep.subr.bf16.mxu0 0
        %6801 = vmatpush1.bf16.msra.mxu0 0
        %6802 = vmatprep.subr.bf16.mxu0 0
        %6803 = vmatpush1.bf16.msra.mxu0 0
        %6804 = vmatprep.subr.bf16.mxu0 0
        %6805 = vmatpush1.bf16.msra.mxu0 0
        %6806 = vmatprep.subr.bf16.mxu0 0
        %6807 = vmatpush1.bf16.msra.mxu0 0
        %6808 = vmatprep.subr.bf16.mxu0 0
        %6809 = vmatpush1.bf16.msra.mxu0 0
        %6810 = vmatprep.subr.bf16.mxu0 0
        %6811 = vmatpush1.bf16.msra.mxu0 0
        %6812 = vmatprep.subr.bf16.mxu0 0
        %6813 = vmatpush1.bf16.msra.mxu0 0
        %6814 = vmatprep.subr.bf16.mxu0 0
        %6815 = vmatpush1.bf16.msra.mxu0 0
        %6816 = vmatprep.subr.bf16.mxu0 0
        %6817 = vmatpush1.bf16.msra.mxu0 0
        %6818 = vmatprep.subr.bf16.mxu0 0
        %6819 = vmatpush1.bf16.msra.mxu0 0
        %6820 = vmatprep.subr.bf16.mxu0 0
        %6821 = vmatpush1.bf16.msra.mxu0 0
        %6822 = vmatprep.subr.bf16.mxu0 0
        %6823 = vmatpush1.bf16.msra.mxu0 0
        %6824 = vmatprep.subr.bf16.mxu0 0
        %6825 = vmatpush1.bf16.msra.mxu0 0
        %6826 = vmatprep.subr.bf16.mxu0 0
        %6827 = vmatpush1.bf16.msra.mxu0 0
        %6828 = vmatprep.subr.bf16.mxu0 0
        %6829 = vmatpush1.bf16.msra.mxu0 0
        %6830 = vmatprep.mubr.bf16.mxu0 0
        %6831 = vmatmul.mubr.bf16.gmra.mrb[0].mxu0 %v6796
        %v6832 = vpop.f32.mrb[0].mxu0
        %v6833 = vadd.f32 0.0, %v6832
        %v6834 = vpop.f32.mrb[0].mxu0
        %v6835 = vpop.f32.mrb[0].mxu0
        %v6836 = vadd.f32 0.0, %v6835
        %v6837 = vpop.f32.mrb[0].mxu0
        %6838 = vdwg.mxu0
        %6839 = vrot.lane.b32.xlu0 %v2116, 112
        %v6840 = vpop.permute.xlu0 %6839
        %v6843 = vsel %vm1736, %v6317, 0
        %6845 = vmatprep.subr.bf16.mxu0 0
        %6846 = vmatpush1.bf16.msra.mxu0 %v6840
        %6847 = vmatprep.subr.bf16.mxu0 0
        %6848 = vmatpush1.bf16.msra.mxu0 0
        %6849 = vmatprep.subr.bf16.mxu0 0
        %6850 = vmatpush1.bf16.msra.mxu0 0
        %6851 = vmatprep.subr.bf16.mxu0 0
        %6852 = vmatpush1.bf16.msra.mxu0 0
        %6853 = vmatprep.subr.bf16.mxu0 0
        %6854 = vmatpush1.bf16.msra.mxu0 0
        %6855 = vmatprep.subr.bf16.mxu0 0
        %6856 = vmatpush1.bf16.msra.mxu0 0
        %6857 = vmatprep.subr.bf16.mxu0 0
        %6858 = vmatpush1.bf16.msra.mxu0 0
        %6859 = vmatprep.subr.bf16.mxu0 0
        %6860 = vmatpush1.bf16.msra.mxu0 0
        %6861 = vmatprep.subr.bf16.mxu0 0
        %6862 = vmatpush1.bf16.msra.mxu0 0
        %6863 = vmatprep.subr.bf16.mxu0 0
        %6864 = vmatpush1.bf16.msra.mxu0 0
        %6865 = vmatprep.subr.bf16.mxu0 0
        %6866 = vmatpush1.bf16.msra.mxu0 0
        %6867 = vmatprep.subr.bf16.mxu0 0
        %6868 = vmatpush1.bf16.msra.mxu0 0
        %6869 = vmatprep.subr.bf16.mxu0 0
        %6870 = vmatpush1.bf16.msra.mxu0 0
        %6871 = vmatprep.subr.bf16.mxu0 0
        %6872 = vmatpush1.bf16.msra.mxu0 0
        %6873 = vmatprep.subr.bf16.mxu0 0
        %6874 = vmatpush1.bf16.msra.mxu0 0
        %6875 = vmatprep.subr.bf16.mxu0 0
        %6876 = vmatpush1.bf16.msra.mxu0 0
        %6877 = vmatprep.mubr.bf16.mxu0 0
        %6878 = vmatmul.mubr.bf16.gmra.mrb[0].mxu0 %v6843
        %v6879 = vpop.f32.mrb[0].mxu0
        %v6880 = vadd.f32 0.0, %v6879
        %v6881 = vpop.f32.mrb[0].mxu0
        %v6882 = vpop.f32.mrb[0].mxu0
        %v6883 = vadd.f32 0.0, %v6882
        %v6884 = vpop.f32.mrb[0].mxu0
        %6885 = vdwg.mxu0
        %6886 = vrot.lane.b32.xlu0 %v2117, 112
        %v6887 = vpop.permute.xlu0 %6886
        %v6890 = vsel %vm1736, %v6318, 0
        %6892 = vmatprep.subr.bf16.mxu0 0
        %6893 = vmatpush1.bf16.msra.mxu0 %v6887
        %6894 = vmatprep.subr.bf16.mxu0 0
        %6895 = vmatpush1.bf16.msra.mxu0 0
        %6896 = vmatprep.subr.bf16.mxu0 0
        %6897 = vmatpush1.bf16.msra.mxu0 0
        %6898 = vmatprep.subr.bf16.mxu0 0
        %6899 = vmatpush1.bf16.msra.mxu0 0
        %6900 = vmatprep.subr.bf16.mxu0 0
        %6901 = vmatpush1.bf16.msra.mxu0 0
        %6902 = vmatprep.subr.bf16.mxu0 0
        %6903 = vmatpush1.bf16.msra.mxu0 0
        %6904 = vmatprep.subr.bf16.mxu0 0
        %6905 = vmatpush1.bf16.msra.mxu0 0
        %6906 = vmatprep.subr.bf16.mxu0 0
        %6907 = vmatpush1.bf16.msra.mxu0 0
        %6908 = vmatprep.subr.bf16.mxu0 0
        %6909 = vmatpush1.bf16.msra.mxu0 0
        %6910 = vmatprep.subr.bf16.mxu0 0
        %6911 = vmatpush1.bf16.msra.mxu0 0
        %6912 = vmatprep.subr.bf16.mxu0 0
        %6913 = vmatpush1.bf16.msra.mxu0 0
        %6914 = vmatprep.subr.bf16.mxu0 0
        %6915 = vmatpush1.bf16.msra.mxu0 0
        %6916 = vmatprep.subr.bf16.mxu0 0
        %6917 = vmatpush1.bf16.msra.mxu0 0
        %6918 = vmatprep.subr.bf16.mxu0 0
        %6919 = vmatpush1.bf16.msra.mxu0 0
        %6920 = vmatprep.subr.bf16.mxu0 0
        %6921 = vmatpush1.bf16.msra.mxu0 0
        %6922 = vmatprep.subr.bf16.mxu0 0
        %6923 = vmatpush1.bf16.msra.mxu0 0
        %6924 = vmatprep.mubr.bf16.mxu0 0
        %6925 = vmatmul.mubr.bf16.gmra.mrb[0].mxu0 %v6890
        %v6926 = vpop.f32.mrb[0].mxu0
        %v6927 = vadd.f32 0.0, %v6926
        %v6928 = vpop.f32.mrb[0].mxu0
        %v6929 = vpop.f32.mrb[0].mxu0
        %v6930 = vadd.f32 0.0, %v6929
        %v6931 = vpop.f32.mrb[0].mxu0
        %6932 = vdwg.mxu0
        %6933 = vrot.lane.b32.xlu0 %v2118, 112
        %v6934 = vpop.permute.xlu0 %6933
        %v6937 = vsel %vm1736, %v6319, 0
        %6939 = vmatprep.subr.bf16.mxu0 0
        %6940 = vmatpush1.bf16.msra.mxu0 %v6934
        %6941 = vmatprep.subr.bf16.mxu0 0
        %6942 = vmatpush1.bf16.msra.mxu0 0
        %6943 = vmatprep.subr.bf16.mxu0 0
        %6944 = vmatpush1.bf16.msra.mxu0 0
        %6945 = vmatprep.subr.bf16.mxu0 0
        %6946 = vmatpush1.bf16.msra.mxu0 0
        %6947 = vmatprep.subr.bf16.mxu0 0
        %6948 = vmatpush1.bf16.msra.mxu0 0
        %6949 = vmatprep.subr.bf16.mxu0 0
        %6950 = vmatpush1.bf16.msra.mxu0 0
        %6951 = vmatprep.subr.bf16.mxu0 0
        %6952 = vmatpush1.bf16.msra.mxu0 0
        %6953 = vmatprep.subr.bf16.mxu0 0
        %6954 = vmatpush1.bf16.msra.mxu0 0
        %6955 = vmatprep.subr.bf16.mxu0 0
        %6956 = vmatpush1.bf16.msra.mxu0 0
        %6957 = vmatprep.subr.bf16.mxu0 0
        %6958 = vmatpush1.bf16.msra.mxu0 0
        %6959 = vmatprep.subr.bf16.mxu0 0
        %6960 = vmatpush1.bf16.msra.mxu0 0
        %6961 = vmatprep.subr.bf16.mxu0 0
        %6962 = vmatpush1.bf16.msra.mxu0 0
        %6963 = vmatprep.subr.bf16.mxu0 0
        %6964 = vmatpush1.bf16.msra.mxu0 0
        %6965 = vmatprep.subr.bf16.mxu0 0
        %6966 = vmatpush1.bf16.msra.mxu0 0
        %6967 = vmatprep.subr.bf16.mxu0 0
        %6968 = vmatpush1.bf16.msra.mxu0 0
        %6969 = vmatprep.subr.bf16.mxu0 0
        %6970 = vmatpush1.bf16.msra.mxu0 0
        %6971 = vmatprep.mubr.bf16.mxu0 0
        %6972 = vmatmul.mubr.bf16.gmra.mrb[0].mxu0 %v6937
        %v6973 = vpop.f32.mrb[0].mxu0
        %v6974 = vadd.f32 0.0, %v6973
        %v6975 = vpop.f32.mrb[0].mxu0
        %v6976 = vpop.f32.mrb[0].mxu0
        %v6977 = vadd.f32 0.0, %v6976
        %v6978 = vpop.f32.mrb[0].mxu0
        %6979 = vdwg.mxu0
        %6980 = vrot.lane.b32.xlu0 %v2119, 112
        %v6981 = vpop.permute.xlu0 %6980
        %v6984 = vsel %vm1736, %v6320, 0
        %6986 = vmatprep.subr.bf16.mxu0 0
        %6987 = vmatpush1.bf16.msra.mxu0 %v6981
        %6988 = vmatprep.subr.bf16.mxu0 0
        %6989 = vmatpush1.bf16.msra.mxu0 0
        %6990 = vmatprep.subr.bf16.mxu0 0
        %6991 = vmatpush1.bf16.msra.mxu0 0
        %6992 = vmatprep.subr.bf16.mxu0 0
        %6993 = vmatpush1.bf16.msra.mxu0 0
        %6994 = vmatprep.subr.bf16.mxu0 0
        %6995 = vmatpush1.bf16.msra.mxu0 0
        %6996 = vmatprep.subr.bf16.mxu0 0
        %6997 = vmatpush1.bf16.msra.mxu0 0
        %6998 = vmatprep.subr.bf16.mxu0 0
        %6999 = vmatpush1.bf16.msra.mxu0 0
        %7000 = vmatprep.subr.bf16.mxu0 0
        %7001 = vmatpush1.bf16.msra.mxu0 0
        %7002 = vmatprep.subr.bf16.mxu0 0
        %7003 = vmatpush1.bf16.msra.mxu0 0
        %7004 = vmatprep.subr.bf16.mxu0 0
        %7005 = vmatpush1.bf16.msra.mxu0 0
        %7006 = vmatprep.subr.bf16.mxu0 0
        %7007 = vmatpush1.bf16.msra.mxu0 0
        %7008 = vmatprep.subr.bf16.mxu0 0
        %7009 = vmatpush1.bf16.msra.mxu0 0
        %7010 = vmatprep.subr.bf16.mxu0 0
        %7011 = vmatpush1.bf16.msra.mxu0 0
        %7012 = vmatprep.subr.bf16.mxu0 0
        %7013 = vmatpush1.bf16.msra.mxu0 0
        %7014 = vmatprep.subr.bf16.mxu0 0
        %7015 = vmatpush1.bf16.msra.mxu0 0
        %7016 = vmatprep.subr.bf16.mxu0 0
        %7017 = vmatpush1.bf16.msra.mxu0 0
        %7018 = vmatprep.mubr.bf16.mxu0 0
        %7019 = vmatmul.mubr.bf16.gmra.mrb[0].mxu0 %v6984
        %v7020 = vpop.f32.mrb[0].mxu0
        %v7021 = vadd.f32 0.0, %v7020
        %v7022 = vpop.f32.mrb[0].mxu0
        %v7023 = vpop.f32.mrb[0].mxu0
        %v7024 = vadd.f32 0.0, %v7023
        %v7025 = vpop.f32.mrb[0].mxu0
        %7026 = vdwg.mxu0
        %7027 = vrot.lane.b32.xlu0 %v2120, 112
        %v7028 = vpop.permute.xlu0 %7027
        %v7031 = vsel %vm1736, %v6321, 0
        %7033 = vmatprep.subr.bf16.mxu0 0
        %7034 = vmatpush1.bf16.msra.mxu0 %v7028
        %7035 = vmatprep.subr.bf16.mxu0 0
        %7036 = vmatpush1.bf16.msra.mxu0 0
        %7037 = vmatprep.subr.bf16.mxu0 0
        %7038 = vmatpush1.bf16.msra.mxu0 0
        %7039 = vmatprep.subr.bf16.mxu0 0
        %7040 = vmatpush1.bf16.msra.mxu0 0
        %7041 = vmatprep.subr.bf16.mxu0 0
        %7042 = vmatpush1.bf16.msra.mxu0 0
        %7043 = vmatprep.subr.bf16.mxu0 0
        %7044 = vmatpush1.bf16.msra.mxu0 0
        %7045 = vmatprep.subr.bf16.mxu0 0
        %7046 = vmatpush1.bf16.msra.mxu0 0
        %7047 = vmatprep.subr.bf16.mxu0 0
        %7048 = vmatpush1.bf16.msra.mxu0 0
        %7049 = vmatprep.subr.bf16.mxu0 0
        %7050 = vmatpush1.bf16.msra.mxu0 0
        %7051 = vmatprep.subr.bf16.mxu0 0
        %7052 = vmatpush1.bf16.msra.mxu0 0
        %7053 = vmatprep.subr.bf16.mxu0 0
        %7054 = vmatpush1.bf16.msra.mxu0 0
        %7055 = vmatprep.subr.bf16.mxu0 0
        %7056 = vmatpush1.bf16.msra.mxu0 0
        %7057 = vmatprep.subr.bf16.mxu0 0
        %7058 = vmatpush1.bf16.msra.mxu0 0
        %7059 = vmatprep.subr.bf16.mxu0 0
        %7060 = vmatpush1.bf16.msra.mxu0 0
        %7061 = vmatprep.subr.bf16.mxu0 0
        %7062 = vmatpush1.bf16.msra.mxu0 0
        %7063 = vmatprep.subr.bf16.mxu0 0
        %7064 = vmatpush1.bf16.msra.mxu0 0
        %7065 = vmatprep.mubr.bf16.mxu0 0
        %7066 = vmatmul.mubr.bf16.gmra.mrb[0].mxu0 %v7031
        %v7067 = vpop.f32.mrb[0].mxu0
        %v7068 = vadd.f32 0.0, %v7067
        %v7069 = vpop.f32.mrb[0].mxu0
        %v7070 = vpop.f32.mrb[0].mxu0
        %v7071 = vadd.f32 0.0, %v7070
        %v7072 = vpop.f32.mrb[0].mxu0
        %7073 = vdwg.mxu0
        %7074 = vrot.lane.b32.xlu0 %v2829, 112
        %v7075 = vpop.permute.xlu0 %7074
        %v7077 = vmul.f32 %v6363, %v7075
        %v7078 = vmul.f32 %v6366, %v7075
        %v7079 = vmul.f32 %v6410, %v7075
        %v7080 = vmul.f32 %v6413, %v7075
        %v7081 = vmul.f32 %v6457, %v7075
        %v7082 = vmul.f32 %v6460, %v7075
        %v7083 = vmul.f32 %v6504, %v7075
        %v7084 = vmul.f32 %v6507, %v7075
        %v7085 = vmul.f32 %v6551, %v7075
        %v7086 = vmul.f32 %v6554, %v7075
        %v7087 = vmul.f32 %v6598, %v7075
        %v7088 = vmul.f32 %v6601, %v7075
        %v7089 = vmul.f32 %v6645, %v7075
        %v7090 = vmul.f32 %v6648, %v7075
        %v7091 = vmul.f32 %v6692, %v7075
        %v7092 = vmul.f32 %v6695, %v7075
        %v7093 = vmul.f32 %v6739, %v7075
        %v7094 = vmul.f32 %v6742, %v7075
        %v7095 = vmul.f32 %v6786, %v7075
        %v7096 = vmul.f32 %v6789, %v7075
        %v7097 = vmul.f32 %v6833, %v7075
        %v7098 = vmul.f32 %v6836, %v7075
        %v7099 = vmul.f32 %v6880, %v7075
        %v7100 = vmul.f32 %v6883, %v7075
        %v7101 = vmul.f32 %v6927, %v7075
        %v7102 = vmul.f32 %v6930, %v7075
        %v7103 = vmul.f32 %v6974, %v7075
        %v7104 = vmul.f32 %v6977, %v7075
        %v7105 = vmul.f32 %v7021, %v7075
        %v7106 = vmul.f32 %v7024, %v7075
        %v7107 = vmul.f32 %v7068, %v7075
        %v7108 = vmul.f32 %v7071, %v7075
        %v7109 = vsel %vm983, %v7077, 0.0
        %7110 = vadd.xlane.f32.xlu0 %v7109
        %v7111 = vpop.xlane.xlu0 %7110
        %v7112 = vsel %vm983, %v7078, 0.0
        %7113 = vadd.xlane.f32.xlu0 %v7112
        %v7114 = vpop.xlane.xlu0 %7113
        %v7115 = vsel %vm983, %v7079, 0.0
        %7116 = vadd.xlane.f32.xlu0 %v7115
        %v7117 = vpop.xlane.xlu0 %7116
        %v7118 = vsel %vm983, %v7080, 0.0
        %7119 = vadd.xlane.f32.xlu0 %v7118
        %v7120 = vpop.xlane.xlu0 %7119
        %v7121 = vsel %vm983, %v7081, 0.0
        %7122 = vadd.xlane.f32.xlu0 %v7121
        %v7123 = vpop.xlane.xlu0 %7122
        %v7124 = vsel %vm983, %v7082, 0.0
        %7125 = vadd.xlane.f32.xlu0 %v7124
        %v7126 = vpop.xlane.xlu0 %7125
        %v7127 = vsel %vm983, %v7083, 0.0
        %7128 = vadd.xlane.f32.xlu0 %v7127
        %v7129 = vpop.xlane.xlu0 %7128
        %v7130 = vsel %vm983, %v7084, 0.0
        %7131 = vadd.xlane.f32.xlu0 %v7130
        %v7132 = vpop.xlane.xlu0 %7131
        %v7133 = vsel %vm983, %v7085, 0.0
        %7134 = vadd.xlane.f32.xlu0 %v7133
        %v7135 = vpop.xlane.xlu0 %7134
        %v7136 = vsel %vm983, %v7086, 0.0
        %7137 = vadd.xlane.f32.xlu0 %v7136
        %v7138 = vpop.xlane.xlu0 %7137
        %v7139 = vsel %vm983, %v7087, 0.0
        %7140 = vadd.xlane.f32.xlu0 %v7139
        %v7141 = vpop.xlane.xlu0 %7140
        %v7142 = vsel %vm983, %v7088, 0.0
        %7143 = vadd.xlane.f32.xlu0 %v7142
        %v7144 = vpop.xlane.xlu0 %7143
        %v7145 = vsel %vm983, %v7089, 0.0
        %7146 = vadd.xlane.f32.xlu0 %v7145
        %v7147 = vpop.xlane.xlu0 %7146
        %v7148 = vsel %vm983, %v7090, 0.0
        %7149 = vadd.xlane.f32.xlu0 %v7148
        %v7150 = vpop.xlane.xlu0 %7149
        %v7151 = vsel %vm983, %v7091, 0.0
        %7152 = vadd.xlane.f32.xlu0 %v7151
        %v7153 = vpop.xlane.xlu0 %7152
        %v7154 = vsel %vm983, %v7092, 0.0
        %7155 = vadd.xlane.f32.xlu0 %v7154
        %v7156 = vpop.xlane.xlu0 %7155
        %v7157 = vsel %vm983, %v7093, 0.0
        %7158 = vadd.xlane.f32.xlu0 %v7157
        %v7159 = vpop.xlane.xlu0 %7158
        %v7160 = vsel %vm983, %v7094, 0.0
        %7161 = vadd.xlane.f32.xlu0 %v7160
        %v7162 = vpop.xlane.xlu0 %7161
        %v7163 = vsel %vm983, %v7095, 0.0
        %7164 = vadd.xlane.f32.xlu0 %v7163
        %v7165 = vpop.xlane.xlu0 %7164
        %v7166 = vsel %vm983, %v7096, 0.0
        %7167 = vadd.xlane.f32.xlu0 %v7166
        %v7168 = vpop.xlane.xlu0 %7167
        %v7169 = vsel %vm983, %v7097, 0.0
        %7170 = vadd.xlane.f32.xlu0 %v7169
        %v7171 = vpop.xlane.xlu0 %7170
        %v7172 = vsel %vm983, %v7098, 0.0
        %7173 = vadd.xlane.f32.xlu0 %v7172
        %v7174 = vpop.xlane.xlu0 %7173
        %v7175 = vsel %vm983, %v7099, 0.0
        %7176 = vadd.xlane.f32.xlu0 %v7175
        %v7177 = vpop.xlane.xlu0 %7176
        %v7178 = vsel %vm983, %v7100, 0.0
        %7179 = vadd.xlane.f32.xlu0 %v7178
        %v7180 = vpop.xlane.xlu0 %7179
        %v7181 = vsel %vm983, %v7101, 0.0
        %7182 = vadd.xlane.f32.xlu0 %v7181
        %v7183 = vpop.xlane.xlu0 %7182
        %v7184 = vsel %vm983, %v7102, 0.0
        %7185 = vadd.xlane.f32.xlu0 %v7184
        %v7186 = vpop.xlane.xlu0 %7185
        %v7187 = vsel %vm983, %v7103, 0.0
        %7188 = vadd.xlane.f32.xlu0 %v7187
        %v7189 = vpop.xlane.xlu0 %7188
        %v7190 = vsel %vm983, %v7104, 0.0
        %7191 = vadd.xlane.f32.xlu0 %v7190
        %v7192 = vpop.xlane.xlu0 %7191
        %v7193 = vsel %vm983, %v7105, 0.0
        %7194 = vadd.xlane.f32.xlu0 %v7193
        %v7195 = vpop.xlane.xlu0 %7194
        %v7196 = vsel %vm983, %v7106, 0.0
        %7197 = vadd.xlane.f32.xlu0 %v7196
        %v7198 = vpop.xlane.xlu0 %7197
        %v7199 = vsel %vm983, %v7107, 0.0
        %7200 = vadd.xlane.f32.xlu0 %v7199
        %v7201 = vpop.xlane.xlu0 %7200
        %v7202 = vsel %vm983, %v7108, 0.0
        %7203 = vadd.xlane.f32.xlu0 %v7202
        %v7204 = vpop.xlane.xlu0 %7203
        %v7205 = vadd.f32 %v5106, %v7111
        %v7206 = vadd.f32 %v5107, %v7114
        %v7207 = vadd.f32 %v5108, %v7117
        %v7208 = vadd.f32 %v5109, %v7120
        %v7209 = vadd.f32 %v5110, %v7123
        %v7210 = vadd.f32 %v5111, %v7126
        %v7211 = vadd.f32 %v5112, %v7129
        %v7212 = vadd.f32 %v5113, %v7132
        %v7213 = vadd.f32 %v5114, %v7135
        %v7214 = vadd.f32 %v5115, %v7138
        %v7215 = vadd.f32 %v5116, %v7141
        %v7216 = vadd.f32 %v5117, %v7144
        %v7217 = vadd.f32 %v5118, %v7147
        %v7218 = vadd.f32 %v5119, %v7150
        %v7219 = vadd.f32 %v5120, %v7153
        %v7220 = vadd.f32 %v5121, %v7156
        %v7221 = vadd.f32 %v5122, %v7159
        %v7222 = vadd.f32 %v5123, %v7162
        %v7223 = vadd.f32 %v5124, %v7165
        %v7224 = vadd.f32 %v5125, %v7168
        %v7225 = vadd.f32 %v5126, %v7171
        %v7226 = vadd.f32 %v5127, %v7174
        %v7227 = vadd.f32 %v5128, %v7177
        %v7228 = vadd.f32 %v5129, %v7180
        %v7229 = vadd.f32 %v5130, %v7183
        %v7230 = vadd.f32 %v5131, %v7186
        %v7231 = vadd.f32 %v5132, %v7189
        %v7232 = vadd.f32 %v5133, %v7192
        %v7233 = vadd.f32 %v5134, %v7195
        %v7234 = vadd.f32 %v5135, %v7198
        %v7235 = vadd.f32 %v5136, %v7201
        %v7236 = vadd.f32 %v5137, %v7204
        %7237 = vrot.lane.b32.xlu0 %v951, 104
        %v7238 = vpop.permute.xlu0 %7237
        %7239 = vrot.lane.b32.xlu0 %v967, 104
        %v7240 = vpop.permute.xlu0 %7239
        %v7242 = vsel %vm983, %v7238, 0
        %v7245 = vsel %vm983, %v7240, 0
        %7247 = vmatprep.subr.bf16.mxu0 0
        %7248 = vmatpush1.bf16.xpose.msra.mxu0 %v7245
        %7249 = vmatprep.subr.bf16.mxu0 0
        %7250 = vmatpush1.bf16.xpose.msra.mxu0 0
        %7251 = vmatprep.subr.bf16.mxu0 0
        %7252 = vmatpush1.bf16.xpose.msra.mxu0 0
        %7253 = vmatprep.subr.bf16.mxu0 0
        %7254 = vmatpush1.bf16.xpose.msra.mxu0 0
        %7255 = vmatprep.subr.bf16.mxu0 0
        %7256 = vmatpush1.bf16.xpose.msra.mxu0 0
        %7257 = vmatprep.subr.bf16.mxu0 0
        %7258 = vmatpush1.bf16.xpose.msra.mxu0 0
        %7259 = vmatprep.subr.bf16.mxu0 0
        %7260 = vmatpush1.bf16.xpose.msra.mxu0 0
        %7261 = vmatprep.subr.bf16.mxu0 0
        %7262 = vmatpush1.bf16.xpose.msra.mxu0 0
        %7263 = vmatprep.subr.bf16.mxu0 0
        %7264 = vmatpush1.bf16.xpose.msra.mxu0 0
        %7265 = vmatprep.subr.bf16.mxu0 0
        %7266 = vmatpush1.bf16.xpose.msra.mxu0 0
        %7267 = vmatprep.subr.bf16.mxu0 0
        %7268 = vmatpush1.bf16.xpose.msra.mxu0 0
        %7269 = vmatprep.subr.bf16.mxu0 0
        %7270 = vmatpush1.bf16.xpose.msra.mxu0 0
        %7271 = vmatprep.subr.bf16.mxu0 0
        %7272 = vmatpush1.bf16.xpose.msra.mxu0 0
        %7273 = vmatprep.subr.bf16.mxu0 0
        %7274 = vmatpush1.bf16.xpose.msra.mxu0 0
        %7275 = vmatprep.subr.bf16.mxu0 0
        %7276 = vmatpush1.bf16.xpose.msra.mxu0 0
        %7277 = vmatprep.subr.bf16.mxu0 0
        %7278 = vmatpush1.bf16.xpose.msra.mxu0 0
        %7279 = vmatprep.mubr.bf16.mxu0 0
        %7280 = vmatmul.mubr.bf16.gmra.mrb[0].mxu0 %v7242
        %v7281 = vpop.f32.mrb[0].mxu0
        %v7282 = vadd.f32 0.0, %v7281
        %v7283 = vpop.f32.mrb[0].mxu0
        %v7284 = vpop.f32.mrb[0].mxu0
        %v7285 = vadd.f32 0.0, %v7284
        %v7286 = vpop.f32.mrb[0].mxu0
        %7287 = vdwg.mxu0
        %7288 = vrot.lane.b32.xlu0 %v952, 104
        %v7289 = vpop.permute.xlu0 %7288
        %7290 = vrot.lane.b32.xlu0 %v968, 104
        %v7291 = vpop.permute.xlu0 %7290
        %v7293 = vsel %vm983, %v7289, 0
        %v7296 = vsel %vm983, %v7291, 0
        %7298 = vmatprep.subr.bf16.mxu0 0
        %7299 = vmatpush1.bf16.xpose.msra.mxu0 %v7296
        %7300 = vmatprep.subr.bf16.mxu0 0
        %7301 = vmatpush1.bf16.xpose.msra.mxu0 0
        %7302 = vmatprep.subr.bf16.mxu0 0
        %7303 = vmatpush1.bf16.xpose.msra.mxu0 0
        %7304 = vmatprep.subr.bf16.mxu0 0
        %7305 = vmatpush1.bf16.xpose.msra.mxu0 0
        %7306 = vmatprep.subr.bf16.mxu0 0
        %7307 = vmatpush1.bf16.xpose.msra.mxu0 0
        %7308 = vmatprep.subr.bf16.mxu0 0
        %7309 = vmatpush1.bf16.xpose.msra.mxu0 0
        %7310 = vmatprep.subr.bf16.mxu0 0
        %7311 = vmatpush1.bf16.xpose.msra.mxu0 0
        %7312 = vmatprep.subr.bf16.mxu0 0
        %7313 = vmatpush1.bf16.xpose.msra.mxu0 0
        %7314 = vmatprep.subr.bf16.mxu0 0
        %7315 = vmatpush1.bf16.xpose.msra.mxu0 0
        %7316 = vmatprep.subr.bf16.mxu0 0
        %7317 = vmatpush1.bf16.xpose.msra.mxu0 0
        %7318 = vmatprep.subr.bf16.mxu0 0
        %7319 = vmatpush1.bf16.xpose.msra.mxu0 0
        %7320 = vmatprep.subr.bf16.mxu0 0
        %7321 = vmatpush1.bf16.xpose.msra.mxu0 0
        %7322 = vmatprep.subr.bf16.mxu0 0
        %7323 = vmatpush1.bf16.xpose.msra.mxu0 0
        %7324 = vmatprep.subr.bf16.mxu0 0
        %7325 = vmatpush1.bf16.xpose.msra.mxu0 0
        %7326 = vmatprep.subr.bf16.mxu0 0
        %7327 = vmatpush1.bf16.xpose.msra.mxu0 0
        %7328 = vmatprep.subr.bf16.mxu0 0
        %7329 = vmatpush1.bf16.xpose.msra.mxu0 0
        %7330 = vmatprep.mubr.bf16.mxu0 0
        %7331 = vmatmul.mubr.bf16.gmra.mrb[0].mxu0 %v7293
        %v7332 = vpop.f32.mrb[0].mxu0
        %v7333 = vadd.f32 0.0, %v7332
        %v7334 = vpop.f32.mrb[0].mxu0
        %v7335 = vpop.f32.mrb[0].mxu0
        %v7336 = vadd.f32 0.0, %v7335
        %v7337 = vpop.f32.mrb[0].mxu0
        %7338 = vdwg.mxu0
        %7339 = vrot.lane.b32.xlu0 %v953, 104
        %v7340 = vpop.permute.xlu0 %7339
        %7341 = vrot.lane.b32.xlu0 %v969, 104
        %v7342 = vpop.permute.xlu0 %7341
        %v7344 = vsel %vm983, %v7340, 0
        %v7347 = vsel %vm983, %v7342, 0
        %7349 = vmatprep.subr.bf16.mxu0 0
        %7350 = vmatpush1.bf16.xpose.msra.mxu0 %v7347
        %7351 = vmatprep.subr.bf16.mxu0 0
        %7352 = vmatpush1.bf16.xpose.msra.mxu0 0
        %7353 = vmatprep.subr.bf16.mxu0 0
        %7354 = vmatpush1.bf16.xpose.msra.mxu0 0
        %7355 = vmatprep.subr.bf16.mxu0 0
        %7356 = vmatpush1.bf16.xpose.msra.mxu0 0
        %7357 = vmatprep.subr.bf16.mxu0 0
        %7358 = vmatpush1.bf16.xpose.msra.mxu0 0
        %7359 = vmatprep.subr.bf16.mxu0 0
        %7360 = vmatpush1.bf16.xpose.msra.mxu0 0
        %7361 = vmatprep.subr.bf16.mxu0 0
        %7362 = vmatpush1.bf16.xpose.msra.mxu0 0
        %7363 = vmatprep.subr.bf16.mxu0 0
        %7364 = vmatpush1.bf16.xpose.msra.mxu0 0
        %7365 = vmatprep.subr.bf16.mxu0 0
        %7366 = vmatpush1.bf16.xpose.msra.mxu0 0
        %7367 = vmatprep.subr.bf16.mxu0 0
        %7368 = vmatpush1.bf16.xpose.msra.mxu0 0
        %7369 = vmatprep.subr.bf16.mxu0 0
        %7370 = vmatpush1.bf16.xpose.msra.mxu0 0
        %7371 = vmatprep.subr.bf16.mxu0 0
        %7372 = vmatpush1.bf16.xpose.msra.mxu0 0
        %7373 = vmatprep.subr.bf16.mxu0 0
        %7374 = vmatpush1.bf16.xpose.msra.mxu0 0
        %7375 = vmatprep.subr.bf16.mxu0 0
        %7376 = vmatpush1.bf16.xpose.msra.mxu0 0
        %7377 = vmatprep.subr.bf16.mxu0 0
        %7378 = vmatpush1.bf16.xpose.msra.mxu0 0
        %7379 = vmatprep.subr.bf16.mxu0 0
        %7380 = vmatpush1.bf16.xpose.msra.mxu0 0
        %7381 = vmatprep.mubr.bf16.mxu0 0
        %7382 = vmatmul.mubr.bf16.gmra.mrb[0].mxu0 %v7344
        %v7383 = vpop.f32.mrb[0].mxu0
        %v7384 = vadd.f32 0.0, %v7383
        %v7385 = vpop.f32.mrb[0].mxu0
        %v7386 = vpop.f32.mrb[0].mxu0
        %v7387 = vadd.f32 0.0, %v7386
        %v7388 = vpop.f32.mrb[0].mxu0
        %7389 = vdwg.mxu0
        %7390 = vrot.lane.b32.xlu0 %v954, 104
        %v7391 = vpop.permute.xlu0 %7390
        %7392 = vrot.lane.b32.xlu0 %v970, 104
        %v7393 = vpop.permute.xlu0 %7392
        %v7395 = vsel %vm983, %v7391, 0
        %v7398 = vsel %vm983, %v7393, 0
        %7400 = vmatprep.subr.bf16.mxu0 0
        %7401 = vmatpush1.bf16.xpose.msra.mxu0 %v7398
        %7402 = vmatprep.subr.bf16.mxu0 0
        %7403 = vmatpush1.bf16.xpose.msra.mxu0 0
        %7404 = vmatprep.subr.bf16.mxu0 0
        %7405 = vmatpush1.bf16.xpose.msra.mxu0 0
        %7406 = vmatprep.subr.bf16.mxu0 0
        %7407 = vmatpush1.bf16.xpose.msra.mxu0 0
        %7408 = vmatprep.subr.bf16.mxu0 0
        %7409 = vmatpush1.bf16.xpose.msra.mxu0 0
        %7410 = vmatprep.subr.bf16.mxu0 0
        %7411 = vmatpush1.bf16.xpose.msra.mxu0 0
        %7412 = vmatprep.subr.bf16.mxu0 0
        %7413 = vmatpush1.bf16.xpose.msra.mxu0 0
        %7414 = vmatprep.subr.bf16.mxu0 0
        %7415 = vmatpush1.bf16.xpose.msra.mxu0 0
        %7416 = vmatprep.subr.bf16.mxu0 0
        %7417 = vmatpush1.bf16.xpose.msra.mxu0 0
        %7418 = vmatprep.subr.bf16.mxu0 0
        %7419 = vmatpush1.bf16.xpose.msra.mxu0 0
        %7420 = vmatprep.subr.bf16.mxu0 0
        %7421 = vmatpush1.bf16.xpose.msra.mxu0 0
        %7422 = vmatprep.subr.bf16.mxu0 0
        %7423 = vmatpush1.bf16.xpose.msra.mxu0 0
        %7424 = vmatprep.subr.bf16.mxu0 0
        %7425 = vmatpush1.bf16.xpose.msra.mxu0 0
        %7426 = vmatprep.subr.bf16.mxu0 0
        %7427 = vmatpush1.bf16.xpose.msra.mxu0 0
        %7428 = vmatprep.subr.bf16.mxu0 0
        %7429 = vmatpush1.bf16.xpose.msra.mxu0 0
        %7430 = vmatprep.subr.bf16.mxu0 0
        %7431 = vmatpush1.bf16.xpose.msra.mxu0 0
        %7432 = vmatprep.mubr.bf16.mxu0 0
        %7433 = vmatmul.mubr.bf16.gmra.mrb[0].mxu0 %v7395
        %v7434 = vpop.f32.mrb[0].mxu0
        %v7435 = vadd.f32 0.0, %v7434
        %v7436 = vpop.f32.mrb[0].mxu0
        %v7437 = vpop.f32.mrb[0].mxu0
        %v7438 = vadd.f32 0.0, %v7437
        %v7439 = vpop.f32.mrb[0].mxu0
        %7440 = vdwg.mxu0
        %7441 = vrot.lane.b32.xlu0 %v955, 104
        %v7442 = vpop.permute.xlu0 %7441
        %7443 = vrot.lane.b32.xlu0 %v971, 104
        %v7444 = vpop.permute.xlu0 %7443
        %v7446 = vsel %vm983, %v7442, 0
        %v7449 = vsel %vm983, %v7444, 0
        %7451 = vmatprep.subr.bf16.mxu0 0
        %7452 = vmatpush1.bf16.xpose.msra.mxu0 %v7449
        %7453 = vmatprep.subr.bf16.mxu0 0
        %7454 = vmatpush1.bf16.xpose.msra.mxu0 0
        %7455 = vmatprep.subr.bf16.mxu0 0
        %7456 = vmatpush1.bf16.xpose.msra.mxu0 0
        %7457 = vmatprep.subr.bf16.mxu0 0
        %7458 = vmatpush1.bf16.xpose.msra.mxu0 0
        %7459 = vmatprep.subr.bf16.mxu0 0
        %7460 = vmatpush1.bf16.xpose.msra.mxu0 0
        %7461 = vmatprep.subr.bf16.mxu0 0
        %7462 = vmatpush1.bf16.xpose.msra.mxu0 0
        %7463 = vmatprep.subr.bf16.mxu0 0
        %7464 = vmatpush1.bf16.xpose.msra.mxu0 0
        %7465 = vmatprep.subr.bf16.mxu0 0
        %7466 = vmatpush1.bf16.xpose.msra.mxu0 0
        %7467 = vmatprep.subr.bf16.mxu0 0
        %7468 = vmatpush1.bf16.xpose.msra.mxu0 0
        %7469 = vmatprep.subr.bf16.mxu0 0
        %7470 = vmatpush1.bf16.xpose.msra.mxu0 0
        %7471 = vmatprep.subr.bf16.mxu0 0
        %7472 = vmatpush1.bf16.xpose.msra.mxu0 0
        %7473 = vmatprep.subr.bf16.mxu0 0
        %7474 = vmatpush1.bf16.xpose.msra.mxu0 0
        %7475 = vmatprep.subr.bf16.mxu0 0
        %7476 = vmatpush1.bf16.xpose.msra.mxu0 0
        %7477 = vmatprep.subr.bf16.mxu0 0
        %7478 = vmatpush1.bf16.xpose.msra.mxu0 0
        %7479 = vmatprep.subr.bf16.mxu0 0
        %7480 = vmatpush1.bf16.xpose.msra.mxu0 0
        %7481 = vmatprep.subr.bf16.mxu0 0
        %7482 = vmatpush1.bf16.xpose.msra.mxu0 0
        %7483 = vmatprep.mubr.bf16.mxu0 0
        %7484 = vmatmul.mubr.bf16.gmra.mrb[0].mxu0 %v7446
        %v7485 = vpop.f32.mrb[0].mxu0
        %v7486 = vadd.f32 0.0, %v7485
        %v7487 = vpop.f32.mrb[0].mxu0
        %v7488 = vpop.f32.mrb[0].mxu0
        %v7489 = vadd.f32 0.0, %v7488
        %v7490 = vpop.f32.mrb[0].mxu0
        %7491 = vdwg.mxu0
        %7492 = vrot.lane.b32.xlu0 %v956, 104
        %v7493 = vpop.permute.xlu0 %7492
        %7494 = vrot.lane.b32.xlu0 %v972, 104
        %v7495 = vpop.permute.xlu0 %7494
        %v7497 = vsel %vm983, %v7493, 0
        %v7500 = vsel %vm983, %v7495, 0
        %7502 = vmatprep.subr.bf16.mxu0 0
        %7503 = vmatpush1.bf16.xpose.msra.mxu0 %v7500
        %7504 = vmatprep.subr.bf16.mxu0 0
        %7505 = vmatpush1.bf16.xpose.msra.mxu0 0
        %7506 = vmatprep.subr.bf16.mxu0 0
        %7507 = vmatpush1.bf16.xpose.msra.mxu0 0
        %7508 = vmatprep.subr.bf16.mxu0 0
        %7509 = vmatpush1.bf16.xpose.msra.mxu0 0
        %7510 = vmatprep.subr.bf16.mxu0 0
        %7511 = vmatpush1.bf16.xpose.msra.mxu0 0
        %7512 = vmatprep.subr.bf16.mxu0 0
        %7513 = vmatpush1.bf16.xpose.msra.mxu0 0
        %7514 = vmatprep.subr.bf16.mxu0 0
        %7515 = vmatpush1.bf16.xpose.msra.mxu0 0
        %7516 = vmatprep.subr.bf16.mxu0 0
        %7517 = vmatpush1.bf16.xpose.msra.mxu0 0
        %7518 = vmatprep.subr.bf16.mxu0 0
        %7519 = vmatpush1.bf16.xpose.msra.mxu0 0
        %7520 = vmatprep.subr.bf16.mxu0 0
        %7521 = vmatpush1.bf16.xpose.msra.mxu0 0
        %7522 = vmatprep.subr.bf16.mxu0 0
        %7523 = vmatpush1.bf16.xpose.msra.mxu0 0
        %7524 = vmatprep.subr.bf16.mxu0 0
        %7525 = vmatpush1.bf16.xpose.msra.mxu0 0
        %7526 = vmatprep.subr.bf16.mxu0 0
        %7527 = vmatpush1.bf16.xpose.msra.mxu0 0
        %7528 = vmatprep.subr.bf16.mxu0 0
        %7529 = vmatpush1.bf16.xpose.msra.mxu0 0
        %7530 = vmatprep.subr.bf16.mxu0 0
        %7531 = vmatpush1.bf16.xpose.msra.mxu0 0
        %7532 = vmatprep.subr.bf16.mxu0 0
        %7533 = vmatpush1.bf16.xpose.msra.mxu0 0
        %7534 = vmatprep.mubr.bf16.mxu0 0
        %7535 = vmatmul.mubr.bf16.gmra.mrb[0].mxu0 %v7497
        %v7536 = vpop.f32.mrb[0].mxu0
        %v7537 = vadd.f32 0.0, %v7536
        %v7538 = vpop.f32.mrb[0].mxu0
        %v7539 = vpop.f32.mrb[0].mxu0
        %v7540 = vadd.f32 0.0, %v7539
        %v7541 = vpop.f32.mrb[0].mxu0
        %7542 = vdwg.mxu0
        %7543 = vrot.lane.b32.xlu0 %v957, 104
        %v7544 = vpop.permute.xlu0 %7543
        %7545 = vrot.lane.b32.xlu0 %v973, 104
        %v7546 = vpop.permute.xlu0 %7545
        %v7548 = vsel %vm983, %v7544, 0
        %v7551 = vsel %vm983, %v7546, 0
        %7553 = vmatprep.subr.bf16.mxu0 0
        %7554 = vmatpush1.bf16.xpose.msra.mxu0 %v7551
        %7555 = vmatprep.subr.bf16.mxu0 0
        %7556 = vmatpush1.bf16.xpose.msra.mxu0 0
        %7557 = vmatprep.subr.bf16.mxu0 0
        %7558 = vmatpush1.bf16.xpose.msra.mxu0 0
        %7559 = vmatprep.subr.bf16.mxu0 0
        %7560 = vmatpush1.bf16.xpose.msra.mxu0 0
        %7561 = vmatprep.subr.bf16.mxu0 0
        %7562 = vmatpush1.bf16.xpose.msra.mxu0 0
        %7563 = vmatprep.subr.bf16.mxu0 0
        %7564 = vmatpush1.bf16.xpose.msra.mxu0 0
        %7565 = vmatprep.subr.bf16.mxu0 0
        %7566 = vmatpush1.bf16.xpose.msra.mxu0 0
        %7567 = vmatprep.subr.bf16.mxu0 0
        %7568 = vmatpush1.bf16.xpose.msra.mxu0 0
        %7569 = vmatprep.subr.bf16.mxu0 0
        %7570 = vmatpush1.bf16.xpose.msra.mxu0 0
        %7571 = vmatprep.subr.bf16.mxu0 0
        %7572 = vmatpush1.bf16.xpose.msra.mxu0 0
        %7573 = vmatprep.subr.bf16.mxu0 0
        %7574 = vmatpush1.bf16.xpose.msra.mxu0 0
        %7575 = vmatprep.subr.bf16.mxu0 0
        %7576 = vmatpush1.bf16.xpose.msra.mxu0 0
        %7577 = vmatprep.subr.bf16.mxu0 0
        %7578 = vmatpush1.bf16.xpose.msra.mxu0 0
        %7579 = vmatprep.subr.bf16.mxu0 0
        %7580 = vmatpush1.bf16.xpose.msra.mxu0 0
        %7581 = vmatprep.subr.bf16.mxu0 0
        %7582 = vmatpush1.bf16.xpose.msra.mxu0 0
        %7583 = vmatprep.subr.bf16.mxu0 0
        %7584 = vmatpush1.bf16.xpose.msra.mxu0 0
        %7585 = vmatprep.mubr.bf16.mxu0 0
        %7586 = vmatmul.mubr.bf16.gmra.mrb[0].mxu0 %v7548
        %v7587 = vpop.f32.mrb[0].mxu0
        %v7588 = vadd.f32 0.0, %v7587
        %v7589 = vpop.f32.mrb[0].mxu0
        %v7590 = vpop.f32.mrb[0].mxu0
        %v7591 = vadd.f32 0.0, %v7590
        %v7592 = vpop.f32.mrb[0].mxu0
        %7593 = vdwg.mxu0
        %7594 = vrot.lane.b32.xlu0 %v958, 104
        %v7595 = vpop.permute.xlu0 %7594
        %7596 = vrot.lane.b32.xlu0 %v974, 104
        %v7597 = vpop.permute.xlu0 %7596
        %v7599 = vsel %vm983, %v7595, 0
        %v7602 = vsel %vm983, %v7597, 0
        %7604 = vmatprep.subr.bf16.mxu0 0
        %7605 = vmatpush1.bf16.xpose.msra.mxu0 %v7602
        %7606 = vmatprep.subr.bf16.mxu0 0
        %7607 = vmatpush1.bf16.xpose.msra.mxu0 0
        %7608 = vmatprep.subr.bf16.mxu0 0
        %7609 = vmatpush1.bf16.xpose.msra.mxu0 0
        %7610 = vmatprep.subr.bf16.mxu0 0
        %7611 = vmatpush1.bf16.xpose.msra.mxu0 0
        %7612 = vmatprep.subr.bf16.mxu0 0
        %7613 = vmatpush1.bf16.xpose.msra.mxu0 0
        %7614 = vmatprep.subr.bf16.mxu0 0
        %7615 = vmatpush1.bf16.xpose.msra.mxu0 0
        %7616 = vmatprep.subr.bf16.mxu0 0
        %7617 = vmatpush1.bf16.xpose.msra.mxu0 0
        %7618 = vmatprep.subr.bf16.mxu0 0
        %7619 = vmatpush1.bf16.xpose.msra.mxu0 0
        %7620 = vmatprep.subr.bf16.mxu0 0
        %7621 = vmatpush1.bf16.xpose.msra.mxu0 0
        %7622 = vmatprep.subr.bf16.mxu0 0
        %7623 = vmatpush1.bf16.xpose.msra.mxu0 0
        %7624 = vmatprep.subr.bf16.mxu0 0
        %7625 = vmatpush1.bf16.xpose.msra.mxu0 0
        %7626 = vmatprep.subr.bf16.mxu0 0
        %7627 = vmatpush1.bf16.xpose.msra.mxu0 0
        %7628 = vmatprep.subr.bf16.mxu0 0
        %7629 = vmatpush1.bf16.xpose.msra.mxu0 0
        %7630 = vmatprep.subr.bf16.mxu0 0
        %7631 = vmatpush1.bf16.xpose.msra.mxu0 0
        %7632 = vmatprep.subr.bf16.mxu0 0
        %7633 = vmatpush1.bf16.xpose.msra.mxu0 0
        %7634 = vmatprep.subr.bf16.mxu0 0
        %7635 = vmatpush1.bf16.xpose.msra.mxu0 0
        %7636 = vmatprep.mubr.bf16.mxu0 0
        %7637 = vmatmul.mubr.bf16.gmra.mrb[0].mxu0 %v7599
        %v7638 = vpop.f32.mrb[0].mxu0
        %v7639 = vadd.f32 0.0, %v7638
        %v7640 = vpop.f32.mrb[0].mxu0
        %v7641 = vpop.f32.mrb[0].mxu0
        %v7642 = vadd.f32 0.0, %v7641
        %v7643 = vpop.f32.mrb[0].mxu0
        %7644 = vdwg.mxu0
        %7645 = vrot.lane.b32.xlu0 %v959, 104
        %v7646 = vpop.permute.xlu0 %7645
        %7647 = vrot.lane.b32.xlu0 %v975, 104
        %v7648 = vpop.permute.xlu0 %7647
        %v7650 = vsel %vm983, %v7646, 0
        %v7653 = vsel %vm983, %v7648, 0
        %7655 = vmatprep.subr.bf16.mxu0 0
        %7656 = vmatpush1.bf16.xpose.msra.mxu0 %v7653
        %7657 = vmatprep.subr.bf16.mxu0 0
        %7658 = vmatpush1.bf16.xpose.msra.mxu0 0
        %7659 = vmatprep.subr.bf16.mxu0 0
        %7660 = vmatpush1.bf16.xpose.msra.mxu0 0
        %7661 = vmatprep.subr.bf16.mxu0 0
        %7662 = vmatpush1.bf16.xpose.msra.mxu0 0
        %7663 = vmatprep.subr.bf16.mxu0 0
        %7664 = vmatpush1.bf16.xpose.msra.mxu0 0
        %7665 = vmatprep.subr.bf16.mxu0 0
        %7666 = vmatpush1.bf16.xpose.msra.mxu0 0
        %7667 = vmatprep.subr.bf16.mxu0 0
        %7668 = vmatpush1.bf16.xpose.msra.mxu0 0
        %7669 = vmatprep.subr.bf16.mxu0 0
        %7670 = vmatpush1.bf16.xpose.msra.mxu0 0
        %7671 = vmatprep.subr.bf16.mxu0 0
        %7672 = vmatpush1.bf16.xpose.msra.mxu0 0
        %7673 = vmatprep.subr.bf16.mxu0 0
        %7674 = vmatpush1.bf16.xpose.msra.mxu0 0
        %7675 = vmatprep.subr.bf16.mxu0 0
        %7676 = vmatpush1.bf16.xpose.msra.mxu0 0
        %7677 = vmatprep.subr.bf16.mxu0 0
        %7678 = vmatpush1.bf16.xpose.msra.mxu0 0
        %7679 = vmatprep.subr.bf16.mxu0 0
        %7680 = vmatpush1.bf16.xpose.msra.mxu0 0
        %7681 = vmatprep.subr.bf16.mxu0 0
        %7682 = vmatpush1.bf16.xpose.msra.mxu0 0
        %7683 = vmatprep.subr.bf16.mxu0 0
        %7684 = vmatpush1.bf16.xpose.msra.mxu0 0
        %7685 = vmatprep.subr.bf16.mxu0 0
        %7686 = vmatpush1.bf16.xpose.msra.mxu0 0
        %7687 = vmatprep.mubr.bf16.mxu0 0
        %7688 = vmatmul.mubr.bf16.gmra.mrb[0].mxu0 %v7650
        %v7689 = vpop.f32.mrb[0].mxu0
        %v7690 = vadd.f32 0.0, %v7689
        %v7691 = vpop.f32.mrb[0].mxu0
        %v7692 = vpop.f32.mrb[0].mxu0
        %v7693 = vadd.f32 0.0, %v7692
        %v7694 = vpop.f32.mrb[0].mxu0
        %7695 = vdwg.mxu0
        %7696 = vrot.lane.b32.xlu0 %v960, 104
        %v7697 = vpop.permute.xlu0 %7696
        %7698 = vrot.lane.b32.xlu0 %v976, 104
        %v7699 = vpop.permute.xlu0 %7698
        %v7701 = vsel %vm983, %v7697, 0
        %v7704 = vsel %vm983, %v7699, 0
        %7706 = vmatprep.subr.bf16.mxu0 0
        %7707 = vmatpush1.bf16.xpose.msra.mxu0 %v7704
        %7708 = vmatprep.subr.bf16.mxu0 0
        %7709 = vmatpush1.bf16.xpose.msra.mxu0 0
        %7710 = vmatprep.subr.bf16.mxu0 0
        %7711 = vmatpush1.bf16.xpose.msra.mxu0 0
        %7712 = vmatprep.subr.bf16.mxu0 0
        %7713 = vmatpush1.bf16.xpose.msra.mxu0 0
        %7714 = vmatprep.subr.bf16.mxu0 0
        %7715 = vmatpush1.bf16.xpose.msra.mxu0 0
        %7716 = vmatprep.subr.bf16.mxu0 0
        %7717 = vmatpush1.bf16.xpose.msra.mxu0 0
        %7718 = vmatprep.subr.bf16.mxu0 0
        %7719 = vmatpush1.bf16.xpose.msra.mxu0 0
        %7720 = vmatprep.subr.bf16.mxu0 0
        %7721 = vmatpush1.bf16.xpose.msra.mxu0 0
        %7722 = vmatprep.subr.bf16.mxu0 0
        %7723 = vmatpush1.bf16.xpose.msra.mxu0 0
        %7724 = vmatprep.subr.bf16.mxu0 0
        %7725 = vmatpush1.bf16.xpose.msra.mxu0 0
        %7726 = vmatprep.subr.bf16.mxu0 0
        %7727 = vmatpush1.bf16.xpose.msra.mxu0 0
        %7728 = vmatprep.subr.bf16.mxu0 0
        %7729 = vmatpush1.bf16.xpose.msra.mxu0 0
        %7730 = vmatprep.subr.bf16.mxu0 0
        %7731 = vmatpush1.bf16.xpose.msra.mxu0 0
        %7732 = vmatprep.subr.bf16.mxu0 0
        %7733 = vmatpush1.bf16.xpose.msra.mxu0 0
        %7734 = vmatprep.subr.bf16.mxu0 0
        %7735 = vmatpush1.bf16.xpose.msra.mxu0 0
        %7736 = vmatprep.subr.bf16.mxu0 0
        %7737 = vmatpush1.bf16.xpose.msra.mxu0 0
        %7738 = vmatprep.mubr.bf16.mxu0 0
        %7739 = vmatmul.mubr.bf16.gmra.mrb[0].mxu0 %v7701
        %v7740 = vpop.f32.mrb[0].mxu0
        %v7741 = vadd.f32 0.0, %v7740
        %v7742 = vpop.f32.mrb[0].mxu0
        %v7743 = vpop.f32.mrb[0].mxu0
        %v7744 = vadd.f32 0.0, %v7743
        %v7745 = vpop.f32.mrb[0].mxu0
        %7746 = vdwg.mxu0
        %7747 = vrot.lane.b32.xlu0 %v961, 104
        %v7748 = vpop.permute.xlu0 %7747
        %7749 = vrot.lane.b32.xlu0 %v977, 104
        %v7750 = vpop.permute.xlu0 %7749
        %v7752 = vsel %vm983, %v7748, 0
        %v7755 = vsel %vm983, %v7750, 0
        %7757 = vmatprep.subr.bf16.mxu0 0
        %7758 = vmatpush1.bf16.xpose.msra.mxu0 %v7755
        %7759 = vmatprep.subr.bf16.mxu0 0
        %7760 = vmatpush1.bf16.xpose.msra.mxu0 0
        %7761 = vmatprep.subr.bf16.mxu0 0
        %7762 = vmatpush1.bf16.xpose.msra.mxu0 0
        %7763 = vmatprep.subr.bf16.mxu0 0
        %7764 = vmatpush1.bf16.xpose.msra.mxu0 0
        %7765 = vmatprep.subr.bf16.mxu0 0
        %7766 = vmatpush1.bf16.xpose.msra.mxu0 0
        %7767 = vmatprep.subr.bf16.mxu0 0
        %7768 = vmatpush1.bf16.xpose.msra.mxu0 0
        %7769 = vmatprep.subr.bf16.mxu0 0
        %7770 = vmatpush1.bf16.xpose.msra.mxu0 0
        %7771 = vmatprep.subr.bf16.mxu0 0
        %7772 = vmatpush1.bf16.xpose.msra.mxu0 0
        %7773 = vmatprep.subr.bf16.mxu0 0
        %7774 = vmatpush1.bf16.xpose.msra.mxu0 0
        %7775 = vmatprep.subr.bf16.mxu0 0
        %7776 = vmatpush1.bf16.xpose.msra.mxu0 0
        %7777 = vmatprep.subr.bf16.mxu0 0
        %7778 = vmatpush1.bf16.xpose.msra.mxu0 0
        %7779 = vmatprep.subr.bf16.mxu0 0
        %7780 = vmatpush1.bf16.xpose.msra.mxu0 0
        %7781 = vmatprep.subr.bf16.mxu0 0
        %7782 = vmatpush1.bf16.xpose.msra.mxu0 0
        %7783 = vmatprep.subr.bf16.mxu0 0
        %7784 = vmatpush1.bf16.xpose.msra.mxu0 0
        %7785 = vmatprep.subr.bf16.mxu0 0
        %7786 = vmatpush1.bf16.xpose.msra.mxu0 0
        %7787 = vmatprep.subr.bf16.mxu0 0
        %7788 = vmatpush1.bf16.xpose.msra.mxu0 0
        %7789 = vmatprep.mubr.bf16.mxu0 0
        %7790 = vmatmul.mubr.bf16.gmra.mrb[0].mxu0 %v7752
        %v7791 = vpop.f32.mrb[0].mxu0
        %v7792 = vadd.f32 0.0, %v7791
        %v7793 = vpop.f32.mrb[0].mxu0
        %v7794 = vpop.f32.mrb[0].mxu0
        %v7795 = vadd.f32 0.0, %v7794
        %v7796 = vpop.f32.mrb[0].mxu0
        %7797 = vdwg.mxu0
        %7798 = vrot.lane.b32.xlu0 %v962, 104
        %v7799 = vpop.permute.xlu0 %7798
        %7800 = vrot.lane.b32.xlu0 %v978, 104
        %v7801 = vpop.permute.xlu0 %7800
        %v7803 = vsel %vm983, %v7799, 0
        %v7806 = vsel %vm983, %v7801, 0
        %7808 = vmatprep.subr.bf16.mxu0 0
        %7809 = vmatpush1.bf16.xpose.msra.mxu0 %v7806
        %7810 = vmatprep.subr.bf16.mxu0 0
        %7811 = vmatpush1.bf16.xpose.msra.mxu0 0
        %7812 = vmatprep.subr.bf16.mxu0 0
        %7813 = vmatpush1.bf16.xpose.msra.mxu0 0
        %7814 = vmatprep.subr.bf16.mxu0 0
        %7815 = vmatpush1.bf16.xpose.msra.mxu0 0
        %7816 = vmatprep.subr.bf16.mxu0 0
        %7817 = vmatpush1.bf16.xpose.msra.mxu0 0
        %7818 = vmatprep.subr.bf16.mxu0 0
        %7819 = vmatpush1.bf16.xpose.msra.mxu0 0
        %7820 = vmatprep.subr.bf16.mxu0 0
        %7821 = vmatpush1.bf16.xpose.msra.mxu0 0
        %7822 = vmatprep.subr.bf16.mxu0 0
        %7823 = vmatpush1.bf16.xpose.msra.mxu0 0
        %7824 = vmatprep.subr.bf16.mxu0 0
        %7825 = vmatpush1.bf16.xpose.msra.mxu0 0
        %7826 = vmatprep.subr.bf16.mxu0 0
        %7827 = vmatpush1.bf16.xpose.msra.mxu0 0
        %7828 = vmatprep.subr.bf16.mxu0 0
        %7829 = vmatpush1.bf16.xpose.msra.mxu0 0
        %7830 = vmatprep.subr.bf16.mxu0 0
        %7831 = vmatpush1.bf16.xpose.msra.mxu0 0
        %7832 = vmatprep.subr.bf16.mxu0 0
        %7833 = vmatpush1.bf16.xpose.msra.mxu0 0
        %7834 = vmatprep.subr.bf16.mxu0 0
        %7835 = vmatpush1.bf16.xpose.msra.mxu0 0
        %7836 = vmatprep.subr.bf16.mxu0 0
        %7837 = vmatpush1.bf16.xpose.msra.mxu0 0
        %7838 = vmatprep.subr.bf16.mxu0 0
        %7839 = vmatpush1.bf16.xpose.msra.mxu0 0
        %7840 = vmatprep.mubr.bf16.mxu0 0
        %7841 = vmatmul.mubr.bf16.gmra.mrb[0].mxu0 %v7803
        %v7842 = vpop.f32.mrb[0].mxu0
        %v7843 = vadd.f32 0.0, %v7842
        %v7844 = vpop.f32.mrb[0].mxu0
        %v7845 = vpop.f32.mrb[0].mxu0
        %v7846 = vadd.f32 0.0, %v7845
        %v7847 = vpop.f32.mrb[0].mxu0
        %7848 = vdwg.mxu0
        %7849 = vrot.lane.b32.xlu0 %v963, 104
        %v7850 = vpop.permute.xlu0 %7849
        %7851 = vrot.lane.b32.xlu0 %v979, 104
        %v7852 = vpop.permute.xlu0 %7851
        %v7854 = vsel %vm983, %v7850, 0
        %v7857 = vsel %vm983, %v7852, 0
        %7859 = vmatprep.subr.bf16.mxu0 0
        %7860 = vmatpush1.bf16.xpose.msra.mxu0 %v7857
        %7861 = vmatprep.subr.bf16.mxu0 0
        %7862 = vmatpush1.bf16.xpose.msra.mxu0 0
        %7863 = vmatprep.subr.bf16.mxu0 0
        %7864 = vmatpush1.bf16.xpose.msra.mxu0 0
        %7865 = vmatprep.subr.bf16.mxu0 0
        %7866 = vmatpush1.bf16.xpose.msra.mxu0 0
        %7867 = vmatprep.subr.bf16.mxu0 0
        %7868 = vmatpush1.bf16.xpose.msra.mxu0 0
        %7869 = vmatprep.subr.bf16.mxu0 0
        %7870 = vmatpush1.bf16.xpose.msra.mxu0 0
        %7871 = vmatprep.subr.bf16.mxu0 0
        %7872 = vmatpush1.bf16.xpose.msra.mxu0 0
        %7873 = vmatprep.subr.bf16.mxu0 0
        %7874 = vmatpush1.bf16.xpose.msra.mxu0 0
        %7875 = vmatprep.subr.bf16.mxu0 0
        %7876 = vmatpush1.bf16.xpose.msra.mxu0 0
        %7877 = vmatprep.subr.bf16.mxu0 0
        %7878 = vmatpush1.bf16.xpose.msra.mxu0 0
        %7879 = vmatprep.subr.bf16.mxu0 0
        %7880 = vmatpush1.bf16.xpose.msra.mxu0 0
        %7881 = vmatprep.subr.bf16.mxu0 0
        %7882 = vmatpush1.bf16.xpose.msra.mxu0 0
        %7883 = vmatprep.subr.bf16.mxu0 0
        %7884 = vmatpush1.bf16.xpose.msra.mxu0 0
        %7885 = vmatprep.subr.bf16.mxu0 0
        %7886 = vmatpush1.bf16.xpose.msra.mxu0 0
        %7887 = vmatprep.subr.bf16.mxu0 0
        %7888 = vmatpush1.bf16.xpose.msra.mxu0 0
        %7889 = vmatprep.subr.bf16.mxu0 0
        %7890 = vmatpush1.bf16.xpose.msra.mxu0 0
        %7891 = vmatprep.mubr.bf16.mxu0 0
        %7892 = vmatmul.mubr.bf16.gmra.mrb[0].mxu0 %v7854
        %v7893 = vpop.f32.mrb[0].mxu0
        %v7894 = vadd.f32 0.0, %v7893
        %v7895 = vpop.f32.mrb[0].mxu0
        %v7896 = vpop.f32.mrb[0].mxu0
        %v7897 = vadd.f32 0.0, %v7896
        %v7898 = vpop.f32.mrb[0].mxu0
        %7899 = vdwg.mxu0
        %7900 = vrot.lane.b32.xlu0 %v964, 104
        %v7901 = vpop.permute.xlu0 %7900
        %7902 = vrot.lane.b32.xlu0 %v980, 104
        %v7903 = vpop.permute.xlu0 %7902
        %v7905 = vsel %vm983, %v7901, 0
        %v7908 = vsel %vm983, %v7903, 0
        %7910 = vmatprep.subr.bf16.mxu0 0
        %7911 = vmatpush1.bf16.xpose.msra.mxu0 %v7908
        %7912 = vmatprep.subr.bf16.mxu0 0
        %7913 = vmatpush1.bf16.xpose.msra.mxu0 0
        %7914 = vmatprep.subr.bf16.mxu0 0
        %7915 = vmatpush1.bf16.xpose.msra.mxu0 0
        %7916 = vmatprep.subr.bf16.mxu0 0
        %7917 = vmatpush1.bf16.xpose.msra.mxu0 0
        %7918 = vmatprep.subr.bf16.mxu0 0
        %7919 = vmatpush1.bf16.xpose.msra.mxu0 0
        %7920 = vmatprep.subr.bf16.mxu0 0
        %7921 = vmatpush1.bf16.xpose.msra.mxu0 0
        %7922 = vmatprep.subr.bf16.mxu0 0
        %7923 = vmatpush1.bf16.xpose.msra.mxu0 0
        %7924 = vmatprep.subr.bf16.mxu0 0
        %7925 = vmatpush1.bf16.xpose.msra.mxu0 0
        %7926 = vmatprep.subr.bf16.mxu0 0
        %7927 = vmatpush1.bf16.xpose.msra.mxu0 0
        %7928 = vmatprep.subr.bf16.mxu0 0
        %7929 = vmatpush1.bf16.xpose.msra.mxu0 0
        %7930 = vmatprep.subr.bf16.mxu0 0
        %7931 = vmatpush1.bf16.xpose.msra.mxu0 0
        %7932 = vmatprep.subr.bf16.mxu0 0
        %7933 = vmatpush1.bf16.xpose.msra.mxu0 0
        %7934 = vmatprep.subr.bf16.mxu0 0
        %7935 = vmatpush1.bf16.xpose.msra.mxu0 0
        %7936 = vmatprep.subr.bf16.mxu0 0
        %7937 = vmatpush1.bf16.xpose.msra.mxu0 0
        %7938 = vmatprep.subr.bf16.mxu0 0
        %7939 = vmatpush1.bf16.xpose.msra.mxu0 0
        %7940 = vmatprep.subr.bf16.mxu0 0
        %7941 = vmatpush1.bf16.xpose.msra.mxu0 0
        %7942 = vmatprep.mubr.bf16.mxu0 0
        %7943 = vmatmul.mubr.bf16.gmra.mrb[0].mxu0 %v7905
        %v7944 = vpop.f32.mrb[0].mxu0
        %v7945 = vadd.f32 0.0, %v7944
        %v7946 = vpop.f32.mrb[0].mxu0
        %v7947 = vpop.f32.mrb[0].mxu0
        %v7948 = vadd.f32 0.0, %v7947
        %v7949 = vpop.f32.mrb[0].mxu0
        %7950 = vdwg.mxu0
        %7951 = vrot.lane.b32.xlu0 %v965, 104
        %v7952 = vpop.permute.xlu0 %7951
        %7953 = vrot.lane.b32.xlu0 %v981, 104
        %v7954 = vpop.permute.xlu0 %7953
        %v7956 = vsel %vm983, %v7952, 0
        %v7959 = vsel %vm983, %v7954, 0
        %7961 = vmatprep.subr.bf16.mxu0 0
        %7962 = vmatpush1.bf16.xpose.msra.mxu0 %v7959
        %7963 = vmatprep.subr.bf16.mxu0 0
        %7964 = vmatpush1.bf16.xpose.msra.mxu0 0
        %7965 = vmatprep.subr.bf16.mxu0 0
        %7966 = vmatpush1.bf16.xpose.msra.mxu0 0
        %7967 = vmatprep.subr.bf16.mxu0 0
        %7968 = vmatpush1.bf16.xpose.msra.mxu0 0
        %7969 = vmatprep.subr.bf16.mxu0 0
        %7970 = vmatpush1.bf16.xpose.msra.mxu0 0
        %7971 = vmatprep.subr.bf16.mxu0 0
        %7972 = vmatpush1.bf16.xpose.msra.mxu0 0
        %7973 = vmatprep.subr.bf16.mxu0 0
        %7974 = vmatpush1.bf16.xpose.msra.mxu0 0
        %7975 = vmatprep.subr.bf16.mxu0 0
        %7976 = vmatpush1.bf16.xpose.msra.mxu0 0
        %7977 = vmatprep.subr.bf16.mxu0 0
        %7978 = vmatpush1.bf16.xpose.msra.mxu0 0
        %7979 = vmatprep.subr.bf16.mxu0 0
        %7980 = vmatpush1.bf16.xpose.msra.mxu0 0
        %7981 = vmatprep.subr.bf16.mxu0 0
        %7982 = vmatpush1.bf16.xpose.msra.mxu0 0
        %7983 = vmatprep.subr.bf16.mxu0 0
        %7984 = vmatpush1.bf16.xpose.msra.mxu0 0
        %7985 = vmatprep.subr.bf16.mxu0 0
        %7986 = vmatpush1.bf16.xpose.msra.mxu0 0
        %7987 = vmatprep.subr.bf16.mxu0 0
        %7988 = vmatpush1.bf16.xpose.msra.mxu0 0
        %7989 = vmatprep.subr.bf16.mxu0 0
        %7990 = vmatpush1.bf16.xpose.msra.mxu0 0
        %7991 = vmatprep.subr.bf16.mxu0 0
        %7992 = vmatpush1.bf16.xpose.msra.mxu0 0
        %7993 = vmatprep.mubr.bf16.mxu0 0
        %7994 = vmatmul.mubr.bf16.gmra.mrb[0].mxu0 %v7956
        %v7995 = vpop.f32.mrb[0].mxu0
        %v7996 = vadd.f32 0.0, %v7995
        %v7997 = vpop.f32.mrb[0].mxu0
        %v7998 = vpop.f32.mrb[0].mxu0
        %v7999 = vadd.f32 0.0, %v7998
        %v8000 = vpop.f32.mrb[0].mxu0
        %8001 = vdwg.mxu0
        %8002 = vrot.lane.b32.xlu0 %v966, 104
        %v8003 = vpop.permute.xlu0 %8002
        %8004 = vrot.lane.b32.xlu0 %v982, 104
        %v8005 = vpop.permute.xlu0 %8004
        %v8007 = vsel %vm983, %v8003, 0
        %v8010 = vsel %vm983, %v8005, 0
        %8012 = vmatprep.subr.bf16.mxu0 0
        %8013 = vmatpush1.bf16.xpose.msra.mxu0 %v8010
        %8014 = vmatprep.subr.bf16.mxu0 0
        %8015 = vmatpush1.bf16.xpose.msra.mxu0 0
        %8016 = vmatprep.subr.bf16.mxu0 0
        %8017 = vmatpush1.bf16.xpose.msra.mxu0 0
        %8018 = vmatprep.subr.bf16.mxu0 0
        %8019 = vmatpush1.bf16.xpose.msra.mxu0 0
        %8020 = vmatprep.subr.bf16.mxu0 0
        %8021 = vmatpush1.bf16.xpose.msra.mxu0 0
        %8022 = vmatprep.subr.bf16.mxu0 0
        %8023 = vmatpush1.bf16.xpose.msra.mxu0 0
        %8024 = vmatprep.subr.bf16.mxu0 0
        %8025 = vmatpush1.bf16.xpose.msra.mxu0 0
        %8026 = vmatprep.subr.bf16.mxu0 0
        %8027 = vmatpush1.bf16.xpose.msra.mxu0 0
        %8028 = vmatprep.subr.bf16.mxu0 0
        %8029 = vmatpush1.bf16.xpose.msra.mxu0 0
        %8030 = vmatprep.subr.bf16.mxu0 0
        %8031 = vmatpush1.bf16.xpose.msra.mxu0 0
        %8032 = vmatprep.subr.bf16.mxu0 0
        %8033 = vmatpush1.bf16.xpose.msra.mxu0 0
        %8034 = vmatprep.subr.bf16.mxu0 0
        %8035 = vmatpush1.bf16.xpose.msra.mxu0 0
        %8036 = vmatprep.subr.bf16.mxu0 0
        %8037 = vmatpush1.bf16.xpose.msra.mxu0 0
        %8038 = vmatprep.subr.bf16.mxu0 0
        %8039 = vmatpush1.bf16.xpose.msra.mxu0 0
        %8040 = vmatprep.subr.bf16.mxu0 0
        %8041 = vmatpush1.bf16.xpose.msra.mxu0 0
        %8042 = vmatprep.subr.bf16.mxu0 0
        %8043 = vmatpush1.bf16.xpose.msra.mxu0 0
        %8044 = vmatprep.mubr.bf16.mxu0 0
        %8045 = vmatmul.mubr.bf16.gmra.mrb[0].mxu0 %v8007
        %v8046 = vpop.f32.mrb[0].mxu0
        %v8047 = vadd.f32 0.0, %v8046
        %v8048 = vpop.f32.mrb[0].mxu0
        %v8049 = vpop.f32.mrb[0].mxu0
        %v8050 = vadd.f32 0.0, %v8049
        %v8051 = vpop.f32.mrb[0].mxu0
        %8052 = vdwg.mxu0
        %v8053 = vsel %vm1736, %v7282, -inf
        %8054 = vmax.xlane.f32.xlu0 %v8053
        %v8055 = vpop.xlane.xlu0 %8054
        %v8056 = vsel %vm1736, %v7285, -inf
        %8057 = vmax.xlane.f32.xlu0 %v8056
        %v8058 = vpop.xlane.xlu0 %8057
        %v8059 = vsel %vm1736, %v7333, -inf
        %8060 = vmax.xlane.f32.xlu0 %v8059
        %v8061 = vpop.xlane.xlu0 %8060
        %v8062 = vsel %vm1736, %v7336, -inf
        %8063 = vmax.xlane.f32.xlu0 %v8062
        %v8064 = vpop.xlane.xlu0 %8063
        %v8065 = vsel %vm1736, %v7384, -inf
        %8066 = vmax.xlane.f32.xlu0 %v8065
        %v8067 = vpop.xlane.xlu0 %8066
        %v8068 = vsel %vm1736, %v7387, -inf
        %8069 = vmax.xlane.f32.xlu0 %v8068
        %v8070 = vpop.xlane.xlu0 %8069
        %v8071 = vsel %vm1736, %v7435, -inf
        %8072 = vmax.xlane.f32.xlu0 %v8071
        %v8073 = vpop.xlane.xlu0 %8072
        %v8074 = vsel %vm1736, %v7438, -inf
        %8075 = vmax.xlane.f32.xlu0 %v8074
        %v8076 = vpop.xlane.xlu0 %8075
        %v8077 = vsel %vm1736, %v7486, -inf
        %8078 = vmax.xlane.f32.xlu0 %v8077
        %v8079 = vpop.xlane.xlu0 %8078
        %v8080 = vsel %vm1736, %v7489, -inf
        %8081 = vmax.xlane.f32.xlu0 %v8080
        %v8082 = vpop.xlane.xlu0 %8081
        %v8083 = vsel %vm1736, %v7537, -inf
        %8084 = vmax.xlane.f32.xlu0 %v8083
        %v8085 = vpop.xlane.xlu0 %8084
        %v8086 = vsel %vm1736, %v7540, -inf
        %8087 = vmax.xlane.f32.xlu0 %v8086
        %v8088 = vpop.xlane.xlu0 %8087
        %v8089 = vsel %vm1736, %v7588, -inf
        %8090 = vmax.xlane.f32.xlu0 %v8089
        %v8091 = vpop.xlane.xlu0 %8090
        %v8092 = vsel %vm1736, %v7591, -inf
        %8093 = vmax.xlane.f32.xlu0 %v8092
        %v8094 = vpop.xlane.xlu0 %8093
        %v8095 = vsel %vm1736, %v7639, -inf
        %8096 = vmax.xlane.f32.xlu0 %v8095
        %v8097 = vpop.xlane.xlu0 %8096
        %v8098 = vsel %vm1736, %v7642, -inf
        %8099 = vmax.xlane.f32.xlu0 %v8098
        %v8100 = vpop.xlane.xlu0 %8099
        %v8101 = vsel %vm1736, %v7690, -inf
        %8102 = vmax.xlane.f32.xlu0 %v8101
        %v8103 = vpop.xlane.xlu0 %8102
        %v8104 = vsel %vm1736, %v7693, -inf
        %8105 = vmax.xlane.f32.xlu0 %v8104
        %v8106 = vpop.xlane.xlu0 %8105
        %v8107 = vsel %vm1736, %v7741, -inf
        %8108 = vmax.xlane.f32.xlu0 %v8107
        %v8109 = vpop.xlane.xlu0 %8108
        %v8110 = vsel %vm1736, %v7744, -inf
        %8111 = vmax.xlane.f32.xlu0 %v8110
        %v8112 = vpop.xlane.xlu0 %8111
        %v8113 = vsel %vm1736, %v7792, -inf
        %8114 = vmax.xlane.f32.xlu0 %v8113
        %v8115 = vpop.xlane.xlu0 %8114
        %v8116 = vsel %vm1736, %v7795, -inf
        %8117 = vmax.xlane.f32.xlu0 %v8116
        %v8118 = vpop.xlane.xlu0 %8117
        %v8119 = vsel %vm1736, %v7843, -inf
        %8120 = vmax.xlane.f32.xlu0 %v8119
        %v8121 = vpop.xlane.xlu0 %8120
        %v8122 = vsel %vm1736, %v7846, -inf
        %8123 = vmax.xlane.f32.xlu0 %v8122
        %v8124 = vpop.xlane.xlu0 %8123
        %v8125 = vsel %vm1736, %v7894, -inf
        %8126 = vmax.xlane.f32.xlu0 %v8125
        %v8127 = vpop.xlane.xlu0 %8126
        %v8128 = vsel %vm1736, %v7897, -inf
        %8129 = vmax.xlane.f32.xlu0 %v8128
        %v8130 = vpop.xlane.xlu0 %8129
        %v8131 = vsel %vm1736, %v7945, -inf
        %8132 = vmax.xlane.f32.xlu0 %v8131
        %v8133 = vpop.xlane.xlu0 %8132
        %v8134 = vsel %vm1736, %v7948, -inf
        %8135 = vmax.xlane.f32.xlu0 %v8134
        %v8136 = vpop.xlane.xlu0 %8135
        %v8137 = vsel %vm1736, %v7996, -inf
        %8138 = vmax.xlane.f32.xlu0 %v8137
        %v8139 = vpop.xlane.xlu0 %8138
        %v8140 = vsel %vm1736, %v7999, -inf
        %8141 = vmax.xlane.f32.xlu0 %v8140
        %v8142 = vpop.xlane.xlu0 %8141
        %v8143 = vsel %vm1736, %v8047, -inf
        %8144 = vmax.xlane.f32.xlu0 %v8143
        %v8145 = vpop.xlane.xlu0 %8144
        %v8146 = vsel %vm1736, %v8050, -inf
        %8147 = vmax.xlane.f32.xlu0 %v8146
        %v8148 = vpop.xlane.xlu0 %8147
        %v8149 = vsub.f32 %v7282, %v8055
        %v8150 = vsub.f32 %v7285, %v8058
        %v8151 = vsub.f32 %v7333, %v8061
        %v8152 = vsub.f32 %v7336, %v8064
        %v8153 = vsub.f32 %v7384, %v8067
        %v8154 = vsub.f32 %v7387, %v8070
        %v8155 = vsub.f32 %v7435, %v8073
        %v8156 = vsub.f32 %v7438, %v8076
        %v8157 = vsub.f32 %v7486, %v8079
        %v8158 = vsub.f32 %v7489, %v8082
        %v8159 = vsub.f32 %v7537, %v8085
        %v8160 = vsub.f32 %v7540, %v8088
        %v8161 = vsub.f32 %v7588, %v8091
        %v8162 = vsub.f32 %v7591, %v8094
        %v8163 = vsub.f32 %v7639, %v8097
        %v8164 = vsub.f32 %v7642, %v8100
        %v8165 = vsub.f32 %v7690, %v8103
        %v8166 = vsub.f32 %v7693, %v8106
        %v8167 = vsub.f32 %v7741, %v8109
        %v8168 = vsub.f32 %v7744, %v8112
        %v8169 = vsub.f32 %v7792, %v8115
        %v8170 = vsub.f32 %v7795, %v8118
        %v8171 = vsub.f32 %v7843, %v8121
        %v8172 = vsub.f32 %v7846, %v8124
        %v8173 = vsub.f32 %v7894, %v8127
        %v8174 = vsub.f32 %v7897, %v8130
        %v8175 = vsub.f32 %v7945, %v8133
        %v8176 = vsub.f32 %v7948, %v8136
        %v8177 = vsub.f32 %v7996, %v8139
        %v8178 = vsub.f32 %v7999, %v8142
        %v8179 = vsub.f32 %v8047, %v8145
        %v8180 = vsub.f32 %v8050, %v8148
        %v8181 = vmul.f32 %v8149, 1.442695
        %v8182 = vpow.pop %v8181
        %v8183 = vmul.f32 %v8150, 1.442695
        %v8184 = vpow.pop %v8183
        %v8185 = vmul.f32 %v8151, 1.442695
        %v8186 = vpow.pop %v8185
        %v8187 = vmul.f32 %v8152, 1.442695
        %v8188 = vpow.pop %v8187
        %v8189 = vmul.f32 %v8153, 1.442695
        %v8190 = vpow.pop %v8189
        %v8191 = vmul.f32 %v8154, 1.442695
        %v8192 = vpow.pop %v8191
        %v8193 = vmul.f32 %v8155, 1.442695
        %v8194 = vpow.pop %v8193
        %v8195 = vmul.f32 %v8156, 1.442695
        %v8196 = vpow.pop %v8195
        %v8197 = vmul.f32 %v8157, 1.442695
        %v8198 = vpow.pop %v8197
        %v8199 = vmul.f32 %v8158, 1.442695
        %v8200 = vpow.pop %v8199
        %v8201 = vmul.f32 %v8159, 1.442695
        %v8202 = vpow.pop %v8201
        %v8203 = vmul.f32 %v8160, 1.442695
        %v8204 = vpow.pop %v8203
        %v8205 = vmul.f32 %v8161, 1.442695
        %v8206 = vpow.pop %v8205
        %v8207 = vmul.f32 %v8162, 1.442695
        %v8208 = vpow.pop %v8207
        %v8209 = vmul.f32 %v8163, 1.442695
        %v8210 = vpow.pop %v8209
        %v8211 = vmul.f32 %v8164, 1.442695
        %v8212 = vpow.pop %v8211
        %v8213 = vmul.f32 %v8165, 1.442695
        %v8214 = vpow.pop %v8213
        %v8215 = vmul.f32 %v8166, 1.442695
        %v8216 = vpow.pop %v8215
        %v8217 = vmul.f32 %v8167, 1.442695
        %v8218 = vpow.pop %v8217
        %v8219 = vmul.f32 %v8168, 1.442695
        %v8220 = vpow.pop %v8219
        %v8221 = vmul.f32 %v8169, 1.442695
        %v8222 = vpow.pop %v8221
        %v8223 = vmul.f32 %v8170, 1.442695
        %v8224 = vpow.pop %v8223
        %v8225 = vmul.f32 %v8171, 1.442695
        %v8226 = vpow.pop %v8225
        %v8227 = vmul.f32 %v8172, 1.442695
        %v8228 = vpow.pop %v8227
        %v8229 = vmul.f32 %v8173, 1.442695
        %v8230 = vpow.pop %v8229
        %v8231 = vmul.f32 %v8174, 1.442695
        %v8232 = vpow.pop %v8231
        %v8233 = vmul.f32 %v8175, 1.442695
        %v8234 = vpow.pop %v8233
        %v8235 = vmul.f32 %v8176, 1.442695
        %v8236 = vpow.pop %v8235
        %v8237 = vmul.f32 %v8177, 1.442695
        %v8238 = vpow.pop %v8237
        %v8239 = vmul.f32 %v8178, 1.442695
        %v8240 = vpow.pop %v8239
        %v8241 = vmul.f32 %v8179, 1.442695
        %v8242 = vpow.pop %v8241
        %v8243 = vmul.f32 %v8180, 1.442695
        %v8244 = vpow.pop %v8243
        %v8245 = vsel %vm1736, %v8182, 0.0
        %8246 = vadd.xlane.f32.xlu0 %v8245
        %v8247 = vpop.xlane.xlu0 %8246
        %v8248 = vsel %vm1736, %v8184, 0.0
        %8249 = vadd.xlane.f32.xlu0 %v8248
        %v8250 = vpop.xlane.xlu0 %8249
        %v8251 = vsel %vm1736, %v8186, 0.0
        %8252 = vadd.xlane.f32.xlu0 %v8251
        %v8253 = vpop.xlane.xlu0 %8252
        %v8254 = vsel %vm1736, %v8188, 0.0
        %8255 = vadd.xlane.f32.xlu0 %v8254
        %v8256 = vpop.xlane.xlu0 %8255
        %v8257 = vsel %vm1736, %v8190, 0.0
        %8258 = vadd.xlane.f32.xlu0 %v8257
        %v8259 = vpop.xlane.xlu0 %8258
        %v8260 = vsel %vm1736, %v8192, 0.0
        %8261 = vadd.xlane.f32.xlu0 %v8260
        %v8262 = vpop.xlane.xlu0 %8261
        %v8263 = vsel %vm1736, %v8194, 0.0
        %8264 = vadd.xlane.f32.xlu0 %v8263
        %v8265 = vpop.xlane.xlu0 %8264
        %v8266 = vsel %vm1736, %v8196, 0.0
        %8267 = vadd.xlane.f32.xlu0 %v8266
        %v8268 = vpop.xlane.xlu0 %8267
        %v8269 = vsel %vm1736, %v8198, 0.0
        %8270 = vadd.xlane.f32.xlu0 %v8269
        %v8271 = vpop.xlane.xlu0 %8270
        %v8272 = vsel %vm1736, %v8200, 0.0
        %8273 = vadd.xlane.f32.xlu0 %v8272
        %v8274 = vpop.xlane.xlu0 %8273
        %v8275 = vsel %vm1736, %v8202, 0.0
        %8276 = vadd.xlane.f32.xlu0 %v8275
        %v8277 = vpop.xlane.xlu0 %8276
        %v8278 = vsel %vm1736, %v8204, 0.0
        %8279 = vadd.xlane.f32.xlu0 %v8278
        %v8280 = vpop.xlane.xlu0 %8279
        %v8281 = vsel %vm1736, %v8206, 0.0
        %8282 = vadd.xlane.f32.xlu0 %v8281
        %v8283 = vpop.xlane.xlu0 %8282
        %v8284 = vsel %vm1736, %v8208, 0.0
        %8285 = vadd.xlane.f32.xlu0 %v8284
        %v8286 = vpop.xlane.xlu0 %8285
        %v8287 = vsel %vm1736, %v8210, 0.0
        %8288 = vadd.xlane.f32.xlu0 %v8287
        %v8289 = vpop.xlane.xlu0 %8288
        %v8290 = vsel %vm1736, %v8212, 0.0
        %8291 = vadd.xlane.f32.xlu0 %v8290
        %v8292 = vpop.xlane.xlu0 %8291
        %v8293 = vsel %vm1736, %v8214, 0.0
        %8294 = vadd.xlane.f32.xlu0 %v8293
        %v8295 = vpop.xlane.xlu0 %8294
        %v8296 = vsel %vm1736, %v8216, 0.0
        %8297 = vadd.xlane.f32.xlu0 %v8296
        %v8298 = vpop.xlane.xlu0 %8297
        %v8299 = vsel %vm1736, %v8218, 0.0
        %8300 = vadd.xlane.f32.xlu0 %v8299
        %v8301 = vpop.xlane.xlu0 %8300
        %v8302 = vsel %vm1736, %v8220, 0.0
        %8303 = vadd.xlane.f32.xlu0 %v8302
        %v8304 = vpop.xlane.xlu0 %8303
        %v8305 = vsel %vm1736, %v8222, 0.0
        %8306 = vadd.xlane.f32.xlu0 %v8305
        %v8307 = vpop.xlane.xlu0 %8306
        %v8308 = vsel %vm1736, %v8224, 0.0
        %8309 = vadd.xlane.f32.xlu0 %v8308
        %v8310 = vpop.xlane.xlu0 %8309
        %v8311 = vsel %vm1736, %v8226, 0.0
        %8312 = vadd.xlane.f32.xlu0 %v8311
        %v8313 = vpop.xlane.xlu0 %8312
        %v8314 = vsel %vm1736, %v8228, 0.0
        %8315 = vadd.xlane.f32.xlu0 %v8314
        %v8316 = vpop.xlane.xlu0 %8315
        %v8317 = vsel %vm1736, %v8230, 0.0
        %8318 = vadd.xlane.f32.xlu0 %v8317
        %v8319 = vpop.xlane.xlu0 %8318
        %v8320 = vsel %vm1736, %v8232, 0.0
        %8321 = vadd.xlane.f32.xlu0 %v8320
        %v8322 = vpop.xlane.xlu0 %8321
        %v8323 = vsel %vm1736, %v8234, 0.0
        %8324 = vadd.xlane.f32.xlu0 %v8323
        %v8325 = vpop.xlane.xlu0 %8324
        %v8326 = vsel %vm1736, %v8236, 0.0
        %8327 = vadd.xlane.f32.xlu0 %v8326
        %v8328 = vpop.xlane.xlu0 %8327
        %v8329 = vsel %vm1736, %v8238, 0.0
        %8330 = vadd.xlane.f32.xlu0 %v8329
        %v8331 = vpop.xlane.xlu0 %8330
        %v8332 = vsel %vm1736, %v8240, 0.0
        %8333 = vadd.xlane.f32.xlu0 %v8332
        %v8334 = vpop.xlane.xlu0 %8333
        %v8335 = vsel %vm1736, %v8242, 0.0
        %8336 = vadd.xlane.f32.xlu0 %v8335
        %v8337 = vpop.xlane.xlu0 %8336
        %v8338 = vsel %vm1736, %v8244, 0.0
        %8339 = vadd.xlane.f32.xlu0 %v8338
        %v8340 = vpop.xlane.xlu0 %8339
        %v8341 = vrcp.pop %v8247
        %v8342 = vmul.f32 %v8182, %v8341
        %v8343 = vrcp.pop %v8250
        %v8344 = vmul.f32 %v8184, %v8343
        %v8345 = vrcp.pop %v8253
        %v8346 = vmul.f32 %v8186, %v8345
        %v8347 = vrcp.pop %v8256
        %v8348 = vmul.f32 %v8188, %v8347
        %v8349 = vrcp.pop %v8259
        %v8350 = vmul.f32 %v8190, %v8349
        %v8351 = vrcp.pop %v8262
        %v8352 = vmul.f32 %v8192, %v8351
        %v8353 = vrcp.pop %v8265
        %v8354 = vmul.f32 %v8194, %v8353
        %v8355 = vrcp.pop %v8268
        %v8356 = vmul.f32 %v8196, %v8355
        %v8357 = vrcp.pop %v8271
        %v8358 = vmul.f32 %v8198, %v8357
        %v8359 = vrcp.pop %v8274
        %v8360 = vmul.f32 %v8200, %v8359
        %v8361 = vrcp.pop %v8277
        %v8362 = vmul.f32 %v8202, %v8361
        %v8363 = vrcp.pop %v8280
        %v8364 = vmul.f32 %v8204, %v8363
        %v8365 = vrcp.pop %v8283
        %v8366 = vmul.f32 %v8206, %v8365
        %v8367 = vrcp.pop %v8286
        %v8368 = vmul.f32 %v8208, %v8367
        %v8369 = vrcp.pop %v8289
        %v8370 = vmul.f32 %v8210, %v8369
        %v8371 = vrcp.pop %v8292
        %v8372 = vmul.f32 %v8212, %v8371
        %v8373 = vrcp.pop %v8295
        %v8374 = vmul.f32 %v8214, %v8373
        %v8375 = vrcp.pop %v8298
        %v8376 = vmul.f32 %v8216, %v8375
        %v8377 = vrcp.pop %v8301
        %v8378 = vmul.f32 %v8218, %v8377
        %v8379 = vrcp.pop %v8304
        %v8380 = vmul.f32 %v8220, %v8379
        %v8381 = vrcp.pop %v8307
        %v8382 = vmul.f32 %v8222, %v8381
        %v8383 = vrcp.pop %v8310
        %v8384 = vmul.f32 %v8224, %v8383
        %v8385 = vrcp.pop %v8313
        %v8386 = vmul.f32 %v8226, %v8385
        %v8387 = vrcp.pop %v8316
        %v8388 = vmul.f32 %v8228, %v8387
        %v8389 = vrcp.pop %v8319
        %v8390 = vmul.f32 %v8230, %v8389
        %v8391 = vrcp.pop %v8322
        %v8392 = vmul.f32 %v8232, %v8391
        %v8393 = vrcp.pop %v8325
        %v8394 = vmul.f32 %v8234, %v8393
        %v8395 = vrcp.pop %v8328
        %v8396 = vmul.f32 %v8236, %v8395
        %v8397 = vrcp.pop %v8331
        %v8398 = vmul.f32 %v8238, %v8397
        %v8399 = vrcp.pop %v8334
        %v8400 = vmul.f32 %v8240, %v8399
        %v8401 = vrcp.pop %v8337
        %v8402 = vmul.f32 %v8242, %v8401
        %v8403 = vrcp.pop %v8340
        %v8404 = vmul.f32 %v8244, %v8403
        %v8405 = vpack.c.bf16 %v8344, %v8342
        %v8406 = vpack.c.bf16 %v8348, %v8346
        %v8407 = vpack.c.bf16 %v8352, %v8350
        %v8408 = vpack.c.bf16 %v8356, %v8354
        %v8409 = vpack.c.bf16 %v8360, %v8358
        %v8410 = vpack.c.bf16 %v8364, %v8362
        %v8411 = vpack.c.bf16 %v8368, %v8366
        %v8412 = vpack.c.bf16 %v8372, %v8370
        %v8413 = vpack.c.bf16 %v8376, %v8374
        %v8414 = vpack.c.bf16 %v8380, %v8378
        %v8415 = vpack.c.bf16 %v8384, %v8382
        %v8416 = vpack.c.bf16 %v8388, %v8386
        %v8417 = vpack.c.bf16 %v8392, %v8390
        %v8418 = vpack.c.bf16 %v8396, %v8394
        %v8419 = vpack.c.bf16 %v8400, %v8398
        %v8420 = vpack.c.bf16 %v8404, %v8402
        %8421 = vrot.lane.b32.xlu0 %v2105, 104
        %v8422 = vpop.permute.xlu0 %8421
        %v8425 = vsel %vm1736, %v8405, 0
        %8427 = vmatprep.subr.bf16.mxu0 0
        %8428 = vmatpush1.bf16.msra.mxu0 %v8422
        %8429 = vmatprep.subr.bf16.mxu0 0
        %8430 = vmatpush1.bf16.msra.mxu0 0
        %8431 = vmatprep.subr.bf16.mxu0 0
        %8432 = vmatpush1.bf16.msra.mxu0 0
        %8433 = vmatprep.subr.bf16.mxu0 0
        %8434 = vmatpush1.bf16.msra.mxu0 0
        %8435 = vmatprep.subr.bf16.mxu0 0
        %8436 = vmatpush1.bf16.msra.mxu0 0
        %8437 = vmatprep.subr.bf16.mxu0 0
        %8438 = vmatpush1.bf16.msra.mxu0 0
        %8439 = vmatprep.subr.bf16.mxu0 0
        %8440 = vmatpush1.bf16.msra.mxu0 0
        %8441 = vmatprep.subr.bf16.mxu0 0
        %8442 = vmatpush1.bf16.msra.mxu0 0
        %8443 = vmatprep.subr.bf16.mxu0 0
        %8444 = vmatpush1.bf16.msra.mxu0 0
        %8445 = vmatprep.subr.bf16.mxu0 0
        %8446 = vmatpush1.bf16.msra.mxu0 0
        %8447 = vmatprep.subr.bf16.mxu0 0
        %8448 = vmatpush1.bf16.msra.mxu0 0
        %8449 = vmatprep.subr.bf16.mxu0 0
        %8450 = vmatpush1.bf16.msra.mxu0 0
        %8451 = vmatprep.subr.bf16.mxu0 0
        %8452 = vmatpush1.bf16.msra.mxu0 0
        %8453 = vmatprep.subr.bf16.mxu0 0
        %8454 = vmatpush1.bf16.msra.mxu0 0
        %8455 = vmatprep.subr.bf16.mxu0 0
        %8456 = vmatpush1.bf16.msra.mxu0 0
        %8457 = vmatprep.subr.bf16.mxu0 0
        %8458 = vmatpush1.bf16.msra.mxu0 0
        %8459 = vmatprep.mubr.bf16.mxu0 0
        %8460 = vmatmul.mubr.bf16.gmra.mrb[0].mxu0 %v8425
        %v8461 = vpop.f32.mrb[0].mxu0
        %v8462 = vadd.f32 0.0, %v8461
        %v8463 = vpop.f32.mrb[0].mxu0
        %v8464 = vpop.f32.mrb[0].mxu0
        %v8465 = vadd.f32 0.0, %v8464
        %v8466 = vpop.f32.mrb[0].mxu0
        %8467 = vdwg.mxu0
        %8468 = vrot.lane.b32.xlu0 %v2106, 104
        %v8469 = vpop.permute.xlu0 %8468
        %v8472 = vsel %vm1736, %v8406, 0
        %8474 = vmatprep.subr.bf16.mxu0 0
        %8475 = vmatpush1.bf16.msra.mxu0 %v8469
        %8476 = vmatprep.subr.bf16.mxu0 0
        %8477 = vmatpush1.bf16.msra.mxu0 0
        %8478 = vmatprep.subr.bf16.mxu0 0
        %8479 = vmatpush1.bf16.msra.mxu0 0
        %8480 = vmatprep.subr.bf16.mxu0 0
        %8481 = vmatpush1.bf16.msra.mxu0 0
        %8482 = vmatprep.subr.bf16.mxu0 0
        %8483 = vmatpush1.bf16.msra.mxu0 0
        %8484 = vmatprep.subr.bf16.mxu0 0
        %8485 = vmatpush1.bf16.msra.mxu0 0
        %8486 = vmatprep.subr.bf16.mxu0 0
        %8487 = vmatpush1.bf16.msra.mxu0 0
        %8488 = vmatprep.subr.bf16.mxu0 0
        %8489 = vmatpush1.bf16.msra.mxu0 0
        %8490 = vmatprep.subr.bf16.mxu0 0
        %8491 = vmatpush1.bf16.msra.mxu0 0
        %8492 = vmatprep.subr.bf16.mxu0 0
        %8493 = vmatpush1.bf16.msra.mxu0 0
        %8494 = vmatprep.subr.bf16.mxu0 0
        %8495 = vmatpush1.bf16.msra.mxu0 0
        %8496 = vmatprep.subr.bf16.mxu0 0
        %8497 = vmatpush1.bf16.msra.mxu0 0
        %8498 = vmatprep.subr.bf16.mxu0 0
        %8499 = vmatpush1.bf16.msra.mxu0 0
        %8500 = vmatprep.subr.bf16.mxu0 0
        %8501 = vmatpush1.bf16.msra.mxu0 0
        %8502 = vmatprep.subr.bf16.mxu0 0
        %8503 = vmatpush1.bf16.msra.mxu0 0
        %8504 = vmatprep.subr.bf16.mxu0 0
        %8505 = vmatpush1.bf16.msra.mxu0 0
        %8506 = vmatprep.mubr.bf16.mxu0 0
        %8507 = vmatmul.mubr.bf16.gmra.mrb[0].mxu0 %v8472
        %v8508 = vpop.f32.mrb[0].mxu0
        %v8509 = vadd.f32 0.0, %v8508
        %v8510 = vpop.f32.mrb[0].mxu0
        %v8511 = vpop.f32.mrb[0].mxu0
        %v8512 = vadd.f32 0.0, %v8511
        %v8513 = vpop.f32.mrb[0].mxu0
        %8514 = vdwg.mxu0
        %8515 = vrot.lane.b32.xlu0 %v2107, 104
        %v8516 = vpop.permute.xlu0 %8515
        %v8519 = vsel %vm1736, %v8407, 0
        %8521 = vmatprep.subr.bf16.mxu0 0
        %8522 = vmatpush1.bf16.msra.mxu0 %v8516
        %8523 = vmatprep.subr.bf16.mxu0 0
        %8524 = vmatpush1.bf16.msra.mxu0 0
        %8525 = vmatprep.subr.bf16.mxu0 0
        %8526 = vmatpush1.bf16.msra.mxu0 0
        %8527 = vmatprep.subr.bf16.mxu0 0
        %8528 = vmatpush1.bf16.msra.mxu0 0
        %8529 = vmatprep.subr.bf16.mxu0 0
        %8530 = vmatpush1.bf16.msra.mxu0 0
        %8531 = vmatprep.subr.bf16.mxu0 0
        %8532 = vmatpush1.bf16.msra.mxu0 0
        %8533 = vmatprep.subr.bf16.mxu0 0
        %8534 = vmatpush1.bf16.msra.mxu0 0
        %8535 = vmatprep.subr.bf16.mxu0 0
        %8536 = vmatpush1.bf16.msra.mxu0 0
        %8537 = vmatprep.subr.bf16.mxu0 0
        %8538 = vmatpush1.bf16.msra.mxu0 0
        %8539 = vmatprep.subr.bf16.mxu0 0
        %8540 = vmatpush1.bf16.msra.mxu0 0
        %8541 = vmatprep.subr.bf16.mxu0 0
        %8542 = vmatpush1.bf16.msra.mxu0 0
        %8543 = vmatprep.subr.bf16.mxu0 0
        %8544 = vmatpush1.bf16.msra.mxu0 0
        %8545 = vmatprep.subr.bf16.mxu0 0
        %8546 = vmatpush1.bf16.msra.mxu0 0
        %8547 = vmatprep.subr.bf16.mxu0 0
        %8548 = vmatpush1.bf16.msra.mxu0 0
        %8549 = vmatprep.subr.bf16.mxu0 0
        %8550 = vmatpush1.bf16.msra.mxu0 0
        %8551 = vmatprep.subr.bf16.mxu0 0
        %8552 = vmatpush1.bf16.msra.mxu0 0
        %8553 = vmatprep.mubr.bf16.mxu0 0
        %8554 = vmatmul.mubr.bf16.gmra.mrb[0].mxu0 %v8519
        %v8555 = vpop.f32.mrb[0].mxu0
        %v8556 = vadd.f32 0.0, %v8555
        %v8557 = vpop.f32.mrb[0].mxu0
        %v8558 = vpop.f32.mrb[0].mxu0
        %v8559 = vadd.f32 0.0, %v8558
        %v8560 = vpop.f32.mrb[0].mxu0
        %8561 = vdwg.mxu0
        %8562 = vrot.lane.b32.xlu0 %v2108, 104
        %v8563 = vpop.permute.xlu0 %8562
        %v8566 = vsel %vm1736, %v8408, 0
        %8568 = vmatprep.subr.bf16.mxu0 0
        %8569 = vmatpush1.bf16.msra.mxu0 %v8563
        %8570 = vmatprep.subr.bf16.mxu0 0
        %8571 = vmatpush1.bf16.msra.mxu0 0
        %8572 = vmatprep.subr.bf16.mxu0 0
        %8573 = vmatpush1.bf16.msra.mxu0 0
        %8574 = vmatprep.subr.bf16.mxu0 0
        %8575 = vmatpush1.bf16.msra.mxu0 0
        %8576 = vmatprep.subr.bf16.mxu0 0
        %8577 = vmatpush1.bf16.msra.mxu0 0
        %8578 = vmatprep.subr.bf16.mxu0 0
        %8579 = vmatpush1.bf16.msra.mxu0 0
        %8580 = vmatprep.subr.bf16.mxu0 0
        %8581 = vmatpush1.bf16.msra.mxu0 0
        %8582 = vmatprep.subr.bf16.mxu0 0
        %8583 = vmatpush1.bf16.msra.mxu0 0
        %8584 = vmatprep.subr.bf16.mxu0 0
        %8585 = vmatpush1.bf16.msra.mxu0 0
        %8586 = vmatprep.subr.bf16.mxu0 0
        %8587 = vmatpush1.bf16.msra.mxu0 0
        %8588 = vmatprep.subr.bf16.mxu0 0
        %8589 = vmatpush1.bf16.msra.mxu0 0
        %8590 = vmatprep.subr.bf16.mxu0 0
        %8591 = vmatpush1.bf16.msra.mxu0 0
        %8592 = vmatprep.subr.bf16.mxu0 0
        %8593 = vmatpush1.bf16.msra.mxu0 0
        %8594 = vmatprep.subr.bf16.mxu0 0
        %8595 = vmatpush1.bf16.msra.mxu0 0
        %8596 = vmatprep.subr.bf16.mxu0 0
        %8597 = vmatpush1.bf16.msra.mxu0 0
        %8598 = vmatprep.subr.bf16.mxu0 0
        %8599 = vmatpush1.bf16.msra.mxu0 0
        %8600 = vmatprep.mubr.bf16.mxu0 0
        %8601 = vmatmul.mubr.bf16.gmra.mrb[0].mxu0 %v8566
        %v8602 = vpop.f32.mrb[0].mxu0
        %v8603 = vadd.f32 0.0, %v8602
        %v8604 = vpop.f32.mrb[0].mxu0
        %v8605 = vpop.f32.mrb[0].mxu0
        %v8606 = vadd.f32 0.0, %v8605
        %v8607 = vpop.f32.mrb[0].mxu0
        %8608 = vdwg.mxu0
        %8609 = vrot.lane.b32.xlu0 %v2109, 104
        %v8610 = vpop.permute.xlu0 %8609
        %v8613 = vsel %vm1736, %v8409, 0
        %8615 = vmatprep.subr.bf16.mxu0 0
        %8616 = vmatpush1.bf16.msra.mxu0 %v8610
        %8617 = vmatprep.subr.bf16.mxu0 0
        %8618 = vmatpush1.bf16.msra.mxu0 0
        %8619 = vmatprep.subr.bf16.mxu0 0
        %8620 = vmatpush1.bf16.msra.mxu0 0
        %8621 = vmatprep.subr.bf16.mxu0 0
        %8622 = vmatpush1.bf16.msra.mxu0 0
        %8623 = vmatprep.subr.bf16.mxu0 0
        %8624 = vmatpush1.bf16.msra.mxu0 0
        %8625 = vmatprep.subr.bf16.mxu0 0
        %8626 = vmatpush1.bf16.msra.mxu0 0
        %8627 = vmatprep.subr.bf16.mxu0 0
        %8628 = vmatpush1.bf16.msra.mxu0 0
        %8629 = vmatprep.subr.bf16.mxu0 0
        %8630 = vmatpush1.bf16.msra.mxu0 0
        %8631 = vmatprep.subr.bf16.mxu0 0
        %8632 = vmatpush1.bf16.msra.mxu0 0
        %8633 = vmatprep.subr.bf16.mxu0 0
        %8634 = vmatpush1.bf16.msra.mxu0 0
        %8635 = vmatprep.subr.bf16.mxu0 0
        %8636 = vmatpush1.bf16.msra.mxu0 0
        %8637 = vmatprep.subr.bf16.mxu0 0
        %8638 = vmatpush1.bf16.msra.mxu0 0
        %8639 = vmatprep.subr.bf16.mxu0 0
        %8640 = vmatpush1.bf16.msra.mxu0 0
        %8641 = vmatprep.subr.bf16.mxu0 0
        %8642 = vmatpush1.bf16.msra.mxu0 0
        %8643 = vmatprep.subr.bf16.mxu0 0
        %8644 = vmatpush1.bf16.msra.mxu0 0
        %8645 = vmatprep.subr.bf16.mxu0 0
        %8646 = vmatpush1.bf16.msra.mxu0 0
        %8647 = vmatprep.mubr.bf16.mxu0 0
        %8648 = vmatmul.mubr.bf16.gmra.mrb[0].mxu0 %v8613
        %v8649 = vpop.f32.mrb[0].mxu0
        %v8650 = vadd.f32 0.0, %v8649
        %v8651 = vpop.f32.mrb[0].mxu0
        %v8652 = vpop.f32.mrb[0].mxu0
        %v8653 = vadd.f32 0.0, %v8652
        %v8654 = vpop.f32.mrb[0].mxu0
        %8655 = vdwg.mxu0
        %8656 = vrot.lane.b32.xlu0 %v2110, 104
        %v8657 = vpop.permute.xlu0 %8656
        %v8660 = vsel %vm1736, %v8410, 0
        %8662 = vmatprep.subr.bf16.mxu0 0
        %8663 = vmatpush1.bf16.msra.mxu0 %v8657
        %8664 = vmatprep.subr.bf16.mxu0 0
        %8665 = vmatpush1.bf16.msra.mxu0 0
        %8666 = vmatprep.subr.bf16.mxu0 0
        %8667 = vmatpush1.bf16.msra.mxu0 0
        %8668 = vmatprep.subr.bf16.mxu0 0
        %8669 = vmatpush1.bf16.msra.mxu0 0
        %8670 = vmatprep.subr.bf16.mxu0 0
        %8671 = vmatpush1.bf16.msra.mxu0 0
        %8672 = vmatprep.subr.bf16.mxu0 0
        %8673 = vmatpush1.bf16.msra.mxu0 0
        %8674 = vmatprep.subr.bf16.mxu0 0
        %8675 = vmatpush1.bf16.msra.mxu0 0
        %8676 = vmatprep.subr.bf16.mxu0 0
        %8677 = vmatpush1.bf16.msra.mxu0 0
        %8678 = vmatprep.subr.bf16.mxu0 0
        %8679 = vmatpush1.bf16.msra.mxu0 0
        %8680 = vmatprep.subr.bf16.mxu0 0
        %8681 = vmatpush1.bf16.msra.mxu0 0
        %8682 = vmatprep.subr.bf16.mxu0 0
        %8683 = vmatpush1.bf16.msra.mxu0 0
        %8684 = vmatprep.subr.bf16.mxu0 0
        %8685 = vmatpush1.bf16.msra.mxu0 0
        %8686 = vmatprep.subr.bf16.mxu0 0
        %8687 = vmatpush1.bf16.msra.mxu0 0
        %8688 = vmatprep.subr.bf16.mxu0 0
        %8689 = vmatpush1.bf16.msra.mxu0 0
        %8690 = vmatprep.subr.bf16.mxu0 0
        %8691 = vmatpush1.bf16.msra.mxu0 0
        %8692 = vmatprep.subr.bf16.mxu0 0
        %8693 = vmatpush1.bf16.msra.mxu0 0
        %8694 = vmatprep.mubr.bf16.mxu0 0
        %8695 = vmatmul.mubr.bf16.gmra.mrb[0].mxu0 %v8660
        %v8696 = vpop.f32.mrb[0].mxu0
        %v8697 = vadd.f32 0.0, %v8696
        %v8698 = vpop.f32.mrb[0].mxu0
        %v8699 = vpop.f32.mrb[0].mxu0
        %v8700 = vadd.f32 0.0, %v8699
        %v8701 = vpop.f32.mrb[0].mxu0
        %8702 = vdwg.mxu0
        %8703 = vrot.lane.b32.xlu0 %v2111, 104
        %v8704 = vpop.permute.xlu0 %8703
        %v8707 = vsel %vm1736, %v8411, 0
        %8709 = vmatprep.subr.bf16.mxu0 0
        %8710 = vmatpush1.bf16.msra.mxu0 %v8704
        %8711 = vmatprep.subr.bf16.mxu0 0
        %8712 = vmatpush1.bf16.msra.mxu0 0
        %8713 = vmatprep.subr.bf16.mxu0 0
        %8714 = vmatpush1.bf16.msra.mxu0 0
        %8715 = vmatprep.subr.bf16.mxu0 0
        %8716 = vmatpush1.bf16.msra.mxu0 0
        %8717 = vmatprep.subr.bf16.mxu0 0
        %8718 = vmatpush1.bf16.msra.mxu0 0
        %8719 = vmatprep.subr.bf16.mxu0 0
        %8720 = vmatpush1.bf16.msra.mxu0 0
        %8721 = vmatprep.subr.bf16.mxu0 0
        %8722 = vmatpush1.bf16.msra.mxu0 0
        %8723 = vmatprep.subr.bf16.mxu0 0
        %8724 = vmatpush1.bf16.msra.mxu0 0
        %8725 = vmatprep.subr.bf16.mxu0 0
        %8726 = vmatpush1.bf16.msra.mxu0 0
        %8727 = vmatprep.subr.bf16.mxu0 0
        %8728 = vmatpush1.bf16.msra.mxu0 0
        %8729 = vmatprep.subr.bf16.mxu0 0
        %8730 = vmatpush1.bf16.msra.mxu0 0
        %8731 = vmatprep.subr.bf16.mxu0 0
        %8732 = vmatpush1.bf16.msra.mxu0 0
        %8733 = vmatprep.subr.bf16.mxu0 0
        %8734 = vmatpush1.bf16.msra.mxu0 0
        %8735 = vmatprep.subr.bf16.mxu0 0
        %8736 = vmatpush1.bf16.msra.mxu0 0
        %8737 = vmatprep.subr.bf16.mxu0 0
        %8738 = vmatpush1.bf16.msra.mxu0 0
        %8739 = vmatprep.subr.bf16.mxu0 0
        %8740 = vmatpush1.bf16.msra.mxu0 0
        %8741 = vmatprep.mubr.bf16.mxu0 0
        %8742 = vmatmul.mubr.bf16.gmra.mrb[0].mxu0 %v8707
        %v8743 = vpop.f32.mrb[0].mxu0
        %v8744 = vadd.f32 0.0, %v8743
        %v8745 = vpop.f32.mrb[0].mxu0
        %v8746 = vpop.f32.mrb[0].mxu0
        %v8747 = vadd.f32 0.0, %v8746
        %v8748 = vpop.f32.mrb[0].mxu0
        %8749 = vdwg.mxu0
        %8750 = vrot.lane.b32.xlu0 %v2112, 104
        %v8751 = vpop.permute.xlu0 %8750
        %v8754 = vsel %vm1736, %v8412, 0
        %8756 = vmatprep.subr.bf16.mxu0 0
        %8757 = vmatpush1.bf16.msra.mxu0 %v8751
        %8758 = vmatprep.subr.bf16.mxu0 0
        %8759 = vmatpush1.bf16.msra.mxu0 0
        %8760 = vmatprep.subr.bf16.mxu0 0
        %8761 = vmatpush1.bf16.msra.mxu0 0
        %8762 = vmatprep.subr.bf16.mxu0 0
        %8763 = vmatpush1.bf16.msra.mxu0 0
        %8764 = vmatprep.subr.bf16.mxu0 0
        %8765 = vmatpush1.bf16.msra.mxu0 0
        %8766 = vmatprep.subr.bf16.mxu0 0
        %8767 = vmatpush1.bf16.msra.mxu0 0
        %8768 = vmatprep.subr.bf16.mxu0 0
        %8769 = vmatpush1.bf16.msra.mxu0 0
        %8770 = vmatprep.subr.bf16.mxu0 0
        %8771 = vmatpush1.bf16.msra.mxu0 0
        %8772 = vmatprep.subr.bf16.mxu0 0
        %8773 = vmatpush1.bf16.msra.mxu0 0
        %8774 = vmatprep.subr.bf16.mxu0 0
        %8775 = vmatpush1.bf16.msra.mxu0 0
        %8776 = vmatprep.subr.bf16.mxu0 0
        %8777 = vmatpush1.bf16.msra.mxu0 0
        %8778 = vmatprep.subr.bf16.mxu0 0
        %8779 = vmatpush1.bf16.msra.mxu0 0
        %8780 = vmatprep.subr.bf16.mxu0 0
        %8781 = vmatpush1.bf16.msra.mxu0 0
        %8782 = vmatprep.subr.bf16.mxu0 0
        %8783 = vmatpush1.bf16.msra.mxu0 0
        %8784 = vmatprep.subr.bf16.mxu0 0
        %8785 = vmatpush1.bf16.msra.mxu0 0
        %8786 = vmatprep.subr.bf16.mxu0 0
        %8787 = vmatpush1.bf16.msra.mxu0 0
        %8788 = vmatprep.mubr.bf16.mxu0 0
        %8789 = vmatmul.mubr.bf16.gmra.mrb[0].mxu0 %v8754
        %v8790 = vpop.f32.mrb[0].mxu0
        %v8791 = vadd.f32 0.0, %v8790
        %v8792 = vpop.f32.mrb[0].mxu0
        %v8793 = vpop.f32.mrb[0].mxu0
        %v8794 = vadd.f32 0.0, %v8793
        %v8795 = vpop.f32.mrb[0].mxu0
        %8796 = vdwg.mxu0
        %8797 = vrot.lane.b32.xlu0 %v2113, 104
        %v8798 = vpop.permute.xlu0 %8797
        %v8801 = vsel %vm1736, %v8413, 0
        %8803 = vmatprep.subr.bf16.mxu0 0
        %8804 = vmatpush1.bf16.msra.mxu0 %v8798
        %8805 = vmatprep.subr.bf16.mxu0 0
        %8806 = vmatpush1.bf16.msra.mxu0 0
        %8807 = vmatprep.subr.bf16.mxu0 0
        %8808 = vmatpush1.bf16.msra.mxu0 0
        %8809 = vmatprep.subr.bf16.mxu0 0
        %8810 = vmatpush1.bf16.msra.mxu0 0
        %8811 = vmatprep.subr.bf16.mxu0 0
        %8812 = vmatpush1.bf16.msra.mxu0 0
        %8813 = vmatprep.subr.bf16.mxu0 0
        %8814 = vmatpush1.bf16.msra.mxu0 0
        %8815 = vmatprep.subr.bf16.mxu0 0
        %8816 = vmatpush1.bf16.msra.mxu0 0
        %8817 = vmatprep.subr.bf16.mxu0 0
        %8818 = vmatpush1.bf16.msra.mxu0 0
        %8819 = vmatprep.subr.bf16.mxu0 0
        %8820 = vmatpush1.bf16.msra.mxu0 0
        %8821 = vmatprep.subr.bf16.mxu0 0
        %8822 = vmatpush1.bf16.msra.mxu0 0
        %8823 = vmatprep.subr.bf16.mxu0 0
        %8824 = vmatpush1.bf16.msra.mxu0 0
        %8825 = vmatprep.subr.bf16.mxu0 0
        %8826 = vmatpush1.bf16.msra.mxu0 0
        %8827 = vmatprep.subr.bf16.mxu0 0
        %8828 = vmatpush1.bf16.msra.mxu0 0
        %8829 = vmatprep.subr.bf16.mxu0 0
        %8830 = vmatpush1.bf16.msra.mxu0 0
        %8831 = vmatprep.subr.bf16.mxu0 0
        %8832 = vmatpush1.bf16.msra.mxu0 0
        %8833 = vmatprep.subr.bf16.mxu0 0
        %8834 = vmatpush1.bf16.msra.mxu0 0
        %8835 = vmatprep.mubr.bf16.mxu0 0
        %8836 = vmatmul.mubr.bf16.gmra.mrb[0].mxu0 %v8801
        %v8837 = vpop.f32.mrb[0].mxu0
        %v8838 = vadd.f32 0.0, %v8837
        %v8839 = vpop.f32.mrb[0].mxu0
        %v8840 = vpop.f32.mrb[0].mxu0
        %v8841 = vadd.f32 0.0, %v8840
        %v8842 = vpop.f32.mrb[0].mxu0
        %8843 = vdwg.mxu0
        %8844 = vrot.lane.b32.xlu0 %v2114, 104
        %v8845 = vpop.permute.xlu0 %8844
        %v8848 = vsel %vm1736, %v8414, 0
        %8850 = vmatprep.subr.bf16.mxu0 0
        %8851 = vmatpush1.bf16.msra.mxu0 %v8845
        %8852 = vmatprep.subr.bf16.mxu0 0
        %8853 = vmatpush1.bf16.msra.mxu0 0
        %8854 = vmatprep.subr.bf16.mxu0 0
        %8855 = vmatpush1.bf16.msra.mxu0 0
        %8856 = vmatprep.subr.bf16.mxu0 0
        %8857 = vmatpush1.bf16.msra.mxu0 0
        %8858 = vmatprep.subr.bf16.mxu0 0
        %8859 = vmatpush1.bf16.msra.mxu0 0
        %8860 = vmatprep.subr.bf16.mxu0 0
        %8861 = vmatpush1.bf16.msra.mxu0 0
        %8862 = vmatprep.subr.bf16.mxu0 0
        %8863 = vmatpush1.bf16.msra.mxu0 0
        %8864 = vmatprep.subr.bf16.mxu0 0
        %8865 = vmatpush1.bf16.msra.mxu0 0
        %8866 = vmatprep.subr.bf16.mxu0 0
        %8867 = vmatpush1.bf16.msra.mxu0 0
        %8868 = vmatprep.subr.bf16.mxu0 0
        %8869 = vmatpush1.bf16.msra.mxu0 0
        %8870 = vmatprep.subr.bf16.mxu0 0
        %8871 = vmatpush1.bf16.msra.mxu0 0
        %8872 = vmatprep.subr.bf16.mxu0 0
        %8873 = vmatpush1.bf16.msra.mxu0 0
        %8874 = vmatprep.subr.bf16.mxu0 0
        %8875 = vmatpush1.bf16.msra.mxu0 0
        %8876 = vmatprep.subr.bf16.mxu0 0
        %8877 = vmatpush1.bf16.msra.mxu0 0
        %8878 = vmatprep.subr.bf16.mxu0 0
        %8879 = vmatpush1.bf16.msra.mxu0 0
        %8880 = vmatprep.subr.bf16.mxu0 0
        %8881 = vmatpush1.bf16.msra.mxu0 0
        %8882 = vmatprep.mubr.bf16.mxu0 0
        %8883 = vmatmul.mubr.bf16.gmra.mrb[0].mxu0 %v8848
        %v8884 = vpop.f32.mrb[0].mxu0
        %v8885 = vadd.f32 0.0, %v8884
        %v8886 = vpop.f32.mrb[0].mxu0
        %v8887 = vpop.f32.mrb[0].mxu0
        %v8888 = vadd.f32 0.0, %v8887
        %v8889 = vpop.f32.mrb[0].mxu0
        %8890 = vdwg.mxu0
        %8891 = vrot.lane.b32.xlu0 %v2115, 104
        %v8892 = vpop.permute.xlu0 %8891
        %v8895 = vsel %vm1736, %v8415, 0
        %8897 = vmatprep.subr.bf16.mxu0 0
        %8898 = vmatpush1.bf16.msra.mxu0 %v8892
        %8899 = vmatprep.subr.bf16.mxu0 0
        %8900 = vmatpush1.bf16.msra.mxu0 0
        %8901 = vmatprep.subr.bf16.mxu0 0
        %8902 = vmatpush1.bf16.msra.mxu0 0
        %8903 = vmatprep.subr.bf16.mxu0 0
        %8904 = vmatpush1.bf16.msra.mxu0 0
        %8905 = vmatprep.subr.bf16.mxu0 0
        %8906 = vmatpush1.bf16.msra.mxu0 0
        %8907 = vmatprep.subr.bf16.mxu0 0
        %8908 = vmatpush1.bf16.msra.mxu0 0
        %8909 = vmatprep.subr.bf16.mxu0 0
        %8910 = vmatpush1.bf16.msra.mxu0 0
        %8911 = vmatprep.subr.bf16.mxu0 0
        %8912 = vmatpush1.bf16.msra.mxu0 0
        %8913 = vmatprep.subr.bf16.mxu0 0
        %8914 = vmatpush1.bf16.msra.mxu0 0
        %8915 = vmatprep.subr.bf16.mxu0 0
        %8916 = vmatpush1.bf16.msra.mxu0 0
        %8917 = vmatprep.subr.bf16.mxu0 0
        %8918 = vmatpush1.bf16.msra.mxu0 0
        %8919 = vmatprep.subr.bf16.mxu0 0
        %8920 = vmatpush1.bf16.msra.mxu0 0
        %8921 = vmatprep.subr.bf16.mxu0 0
        %8922 = vmatpush1.bf16.msra.mxu0 0
        %8923 = vmatprep.subr.bf16.mxu0 0
        %8924 = vmatpush1.bf16.msra.mxu0 0
        %8925 = vmatprep.subr.bf16.mxu0 0
        %8926 = vmatpush1.bf16.msra.mxu0 0
        %8927 = vmatprep.subr.bf16.mxu0 0
        %8928 = vmatpush1.bf16.msra.mxu0 0
        %8929 = vmatprep.mubr.bf16.mxu0 0
        %8930 = vmatmul.mubr.bf16.gmra.mrb[0].mxu0 %v8895
        %v8931 = vpop.f32.mrb[0].mxu0
        %v8932 = vadd.f32 0.0, %v8931
        %v8933 = vpop.f32.mrb[0].mxu0
        %v8934 = vpop.f32.mrb[0].mxu0
        %v8935 = vadd.f32 0.0, %v8934
        %v8936 = vpop.f32.mrb[0].mxu0
        %8937 = vdwg.mxu0
        %8938 = vrot.lane.b32.xlu0 %v2116, 104
        %v8939 = vpop.permute.xlu0 %8938
        %v8942 = vsel %vm1736, %v8416, 0
        %8944 = vmatprep.subr.bf16.mxu0 0
        %8945 = vmatpush1.bf16.msra.mxu0 %v8939
        %8946 = vmatprep.subr.bf16.mxu0 0
        %8947 = vmatpush1.bf16.msra.mxu0 0
        %8948 = vmatprep.subr.bf16.mxu0 0
        %8949 = vmatpush1.bf16.msra.mxu0 0
        %8950 = vmatprep.subr.bf16.mxu0 0
        %8951 = vmatpush1.bf16.msra.mxu0 0
        %8952 = vmatprep.subr.bf16.mxu0 0
        %8953 = vmatpush1.bf16.msra.mxu0 0
        %8954 = vmatprep.subr.bf16.mxu0 0
        %8955 = vmatpush1.bf16.msra.mxu0 0
        %8956 = vmatprep.subr.bf16.mxu0 0
        %8957 = vmatpush1.bf16.msra.mxu0 0
        %8958 = vmatprep.subr.bf16.mxu0 0
        %8959 = vmatpush1.bf16.msra.mxu0 0
        %8960 = vmatprep.subr.bf16.mxu0 0
        %8961 = vmatpush1.bf16.msra.mxu0 0
        %8962 = vmatprep.subr.bf16.mxu0 0
        %8963 = vmatpush1.bf16.msra.mxu0 0
        %8964 = vmatprep.subr.bf16.mxu0 0
        %8965 = vmatpush1.bf16.msra.mxu0 0
        %8966 = vmatprep.subr.bf16.mxu0 0
        %8967 = vmatpush1.bf16.msra.mxu0 0
        %8968 = vmatprep.subr.bf16.mxu0 0
        %8969 = vmatpush1.bf16.msra.mxu0 0
        %8970 = vmatprep.subr.bf16.mxu0 0
        %8971 = vmatpush1.bf16.msra.mxu0 0
        %8972 = vmatprep.subr.bf16.mxu0 0
        %8973 = vmatpush1.bf16.msra.mxu0 0
        %8974 = vmatprep.subr.bf16.mxu0 0
        %8975 = vmatpush1.bf16.msra.mxu0 0
        %8976 = vmatprep.mubr.bf16.mxu0 0
        %8977 = vmatmul.mubr.bf16.gmra.mrb[0].mxu0 %v8942
        %v8978 = vpop.f32.mrb[0].mxu0
        %v8979 = vadd.f32 0.0, %v8978
        %v8980 = vpop.f32.mrb[0].mxu0
        %v8981 = vpop.f32.mrb[0].mxu0
        %v8982 = vadd.f32 0.0, %v8981
        %v8983 = vpop.f32.mrb[0].mxu0
        %8984 = vdwg.mxu0
        %8985 = vrot.lane.b32.xlu0 %v2117, 104
        %v8986 = vpop.permute.xlu0 %8985
        %v8989 = vsel %vm1736, %v8417, 0
        %8991 = vmatprep.subr.bf16.mxu0 0
        %8992 = vmatpush1.bf16.msra.mxu0 %v8986
        %8993 = vmatprep.subr.bf16.mxu0 0
        %8994 = vmatpush1.bf16.msra.mxu0 0
        %8995 = vmatprep.subr.bf16.mxu0 0
        %8996 = vmatpush1.bf16.msra.mxu0 0
        %8997 = vmatprep.subr.bf16.mxu0 0
        %8998 = vmatpush1.bf16.msra.mxu0 0
        %8999 = vmatprep.subr.bf16.mxu0 0
        %9000 = vmatpush1.bf16.msra.mxu0 0
        %9001 = vmatprep.subr.bf16.mxu0 0
        %9002 = vmatpush1.bf16.msra.mxu0 0
        %9003 = vmatprep.subr.bf16.mxu0 0
        %9004 = vmatpush1.bf16.msra.mxu0 0
        %9005 = vmatprep.subr.bf16.mxu0 0
        %9006 = vmatpush1.bf16.msra.mxu0 0
        %9007 = vmatprep.subr.bf16.mxu0 0
        %9008 = vmatpush1.bf16.msra.mxu0 0
        %9009 = vmatprep.subr.bf16.mxu0 0
        %9010 = vmatpush1.bf16.msra.mxu0 0
        %9011 = vmatprep.subr.bf16.mxu0 0
        %9012 = vmatpush1.bf16.msra.mxu0 0
        %9013 = vmatprep.subr.bf16.mxu0 0
        %9014 = vmatpush1.bf16.msra.mxu0 0
        %9015 = vmatprep.subr.bf16.mxu0 0
        %9016 = vmatpush1.bf16.msra.mxu0 0
        %9017 = vmatprep.subr.bf16.mxu0 0
        %9018 = vmatpush1.bf16.msra.mxu0 0
        %9019 = vmatprep.subr.bf16.mxu0 0
        %9020 = vmatpush1.bf16.msra.mxu0 0
        %9021 = vmatprep.subr.bf16.mxu0 0
        %9022 = vmatpush1.bf16.msra.mxu0 0
        %9023 = vmatprep.mubr.bf16.mxu0 0
        %9024 = vmatmul.mubr.bf16.gmra.mrb[0].mxu0 %v8989
        %v9025 = vpop.f32.mrb[0].mxu0
        %v9026 = vadd.f32 0.0, %v9025
        %v9027 = vpop.f32.mrb[0].mxu0
        %v9028 = vpop.f32.mrb[0].mxu0
        %v9029 = vadd.f32 0.0, %v9028
        %v9030 = vpop.f32.mrb[0].mxu0
        %9031 = vdwg.mxu0
        %9032 = vrot.lane.b32.xlu0 %v2118, 104
        %v9033 = vpop.permute.xlu0 %9032
        %v9036 = vsel %vm1736, %v8418, 0
        %9038 = vmatprep.subr.bf16.mxu0 0
        %9039 = vmatpush1.bf16.msra.mxu0 %v9033
        %9040 = vmatprep.subr.bf16.mxu0 0
        %9041 = vmatpush1.bf16.msra.mxu0 0
        %9042 = vmatprep.subr.bf16.mxu0 0
        %9043 = vmatpush1.bf16.msra.mxu0 0
        %9044 = vmatprep.subr.bf16.mxu0 0
        %9045 = vmatpush1.bf16.msra.mxu0 0
        %9046 = vmatprep.subr.bf16.mxu0 0
        %9047 = vmatpush1.bf16.msra.mxu0 0
        %9048 = vmatprep.subr.bf16.mxu0 0
        %9049 = vmatpush1.bf16.msra.mxu0 0
        %9050 = vmatprep.subr.bf16.mxu0 0
        %9051 = vmatpush1.bf16.msra.mxu0 0
        %9052 = vmatprep.subr.bf16.mxu0 0
        %9053 = vmatpush1.bf16.msra.mxu0 0
        %9054 = vmatprep.subr.bf16.mxu0 0
        %9055 = vmatpush1.bf16.msra.mxu0 0
        %9056 = vmatprep.subr.bf16.mxu0 0
        %9057 = vmatpush1.bf16.msra.mxu0 0
        %9058 = vmatprep.subr.bf16.mxu0 0
        %9059 = vmatpush1.bf16.msra.mxu0 0
        %9060 = vmatprep.subr.bf16.mxu0 0
        %9061 = vmatpush1.bf16.msra.mxu0 0
        %9062 = vmatprep.subr.bf16.mxu0 0
        %9063 = vmatpush1.bf16.msra.mxu0 0
        %9064 = vmatprep.subr.bf16.mxu0 0
        %9065 = vmatpush1.bf16.msra.mxu0 0
        %9066 = vmatprep.subr.bf16.mxu0 0
        %9067 = vmatpush1.bf16.msra.mxu0 0
        %9068 = vmatprep.subr.bf16.mxu0 0
        %9069 = vmatpush1.bf16.msra.mxu0 0
        %9070 = vmatprep.mubr.bf16.mxu0 0
        %9071 = vmatmul.mubr.bf16.gmra.mrb[0].mxu0 %v9036
        %v9072 = vpop.f32.mrb[0].mxu0
        %v9073 = vadd.f32 0.0, %v9072
        %v9074 = vpop.f32.mrb[0].mxu0
        %v9075 = vpop.f32.mrb[0].mxu0
        %v9076 = vadd.f32 0.0, %v9075
        %v9077 = vpop.f32.mrb[0].mxu0
        %9078 = vdwg.mxu0
        %9079 = vrot.lane.b32.xlu0 %v2119, 104
        %v9080 = vpop.permute.xlu0 %9079
        %v9083 = vsel %vm1736, %v8419, 0
        %9085 = vmatprep.subr.bf16.mxu0 0
        %9086 = vmatpush1.bf16.msra.mxu0 %v9080
        %9087 = vmatprep.subr.bf16.mxu0 0
        %9088 = vmatpush1.bf16.msra.mxu0 0
        %9089 = vmatprep.subr.bf16.mxu0 0
        %9090 = vmatpush1.bf16.msra.mxu0 0
        %9091 = vmatprep.subr.bf16.mxu0 0
        %9092 = vmatpush1.bf16.msra.mxu0 0
        %9093 = vmatprep.subr.bf16.mxu0 0
        %9094 = vmatpush1.bf16.msra.mxu0 0
        %9095 = vmatprep.subr.bf16.mxu0 0
        %9096 = vmatpush1.bf16.msra.mxu0 0
        %9097 = vmatprep.subr.bf16.mxu0 0
        %9098 = vmatpush1.bf16.msra.mxu0 0
        %9099 = vmatprep.subr.bf16.mxu0 0
        %9100 = vmatpush1.bf16.msra.mxu0 0
        %9101 = vmatprep.subr.bf16.mxu0 0
        %9102 = vmatpush1.bf16.msra.mxu0 0
        %9103 = vmatprep.subr.bf16.mxu0 0
        %9104 = vmatpush1.bf16.msra.mxu0 0
        %9105 = vmatprep.subr.bf16.mxu0 0
        %9106 = vmatpush1.bf16.msra.mxu0 0
        %9107 = vmatprep.subr.bf16.mxu0 0
        %9108 = vmatpush1.bf16.msra.mxu0 0
        %9109 = vmatprep.subr.bf16.mxu0 0
        %9110 = vmatpush1.bf16.msra.mxu0 0
        %9111 = vmatprep.subr.bf16.mxu0 0
        %9112 = vmatpush1.bf16.msra.mxu0 0
        %9113 = vmatprep.subr.bf16.mxu0 0
        %9114 = vmatpush1.bf16.msra.mxu0 0
        %9115 = vmatprep.subr.bf16.mxu0 0
        %9116 = vmatpush1.bf16.msra.mxu0 0
        %9117 = vmatprep.mubr.bf16.mxu0 0
        %9118 = vmatmul.mubr.bf16.gmra.mrb[0].mxu0 %v9083
        %v9119 = vpop.f32.mrb[0].mxu0
        %v9120 = vadd.f32 0.0, %v9119
        %v9121 = vpop.f32.mrb[0].mxu0
        %v9122 = vpop.f32.mrb[0].mxu0
        %v9123 = vadd.f32 0.0, %v9122
        %v9124 = vpop.f32.mrb[0].mxu0
        %9125 = vdwg.mxu0
        %9126 = vrot.lane.b32.xlu0 %v2120, 104
        %v9127 = vpop.permute.xlu0 %9126
        %v9130 = vsel %vm1736, %v8420, 0
        %9132 = vmatprep.subr.bf16.mxu0 0
        %9133 = vmatpush1.bf16.msra.mxu0 %v9127
        %9134 = vmatprep.subr.bf16.mxu0 0
        %9135 = vmatpush1.bf16.msra.mxu0 0
        %9136 = vmatprep.subr.bf16.mxu0 0
        %9137 = vmatpush1.bf16.msra.mxu0 0
        %9138 = vmatprep.subr.bf16.mxu0 0
        %9139 = vmatpush1.bf16.msra.mxu0 0
        %9140 = vmatprep.subr.bf16.mxu0 0
        %9141 = vmatpush1.bf16.msra.mxu0 0
        %9142 = vmatprep.subr.bf16.mxu0 0
        %9143 = vmatpush1.bf16.msra.mxu0 0
        %9144 = vmatprep.subr.bf16.mxu0 0
        %9145 = vmatpush1.bf16.msra.mxu0 0
        %9146 = vmatprep.subr.bf16.mxu0 0
        %9147 = vmatpush1.bf16.msra.mxu0 0
        %9148 = vmatprep.subr.bf16.mxu0 0
        %9149 = vmatpush1.bf16.msra.mxu0 0
        %9150 = vmatprep.subr.bf16.mxu0 0
        %9151 = vmatpush1.bf16.msra.mxu0 0
        %9152 = vmatprep.subr.bf16.mxu0 0
        %9153 = vmatpush1.bf16.msra.mxu0 0
        %9154 = vmatprep.subr.bf16.mxu0 0
        %9155 = vmatpush1.bf16.msra.mxu0 0
        %9156 = vmatprep.subr.bf16.mxu0 0
        %9157 = vmatpush1.bf16.msra.mxu0 0
        %9158 = vmatprep.subr.bf16.mxu0 0
        %9159 = vmatpush1.bf16.msra.mxu0 0
        %9160 = vmatprep.subr.bf16.mxu0 0
        %9161 = vmatpush1.bf16.msra.mxu0 0
        %9162 = vmatprep.subr.bf16.mxu0 0
        %9163 = vmatpush1.bf16.msra.mxu0 0
        %9164 = vmatprep.mubr.bf16.mxu0 0
        %9165 = vmatmul.mubr.bf16.gmra.mrb[0].mxu0 %v9130
        %v9166 = vpop.f32.mrb[0].mxu0
        %v9167 = vadd.f32 0.0, %v9166
        %v9168 = vpop.f32.mrb[0].mxu0
        %v9169 = vpop.f32.mrb[0].mxu0
        %v9170 = vadd.f32 0.0, %v9169
        %v9171 = vpop.f32.mrb[0].mxu0
        %9172 = vdwg.mxu0
        %9173 = vrot.lane.b32.xlu0 %v2829, 104
        %v9174 = vpop.permute.xlu0 %9173
        %v9176 = vmul.f32 %v8462, %v9174
        %v9177 = vmul.f32 %v8465, %v9174
        %v9178 = vmul.f32 %v8509, %v9174
        %v9179 = vmul.f32 %v8512, %v9174
        %v9180 = vmul.f32 %v8556, %v9174
        %v9181 = vmul.f32 %v8559, %v9174
        %v9182 = vmul.f32 %v8603, %v9174
        %v9183 = vmul.f32 %v8606, %v9174
        %v9184 = vmul.f32 %v8650, %v9174
        %v9185 = vmul.f32 %v8653, %v9174
        %v9186 = vmul.f32 %v8697, %v9174
        %v9187 = vmul.f32 %v8700, %v9174
        %v9188 = vmul.f32 %v8744, %v9174
        %v9189 = vmul.f32 %v8747, %v9174
        %v9190 = vmul.f32 %v8791, %v9174
        %v9191 = vmul.f32 %v8794, %v9174
        %v9192 = vmul.f32 %v8838, %v9174
        %v9193 = vmul.f32 %v8841, %v9174
        %v9194 = vmul.f32 %v8885, %v9174
        %v9195 = vmul.f32 %v8888, %v9174
        %v9196 = vmul.f32 %v8932, %v9174
        %v9197 = vmul.f32 %v8935, %v9174
        %v9198 = vmul.f32 %v8979, %v9174
        %v9199 = vmul.f32 %v8982, %v9174
        %v9200 = vmul.f32 %v9026, %v9174
        %v9201 = vmul.f32 %v9029, %v9174
        %v9202 = vmul.f32 %v9073, %v9174
        %v9203 = vmul.f32 %v9076, %v9174
        %v9204 = vmul.f32 %v9120, %v9174
        %v9205 = vmul.f32 %v9123, %v9174
        %v9206 = vmul.f32 %v9167, %v9174
        %v9207 = vmul.f32 %v9170, %v9174
        %v9208 = vsel %vm983, %v9176, 0.0
        %9209 = vadd.xlane.f32.xlu0 %v9208
        %v9210 = vpop.xlane.xlu0 %9209
        %v9211 = vsel %vm983, %v9177, 0.0
        %9212 = vadd.xlane.f32.xlu0 %v9211
        %v9213 = vpop.xlane.xlu0 %9212
        %v9214 = vsel %vm983, %v9178, 0.0
        %9215 = vadd.xlane.f32.xlu0 %v9214
        %v9216 = vpop.xlane.xlu0 %9215
        %v9217 = vsel %vm983, %v9179, 0.0
        %9218 = vadd.xlane.f32.xlu0 %v9217
        %v9219 = vpop.xlane.xlu0 %9218
        %v9220 = vsel %vm983, %v9180, 0.0
        %9221 = vadd.xlane.f32.xlu0 %v9220
        %v9222 = vpop.xlane.xlu0 %9221
        %v9223 = vsel %vm983, %v9181, 0.0
        %9224 = vadd.xlane.f32.xlu0 %v9223
        %v9225 = vpop.xlane.xlu0 %9224
        %v9226 = vsel %vm983, %v9182, 0.0
        %9227 = vadd.xlane.f32.xlu0 %v9226
        %v9228 = vpop.xlane.xlu0 %9227
        %v9229 = vsel %vm983, %v9183, 0.0
        %9230 = vadd.xlane.f32.xlu0 %v9229
        %v9231 = vpop.xlane.xlu0 %9230
        %v9232 = vsel %vm983, %v9184, 0.0
        %9233 = vadd.xlane.f32.xlu0 %v9232
        %v9234 = vpop.xlane.xlu0 %9233
        %v9235 = vsel %vm983, %v9185, 0.0
        %9236 = vadd.xlane.f32.xlu0 %v9235
        %v9237 = vpop.xlane.xlu0 %9236
        %v9238 = vsel %vm983, %v9186, 0.0
        %9239 = vadd.xlane.f32.xlu0 %v9238
        %v9240 = vpop.xlane.xlu0 %9239
        %v9241 = vsel %vm983, %v9187, 0.0
        %9242 = vadd.xlane.f32.xlu0 %v9241
        %v9243 = vpop.xlane.xlu0 %9242
        %v9244 = vsel %vm983, %v9188, 0.0
        %9245 = vadd.xlane.f32.xlu0 %v9244
        %v9246 = vpop.xlane.xlu0 %9245
        %v9247 = vsel %vm983, %v9189, 0.0
        %9248 = vadd.xlane.f32.xlu0 %v9247
        %v9249 = vpop.xlane.xlu0 %9248
        %v9250 = vsel %vm983, %v9190, 0.0
        %9251 = vadd.xlane.f32.xlu0 %v9250
        %v9252 = vpop.xlane.xlu0 %9251
        %v9253 = vsel %vm983, %v9191, 0.0
        %9254 = vadd.xlane.f32.xlu0 %v9253
        %v9255 = vpop.xlane.xlu0 %9254
        %v9256 = vsel %vm983, %v9192, 0.0
        %9257 = vadd.xlane.f32.xlu0 %v9256
        %v9258 = vpop.xlane.xlu0 %9257
        %v9259 = vsel %vm983, %v9193, 0.0
        %9260 = vadd.xlane.f32.xlu0 %v9259
        %v9261 = vpop.xlane.xlu0 %9260
        %v9262 = vsel %vm983, %v9194, 0.0
        %9263 = vadd.xlane.f32.xlu0 %v9262
        %v9264 = vpop.xlane.xlu0 %9263
        %v9265 = vsel %vm983, %v9195, 0.0
        %9266 = vadd.xlane.f32.xlu0 %v9265
        %v9267 = vpop.xlane.xlu0 %9266
        %v9268 = vsel %vm983, %v9196, 0.0
        %9269 = vadd.xlane.f32.xlu0 %v9268
        %v9270 = vpop.xlane.xlu0 %9269
        %v9271 = vsel %vm983, %v9197, 0.0
        %9272 = vadd.xlane.f32.xlu0 %v9271
        %v9273 = vpop.xlane.xlu0 %9272
        %v9274 = vsel %vm983, %v9198, 0.0
        %9275 = vadd.xlane.f32.xlu0 %v9274
        %v9276 = vpop.xlane.xlu0 %9275
        %v9277 = vsel %vm983, %v9199, 0.0
        %9278 = vadd.xlane.f32.xlu0 %v9277
        %v9279 = vpop.xlane.xlu0 %9278
        %v9280 = vsel %vm983, %v9200, 0.0
        %9281 = vadd.xlane.f32.xlu0 %v9280
        %v9282 = vpop.xlane.xlu0 %9281
        %v9283 = vsel %vm983, %v9201, 0.0
        %9284 = vadd.xlane.f32.xlu0 %v9283
        %v9285 = vpop.xlane.xlu0 %9284
        %v9286 = vsel %vm983, %v9202, 0.0
        %9287 = vadd.xlane.f32.xlu0 %v9286
        %v9288 = vpop.xlane.xlu0 %9287
        %v9289 = vsel %vm983, %v9203, 0.0
        %9290 = vadd.xlane.f32.xlu0 %v9289
        %v9291 = vpop.xlane.xlu0 %9290
        %v9292 = vsel %vm983, %v9204, 0.0
        %9293 = vadd.xlane.f32.xlu0 %v9292
        %v9294 = vpop.xlane.xlu0 %9293
        %v9295 = vsel %vm983, %v9205, 0.0
        %9296 = vadd.xlane.f32.xlu0 %v9295
        %v9297 = vpop.xlane.xlu0 %9296
        %v9298 = vsel %vm983, %v9206, 0.0
        %9299 = vadd.xlane.f32.xlu0 %v9298
        %v9300 = vpop.xlane.xlu0 %9299
        %v9301 = vsel %vm983, %v9207, 0.0
        %9302 = vadd.xlane.f32.xlu0 %v9301
        %v9303 = vpop.xlane.xlu0 %9302
        %v9304 = vadd.f32 %v7205, %v9210
        %v9305 = vadd.f32 %v7206, %v9213
        %v9306 = vadd.f32 %v7207, %v9216
        %v9307 = vadd.f32 %v7208, %v9219
        %v9308 = vadd.f32 %v7209, %v9222
        %v9309 = vadd.f32 %v7210, %v9225
        %v9310 = vadd.f32 %v7211, %v9228
        %v9311 = vadd.f32 %v7212, %v9231
        %v9312 = vadd.f32 %v7213, %v9234
        %v9313 = vadd.f32 %v7214, %v9237
        %v9314 = vadd.f32 %v7215, %v9240
        %v9315 = vadd.f32 %v7216, %v9243
        %v9316 = vadd.f32 %v7217, %v9246
        %v9317 = vadd.f32 %v7218, %v9249
        %v9318 = vadd.f32 %v7219, %v9252
        %v9319 = vadd.f32 %v7220, %v9255
        %v9320 = vadd.f32 %v7221, %v9258
        %v9321 = vadd.f32 %v7222, %v9261
        %v9322 = vadd.f32 %v7223, %v9264
        %v9323 = vadd.f32 %v7224, %v9267
        %v9324 = vadd.f32 %v7225, %v9270
        %v9325 = vadd.f32 %v7226, %v9273
        %v9326 = vadd.f32 %v7227, %v9276
        %v9327 = vadd.f32 %v7228, %v9279
        %v9328 = vadd.f32 %v7229, %v9282
        %v9329 = vadd.f32 %v7230, %v9285
        %v9330 = vadd.f32 %v7231, %v9288
        %v9331 = vadd.f32 %v7232, %v9291
        %v9332 = vadd.f32 %v7233, %v9294
        %v9333 = vadd.f32 %v7234, %v9297
        %v9334 = vadd.f32 %v7235, %v9300
        %v9335 = vadd.f32 %v7236, %v9303
        %v9368 = vlaneseq
        %v9369 = vand.u32 %v9368, 127
        %v9370 = vlaneseq
        %v9371 = vshrl.u32 %v9370, 7
        %v9372 = vsub.s32 %v9369, %v9371
        %v9373 = vrot.slane %v9304, %v9372
        %v9374 = vadd.s32 %v9369, 4294967288
        %v9375 = vlaneseq
        %v9376 = vshrl.u32 %v9375, 7
        %v9377 = vsub.s32 %v9374, %v9376
        %v9378 = vrot.slane %v9305, %v9377
        %vm9379 = vcmask 130112
        %v9380 = vsel %vm9379, %v9378, %v9373
        %v9381 = vlaneseq
        %v9382 = vshrl.u32 %v9381, 7
        %v9383 = vsub.s32 %v9369, %v9382
        %v9384 = vrot.slane %v9306, %v9383
        %v9385 = vlaneseq
        %v9386 = vshrl.u32 %v9385, 7
        %v9387 = vsub.s32 %v9374, %v9386
        %v9388 = vrot.slane %v9307, %v9387
        %v9389 = vsel %vm9379, %v9388, %v9384
        %v9390 = vlaneseq
        %v9391 = vshrl.u32 %v9390, 7
        %v9392 = vsub.s32 %v9369, %v9391
        %v9393 = vrot.slane %v9308, %v9392
        %v9394 = vlaneseq
        %v9395 = vshrl.u32 %v9394, 7
        %v9396 = vsub.s32 %v9374, %v9395
        %v9397 = vrot.slane %v9309, %v9396
        %v9398 = vsel %vm9379, %v9397, %v9393
        %v9399 = vlaneseq
        %v9400 = vshrl.u32 %v9399, 7
        %v9401 = vsub.s32 %v9369, %v9400
        %v9402 = vrot.slane %v9310, %v9401
        %v9403 = vlaneseq
        %v9404 = vshrl.u32 %v9403, 7
        %v9405 = vsub.s32 %v9374, %v9404
        %v9406 = vrot.slane %v9311, %v9405
        %v9407 = vsel %vm9379, %v9406, %v9402
        %v9408 = vlaneseq
        %v9409 = vshrl.u32 %v9408, 7
        %v9410 = vsub.s32 %v9369, %v9409
        %v9411 = vrot.slane %v9312, %v9410
        %v9412 = vlaneseq
        %v9413 = vshrl.u32 %v9412, 7
        %v9414 = vsub.s32 %v9374, %v9413
        %v9415 = vrot.slane %v9313, %v9414
        %v9416 = vsel %vm9379, %v9415, %v9411
        %v9417 = vlaneseq
        %v9418 = vshrl.u32 %v9417, 7
        %v9419 = vsub.s32 %v9369, %v9418
        %v9420 = vrot.slane %v9314, %v9419
        %v9421 = vlaneseq
        %v9422 = vshrl.u32 %v9421, 7
        %v9423 = vsub.s32 %v9374, %v9422
        %v9424 = vrot.slane %v9315, %v9423
        %v9425 = vsel %vm9379, %v9424, %v9420
        %v9426 = vlaneseq
        %v9427 = vshrl.u32 %v9426, 7
        %v9428 = vsub.s32 %v9369, %v9427
        %v9429 = vrot.slane %v9316, %v9428
        %v9430 = vlaneseq
        %v9431 = vshrl.u32 %v9430, 7
        %v9432 = vsub.s32 %v9374, %v9431
        %v9433 = vrot.slane %v9317, %v9432
        %v9434 = vsel %vm9379, %v9433, %v9429
        %v9435 = vlaneseq
        %v9436 = vshrl.u32 %v9435, 7
        %v9437 = vsub.s32 %v9369, %v9436
        %v9438 = vrot.slane %v9318, %v9437
        %v9439 = vlaneseq
        %v9440 = vshrl.u32 %v9439, 7
        %v9441 = vsub.s32 %v9374, %v9440
        %v9442 = vrot.slane %v9319, %v9441
        %v9443 = vsel %vm9379, %v9442, %v9438
        %v9444 = vlaneseq
        %v9445 = vshrl.u32 %v9444, 7
        %v9446 = vsub.s32 %v9369, %v9445
        %v9447 = vrot.slane %v9320, %v9446
        %v9448 = vlaneseq
        %v9449 = vshrl.u32 %v9448, 7
        %v9450 = vsub.s32 %v9374, %v9449
        %v9451 = vrot.slane %v9321, %v9450
        %v9452 = vsel %vm9379, %v9451, %v9447
        %v9453 = vlaneseq
        %v9454 = vshrl.u32 %v9453, 7
        %v9455 = vsub.s32 %v9369, %v9454
        %v9456 = vrot.slane %v9322, %v9455
        %v9457 = vlaneseq
        %v9458 = vshrl.u32 %v9457, 7
        %v9459 = vsub.s32 %v9374, %v9458
        %v9460 = vrot.slane %v9323, %v9459
        %v9461 = vsel %vm9379, %v9460, %v9456
        %v9462 = vlaneseq
        %v9463 = vshrl.u32 %v9462, 7
        %v9464 = vsub.s32 %v9369, %v9463
        %v9465 = vrot.slane %v9324, %v9464
        %v9466 = vlaneseq
        %v9467 = vshrl.u32 %v9466, 7
        %v9468 = vsub.s32 %v9374, %v9467
        %v9469 = vrot.slane %v9325, %v9468
        %v9470 = vsel %vm9379, %v9469, %v9465
        %v9471 = vlaneseq
        %v9472 = vshrl.u32 %v9471, 7
        %v9473 = vsub.s32 %v9369, %v9472
        %v9474 = vrot.slane %v9326, %v9473
        %v9475 = vlaneseq
        %v9476 = vshrl.u32 %v9475, 7
        %v9477 = vsub.s32 %v9374, %v9476
        %v9478 = vrot.slane %v9327, %v9477
        %v9479 = vsel %vm9379, %v9478, %v9474
        %v9480 = vlaneseq
        %v9481 = vshrl.u32 %v9480, 7
        %v9482 = vsub.s32 %v9369, %v9481
        %v9483 = vrot.slane %v9328, %v9482
        %v9484 = vlaneseq
        %v9485 = vshrl.u32 %v9484, 7
        %v9486 = vsub.s32 %v9374, %v9485
        %v9487 = vrot.slane %v9329, %v9486
        %v9488 = vsel %vm9379, %v9487, %v9483
        %v9489 = vlaneseq
        %v9490 = vshrl.u32 %v9489, 7
        %v9491 = vsub.s32 %v9369, %v9490
        %v9492 = vrot.slane %v9330, %v9491
        %v9493 = vlaneseq
        %v9494 = vshrl.u32 %v9493, 7
        %v9495 = vsub.s32 %v9374, %v9494
        %v9496 = vrot.slane %v9331, %v9495
        %v9497 = vsel %vm9379, %v9496, %v9492
        %v9498 = vlaneseq
        %v9499 = vshrl.u32 %v9498, 7
        %v9500 = vsub.s32 %v9369, %v9499
        %v9501 = vrot.slane %v9332, %v9500
        %v9502 = vlaneseq
        %v9503 = vshrl.u32 %v9502, 7
        %v9504 = vsub.s32 %v9374, %v9503
        %v9505 = vrot.slane %v9333, %v9504
        %v9506 = vsel %vm9379, %v9505, %v9501
        %v9507 = vlaneseq
        %v9508 = vshrl.u32 %v9507, 7
        %v9509 = vsub.s32 %v9369, %v9508
        %v9510 = vrot.slane %v9334, %v9509
        %v9511 = vlaneseq
        %v9512 = vshrl.u32 %v9511, 7
        %v9513 = vsub.s32 %v9374, %v9512
        %v9514 = vrot.slane %v9335, %v9513
        %v9515 = vsel %vm9379, %v9514, %v9510
        %vm9516 = vcmask 1041409
        %v9517 = vsel %vm9516, %v9389, %v9380
        %vm9518 = vcmask 1042434
        %v9519 = vsel %vm9518, %v9398, %v9517
        %vm9520 = vcmask 1043459
        %v9521 = vsel %vm9520, %v9407, %v9519
        %vm9522 = vcmask 1044484
        %v9523 = vsel %vm9522, %v9416, %v9521
        %vm9524 = vcmask 1045509
        %v9525 = vsel %vm9524, %v9425, %v9523
        %vm9526 = vcmask 1046534
        %v9527 = vsel %vm9526, %v9434, %v9525
        %vm9528 = vcmask 1047559
        %v9529 = vsel %vm9528, %v9443, %v9527
        %v9530 = vsel %vm9516, %v9461, %v9452
        %v9531 = vsel %vm9518, %v9470, %v9530
        %v9532 = vsel %vm9520, %v9479, %v9531
        %v9533 = vsel %vm9522, %v9488, %v9532
        %v9534 = vsel %vm9524, %v9497, %v9533
        %v9535 = vsel %vm9526, %v9506, %v9534
        %v9536 = vsel %vm9528, %v9515, %v9535
        %v9539 = vsel %vm1736, %v9529, 0.0
        %9540 = vadd.xlane.f32.xlu0 %v9539
        %v9541 = vpop.xlane.xlu0 %9540
        %v9542 = vsel %vm1736, %v9536, 0.0
        %9543 = vadd.xlane.f32.xlu0 %v9542
        %v9544 = vpop.xlane.xlu0 %9543
        %v9545 = vrcp.pop 16.0
        %v9546 = vmul.f32 %v9541, %v9545
        %v9547 = vmul.f32 %v9544, %v9545
        %v9550 = vlaneseq
        %v9551 = vshrl.u32 %v9550, 7
        %v9552 = vsub.s32 %v9369, %v9551
        %v9553 = vrot.slane %v9546, %v9552
        %v9554 = vlaneseq
        %v9555 = vshrl.u32 %v9554, 7
        %v9556 = vsub.s32 %v9374, %v9555
        %v9557 = vrot.slane %v9547, %v9556
        %v9558 = vsel %vm9379, %v9557, %v9553
        %vm9560 = vcmask 122880
        %9561 = vst.msk [vmem:[%s230] sm:$0x1] %vm9560, %v9558
        %s9562 = sand.u32 %s119, 1
        %s9563 = scalar_lea.sflag [#allocation4], %s9562
        %s9564 = sand.u32 %s119, 1
        %s9565 = scalar_lea.vmem [#allocation7], %s9564
        // Predicated region
        $region45: #{tpu_custom_call.1} parent=35 // pred_check
          %p9566 = pneg %p129
        $region46: #{tpu_custom_call.1} parent=35 // pred_check_branch
          %9568 = sbr.rel (%p9566) target = $region48
        $region47: #{tpu_custom_call.1} parent=35 // pred_region
          %s9570 = ssub.s32 16, 16
          %9571 = vsyncadd %s9563, %s9570
          %s9572 = smul.addr %s22, 16
          %s9573 = scalar_lea.hbm %s4, %s9572
          %s9575 = sshll.u32 %s9565, 4
          %s9576 = int_to_ptr.vmem [resolvable:$true] %s9575
          %9578 = dma.vmem_to_hbm [thread:$0]  %s9576, 16, %s9573, %s9563
        $region48: #{tpu_custom_call.1} parent=35 // pred_fallthru
          _
      $region36: #{tpu_custom_call.1} parent=5 // pred_fallthru
        _
      %p9579 = scmp.le.s32.totalorder 2, %s17
      // Predicated region
      $region49: #{tpu_custom_call.1} parent=5 // pred_check
        %p9580 = pneg %p9579
      $region50: #{tpu_custom_call.1} parent=5 // pred_check_branch
        %9582 = sbr.rel (%p9580) target = $region52
      $region51: #{tpu_custom_call.1} parent=5 // pred_region
        %s9583 = ssub.s32 %s17, 2
        // Predicated region
        $region53: #{tpu_custom_call.1} parent=51 // pred_check
          %p9584 = pneg %p135
        $region54: #{tpu_custom_call.1} parent=51 // pred_check_branch
          %9586 = sbr.rel (%p9584) target = $region56
        $region55: #{tpu_custom_call.1} parent=51 // pred_region
          %s9587 = sand.u32 %s120, 1
          %s9588 = scalar_lea.sflag [#allocation4], %s9587
          %s9589 = sand.u32 %s120, 1
          %s9590 = scalar_lea.vmem [#allocation7], %s9589
          %9591 = dma.done %s9588, 16
        $region56: #{tpu_custom_call.1} parent=51 // pred_fallthru
          _
      $region52: #{tpu_custom_call.1} parent=5 // pred_fallthru
        _
    $region6: #{tpu_custom_call.1} parent=1 // loop_footer
      %s21 = sadd.s32 1, %s17
    $region7: #{tpu_custom_call.1} parent=1 // loop_footer_branch
      %16 = sbr.rel target = $region3
    $region8: #{tpu_custom_call.1} parent=1 // loop_exit
      _
    %9592 = vsyncpa [#allocation3], 1
    %s9593 = scalar_lea.sflag [#allocation3], 1
    %9594 = vsyncpa %s9593, 1
    %9595 = vsyncpa [#allocation6], 1
    %9596 = vsyncpa [#allocation4], 1
    %s9597 = scalar_lea.sflag [#allocation4], 1
    %9598 = vsyncpa %s9597, 1

</llo_original>
